<compile_context>
chip_gen: v5e
topology: v5e:2x2
jax: 0.10.0
libtpu: 0.0.40
codegen_flags: <defaults>
</compile_context>

<pallas_src>
import functools

import jax
import jax.numpy as jnp
from jax.experimental import pallas as pl
from jax.experimental.pallas import tpu as pltpu


# ----------------------------- fused ViT kernel ------------------------------

def vit_fused_kernel(
    patches_ref, embed_bias_ref, attn_bias_ref, patch_w_ref,
    ln1_g_ref, ln1_b_ref, qkv_w_ref, qkv_b_ref, proj_w_ref, proj_b_ref,
    ln2_g_ref, ln2_b_ref, fc1_w_ref, fc1_b_ref, fc2_w_ref, fc2_b_ref,
    norm_g_ref, norm_b_ref, head_w_ref, head_b_ref,
    o_ref,
    *, depth, num_heads, head_dim, seq_pad, batch_tile):
    """One grid step == `batch_tile` batch elements stacked along sublanes."""
    emb = patch_w_ref.shape[1]
    bf16 = jnp.bfloat16
    f32 = jnp.float32

    def layernorm(x, g, b):
        # one-pass stats (var = E[x^2] - E[x]^2), eps = 1e-5 (PyTorch default)
        m = jnp.mean(x, axis=-1, keepdims=True)
        m2 = jnp.mean(x * x, axis=-1, keepdims=True)
        return (x - m) * jax.lax.rsqrt(m2 - m * m + 1e-5) * g + b

    # --- patch embedding + cls token + pos embed (bias table pre-folded) ----
    # padded rows of `patches` are zero, so they only pick up embed_bias rows,
    # exactly reproducing concat([cls, proj(patches)]) + pos per batch element.
    x = jnp.dot(patches_ref[0], patch_w_ref[...],
                preferred_element_type=f32) + embed_bias_ref[...]

    # additive mask: 0 where key is in the same batch block and a real token,
    # -1e30 otherwise (block-diagonal over the stacked batch elements).
    attn_bias = attn_bias_ref[...]

    # TODO(synk): for large configs stream per-layer weights (depth grid axis /
    # emit_pipeline) instead of full VMEM residency; at this size all fit.
    for d in range(depth):                      # depth=2 -> static unroll ok
        # ------------------ attention branch (residual fused) --------------
        xn = layernorm(x, ln1_g_ref[d], ln1_b_ref[d])
        # attention scale is pre-folded into W_q / b_q in the wrapper
        qkv = (jnp.dot(xn.astype(bf16), qkv_w_ref[d],
                       preferred_element_type=f32)
               + qkv_b_ref[d]).astype(bf16)     # (R, 3E) bf16
        heads = []
        for h in range(num_heads):              # static unroll over heads
            lo = h * head_dim
            hi = lo + head_dim
            s = jax.lax.dot_general(qkv[:, lo:hi], qkv[:, emb + lo:emb + hi],
                                    (((1,), (1,)), ((), ())),
                                    preferred_element_type=f32)
            s = s + attn_bias
            s = s - jnp.max(s, axis=-1, keepdims=True)
            p = jnp.exp(s)
            inv = pl.reciprocal(jnp.sum(p, axis=-1, keepdims=True), approx=True)
            oh = jnp.dot(p.astype(bf16), qkv[:, 2 * emb + lo:2 * emb + hi],
                         preferred_element_type=f32) * inv
            heads.append(oh)
        # concat(heads) @ W_proj == ONE (R,E)@(E,E) matmul per layer
        attn_out = jnp.concatenate(heads, axis=-1).astype(bf16)
        x = x + proj_b_ref[d] + jnp.dot(attn_out, proj_w_ref[d],
                                        preferred_element_type=f32)

        # ---------------------- MLP branch (residual fused) ----------------
        xn = layernorm(x, ln2_g_ref[d], ln2_b_ref[d])
        hdn = jnp.dot(xn.astype(bf16), fc1_w_ref[d],
                      preferred_element_type=f32) + fc1_b_ref[d]
        # exact (erf) GELU, matching nn.GELU() default
        hdn = 0.5 * hdn * (1.0 + jax.lax.erf(hdn * jnp.float32(0.7071067811865476)))
        x = x + fc2_b_ref[d] + jnp.dot(hdn.astype(bf16), fc2_w_ref[d],
                                       preferred_element_type=f32)

    # ------------- final LayerNorm on cls tokens + classifier ---------------
    cls_rows = jnp.concatenate(
        [x[b * seq_pad:b * seq_pad + 1, :] for b in range(batch_tile)], axis=0)
    cls = layernorm(cls_rows, norm_g_ref[...], norm_b_ref[...])
    logits = jnp.dot(cls.astype(bf16), head_w_ref[...],
                     preferred_element_type=f32) + head_b_ref[...]
    o_ref[0] = logits.astype(o_ref.dtype)       # (batch_tile, 128) lane-dense


# ----------------------------- parameters ------------------------------------

def init_params(key, cfg):
    C = cfg["in_channels"]
    ph, pw = cfg["patch_size"]
    E = cfg["embed_dim"]
    Mh = cfg["mlp_dim"]
    ncls = cfg["num_classes"]
    depth = cfg["depth"]
    Gh = cfg["img_size"][0] // ph
    Gw = cfg["img_size"][1] // pw
    S = Gh * Gw + 1
    patch_dim = C * ph * pw

    def nrm(k, shape, std=0.02):
        return jax.random.normal(k, shape, jnp.float32) * std

    keys = jax.random.split(key, 8)
    return {
        # Conv2d(C, E, kernel=patch, stride=patch) == (C*ph*pw, E) matmul
        "patch_w": nrm(keys[0], (patch_dim, E)),
        "patch_b": jnp.zeros((1, E), jnp.float32),
        "cls_token": nrm(keys[1], (1, 1, E)),
        "pos_embed": nrm(keys[2], (1, S, E)),
        "norm_g": jnp.ones((1, E), jnp.float32),
        "norm_b": jnp.zeros((1, E), jnp.float32),
        "head_w": nrm(keys[3], (E, ncls)),
        "head_b": jnp.zeros((1, ncls), jnp.float32),
        # per-block weights stacked along a leading depth axis
        "ln1_g": jnp.ones((depth, 1, E), jnp.float32),
        "ln1_b": jnp.zeros((depth, 1, E), jnp.float32),
        "qkv_w": nrm(keys[4], (depth, E, 3 * E)),
        "qkv_b": jnp.zeros((depth, 1, 3 * E), jnp.float32),
        "proj_w": nrm(keys[5], (depth, E, E)),
        "proj_b": jnp.zeros((depth, 1, E), jnp.float32),
        "ln2_g": jnp.ones((depth, 1, E), jnp.float32),
        "ln2_b": jnp.zeros((depth, 1, E), jnp.float32),
        "fc1_w": nrm(keys[6], (depth, E, Mh)),
        "fc1_b": jnp.zeros((depth, 1, Mh), jnp.float32),
        "fc2_w": nrm(keys[7], (depth, Mh, E)),
        "fc2_b": jnp.zeros((depth, 1, E), jnp.float32),
    }


# ----------------------------- forward ---------------------------------------

def vit_forward(params, x, cfg):
    B, C, H, W = x.shape
    ph, pw = cfg["patch_size"]
    Gh, Gw = H // ph, W // pw
    N = Gh * Gw
    E = cfg["embed_dim"]
    Hh = cfg["num_heads"]
    Dh = E // Hh
    ncls = cfg["num_classes"]
    depth = cfg["depth"]
    Mh = cfg["mlp_dim"]
    S = N + 1
    S_pad = ((S + 7) // 8) * 8                  # pad sequence to sublane multiple
    patch_dim = C * ph * pw
    NC_pad = ((ncls + 127) // 128) * 128        # lane-dense logits writeback

    # batch tiling: stack `bt` elements along sublanes per grid step; keep
    # >= 2 grid steps when possible so both v7x TensorCores have work.
    bt = max(1, 128 // S_pad)
    if B >= 2:
        bt = min(bt, pl.cdiv(B, 2))
    bt = min(bt, B)
    num_steps = pl.cdiv(B, bt)
    B_pad = num_steps * bt
    R = bt * S_pad

    # --- XLA glue (pure layout): Conv2d(stride=patch) -> patch rows, one zero
    # row in front of each element (cls slot), zero padding rows/elements.
    patches = (x.reshape(B, C, Gh, ph, Gw, pw)
                .transpose(0, 2, 4, 1, 3, 5)
                .reshape(B, N, patch_dim))
    patches = jnp.pad(patches, ((0, B_pad - B), (1, S_pad - S), (0, 0)))
    patches = patches.reshape(num_steps, R, patch_dim).astype(jnp.bfloat16)

    # parameter-only bias table: row0 = cls + pos[0]; rows 1..N = pos + conv
    # bias; zero pad rows; tiled over the batch_tile stacked elements.
    cls_row = params["cls_token"].reshape(1, E) + params["pos_embed"][0, 0:1, :]
    tok_rows = params["pos_embed"][0, 1:S, :] + params["patch_b"]
    embed_bias = jnp.concatenate(
        [cls_row, tok_rows, jnp.zeros((S_pad - S, E), jnp.float32)], axis=0)
    embed_bias = jnp.tile(embed_bias, (bt, 1))                    # (R, E)

    # block-diagonal key-validity mask as additive bias (0 valid / -1e30 not)
    row_blk = jnp.arange(R, dtype=jnp.int32)[:, None] // S_pad
    col = jnp.arange(R, dtype=jnp.int32)[None, :]
    valid = (row_blk == col // S_pad) & ((col % S_pad) < S)
    attn_bias = jnp.where(valid, 0.0, -1e30).astype(jnp.float32)  # (R, R)

    # fold the attention scale into the Q slice of the QKV weights / bias
    scale = float(Dh) ** -0.5
    qkv_w = params["qkv_w"].at[:, :, 0:E].multiply(scale)
    qkv_b = params["qkv_b"].at[:, :, 0:E].multiply(scale)

    # pad classifier to a full 128-lane write (sliced back outside)
    head_w = jnp.pad(params["head_w"], ((0, 0), (0, NC_pad - ncls)))
    head_b = jnp.pad(params["head_b"], ((0, 0), (0, NC_pad - ncls)))

    bf = lambda a: a.astype(jnp.bfloat16)       # bf16 matmul operands

    def _wspec(shape):
        return pl.BlockSpec(shape, lambda s, _n=len(shape): (0,) * _n)

    kernel = functools.partial(
        vit_fused_kernel, depth=depth, num_heads=Hh, head_dim=Dh,
        seq_pad=S_pad, batch_tile=bt)

    out = pl.pallas_call(
        kernel,
        out_shape=jax.ShapeDtypeStruct((num_steps, bt, NC_pad), jnp.float32),
        grid=(num_steps,),
        in_specs=[
            pl.BlockSpec((1, R, patch_dim), lambda s: (s, 0, 0)),
            _wspec((R, E)),
            _wspec((R, R)),
            _wspec((patch_dim, E)),
            _wspec((depth, 1, E)), _wspec((depth, 1, E)),
            _wspec((depth, E, 3 * E)), _wspec((depth, 1, 3 * E)),
            _wspec((depth, E, E)), _wspec((depth, 1, E)),
            _wspec((depth, 1, E)), _wspec((depth, 1, E)),
            _wspec((depth, E, Mh)), _wspec((depth, 1, Mh)),
            _wspec((depth, Mh, E)), _wspec((depth, 1, E)),
            _wspec((1, E)), _wspec((1, E)),
            _wspec((E, NC_pad)), _wspec((1, NC_pad)),
        ],
        out_specs=pl.BlockSpec((1, bt, NC_pad), lambda s: (s, 0, 0)),
        compiler_params=pltpu.CompilerParams(
            dimension_semantics=("parallel",)),
    )(patches, embed_bias, attn_bias, bf(params["patch_w"]),
      params["ln1_g"], params["ln1_b"], bf(qkv_w), qkv_b,
      bf(params["proj_w"]), params["proj_b"],
      params["ln2_g"], params["ln2_b"],
      bf(params["fc1_w"]), params["fc1_b"],
      bf(params["fc2_w"]), params["fc2_b"],
      params["norm_g"], params["norm_b"], bf(head_w), head_b)

    return out.reshape(B_pad, NC_pad)[:B, :ncls]


# ----------------------------- pure-JAX reference ----------------------------

def vit_reference(params, x, cfg):
    B, C, H, W = x.shape
    ph, pw = cfg["patch_size"]
    Gh, Gw = H // ph, W // pw
    N = Gh * Gw
    E = cfg["embed_dim"]
    Hh = cfg["num_heads"]
    Dh = E // Hh
    depth = cfg["depth"]
    S = N + 1
    patch_dim = C * ph * pw

    patches = (x.reshape(B, C, Gh, ph, Gw, pw)
                .transpose(0, 2, 4, 1, 3, 5)
                .reshape(B, N, patch_dim))
    tok = patches @ params["patch_w"] + params["patch_b"]
    cls = jnp.broadcast_to(params["cls_token"], (B, 1, E))
    h = jnp.concatenate([cls, tok], axis=1) + params["pos_embed"]

    def ln(t, g, b):
        m = t.mean(-1, keepdims=True)
        var = ((t - m) ** 2).mean(-1, keepdims=True)
        return (t - m) / jnp.sqrt(var + 1e-5) * g + b

    for d in range(depth):
        xn = ln(h, params["ln1_g"][d], params["ln1_b"][d])
        qkv = xn @ params["qkv_w"][d] + params["qkv_b"][d]
        q, k, v = jnp.split(qkv, 3, axis=-1)
        q = q.reshape(B, S, Hh, Dh).transpose(0, 2, 1, 3)
        k = k.reshape(B, S, Hh, Dh).transpose(0, 2, 1, 3)
        v = v.reshape(B, S, Hh, Dh).transpose(0, 2, 1, 3)
        attn = jax.nn.softmax((q @ jnp.swapaxes(k, -1, -2)) * (Dh ** -0.5), -1)
        out = (attn @ v).transpose(0, 2, 1, 3).reshape(B, S, E)
        h = h + out @ params["proj_w"][d] + params["proj_b"][d]
        xn = ln(h, params["ln2_g"][d], params["ln2_b"][d])
        m1 = xn @ params["fc1_w"][d] + params["fc1_b"][d]
        m1 = 0.5 * m1 * (1.0 + jax.lax.erf(m1 * (2.0 ** -0.5)))
        h = h + m1 @ params["fc2_w"][d] + params["fc2_b"][d]
    cls_out = ln(h[:, 0], params["norm_g"], params["norm_b"])
    return cls_out @ params["head_w"] + params["head_b"]


# ----------------------------- main -------------------------------------------

if __name__ == "__main__":
    cfg = dict(
        img_size=(16, 16),
        patch_size=(4, 4),
        in_channels=4,
        embed_dim=32,
        depth=2,
        num_heads=4,
        mlp_dim=64,
        num_classes=30,
    )
    key = jax.random.PRNGKey(0)
    k_param, k_x = jax.random.split(key)
    params = init_params(k_param, cfg)

    B = 8   # -> batch_tile=4 elements per grid step, 2 grid steps (v7x: 1/TC)
    x = jax.random.normal(k_x, (B, cfg["in_channels"], *cfg["img_size"]),
                          jnp.float32)

    # TODO(synk): nn.Dropout(0.1) (pos_drop) is identity at inference and omitted.
    fwd = jax.jit(functools.partial(vit_forward, cfg=cfg))
    logits = jax.block_until_ready(fwd(params, x))

    assert logits.shape == (B, cfg["num_classes"]), logits.shape
    assert bool(jnp.all(jnp.isfinite(logits)))

    # loose sanity check vs. f32 reference (kernel uses bf16 matmul operands
    # and approx softmax reciprocal, so exact match is not expected)
    ref = vit_reference(params, x, cfg)
    err = float(jnp.max(jnp.abs(logits - ref)))
    assert err < 3e-2, f"max |kernel - reference| = {err}"
    print("KERNEL_OK")
</pallas_src>

<mosaic_0001>
module attributes {stable_mosaic.version = 11 : i64} {
  func.func @vit_fused_kernel(%arg0: i32, %arg1: memref<1x96x64xbf16, #tpu.memory_space<vmem>>, %arg2: memref<96x32xf32, #tpu.memory_space<vmem>>, %arg3: memref<96x96xf32, #tpu.memory_space<vmem>>, %arg4: memref<64x32xbf16, #tpu.memory_space<vmem>>, %arg5: memref<2x1x32xf32, #tpu.memory_space<vmem>>, %arg6: memref<2x1x32xf32, #tpu.memory_space<vmem>>, %arg7: memref<2x32x96xbf16, #tpu.memory_space<vmem>>, %arg8: memref<2x1x96xf32, #tpu.memory_space<vmem>>, %arg9: memref<2x32x32xbf16, #tpu.memory_space<vmem>>, %arg10: memref<2x1x32xf32, #tpu.memory_space<vmem>>, %arg11: memref<2x1x32xf32, #tpu.memory_space<vmem>>, %arg12: memref<2x1x32xf32, #tpu.memory_space<vmem>>, %arg13: memref<2x32x64xbf16, #tpu.memory_space<vmem>>, %arg14: memref<2x1x64xf32, #tpu.memory_space<vmem>>, %arg15: memref<2x64x32xbf16, #tpu.memory_space<vmem>>, %arg16: memref<2x1x32xf32, #tpu.memory_space<vmem>>, %arg17: memref<1x32xf32, #tpu.memory_space<vmem>>, %arg18: memref<1x32xf32, #tpu.memory_space<vmem>>, %arg19: memref<32x128xbf16, #tpu.memory_space<vmem>>, %arg20: memref<1x128xf32, #tpu.memory_space<vmem>>, %arg21: memref<1x4x128xf32, #tpu.memory_space<vmem>>) attributes {dimension_semantics = [#tpu.dimension_semantics<parallel>], iteration_bounds = array<i64: 2>, scalar_prefetch = 0 : i64, scratch_operands = 0 : i64, tpu.core_type = #tpu.core_type<tc>, window_params = [{transform_indices = @transform_0, window_bounds = array<i64: 1, 96, 64>}, {pipeline_mode = #tpu.pipeline_mode<synchronous>, transform_indices = @transform_1, window_bounds = array<i64: 96, 32>}, {pipeline_mode = #tpu.pipeline_mode<synchronous>, transform_indices = @transform_2, window_bounds = array<i64: 96, 96>}, {pipeline_mode = #tpu.pipeline_mode<synchronous>, transform_indices = @transform_3, window_bounds = array<i64: 64, 32>}, {pipeline_mode = #tpu.pipeline_mode<synchronous>, transform_indices = @transform_4, window_bounds = array<i64: 2, 1, 32>}, {pipeline_mode = #tpu.pipeline_mode<synchronous>, transform_indices = @transform_5, window_bounds = array<i64: 2, 1, 32>}, {pipeline_mode = #tpu.pipeline_mode<synchronous>, transform_indices = @transform_6, window_bounds = array<i64: 2, 32, 96>}, {pipeline_mode = #tpu.pipeline_mode<synchronous>, transform_indices = @transform_7, window_bounds = array<i64: 2, 1, 96>}, {pipeline_mode = #tpu.pipeline_mode<synchronous>, transform_indices = @transform_8, window_bounds = array<i64: 2, 32, 32>}, {pipeline_mode = #tpu.pipeline_mode<synchronous>, transform_indices = @transform_9, window_bounds = array<i64: 2, 1, 32>}, {pipeline_mode = #tpu.pipeline_mode<synchronous>, transform_indices = @transform_10, window_bounds = array<i64: 2, 1, 32>}, {pipeline_mode = #tpu.pipeline_mode<synchronous>, transform_indices = @transform_11, window_bounds = array<i64: 2, 1, 32>}, {pipeline_mode = #tpu.pipeline_mode<synchronous>, transform_indices = @transform_12, window_bounds = array<i64: 2, 32, 64>}, {pipeline_mode = #tpu.pipeline_mode<synchronous>, transform_indices = @transform_13, window_bounds = array<i64: 2, 1, 64>}, {pipeline_mode = #tpu.pipeline_mode<synchronous>, transform_indices = @transform_14, window_bounds = array<i64: 2, 64, 32>}, {pipeline_mode = #tpu.pipeline_mode<synchronous>, transform_indices = @transform_15, window_bounds = array<i64: 2, 1, 32>}, {pipeline_mode = #tpu.pipeline_mode<synchronous>, transform_indices = @transform_16, window_bounds = array<i64: 1, 32>}, {pipeline_mode = #tpu.pipeline_mode<synchronous>, transform_indices = @transform_17, window_bounds = array<i64: 1, 32>}, {pipeline_mode = #tpu.pipeline_mode<synchronous>, transform_indices = @transform_18, window_bounds = array<i64: 32, 128>}, {pipeline_mode = #tpu.pipeline_mode<synchronous>, transform_indices = @transform_19, window_bounds = array<i64: 1, 128>}, {transform_indices = @transform_20, window_bounds = array<i64: 1, 4, 128>}]} {
    %c0 = arith.constant 0 : index
    %c0_0 = arith.constant 0 : index
    %c0_1 = arith.constant 0 : index
    %0 = vector.load %arg1[%c0, %c0_0, %c0_1] : memref<1x96x64xbf16, #tpu.memory_space<vmem>>, vector<1x96x64xbf16>
    %1 = vector.shape_cast %0 : vector<1x96x64xbf16> to vector<96x64xbf16>
    %c0_2 = arith.constant 0 : index
    %c0_3 = arith.constant 0 : index
    %2 = vector.load %arg4[%c0_2, %c0_3] : memref<64x32xbf16, #tpu.memory_space<vmem>>, vector<64x32xbf16>
    %cst = arith.constant dense<0.000000e+00> : vector<96x32xf32>
    %3 = tpu.matmul %1, %2, %cst {dimension_numbers = #tpu.dot_dimension_numbers<[1], [0], [0], [1], [0, 0, 1, 1], [], []>} : vector<96x64xbf16>, vector<64x32xbf16>, vector<96x32xf32> -> vector<96x32xf32>
    %c0_4 = arith.constant 0 : index
    %c0_5 = arith.constant 0 : index
    %4 = vector.load %arg2[%c0_4, %c0_5] : memref<96x32xf32, #tpu.memory_space<vmem>>, vector<96x32xf32>
    %5 = arith.addf %3, %4 : vector<96x32xf32>
    %c0_6 = arith.constant 0 : index
    %c0_7 = arith.constant 0 : index
    %6 = vector.load %arg3[%c0_6, %c0_7] : memref<96x96xf32, #tpu.memory_space<vmem>>, vector<96x96xf32>
    %c0_8 = arith.constant 0 : index
    %c0_9 = arith.constant 0 : index
    %c0_10 = arith.constant 0 : index
    %7 = vector.load %arg5[%c0_8, %c0_9, %c0_10] : memref<2x1x32xf32, #tpu.memory_space<vmem>>, vector<1x1x32xf32>
    %8 = vector.shape_cast %7 : vector<1x1x32xf32> to vector<1x32xf32>
    %c0_11 = arith.constant 0 : index
    %c0_12 = arith.constant 0 : index
    %c0_13 = arith.constant 0 : index
    %9 = vector.load %arg6[%c0_11, %c0_12, %c0_13] : memref<2x1x32xf32, #tpu.memory_space<vmem>>, vector<1x1x32xf32>
    %10 = vector.shape_cast %9 : vector<1x1x32xf32> to vector<1x32xf32>
    %cst_14 = arith.constant dense<0.000000e+00> : vector<96xf32>
    %11 = vector.multi_reduction <add>, %5, %cst_14 [1] : vector<96x32xf32> to vector<96xf32>
    %12 = vector.shape_cast %11 : vector<96xf32> to vector<96x1xf32>
    %cst_15 = arith.constant 3.200000e+01 : f32
    %13 = vector.broadcast %cst_15 : f32 to vector<96x1xf32>
    %14 = arith.divf %12, %13 : vector<96x1xf32>
    %15 = arith.mulf %5, %5 : vector<96x32xf32>
    %cst_16 = arith.constant dense<0.000000e+00> : vector<96xf32>
    %16 = vector.multi_reduction <add>, %15, %cst_16 [1] : vector<96x32xf32> to vector<96xf32>
    %17 = vector.shape_cast %16 : vector<96xf32> to vector<96x1xf32>
    %cst_17 = arith.constant 3.200000e+01 : f32
    %18 = vector.broadcast %cst_17 : f32 to vector<96x1xf32>
    %19 = arith.divf %17, %18 : vector<96x1xf32>
    %20 = vector.broadcast %14 : vector<96x1xf32> to vector<96x32xf32>
    %21 = arith.subf %5, %20 : vector<96x32xf32>
    %22 = arith.mulf %14, %14 : vector<96x1xf32>
    %23 = arith.subf %19, %22 : vector<96x1xf32>
    %cst_18 = arith.constant 9.99999974E-6 : f32
    %24 = vector.broadcast %cst_18 : f32 to vector<96x1xf32>
    %25 = arith.addf %23, %24 : vector<96x1xf32>
    %26 = math.rsqrt %25 : vector<96x1xf32>
    %27 = vector.broadcast %26 : vector<96x1xf32> to vector<96x32xf32>
    %28 = arith.mulf %21, %27 : vector<96x32xf32>
    %29 = vector.broadcast %8 : vector<1x32xf32> to vector<96x32xf32>
    %30 = arith.mulf %28, %29 : vector<96x32xf32>
    %31 = vector.broadcast %10 : vector<1x32xf32> to vector<96x32xf32>
    %32 = arith.addf %30, %31 : vector<96x32xf32>
    %33 = arith.truncf %32 : vector<96x32xf32> to vector<96x32xbf16>
    %c0_19 = arith.constant 0 : index
    %c0_20 = arith.constant 0 : index
    %c0_21 = arith.constant 0 : index
    %34 = vector.load %arg7[%c0_19, %c0_20, %c0_21] : memref<2x32x96xbf16, #tpu.memory_space<vmem>>, vector<1x32x96xbf16>
    %35 = vector.shape_cast %34 : vector<1x32x96xbf16> to vector<32x96xbf16>
    %cst_22 = arith.constant dense<0.000000e+00> : vector<96x96xf32>
    %36 = tpu.matmul %33, %35, %cst_22 {dimension_numbers = #tpu.dot_dimension_numbers<[1], [0], [0], [1], [0, 0, 1, 1], [], []>} : vector<96x32xbf16>, vector<32x96xbf16>, vector<96x96xf32> -> vector<96x96xf32>
    %c0_23 = arith.constant 0 : index
    %c0_24 = arith.constant 0 : index
    %c0_25 = arith.constant 0 : index
    %37 = vector.load %arg8[%c0_23, %c0_24, %c0_25] : memref<2x1x96xf32, #tpu.memory_space<vmem>>, vector<1x1x96xf32>
    %38 = vector.shape_cast %37 : vector<1x1x96xf32> to vector<1x96xf32>
    %39 = vector.broadcast %38 : vector<1x96xf32> to vector<96x96xf32>
    %40 = arith.addf %36, %39 : vector<96x96xf32>
    %41 = arith.truncf %40 : vector<96x96xf32> to vector<96x96xbf16>
    %42 = vector.extract_strided_slice %41 {offsets = [0, 0], sizes = [96, 8], strides = [1, 1]} : vector<96x96xbf16> to vector<96x8xbf16>
    %43 = vector.extract_strided_slice %41 {offsets = [0, 32], sizes = [96, 8], strides = [1, 1]} : vector<96x96xbf16> to vector<96x8xbf16>
    %cst_26 = arith.constant dense<0.000000e+00> : vector<96x96xf32>
    %44 = tpu.matmul %42, %43, %cst_26 {dimension_numbers = #tpu.dot_dimension_numbers<[1], [1], [0], [0], [0, 0, 1, 0], [], []>} : vector<96x8xbf16>, vector<96x8xbf16>, vector<96x96xf32> -> vector<96x96xf32>
    %45 = arith.addf %44, %6 : vector<96x96xf32>
    %cst_27 = arith.constant dense<0xFF800000> : vector<96xf32>
    %46 = vector.multi_reduction <maximumf>, %45, %cst_27 [1] : vector<96x96xf32> to vector<96xf32>
    %47 = vector.shape_cast %46 : vector<96xf32> to vector<96x1xf32>
    %48 = vector.broadcast %47 : vector<96x1xf32> to vector<96x96xf32>
    %49 = arith.subf %45, %48 : vector<96x96xf32>
    %50 = math.exp %49 : vector<96x96xf32>
    %cst_28 = arith.constant dense<0.000000e+00> : vector<96xf32>
    %51 = vector.multi_reduction <add>, %50, %cst_28 [1] : vector<96x96xf32> to vector<96xf32>
    %52 = vector.shape_cast %51 : vector<96xf32> to vector<96x1xf32>
    %53 = tpu.reciprocal %52 {approx = true} : vector<96x1xf32> -> vector<96x1xf32>
    %54 = arith.truncf %50 : vector<96x96xf32> to vector<96x96xbf16>
    %55 = vector.extract_strided_slice %41 {offsets = [0, 64], sizes = [96, 8], strides = [1, 1]} : vector<96x96xbf16> to vector<96x8xbf16>
    %cst_29 = arith.constant dense<0.000000e+00> : vector<96x8xf32>
    %56 = tpu.matmul %54, %55, %cst_29 {dimension_numbers = #tpu.dot_dimension_numbers<[1], [0], [0], [1], [0, 0, 1, 1], [], []>} : vector<96x96xbf16>, vector<96x8xbf16>, vector<96x8xf32> -> vector<96x8xf32>
    %57 = vector.broadcast %53 : vector<96x1xf32> to vector<96x8xf32>
    %58 = arith.mulf %56, %57 : vector<96x8xf32>
    %59 = vector.extract_strided_slice %41 {offsets = [0, 8], sizes = [96, 8], strides = [1, 1]} : vector<96x96xbf16> to vector<96x8xbf16>
    %60 = vector.extract_strided_slice %41 {offsets = [0, 40], sizes = [96, 8], strides = [1, 1]} : vector<96x96xbf16> to vector<96x8xbf16>
    %cst_30 = arith.constant dense<0.000000e+00> : vector<96x96xf32>
    %61 = tpu.matmul %59, %60, %cst_30 {dimension_numbers = #tpu.dot_dimension_numbers<[1], [1], [0], [0], [0, 0, 1, 0], [], []>} : vector<96x8xbf16>, vector<96x8xbf16>, vector<96x96xf32> -> vector<96x96xf32>
    %62 = arith.addf %61, %6 : vector<96x96xf32>
    %cst_31 = arith.constant dense<0xFF800000> : vector<96xf32>
    %63 = vector.multi_reduction <maximumf>, %62, %cst_31 [1] : vector<96x96xf32> to vector<96xf32>
    %64 = vector.shape_cast %63 : vector<96xf32> to vector<96x1xf32>
    %65 = vector.broadcast %64 : vector<96x1xf32> to vector<96x96xf32>
    %66 = arith.subf %62, %65 : vector<96x96xf32>
    %67 = math.exp %66 : vector<96x96xf32>
    %cst_32 = arith.constant dense<0.000000e+00> : vector<96xf32>
    %68 = vector.multi_reduction <add>, %67, %cst_32 [1] : vector<96x96xf32> to vector<96xf32>
    %69 = vector.shape_cast %68 : vector<96xf32> to vector<96x1xf32>
    %70 = tpu.reciprocal %69 {approx = true} : vector<96x1xf32> -> vector<96x1xf32>
    %71 = arith.truncf %67 : vector<96x96xf32> to vector<96x96xbf16>
    %72 = vector.extract_strided_slice %41 {offsets = [0, 72], sizes = [96, 8], strides = [1, 1]} : vector<96x96xbf16> to vector<96x8xbf16>
    %cst_33 = arith.constant dense<0.000000e+00> : vector<96x8xf32>
    %73 = tpu.matmul %71, %72, %cst_33 {dimension_numbers = #tpu.dot_dimension_numbers<[1], [0], [0], [1], [0, 0, 1, 1], [], []>} : vector<96x96xbf16>, vector<96x8xbf16>, vector<96x8xf32> -> vector<96x8xf32>
    %74 = vector.broadcast %70 : vector<96x1xf32> to vector<96x8xf32>
    %75 = arith.mulf %73, %74 : vector<96x8xf32>
    %76 = vector.extract_strided_slice %41 {offsets = [0, 16], sizes = [96, 8], strides = [1, 1]} : vector<96x96xbf16> to vector<96x8xbf16>
    %77 = vector.extract_strided_slice %41 {offsets = [0, 48], sizes = [96, 8], strides = [1, 1]} : vector<96x96xbf16> to vector<96x8xbf16>
    %cst_34 = arith.constant dense<0.000000e+00> : vector<96x96xf32>
    %78 = tpu.matmul %76, %77, %cst_34 {dimension_numbers = #tpu.dot_dimension_numbers<[1], [1], [0], [0], [0, 0, 1, 0], [], []>} : vector<96x8xbf16>, vector<96x8xbf16>, vector<96x96xf32> -> vector<96x96xf32>
    %79 = arith.addf %78, %6 : vector<96x96xf32>
    %cst_35 = arith.constant dense<0xFF800000> : vector<96xf32>
    %80 = vector.multi_reduction <maximumf>, %79, %cst_35 [1] : vector<96x96xf32> to vector<96xf32>
    %81 = vector.shape_cast %80 : vector<96xf32> to vector<96x1xf32>
    %82 = vector.broadcast %81 : vector<96x1xf32> to vector<96x96xf32>
    %83 = arith.subf %79, %82 : vector<96x96xf32>
    %84 = math.exp %83 : vector<96x96xf32>
    %cst_36 = arith.constant dense<0.000000e+00> : vector<96xf32>
    %85 = vector.multi_reduction <add>, %84, %cst_36 [1] : vector<96x96xf32> to vector<96xf32>
    %86 = vector.shape_cast %85 : vector<96xf32> to vector<96x1xf32>
    %87 = tpu.reciprocal %86 {approx = true} : vector<96x1xf32> -> vector<96x1xf32>
    %88 = arith.truncf %84 : vector<96x96xf32> to vector<96x96xbf16>
    %89 = vector.extract_strided_slice %41 {offsets = [0, 80], sizes = [96, 8], strides = [1, 1]} : vector<96x96xbf16> to vector<96x8xbf16>
    %cst_37 = arith.constant dense<0.000000e+00> : vector<96x8xf32>
    %90 = tpu.matmul %88, %89, %cst_37 {dimension_numbers = #tpu.dot_dimension_numbers<[1], [0], [0], [1], [0, 0, 1, 1], [], []>} : vector<96x96xbf16>, vector<96x8xbf16>, vector<96x8xf32> -> vector<96x8xf32>
    %91 = vector.broadcast %87 : vector<96x1xf32> to vector<96x8xf32>
    %92 = arith.mulf %90, %91 : vector<96x8xf32>
    %93 = vector.extract_strided_slice %41 {offsets = [0, 24], sizes = [96, 8], strides = [1, 1]} : vector<96x96xbf16> to vector<96x8xbf16>
    %94 = vector.extract_strided_slice %41 {offsets = [0, 56], sizes = [96, 8], strides = [1, 1]} : vector<96x96xbf16> to vector<96x8xbf16>
    %cst_38 = arith.constant dense<0.000000e+00> : vector<96x96xf32>
    %95 = tpu.matmul %93, %94, %cst_38 {dimension_numbers = #tpu.dot_dimension_numbers<[1], [1], [0], [0], [0, 0, 1, 0], [], []>} : vector<96x8xbf16>, vector<96x8xbf16>, vector<96x96xf32> -> vector<96x96xf32>
    %96 = arith.addf %95, %6 : vector<96x96xf32>
    %cst_39 = arith.constant dense<0xFF800000> : vector<96xf32>
    %97 = vector.multi_reduction <maximumf>, %96, %cst_39 [1] : vector<96x96xf32> to vector<96xf32>
    %98 = vector.shape_cast %97 : vector<96xf32> to vector<96x1xf32>
    %99 = vector.broadcast %98 : vector<96x1xf32> to vector<96x96xf32>
    %100 = arith.subf %96, %99 : vector<96x96xf32>
    %101 = math.exp %100 : vector<96x96xf32>
    %cst_40 = arith.constant dense<0.000000e+00> : vector<96xf32>
    %102 = vector.multi_reduction <add>, %101, %cst_40 [1] : vector<96x96xf32> to vector<96xf32>
    %103 = vector.shape_cast %102 : vector<96xf32> to vector<96x1xf32>
    %104 = tpu.reciprocal %103 {approx = true} : vector<96x1xf32> -> vector<96x1xf32>
    %105 = arith.truncf %101 : vector<96x96xf32> to vector<96x96xbf16>
    %106 = vector.extract_strided_slice %41 {offsets = [0, 88], sizes = [96, 8], strides = [1, 1]} : vector<96x96xbf16> to vector<96x8xbf16>
    %cst_41 = arith.constant dense<0.000000e+00> : vector<96x8xf32>
    %107 = tpu.matmul %105, %106, %cst_41 {dimension_numbers = #tpu.dot_dimension_numbers<[1], [0], [0], [1], [0, 0, 1, 1], [], []>} : vector<96x96xbf16>, vector<96x8xbf16>, vector<96x8xf32> -> vector<96x8xf32>
    %108 = vector.broadcast %104 : vector<96x1xf32> to vector<96x8xf32>
    %109 = arith.mulf %107, %108 : vector<96x8xf32>
    %110 = tpu.concatenate %58, %75, %92, %109 in 1 : vector<96x8xf32>, vector<96x8xf32>, vector<96x8xf32>, vector<96x8xf32> -> vector<96x32xf32>
    %111 = arith.truncf %110 : vector<96x32xf32> to vector<96x32xbf16>
    %c0_42 = arith.constant 0 : index
    %c0_43 = arith.constant 0 : index
    %c0_44 = arith.constant 0 : index
    %112 = vector.load %arg10[%c0_42, %c0_43, %c0_44] : memref<2x1x32xf32, #tpu.memory_space<vmem>>, vector<1x1x32xf32>
    %113 = vector.shape_cast %112 : vector<1x1x32xf32> to vector<1x32xf32>
    %114 = vector.broadcast %113 : vector<1x32xf32> to vector<96x32xf32>
    %115 = arith.addf %5, %114 : vector<96x32xf32>
    %c0_45 = arith.constant 0 : index
    %c0_46 = arith.constant 0 : index
    %c0_47 = arith.constant 0 : index
    %116 = vector.load %arg9[%c0_45, %c0_46, %c0_47] : memref<2x32x32xbf16, #tpu.memory_space<vmem>>, vector<1x32x32xbf16>
    %117 = vector.shape_cast %116 : vector<1x32x32xbf16> to vector<32x32xbf16>
    %cst_48 = arith.constant dense<0.000000e+00> : vector<96x32xf32>
    %118 = tpu.matmul %111, %117, %cst_48 {dimension_numbers = #tpu.dot_dimension_numbers<[1], [0], [0], [1], [0, 0, 1, 1], [], []>} : vector<96x32xbf16>, vector<32x32xbf16>, vector<96x32xf32> -> vector<96x32xf32>
    %119 = arith.addf %115, %118 : vector<96x32xf32>
    %c0_49 = arith.constant 0 : index
    %c0_50 = arith.constant 0 : index
    %c0_51 = arith.constant 0 : index
    %120 = vector.load %arg11[%c0_49, %c0_50, %c0_51] : memref<2x1x32xf32, #tpu.memory_space<vmem>>, vector<1x1x32xf32>
    %121 = vector.shape_cast %120 : vector<1x1x32xf32> to vector<1x32xf32>
    %c0_52 = arith.constant 0 : index
    %c0_53 = arith.constant 0 : index
    %c0_54 = arith.constant 0 : index
    %122 = vector.load %arg12[%c0_52, %c0_53, %c0_54] : memref<2x1x32xf32, #tpu.memory_space<vmem>>, vector<1x1x32xf32>
    %123 = vector.shape_cast %122 : vector<1x1x32xf32> to vector<1x32xf32>
    %cst_55 = arith.constant dense<0.000000e+00> : vector<96xf32>
    %124 = vector.multi_reduction <add>, %119, %cst_55 [1] : vector<96x32xf32> to vector<96xf32>
    %125 = vector.shape_cast %124 : vector<96xf32> to vector<96x1xf32>
    %cst_56 = arith.constant 3.200000e+01 : f32
    %126 = vector.broadcast %cst_56 : f32 to vector<96x1xf32>
    %127 = arith.divf %125, %126 : vector<96x1xf32>
    %128 = arith.mulf %119, %119 : vector<96x32xf32>
    %cst_57 = arith.constant dense<0.000000e+00> : vector<96xf32>
    %129 = vector.multi_reduction <add>, %128, %cst_57 [1] : vector<96x32xf32> to vector<96xf32>
    %130 = vector.shape_cast %129 : vector<96xf32> to vector<96x1xf32>
    %cst_58 = arith.constant 3.200000e+01 : f32
    %131 = vector.broadcast %cst_58 : f32 to vector<96x1xf32>
    %132 = arith.divf %130, %131 : vector<96x1xf32>
    %133 = vector.broadcast %127 : vector<96x1xf32> to vector<96x32xf32>
    %134 = arith.subf %119, %133 : vector<96x32xf32>
    %135 = arith.mulf %127, %127 : vector<96x1xf32>
    %136 = arith.subf %132, %135 : vector<96x1xf32>
    %cst_59 = arith.constant 9.99999974E-6 : f32
    %137 = vector.broadcast %cst_59 : f32 to vector<96x1xf32>
    %138 = arith.addf %136, %137 : vector<96x1xf32>
    %139 = math.rsqrt %138 : vector<96x1xf32>
    %140 = vector.broadcast %139 : vector<96x1xf32> to vector<96x32xf32>
    %141 = arith.mulf %134, %140 : vector<96x32xf32>
    %142 = vector.broadcast %121 : vector<1x32xf32> to vector<96x32xf32>
    %143 = arith.mulf %141, %142 : vector<96x32xf32>
    %144 = vector.broadcast %123 : vector<1x32xf32> to vector<96x32xf32>
    %145 = arith.addf %143, %144 : vector<96x32xf32>
    %146 = arith.truncf %145 : vector<96x32xf32> to vector<96x32xbf16>
    %c0_60 = arith.constant 0 : index
    %c0_61 = arith.constant 0 : index
    %c0_62 = arith.constant 0 : index
    %147 = vector.load %arg13[%c0_60, %c0_61, %c0_62] : memref<2x32x64xbf16, #tpu.memory_space<vmem>>, vector<1x32x64xbf16>
    %148 = vector.shape_cast %147 : vector<1x32x64xbf16> to vector<32x64xbf16>
    %cst_63 = arith.constant dense<0.000000e+00> : vector<96x64xf32>
    %149 = tpu.matmul %146, %148, %cst_63 {dimension_numbers = #tpu.dot_dimension_numbers<[1], [0], [0], [1], [0, 0, 1, 1], [], []>} : vector<96x32xbf16>, vector<32x64xbf16>, vector<96x64xf32> -> vector<96x64xf32>
    %c0_64 = arith.constant 0 : index
    %c0_65 = arith.constant 0 : index
    %c0_66 = arith.constant 0 : index
    %150 = vector.load %arg14[%c0_64, %c0_65, %c0_66] : memref<2x1x64xf32, #tpu.memory_space<vmem>>, vector<1x1x64xf32>
    %151 = vector.shape_cast %150 : vector<1x1x64xf32> to vector<1x64xf32>
    %152 = vector.broadcast %151 : vector<1x64xf32> to vector<96x64xf32>
    %153 = arith.addf %149, %152 : vector<96x64xf32>
    %cst_67 = arith.constant 5.000000e-01 : f32
    %154 = vector.broadcast %cst_67 : f32 to vector<96x64xf32>
    %155 = arith.mulf %154, %153 : vector<96x64xf32>
    %cst_68 = arith.constant 0.707106769 : f32
    %156 = vector.broadcast %cst_68 : f32 to vector<96x64xf32>
    %157 = arith.mulf %153, %156 : vector<96x64xf32>
    %158 = math.erf %157 : vector<96x64xf32>
    %cst_69 = arith.constant 1.000000e+00 : f32
    %159 = vector.broadcast %cst_69 : f32 to vector<96x64xf32>
    %160 = arith.addf %159, %158 : vector<96x64xf32>
    %161 = arith.mulf %155, %160 : vector<96x64xf32>
    %c0_70 = arith.constant 0 : index
    %c0_71 = arith.constant 0 : index
    %c0_72 = arith.constant 0 : index
    %162 = vector.load %arg16[%c0_70, %c0_71, %c0_72] : memref<2x1x32xf32, #tpu.memory_space<vmem>>, vector<1x1x32xf32>
    %163 = vector.shape_cast %162 : vector<1x1x32xf32> to vector<1x32xf32>
    %164 = vector.broadcast %163 : vector<1x32xf32> to vector<96x32xf32>
    %165 = arith.addf %119, %164 : vector<96x32xf32>
    %166 = arith.truncf %161 : vector<96x64xf32> to vector<96x64xbf16>
    %c0_73 = arith.constant 0 : index
    %c0_74 = arith.constant 0 : index
    %c0_75 = arith.constant 0 : index
    %167 = vector.load %arg15[%c0_73, %c0_74, %c0_75] : memref<2x64x32xbf16, #tpu.memory_space<vmem>>, vector<1x64x32xbf16>
    %168 = vector.shape_cast %167 : vector<1x64x32xbf16> to vector<64x32xbf16>
    %cst_76 = arith.constant dense<0.000000e+00> : vector<96x32xf32>
    %169 = tpu.matmul %166, %168, %cst_76 {dimension_numbers = #tpu.dot_dimension_numbers<[1], [0], [0], [1], [0, 0, 1, 1], [], []>} : vector<96x64xbf16>, vector<64x32xbf16>, vector<96x32xf32> -> vector<96x32xf32>
    %170 = arith.addf %165, %169 : vector<96x32xf32>
    %c1 = arith.constant 1 : index
    %c0_77 = arith.constant 0 : index
    %c0_78 = arith.constant 0 : index
    %171 = vector.load %arg5[%c1, %c0_77, %c0_78] : memref<2x1x32xf32, #tpu.memory_space<vmem>>, vector<1x1x32xf32>
    %172 = vector.shape_cast %171 : vector<1x1x32xf32> to vector<1x32xf32>
    %c1_79 = arith.constant 1 : index
    %c0_80 = arith.constant 0 : index
    %c0_81 = arith.constant 0 : index
    %173 = vector.load %arg6[%c1_79, %c0_80, %c0_81] : memref<2x1x32xf32, #tpu.memory_space<vmem>>, vector<1x1x32xf32>
    %174 = vector.shape_cast %173 : vector<1x1x32xf32> to vector<1x32xf32>
    %cst_82 = arith.constant dense<0.000000e+00> : vector<96xf32>
    %175 = vector.multi_reduction <add>, %170, %cst_82 [1] : vector<96x32xf32> to vector<96xf32>
    %176 = vector.shape_cast %175 : vector<96xf32> to vector<96x1xf32>
    %cst_83 = arith.constant 3.200000e+01 : f32
    %177 = vector.broadcast %cst_83 : f32 to vector<96x1xf32>
    %178 = arith.divf %176, %177 : vector<96x1xf32>
    %179 = arith.mulf %170, %170 : vector<96x32xf32>
    %cst_84 = arith.constant dense<0.000000e+00> : vector<96xf32>
    %180 = vector.multi_reduction <add>, %179, %cst_84 [1] : vector<96x32xf32> to vector<96xf32>
    %181 = vector.shape_cast %180 : vector<96xf32> to vector<96x1xf32>
    %cst_85 = arith.constant 3.200000e+01 : f32
    %182 = vector.broadcast %cst_85 : f32 to vector<96x1xf32>
    %183 = arith.divf %181, %182 : vector<96x1xf32>
    %184 = vector.broadcast %178 : vector<96x1xf32> to vector<96x32xf32>
    %185 = arith.subf %170, %184 : vector<96x32xf32>
    %186 = arith.mulf %178, %178 : vector<96x1xf32>
    %187 = arith.subf %183, %186 : vector<96x1xf32>
    %cst_86 = arith.constant 9.99999974E-6 : f32
    %188 = vector.broadcast %cst_86 : f32 to vector<96x1xf32>
    %189 = arith.addf %187, %188 : vector<96x1xf32>
    %190 = math.rsqrt %189 : vector<96x1xf32>
    %191 = vector.broadcast %190 : vector<96x1xf32> to vector<96x32xf32>
    %192 = arith.mulf %185, %191 : vector<96x32xf32>
    %193 = vector.broadcast %172 : vector<1x32xf32> to vector<96x32xf32>
    %194 = arith.mulf %192, %193 : vector<96x32xf32>
    %195 = vector.broadcast %174 : vector<1x32xf32> to vector<96x32xf32>
    %196 = arith.addf %194, %195 : vector<96x32xf32>
    %197 = arith.truncf %196 : vector<96x32xf32> to vector<96x32xbf16>
    %c1_87 = arith.constant 1 : index
    %c0_88 = arith.constant 0 : index
    %c0_89 = arith.constant 0 : index
    %198 = vector.load %arg7[%c1_87, %c0_88, %c0_89] : memref<2x32x96xbf16, #tpu.memory_space<vmem>>, vector<1x32x96xbf16>
    %199 = vector.shape_cast %198 : vector<1x32x96xbf16> to vector<32x96xbf16>
    %cst_90 = arith.constant dense<0.000000e+00> : vector<96x96xf32>
    %200 = tpu.matmul %197, %199, %cst_90 {dimension_numbers = #tpu.dot_dimension_numbers<[1], [0], [0], [1], [0, 0, 1, 1], [], []>} : vector<96x32xbf16>, vector<32x96xbf16>, vector<96x96xf32> -> vector<96x96xf32>
    %c1_91 = arith.constant 1 : index
    %c0_92 = arith.constant 0 : index
    %c0_93 = arith.constant 0 : index
    %201 = vector.load %arg8[%c1_91, %c0_92, %c0_93] : memref<2x1x96xf32, #tpu.memory_space<vmem>>, vector<1x1x96xf32>
    %202 = vector.shape_cast %201 : vector<1x1x96xf32> to vector<1x96xf32>
    %203 = vector.broadcast %202 : vector<1x96xf32> to vector<96x96xf32>
    %204 = arith.addf %200, %203 : vector<96x96xf32>
    %205 = arith.truncf %204 : vector<96x96xf32> to vector<96x96xbf16>
    %206 = vector.extract_strided_slice %205 {offsets = [0, 0], sizes = [96, 8], strides = [1, 1]} : vector<96x96xbf16> to vector<96x8xbf16>
    %207 = vector.extract_strided_slice %205 {offsets = [0, 32], sizes = [96, 8], strides = [1, 1]} : vector<96x96xbf16> to vector<96x8xbf16>
    %cst_94 = arith.constant dense<0.000000e+00> : vector<96x96xf32>
    %208 = tpu.matmul %206, %207, %cst_94 {dimension_numbers = #tpu.dot_dimension_numbers<[1], [1], [0], [0], [0, 0, 1, 0], [], []>} : vector<96x8xbf16>, vector<96x8xbf16>, vector<96x96xf32> -> vector<96x96xf32>
    %209 = arith.addf %208, %6 : vector<96x96xf32>
    %cst_95 = arith.constant dense<0xFF800000> : vector<96xf32>
    %210 = vector.multi_reduction <maximumf>, %209, %cst_95 [1] : vector<96x96xf32> to vector<96xf32>
    %211 = vector.shape_cast %210 : vector<96xf32> to vector<96x1xf32>
    %212 = vector.broadcast %211 : vector<96x1xf32> to vector<96x96xf32>
    %213 = arith.subf %209, %212 : vector<96x96xf32>
    %214 = math.exp %213 : vector<96x96xf32>
    %cst_96 = arith.constant dense<0.000000e+00> : vector<96xf32>
    %215 = vector.multi_reduction <add>, %214, %cst_96 [1] : vector<96x96xf32> to vector<96xf32>
    %216 = vector.shape_cast %215 : vector<96xf32> to vector<96x1xf32>
    %217 = tpu.reciprocal %216 {approx = true} : vector<96x1xf32> -> vector<96x1xf32>
    %218 = arith.truncf %214 : vector<96x96xf32> to vector<96x96xbf16>
    %219 = vector.extract_strided_slice %205 {offsets = [0, 64], sizes = [96, 8], strides = [1, 1]} : vector<96x96xbf16> to vector<96x8xbf16>
    %cst_97 = arith.constant dense<0.000000e+00> : vector<96x8xf32>
    %220 = tpu.matmul %218, %219, %cst_97 {dimension_numbers = #tpu.dot_dimension_numbers<[1], [0], [0], [1], [0, 0, 1, 1], [], []>} : vector<96x96xbf16>, vector<96x8xbf16>, vector<96x8xf32> -> vector<96x8xf32>
    %221 = vector.broadcast %217 : vector<96x1xf32> to vector<96x8xf32>
    %222 = arith.mulf %220, %221 : vector<96x8xf32>
    %223 = vector.extract_strided_slice %205 {offsets = [0, 8], sizes = [96, 8], strides = [1, 1]} : vector<96x96xbf16> to vector<96x8xbf16>
    %224 = vector.extract_strided_slice %205 {offsets = [0, 40], sizes = [96, 8], strides = [1, 1]} : vector<96x96xbf16> to vector<96x8xbf16>
    %cst_98 = arith.constant dense<0.000000e+00> : vector<96x96xf32>
    %225 = tpu.matmul %223, %224, %cst_98 {dimension_numbers = #tpu.dot_dimension_numbers<[1], [1], [0], [0], [0, 0, 1, 0], [], []>} : vector<96x8xbf16>, vector<96x8xbf16>, vector<96x96xf32> -> vector<96x96xf32>
    %226 = arith.addf %225, %6 : vector<96x96xf32>
    %cst_99 = arith.constant dense<0xFF800000> : vector<96xf32>
    %227 = vector.multi_reduction <maximumf>, %226, %cst_99 [1] : vector<96x96xf32> to vector<96xf32>
    %228 = vector.shape_cast %227 : vector<96xf32> to vector<96x1xf32>
    %229 = vector.broadcast %228 : vector<96x1xf32> to vector<96x96xf32>
    %230 = arith.subf %226, %229 : vector<96x96xf32>
    %231 = math.exp %230 : vector<96x96xf32>
    %cst_100 = arith.constant dense<0.000000e+00> : vector<96xf32>
    %232 = vector.multi_reduction <add>, %231, %cst_100 [1] : vector<96x96xf32> to vector<96xf32>
    %233 = vector.shape_cast %232 : vector<96xf32> to vector<96x1xf32>
    %234 = tpu.reciprocal %233 {approx = true} : vector<96x1xf32> -> vector<96x1xf32>
    %235 = arith.truncf %231 : vector<96x96xf32> to vector<96x96xbf16>
    %236 = vector.extract_strided_slice %205 {offsets = [0, 72], sizes = [96, 8], strides = [1, 1]} : vector<96x96xbf16> to vector<96x8xbf16>
    %cst_101 = arith.constant dense<0.000000e+00> : vector<96x8xf32>
    %237 = tpu.matmul %235, %236, %cst_101 {dimension_numbers = #tpu.dot_dimension_numbers<[1], [0], [0], [1], [0, 0, 1, 1], [], []>} : vector<96x96xbf16>, vector<96x8xbf16>, vector<96x8xf32> -> vector<96x8xf32>
    %238 = vector.broadcast %234 : vector<96x1xf32> to vector<96x8xf32>
    %239 = arith.mulf %237, %238 : vector<96x8xf32>
    %240 = vector.extract_strided_slice %205 {offsets = [0, 16], sizes = [96, 8], strides = [1, 1]} : vector<96x96xbf16> to vector<96x8xbf16>
    %241 = vector.extract_strided_slice %205 {offsets = [0, 48], sizes = [96, 8], strides = [1, 1]} : vector<96x96xbf16> to vector<96x8xbf16>
    %cst_102 = arith.constant dense<0.000000e+00> : vector<96x96xf32>
    %242 = tpu.matmul %240, %241, %cst_102 {dimension_numbers = #tpu.dot_dimension_numbers<[1], [1], [0], [0], [0, 0, 1, 0], [], []>} : vector<96x8xbf16>, vector<96x8xbf16>, vector<96x96xf32> -> vector<96x96xf32>
    %243 = arith.addf %242, %6 : vector<96x96xf32>
    %cst_103 = arith.constant dense<0xFF800000> : vector<96xf32>
    %244 = vector.multi_reduction <maximumf>, %243, %cst_103 [1] : vector<96x96xf32> to vector<96xf32>
    %245 = vector.shape_cast %244 : vector<96xf32> to vector<96x1xf32>
    %246 = vector.broadcast %245 : vector<96x1xf32> to vector<96x96xf32>
    %247 = arith.subf %243, %246 : vector<96x96xf32>
    %248 = math.exp %247 : vector<96x96xf32>
    %cst_104 = arith.constant dense<0.000000e+00> : vector<96xf32>
    %249 = vector.multi_reduction <add>, %248, %cst_104 [1] : vector<96x96xf32> to vector<96xf32>
    %250 = vector.shape_cast %249 : vector<96xf32> to vector<96x1xf32>
    %251 = tpu.reciprocal %250 {approx = true} : vector<96x1xf32> -> vector<96x1xf32>
    %252 = arith.truncf %248 : vector<96x96xf32> to vector<96x96xbf16>
    %253 = vector.extract_strided_slice %205 {offsets = [0, 80], sizes = [96, 8], strides = [1, 1]} : vector<96x96xbf16> to vector<96x8xbf16>
    %cst_105 = arith.constant dense<0.000000e+00> : vector<96x8xf32>
    %254 = tpu.matmul %252, %253, %cst_105 {dimension_numbers = #tpu.dot_dimension_numbers<[1], [0], [0], [1], [0, 0, 1, 1], [], []>} : vector<96x96xbf16>, vector<96x8xbf16>, vector<96x8xf32> -> vector<96x8xf32>
    %255 = vector.broadcast %251 : vector<96x1xf32> to vector<96x8xf32>
    %256 = arith.mulf %254, %255 : vector<96x8xf32>
    %257 = vector.extract_strided_slice %205 {offsets = [0, 24], sizes = [96, 8], strides = [1, 1]} : vector<96x96xbf16> to vector<96x8xbf16>
    %258 = vector.extract_strided_slice %205 {offsets = [0, 56], sizes = [96, 8], strides = [1, 1]} : vector<96x96xbf16> to vector<96x8xbf16>
    %cst_106 = arith.constant dense<0.000000e+00> : vector<96x96xf32>
    %259 = tpu.matmul %257, %258, %cst_106 {dimension_numbers = #tpu.dot_dimension_numbers<[1], [1], [0], [0], [0, 0, 1, 0], [], []>} : vector<96x8xbf16>, vector<96x8xbf16>, vector<96x96xf32> -> vector<96x96xf32>
    %260 = arith.addf %259, %6 : vector<96x96xf32>
    %cst_107 = arith.constant dense<0xFF800000> : vector<96xf32>
    %261 = vector.multi_reduction <maximumf>, %260, %cst_107 [1] : vector<96x96xf32> to vector<96xf32>
    %262 = vector.shape_cast %261 : vector<96xf32> to vector<96x1xf32>
    %263 = vector.broadcast %262 : vector<96x1xf32> to vector<96x96xf32>
    %264 = arith.subf %260, %263 : vector<96x96xf32>
    %265 = math.exp %264 : vector<96x96xf32>
    %cst_108 = arith.constant dense<0.000000e+00> : vector<96xf32>
    %266 = vector.multi_reduction <add>, %265, %cst_108 [1] : vector<96x96xf32> to vector<96xf32>
    %267 = vector.shape_cast %266 : vector<96xf32> to vector<96x1xf32>
    %268 = tpu.reciprocal %267 {approx = true} : vector<96x1xf32> -> vector<96x1xf32>
    %269 = arith.truncf %265 : vector<96x96xf32> to vector<96x96xbf16>
    %270 = vector.extract_strided_slice %205 {offsets = [0, 88], sizes = [96, 8], strides = [1, 1]} : vector<96x96xbf16> to vector<96x8xbf16>
    %cst_109 = arith.constant dense<0.000000e+00> : vector<96x8xf32>
    %271 = tpu.matmul %269, %270, %cst_109 {dimension_numbers = #tpu.dot_dimension_numbers<[1], [0], [0], [1], [0, 0, 1, 1], [], []>} : vector<96x96xbf16>, vector<96x8xbf16>, vector<96x8xf32> -> vector<96x8xf32>
    %272 = vector.broadcast %268 : vector<96x1xf32> to vector<96x8xf32>
    %273 = arith.mulf %271, %272 : vector<96x8xf32>
    %274 = tpu.concatenate %222, %239, %256, %273 in 1 : vector<96x8xf32>, vector<96x8xf32>, vector<96x8xf32>, vector<96x8xf32> -> vector<96x32xf32>
    %275 = arith.truncf %274 : vector<96x32xf32> to vector<96x32xbf16>
    %c1_110 = arith.constant 1 : index
    %c0_111 = arith.constant 0 : index
    %c0_112 = arith.constant 0 : index
    %276 = vector.load %arg10[%c1_110, %c0_111, %c0_112] : memref<2x1x32xf32, #tpu.memory_space<vmem>>, vector<1x1x32xf32>
    %277 = vector.shape_cast %276 : vector<1x1x32xf32> to vector<1x32xf32>
    %278 = vector.broadcast %277 : vector<1x32xf32> to vector<96x32xf32>
    %279 = arith.addf %170, %278 : vector<96x32xf32>
    %c1_113 = arith.constant 1 : index
    %c0_114 = arith.constant 0 : index
    %c0_115 = arith.constant 0 : index
    %280 = vector.load %arg9[%c1_113, %c0_114, %c0_115] : memref<2x32x32xbf16, #tpu.memory_space<vmem>>, vector<1x32x32xbf16>
    %281 = vector.shape_cast %280 : vector<1x32x32xbf16> to vector<32x32xbf16>
    %cst_116 = arith.constant dense<0.000000e+00> : vector<96x32xf32>
    %282 = tpu.matmul %275, %281, %cst_116 {dimension_numbers = #tpu.dot_dimension_numbers<[1], [0], [0], [1], [0, 0, 1, 1], [], []>} : vector<96x32xbf16>, vector<32x32xbf16>, vector<96x32xf32> -> vector<96x32xf32>
    %283 = arith.addf %279, %282 : vector<96x32xf32>
    %c1_117 = arith.constant 1 : index
    %c0_118 = arith.constant 0 : index
    %c0_119 = arith.constant 0 : index
    %284 = vector.load %arg11[%c1_117, %c0_118, %c0_119] : memref<2x1x32xf32, #tpu.memory_space<vmem>>, vector<1x1x32xf32>
    %285 = vector.shape_cast %284 : vector<1x1x32xf32> to vector<1x32xf32>
    %c1_120 = arith.constant 1 : index
    %c0_121 = arith.constant 0 : index
    %c0_122 = arith.constant 0 : index
    %286 = vector.load %arg12[%c1_120, %c0_121, %c0_122] : memref<2x1x32xf32, #tpu.memory_space<vmem>>, vector<1x1x32xf32>
    %287 = vector.shape_cast %286 : vector<1x1x32xf32> to vector<1x32xf32>
    %cst_123 = arith.constant dense<0.000000e+00> : vector<96xf32>
    %288 = vector.multi_reduction <add>, %283, %cst_123 [1] : vector<96x32xf32> to vector<96xf32>
    %289 = vector.shape_cast %288 : vector<96xf32> to vector<96x1xf32>
    %cst_124 = arith.constant 3.200000e+01 : f32
    %290 = vector.broadcast %cst_124 : f32 to vector<96x1xf32>
    %291 = arith.divf %289, %290 : vector<96x1xf32>
    %292 = arith.mulf %283, %283 : vector<96x32xf32>
    %cst_125 = arith.constant dense<0.000000e+00> : vector<96xf32>
    %293 = vector.multi_reduction <add>, %292, %cst_125 [1] : vector<96x32xf32> to vector<96xf32>
    %294 = vector.shape_cast %293 : vector<96xf32> to vector<96x1xf32>
    %cst_126 = arith.constant 3.200000e+01 : f32
    %295 = vector.broadcast %cst_126 : f32 to vector<96x1xf32>
    %296 = arith.divf %294, %295 : vector<96x1xf32>
    %297 = vector.broadcast %291 : vector<96x1xf32> to vector<96x32xf32>
    %298 = arith.subf %283, %297 : vector<96x32xf32>
    %299 = arith.mulf %291, %291 : vector<96x1xf32>
    %300 = arith.subf %296, %299 : vector<96x1xf32>
    %cst_127 = arith.constant 9.99999974E-6 : f32
    %301 = vector.broadcast %cst_127 : f32 to vector<96x1xf32>
    %302 = arith.addf %300, %301 : vector<96x1xf32>
    %303 = math.rsqrt %302 : vector<96x1xf32>
    %304 = vector.broadcast %303 : vector<96x1xf32> to vector<96x32xf32>
    %305 = arith.mulf %298, %304 : vector<96x32xf32>
    %306 = vector.broadcast %285 : vector<1x32xf32> to vector<96x32xf32>
    %307 = arith.mulf %305, %306 : vector<96x32xf32>
    %308 = vector.broadcast %287 : vector<1x32xf32> to vector<96x32xf32>
    %309 = arith.addf %307, %308 : vector<96x32xf32>
    %310 = arith.truncf %309 : vector<96x32xf32> to vector<96x32xbf16>
    %c1_128 = arith.constant 1 : index
    %c0_129 = arith.constant 0 : index
    %c0_130 = arith.constant 0 : index
    %311 = vector.load %arg13[%c1_128, %c0_129, %c0_130] : memref<2x32x64xbf16, #tpu.memory_space<vmem>>, vector<1x32x64xbf16>
    %312 = vector.shape_cast %311 : vector<1x32x64xbf16> to vector<32x64xbf16>
    %cst_131 = arith.constant dense<0.000000e+00> : vector<96x64xf32>
    %313 = tpu.matmul %310, %312, %cst_131 {dimension_numbers = #tpu.dot_dimension_numbers<[1], [0], [0], [1], [0, 0, 1, 1], [], []>} : vector<96x32xbf16>, vector<32x64xbf16>, vector<96x64xf32> -> vector<96x64xf32>
    %c1_132 = arith.constant 1 : index
    %c0_133 = arith.constant 0 : index
    %c0_134 = arith.constant 0 : index
    %314 = vector.load %arg14[%c1_132, %c0_133, %c0_134] : memref<2x1x64xf32, #tpu.memory_space<vmem>>, vector<1x1x64xf32>
    %315 = vector.shape_cast %314 : vector<1x1x64xf32> to vector<1x64xf32>
    %316 = vector.broadcast %315 : vector<1x64xf32> to vector<96x64xf32>
    %317 = arith.addf %313, %316 : vector<96x64xf32>
    %cst_135 = arith.constant 5.000000e-01 : f32
    %318 = vector.broadcast %cst_135 : f32 to vector<96x64xf32>
    %319 = arith.mulf %318, %317 : vector<96x64xf32>
    %cst_136 = arith.constant 0.707106769 : f32
    %320 = vector.broadcast %cst_136 : f32 to vector<96x64xf32>
    %321 = arith.mulf %317, %320 : vector<96x64xf32>
    %322 = math.erf %321 : vector<96x64xf32>
    %cst_137 = arith.constant 1.000000e+00 : f32
    %323 = vector.broadcast %cst_137 : f32 to vector<96x64xf32>
    %324 = arith.addf %323, %322 : vector<96x64xf32>
    %325 = arith.mulf %319, %324 : vector<96x64xf32>
    %c1_138 = arith.constant 1 : index
    %c0_139 = arith.constant 0 : index
    %c0_140 = arith.constant 0 : index
    %326 = vector.load %arg16[%c1_138, %c0_139, %c0_140] : memref<2x1x32xf32, #tpu.memory_space<vmem>>, vector<1x1x32xf32>
    %327 = vector.shape_cast %326 : vector<1x1x32xf32> to vector<1x32xf32>
    %328 = vector.broadcast %327 : vector<1x32xf32> to vector<96x32xf32>
    %329 = arith.addf %283, %328 : vector<96x32xf32>
    %330 = arith.truncf %325 : vector<96x64xf32> to vector<96x64xbf16>
    %c1_141 = arith.constant 1 : index
    %c0_142 = arith.constant 0 : index
    %c0_143 = arith.constant 0 : index
    %331 = vector.load %arg15[%c1_141, %c0_142, %c0_143] : memref<2x64x32xbf16, #tpu.memory_space<vmem>>, vector<1x64x32xbf16>
    %332 = vector.shape_cast %331 : vector<1x64x32xbf16> to vector<64x32xbf16>
    %cst_144 = arith.constant dense<0.000000e+00> : vector<96x32xf32>
    %333 = tpu.matmul %330, %332, %cst_144 {dimension_numbers = #tpu.dot_dimension_numbers<[1], [0], [0], [1], [0, 0, 1, 1], [], []>} : vector<96x64xbf16>, vector<64x32xbf16>, vector<96x32xf32> -> vector<96x32xf32>
    %334 = arith.addf %329, %333 : vector<96x32xf32>
    %335 = vector.extract_strided_slice %334 {offsets = [0, 0], sizes = [1, 32], strides = [1, 1]} : vector<96x32xf32> to vector<1x32xf32>
    %336 = vector.extract_strided_slice %334 {offsets = [24, 0], sizes = [1, 32], strides = [1, 1]} : vector<96x32xf32> to vector<1x32xf32>
    %337 = vector.extract_strided_slice %334 {offsets = [48, 0], sizes = [1, 32], strides = [1, 1]} : vector<96x32xf32> to vector<1x32xf32>
    %338 = vector.extract_strided_slice %334 {offsets = [72, 0], sizes = [1, 32], strides = [1, 1]} : vector<96x32xf32> to vector<1x32xf32>
    %339 = tpu.concatenate %335, %336, %337, %338 in 0 : vector<1x32xf32>, vector<1x32xf32>, vector<1x32xf32>, vector<1x32xf32> -> vector<4x32xf32>
    %c0_145 = arith.constant 0 : index
    %c0_146 = arith.constant 0 : index
    %340 = vector.load %arg17[%c0_145, %c0_146] : memref<1x32xf32, #tpu.memory_space<vmem>>, vector<1x32xf32>
    %c0_147 = arith.constant 0 : index
    %c0_148 = arith.constant 0 : index
    %341 = vector.load %arg18[%c0_147, %c0_148] : memref<1x32xf32, #tpu.memory_space<vmem>>, vector<1x32xf32>
    %cst_149 = arith.constant dense<0.000000e+00> : vector<4xf32>
    %342 = vector.multi_reduction <add>, %339, %cst_149 [1] : vector<4x32xf32> to vector<4xf32>
    %343 = vector.shape_cast %342 : vector<4xf32> to vector<4x1xf32>
    %cst_150 = arith.constant 3.200000e+01 : f32
    %344 = vector.broadcast %cst_150 : f32 to vector<4x1xf32>
    %345 = arith.divf %343, %344 : vector<4x1xf32>
    %346 = arith.mulf %339, %339 : vector<4x32xf32>
    %cst_151 = arith.constant dense<0.000000e+00> : vector<4xf32>
    %347 = vector.multi_reduction <add>, %346, %cst_151 [1] : vector<4x32xf32> to vector<4xf32>
    %348 = vector.shape_cast %347 : vector<4xf32> to vector<4x1xf32>
    %cst_152 = arith.constant 3.200000e+01 : f32
    %349 = vector.broadcast %cst_152 : f32 to vector<4x1xf32>
    %350 = arith.divf %348, %349 : vector<4x1xf32>
    %351 = vector.broadcast %345 : vector<4x1xf32> to vector<4x32xf32>
    %352 = arith.subf %339, %351 : vector<4x32xf32>
    %353 = arith.mulf %345, %345 : vector<4x1xf32>
    %354 = arith.subf %350, %353 : vector<4x1xf32>
    %cst_153 = arith.constant 9.99999974E-6 : f32
    %355 = vector.broadcast %cst_153 : f32 to vector<4x1xf32>
    %356 = arith.addf %354, %355 : vector<4x1xf32>
    %357 = math.rsqrt %356 : vector<4x1xf32>
    %358 = vector.broadcast %357 : vector<4x1xf32> to vector<4x32xf32>
    %359 = arith.mulf %352, %358 : vector<4x32xf32>
    %360 = vector.broadcast %340 : vector<1x32xf32> to vector<4x32xf32>
    %361 = arith.mulf %359, %360 : vector<4x32xf32>
    %362 = vector.broadcast %341 : vector<1x32xf32> to vector<4x32xf32>
    %363 = arith.addf %361, %362 : vector<4x32xf32>
    %364 = arith.truncf %363 : vector<4x32xf32> to vector<4x32xbf16>
    %c0_154 = arith.constant 0 : index
    %c0_155 = arith.constant 0 : index
    %365 = vector.load %arg19[%c0_154, %c0_155] : memref<32x128xbf16, #tpu.memory_space<vmem>>, vector<32x128xbf16>
    %cst_156 = arith.constant dense<0.000000e+00> : vector<4x128xf32>
    %366 = tpu.matmul %364, %365, %cst_156 {dimension_numbers = #tpu.dot_dimension_numbers<[1], [0], [0], [1], [0, 0, 1, 1], [], []>} : vector<4x32xbf16>, vector<32x128xbf16>, vector<4x128xf32> -> vector<4x128xf32>
    %c0_157 = arith.constant 0 : index
    %c0_158 = arith.constant 0 : index
    %367 = vector.load %arg20[%c0_157, %c0_158] : memref<1x128xf32, #tpu.memory_space<vmem>>, vector<1x128xf32>
    %368 = vector.broadcast %367 : vector<1x128xf32> to vector<4x128xf32>
    %369 = arith.addf %366, %368 : vector<4x128xf32>
    %c0_159 = arith.constant 0 : index
    %c0_160 = arith.constant 0 : index
    %c0_161 = arith.constant 0 : index
    %370 = vector.load %arg21[%c0_159, %c0_160, %c0_161] : memref<1x4x128xf32, #tpu.memory_space<vmem>>, vector<1x4x128xf32>
    %371 = vector.shape_cast %370 : vector<1x4x128xf32> to vector<4x128xf32>
    %372 = vector.shape_cast %369 : vector<4x128xf32> to vector<1x4x128xf32>
    tpu.vector_store %arg21[%c0_159, %c0_160, %c0_161], %372 {strides = array<i32>} : memref<1x4x128xf32, #tpu.memory_space<vmem>>, vector<1x4x128xf32>,
    return
  }
  func.func @transform_0(%arg0: i32) -> (i32, i32, i32) {
    %c0_i32 = arith.constant 0 : i32
    %c0_i32_0 = arith.constant 0 : i32
    %c0_i32_1 = arith.constant 0 : i32
    return %arg0, %c0_i32, %c0_i32_0 : i32, i32, i32
  }
  func.func @transform_1(%arg0: i32) -> (i32, i32) {
    %c0_i32 = arith.constant 0 : i32
    %c0_i32_0 = arith.constant 0 : i32
    %c0_i32_1 = arith.constant 0 : i32
    return %c0_i32, %c0_i32_0 : i32, i32
  }
  func.func @transform_2(%arg0: i32) -> (i32, i32) {
    %c0_i32 = arith.constant 0 : i32
    %c0_i32_0 = arith.constant 0 : i32
    %c0_i32_1 = arith.constant 0 : i32
    return %c0_i32, %c0_i32_0 : i32, i32
  }
  func.func @transform_3(%arg0: i32) -> (i32, i32) {
    %c0_i32 = arith.constant 0 : i32
    %c0_i32_0 = arith.constant 0 : i32
    %c0_i32_1 = arith.constant 0 : i32
    return %c0_i32, %c0_i32_0 : i32, i32
  }
  func.func @transform_4(%arg0: i32) -> (i32, i32, i32) {
    %c0_i32 = arith.constant 0 : i32
    %c0_i32_0 = arith.constant 0 : i32
    %c0_i32_1 = arith.constant 0 : i32
    %c0_i32_2 = arith.constant 0 : i32
    return %c0_i32, %c0_i32_0, %c0_i32_1 : i32, i32, i32
  }
  func.func @transform_5(%arg0: i32) -> (i32, i32, i32) {
    %c0_i32 = arith.constant 0 : i32
    %c0_i32_0 = arith.constant 0 : i32
    %c0_i32_1 = arith.constant 0 : i32
    %c0_i32_2 = arith.constant 0 : i32
    return %c0_i32, %c0_i32_0, %c0_i32_1 : i32, i32, i32
  }
  func.func @transform_6(%arg0: i32) -> (i32, i32, i32) {
    %c0_i32 = arith.constant 0 : i32
    %c0_i32_0 = arith.constant 0 : i32
    %c0_i32_1 = arith.constant 0 : i32
    %c0_i32_2 = arith.constant 0 : i32
    return %c0_i32, %c0_i32_0, %c0_i32_1 : i32, i32, i32
  }
  func.func @transform_7(%arg0: i32) -> (i32, i32, i32) {
    %c0_i32 = arith.constant 0 : i32
    %c0_i32_0 = arith.constant 0 : i32
    %c0_i32_1 = arith.constant 0 : i32
    %c0_i32_2 = arith.constant 0 : i32
    return %c0_i32, %c0_i32_0, %c0_i32_1 : i32, i32, i32
  }
  func.func @transform_8(%arg0: i32) -> (i32, i32, i32) {
    %c0_i32 = arith.constant 0 : i32
    %c0_i32_0 = arith.constant 0 : i32
    %c0_i32_1 = arith.constant 0 : i32
    %c0_i32_2 = arith.constant 0 : i32
    return %c0_i32, %c0_i32_0, %c0_i32_1 : i32, i32, i32
  }
  func.func @transform_9(%arg0: i32) -> (i32, i32, i32) {
    %c0_i32 = arith.constant 0 : i32
    %c0_i32_0 = arith.constant 0 : i32
    %c0_i32_1 = arith.constant 0 : i32
    %c0_i32_2 = arith.constant 0 : i32
    return %c0_i32, %c0_i32_0, %c0_i32_1 : i32, i32, i32
  }
  func.func @transform_10(%arg0: i32) -> (i32, i32, i32) {
    %c0_i32 = arith.constant 0 : i32
    %c0_i32_0 = arith.constant 0 : i32
    %c0_i32_1 = arith.constant 0 : i32
    %c0_i32_2 = arith.constant 0 : i32
    return %c0_i32, %c0_i32_0, %c0_i32_1 : i32, i32, i32
  }
  func.func @transform_11(%arg0: i32) -> (i32, i32, i32) {
    %c0_i32 = arith.constant 0 : i32
    %c0_i32_0 = arith.constant 0 : i32
    %c0_i32_1 = arith.constant 0 : i32
    %c0_i32_2 = arith.constant 0 : i32
    return %c0_i32, %c0_i32_0, %c0_i32_1 : i32, i32, i32
  }
  func.func @transform_12(%arg0: i32) -> (i32, i32, i32) {
    %c0_i32 = arith.constant 0 : i32
    %c0_i32_0 = arith.constant 0 : i32
    %c0_i32_1 = arith.constant 0 : i32
    %c0_i32_2 = arith.constant 0 : i32
    return %c0_i32, %c0_i32_0, %c0_i32_1 : i32, i32, i32
  }
  func.func @transform_13(%arg0: i32) -> (i32, i32, i32) {
    %c0_i32 = arith.constant 0 : i32
    %c0_i32_0 = arith.constant 0 : i32
    %c0_i32_1 = arith.constant 0 : i32
    %c0_i32_2 = arith.constant 0 : i32
    return %c0_i32, %c0_i32_0, %c0_i32_1 : i32, i32, i32
  }
  func.func @transform_14(%arg0: i32) -> (i32, i32, i32) {
    %c0_i32 = arith.constant 0 : i32
    %c0_i32_0 = arith.constant 0 : i32
    %c0_i32_1 = arith.constant 0 : i32
    %c0_i32_2 = arith.constant 0 : i32
    return %c0_i32, %c0_i32_0, %c0_i32_1 : i32, i32, i32
  }
  func.func @transform_15(%arg0: i32) -> (i32, i32, i32) {
    %c0_i32 = arith.constant 0 : i32
    %c0_i32_0 = arith.constant 0 : i32
    %c0_i32_1 = arith.constant 0 : i32
    %c0_i32_2 = arith.constant 0 : i32
    return %c0_i32, %c0_i32_0, %c0_i32_1 : i32, i32, i32
  }
  func.func @transform_16(%arg0: i32) -> (i32, i32) {
    %c0_i32 = arith.constant 0 : i32
    %c0_i32_0 = arith.constant 0 : i32
    %c0_i32_1 = arith.constant 0 : i32
    return %c0_i32, %c0_i32_0 : i32, i32
  }
  func.func @transform_17(%arg0: i32) -> (i32, i32) {
    %c0_i32 = arith.constant 0 : i32
    %c0_i32_0 = arith.constant 0 : i32
    %c0_i32_1 = arith.constant 0 : i32
    return %c0_i32, %c0_i32_0 : i32, i32
  }
  func.func @transform_18(%arg0: i32) -> (i32, i32) {
    %c0_i32 = arith.constant 0 : i32
    %c0_i32_0 = arith.constant 0 : i32
    %c0_i32_1 = arith.constant 0 : i32
    return %c0_i32, %c0_i32_0 : i32, i32
  }
  func.func @transform_19(%arg0: i32) -> (i32, i32) {
    %c0_i32 = arith.constant 0 : i32
    %c0_i32_0 = arith.constant 0 : i32
    %c0_i32_1 = arith.constant 0 : i32
    return %c0_i32, %c0_i32_0 : i32, i32
  }
  func.func @transform_20(%arg0: i32) -> (i32, i32, i32) {
    %c0_i32 = arith.constant 0 : i32
    %c0_i32_0 = arith.constant 0 : i32
    %c0_i32_1 = arith.constant 0 : i32
    return %arg0, %c0_i32, %c0_i32_0 : i32, i32, i32
  }
}

</mosaic_0001>

<llo_original>
// kernel: vit_forward.1
$region0: #{vit_forward.1}
  #allocation0 [shape = 'u32[]', space=smem, size = 0x4, offset = 0x4, fixed_abs, tag = 'smem constant byte address 0x4 - core index']
  #allocation1 [shape = 'u32[72,128]{1,0:T(1,128)}', space=vmem, size = 0x9000, scoped, tag = 'internal scratch']
  %s0 = inlined_call_operand.vmem [shape: bf16[2,96,64], index: 0, kind: input, shape index: {}]
  %s1 = inlined_call_operand.vmem [shape: f32[96,32], index: 1, kind: input, shape index: {}]
  %s2 = inlined_call_operand.vmem [shape: f32[96,96], index: 2, kind: input, shape index: {}]
  %s3 = inlined_call_operand.vmem [shape: bf16[64,32], index: 3, kind: input, shape index: {}]
  %s4 = inlined_call_operand.vmem [shape: f32[2,1,32], index: 4, kind: input, shape index: {}]
  %s5 = inlined_call_operand.vmem [shape: f32[2,1,32], index: 5, kind: input, shape index: {}]
  %s6 = inlined_call_operand.vmem [shape: bf16[2,32,96], index: 6, kind: input, shape index: {}]
  %s7 = inlined_call_operand.vmem [shape: f32[2,1,96], index: 7, kind: input, shape index: {}]
  %s8 = inlined_call_operand.vmem [shape: bf16[2,32,32], index: 8, kind: input, shape index: {}]
  %s9 = inlined_call_operand.vmem [shape: f32[2,1,32], index: 9, kind: input, shape index: {}]
  %s10 = inlined_call_operand.vmem [shape: f32[2,1,32], index: 10, kind: input, shape index: {}]
  %s11 = inlined_call_operand.vmem [shape: f32[2,1,32], index: 11, kind: input, shape index: {}]
  %s12 = inlined_call_operand.vmem [shape: bf16[2,32,64], index: 12, kind: input, shape index: {}]
  %s13 = inlined_call_operand.vmem [shape: f32[2,1,64], index: 13, kind: input, shape index: {}]
  %s14 = inlined_call_operand.vmem [shape: bf16[2,64,32], index: 14, kind: input, shape index: {}]
  %s15 = inlined_call_operand.vmem [shape: f32[2,1,32], index: 15, kind: input, shape index: {}]
  %s16 = inlined_call_operand.vmem [shape: f32[1,32], index: 16, kind: input, shape index: {}]
  %s17 = inlined_call_operand.vmem [shape: f32[1,32], index: 17, kind: input, shape index: {}]
  %s18 = inlined_call_operand.vmem [shape: bf16[32,128], index: 18, kind: input, shape index: {}]
  %s19 = inlined_call_operand.vmem [shape: f32[1,128], index: 19, kind: input, shape index: {}]
  %s20 = inlined_call_operand.hbm [shape: f32[2,4,128], index: 20, kind: output, shape index: {}]
  %s21 = sld [smem:[#allocation0]]
  $region113: #{vit_forward.1} parent=0
    _
  %s23 = ssub.s32 1, %s21
  %s24 = scalar_select 0, %s23, %s21
  $region1: #{vit_forward.1} parent=0
    #allocation2 [shape = 'u8[4096]{0}', space=vmem, size = 0x1000, scoped, tag = 'output window, operand 0']
    #allocation3 [shape = 's32[2]{0}', space=sflag, size = 0x8, scoped, tag = 'scoped memory for vit_forward.1']
    %25 = vsyncpa [#allocation3], 0
    %s26 = scalar_lea.sflag [#allocation3], 1
    %27 = vsyncpa %s26, 0
    loop: start=0, step=1, limit=4
    $region2: #{vit_forward.1} parent=1 // loop_pre_header
      _
    $region3: #{vit_forward.1} parent=1 // loop_header
      %s29 = sphi 0, %s33
      %p30 = scmp.ge.s32.totalorder %s29, 4
      %s39 = sphi 0, %s41
      %s42 = sphi 0, %s39
      %s43 = sphi 0, %s42
      %s59 = sphi 0, %s43
      %s63 = sphi 0, %s63
      %s65 = sphi 0, %s63
      %s66 = sphi 0, %s65
      %s80 = sphi 0, %s66
      %s84 = sphi 0, %s84
      %s86 = sphi 0, %s84
      %s87 = sphi 0, %s86
      %s101 = sphi 0, %s87
      %s105 = sphi 0, %s105
      %s107 = sphi 0, %s105
      %s108 = sphi 0, %s107
      %s122 = sphi 0, %s108
      %s126 = sphi 0, %s126
      %s128 = sphi 0, %s126
      %s129 = sphi 0, %s128
      %s143 = sphi 0, %s129
      %s147 = sphi 0, %s147
      %s149 = sphi 0, %s147
      %s150 = sphi 0, %s149
      %s164 = sphi 0, %s150
      %s168 = sphi 0, %s168
      %s170 = sphi 0, %s168
      %s171 = sphi 0, %s170
      %s185 = sphi 0, %s171
      %s189 = sphi 0, %s189
      %s191 = sphi 0, %s189
      %s192 = sphi 0, %s191
      %s206 = sphi 0, %s192
      %s210 = sphi 0, %s210
      %s212 = sphi 0, %s210
      %s213 = sphi 0, %s212
      %s227 = sphi 0, %s213
      %s231 = sphi 0, %s231
      %s233 = sphi 0, %s231
      %s234 = sphi 0, %s233
      %s248 = sphi 0, %s234
      %s252 = sphi 0, %s252
      %s254 = sphi 0, %s252
      %s255 = sphi 0, %s254
      %s269 = sphi 0, %s255
      %s273 = sphi 0, %s273
      %s275 = sphi 0, %s273
      %s276 = sphi 0, %s275
      %s290 = sphi 0, %s276
      %s294 = sphi 0, %s294
      %s296 = sphi 0, %s294
      %s297 = sphi 0, %s296
      %s311 = sphi 0, %s297
      %s315 = sphi 0, %s315
      %s317 = sphi 0, %s315
      %s318 = sphi 0, %s317
      %s332 = sphi 0, %s318
      %s336 = sphi 0, %s336
      %s338 = sphi 0, %s336
      %s339 = sphi 0, %s338
      %s353 = sphi 0, %s339
      %s357 = sphi 0, %s357
      %s359 = sphi 0, %s357
      %s360 = sphi 0, %s359
      %s374 = sphi 0, %s360
      %s378 = sphi 0, %s378
      %s380 = sphi 0, %s378
      %s381 = sphi 0, %s380
      %s395 = sphi 0, %s381
      %s399 = sphi 0, %s399
      %s401 = sphi 0, %s399
      %s402 = sphi 0, %s401
      %s416 = sphi 0, %s402
      %s420 = sphi 0, %s420
      %s422 = sphi 0, %s420
      %s423 = sphi 0, %s422
      %s437 = sphi 0, %s423
      %s441 = sphi 0, %s441
      %s443 = sphi 0, %s441
      %s444 = sphi 0, %s443
      %s458 = sphi 0, %s444
      %s464 = sphi 0, %s466
      %s467 = sphi 0, %s464
      %s468 = sphi 0, %s467
      %s484 = sphi 0, %s468
    $region4: #{vit_forward.1} parent=1 // loop_header_branch
      %32 = sbr.rel (%p30) target = $region8
    $region5: #{vit_forward.1} parent=1 // loop_body
      %s34 = ssub.s32 %s29, 1
      %s35 = ssub.s32 %s29, 2
      %s36 = sadd.s32 %s29, 1
      %s37 = ssub.s32 %s29, %s36
      %p38 = scmp.eq.s32.totalorder %s37, 0
      %s40 = sadd.s32 %s39, 1
      %s41 = scalar_select %p38, %s39, %s40
      %p44 = pneg %p38
      %p45 = scmp.eq.s32.totalorder %s29, 1
      %p46 = por %p44, %p45
      %p47 = scmp.ne.s32.totalorder %s39, %s42
      %p48 = scmp.eq.s32.totalorder %s29, 0
      %p49 = por %p47, %p48
      %p50 = scmp.ne.s32.totalorder %s39, %s42
      %p51 = scmp.eq.s32.totalorder %s34, 1
      %p52 = por %p50, %p51
      %p53 = scmp.ne.s32.totalorder %s42, %s43
      %p54 = scmp.eq.s32.totalorder %s34, 0
      %p55 = por %p53, %p54
      %p56 = scmp.ne.s32.totalorder %s42, %s43
      %p57 = scmp.eq.s32.totalorder %s35, 1
      %p58 = por %p56, %p57
      %p60 = scmp.ne.s32.totalorder %s43, %s59
      %p61 = scmp.eq.s32.totalorder %s35, 0
      %p62 = por %p60, %p61
      %s64 = sadd.s32 %s63, 1
      %p67 = scmp.eq.s32.totalorder %s29, 1
      %p68 = scmp.ne.s32.totalorder %s63, %s65
      %p69 = scmp.eq.s32.totalorder %s29, 0
      %p70 = por %p68, %p69
      %p71 = scmp.ne.s32.totalorder %s63, %s65
      %p72 = scmp.eq.s32.totalorder %s34, 1
      %p73 = por %p71, %p72
      %p74 = scmp.ne.s32.totalorder %s65, %s66
      %p75 = scmp.eq.s32.totalorder %s34, 0
      %p76 = por %p74, %p75
      %p77 = scmp.ne.s32.totalorder %s65, %s66
      %p78 = scmp.eq.s32.totalorder %s35, 1
      %p79 = por %p77, %p78
      %p81 = scmp.ne.s32.totalorder %s66, %s80
      %p82 = scmp.eq.s32.totalorder %s35, 0
      %p83 = por %p81, %p82
      %s85 = sadd.s32 %s84, 1
      %p88 = scmp.eq.s32.totalorder %s29, 1
      %p89 = scmp.ne.s32.totalorder %s84, %s86
      %p90 = scmp.eq.s32.totalorder %s29, 0
      %p91 = por %p89, %p90
      %p92 = scmp.ne.s32.totalorder %s84, %s86
      %p93 = scmp.eq.s32.totalorder %s34, 1
      %p94 = por %p92, %p93
      %p95 = scmp.ne.s32.totalorder %s86, %s87
      %p96 = scmp.eq.s32.totalorder %s34, 0
      %p97 = por %p95, %p96
      %p98 = scmp.ne.s32.totalorder %s86, %s87
      %p99 = scmp.eq.s32.totalorder %s35, 1
      %p100 = por %p98, %p99
      %p102 = scmp.ne.s32.totalorder %s87, %s101
      %p103 = scmp.eq.s32.totalorder %s35, 0
      %p104 = por %p102, %p103
      %s106 = sadd.s32 %s105, 1
      %p109 = scmp.eq.s32.totalorder %s29, 1
      %p110 = scmp.ne.s32.totalorder %s105, %s107
      %p111 = scmp.eq.s32.totalorder %s29, 0
      %p112 = por %p110, %p111
      %p113 = scmp.ne.s32.totalorder %s105, %s107
      %p114 = scmp.eq.s32.totalorder %s34, 1
      %p115 = por %p113, %p114
      %p116 = scmp.ne.s32.totalorder %s107, %s108
      %p117 = scmp.eq.s32.totalorder %s34, 0
      %p118 = por %p116, %p117
      %p119 = scmp.ne.s32.totalorder %s107, %s108
      %p120 = scmp.eq.s32.totalorder %s35, 1
      %p121 = por %p119, %p120
      %p123 = scmp.ne.s32.totalorder %s108, %s122
      %p124 = scmp.eq.s32.totalorder %s35, 0
      %p125 = por %p123, %p124
      %s127 = sadd.s32 %s126, 1
      %p130 = scmp.eq.s32.totalorder %s29, 1
      %p131 = scmp.ne.s32.totalorder %s126, %s128
      %p132 = scmp.eq.s32.totalorder %s29, 0
      %p133 = por %p131, %p132
      %p134 = scmp.ne.s32.totalorder %s126, %s128
      %p135 = scmp.eq.s32.totalorder %s34, 1
      %p136 = por %p134, %p135
      %p137 = scmp.ne.s32.totalorder %s128, %s129
      %p138 = scmp.eq.s32.totalorder %s34, 0
      %p139 = por %p137, %p138
      %p140 = scmp.ne.s32.totalorder %s128, %s129
      %p141 = scmp.eq.s32.totalorder %s35, 1
      %p142 = por %p140, %p141
      %p144 = scmp.ne.s32.totalorder %s129, %s143
      %p145 = scmp.eq.s32.totalorder %s35, 0
      %p146 = por %p144, %p145
      %s148 = sadd.s32 %s147, 1
      %p151 = scmp.eq.s32.totalorder %s29, 1
      %p152 = scmp.ne.s32.totalorder %s147, %s149
      %p153 = scmp.eq.s32.totalorder %s29, 0
      %p154 = por %p152, %p153
      %p155 = scmp.ne.s32.totalorder %s147, %s149
      %p156 = scmp.eq.s32.totalorder %s34, 1
      %p157 = por %p155, %p156
      %p158 = scmp.ne.s32.totalorder %s149, %s150
      %p159 = scmp.eq.s32.totalorder %s34, 0
      %p160 = por %p158, %p159
      %p161 = scmp.ne.s32.totalorder %s149, %s150
      %p162 = scmp.eq.s32.totalorder %s35, 1
      %p163 = por %p161, %p162
      %p165 = scmp.ne.s32.totalorder %s150, %s164
      %p166 = scmp.eq.s32.totalorder %s35, 0
      %p167 = por %p165, %p166
      %s169 = sadd.s32 %s168, 1
      %p172 = scmp.eq.s32.totalorder %s29, 1
      %p173 = scmp.ne.s32.totalorder %s168, %s170
      %p174 = scmp.eq.s32.totalorder %s29, 0
      %p175 = por %p173, %p174
      %p176 = scmp.ne.s32.totalorder %s168, %s170
      %p177 = scmp.eq.s32.totalorder %s34, 1
      %p178 = por %p176, %p177
      %p179 = scmp.ne.s32.totalorder %s170, %s171
      %p180 = scmp.eq.s32.totalorder %s34, 0
      %p181 = por %p179, %p180
      %p182 = scmp.ne.s32.totalorder %s170, %s171
      %p183 = scmp.eq.s32.totalorder %s35, 1
      %p184 = por %p182, %p183
      %p186 = scmp.ne.s32.totalorder %s171, %s185
      %p187 = scmp.eq.s32.totalorder %s35, 0
      %p188 = por %p186, %p187
      %s190 = sadd.s32 %s189, 1
      %p193 = scmp.eq.s32.totalorder %s29, 1
      %p194 = scmp.ne.s32.totalorder %s189, %s191
      %p195 = scmp.eq.s32.totalorder %s29, 0
      %p196 = por %p194, %p195
      %p197 = scmp.ne.s32.totalorder %s189, %s191
      %p198 = scmp.eq.s32.totalorder %s34, 1
      %p199 = por %p197, %p198
      %p200 = scmp.ne.s32.totalorder %s191, %s192
      %p201 = scmp.eq.s32.totalorder %s34, 0
      %p202 = por %p200, %p201
      %p203 = scmp.ne.s32.totalorder %s191, %s192
      %p204 = scmp.eq.s32.totalorder %s35, 1
      %p205 = por %p203, %p204
      %p207 = scmp.ne.s32.totalorder %s192, %s206
      %p208 = scmp.eq.s32.totalorder %s35, 0
      %p209 = por %p207, %p208
      %s211 = sadd.s32 %s210, 1
      %p214 = scmp.eq.s32.totalorder %s29, 1
      %p215 = scmp.ne.s32.totalorder %s210, %s212
      %p216 = scmp.eq.s32.totalorder %s29, 0
      %p217 = por %p215, %p216
      %p218 = scmp.ne.s32.totalorder %s210, %s212
      %p219 = scmp.eq.s32.totalorder %s34, 1
      %p220 = por %p218, %p219
      %p221 = scmp.ne.s32.totalorder %s212, %s213
      %p222 = scmp.eq.s32.totalorder %s34, 0
      %p223 = por %p221, %p222
      %p224 = scmp.ne.s32.totalorder %s212, %s213
      %p225 = scmp.eq.s32.totalorder %s35, 1
      %p226 = por %p224, %p225
      %p228 = scmp.ne.s32.totalorder %s213, %s227
      %p229 = scmp.eq.s32.totalorder %s35, 0
      %p230 = por %p228, %p229
      %s232 = sadd.s32 %s231, 1
      %p235 = scmp.eq.s32.totalorder %s29, 1
      %p236 = scmp.ne.s32.totalorder %s231, %s233
      %p237 = scmp.eq.s32.totalorder %s29, 0
      %p238 = por %p236, %p237
      %p239 = scmp.ne.s32.totalorder %s231, %s233
      %p240 = scmp.eq.s32.totalorder %s34, 1
      %p241 = por %p239, %p240
      %p242 = scmp.ne.s32.totalorder %s233, %s234
      %p243 = scmp.eq.s32.totalorder %s34, 0
      %p244 = por %p242, %p243
      %p245 = scmp.ne.s32.totalorder %s233, %s234
      %p246 = scmp.eq.s32.totalorder %s35, 1
      %p247 = por %p245, %p246
      %p249 = scmp.ne.s32.totalorder %s234, %s248
      %p250 = scmp.eq.s32.totalorder %s35, 0
      %p251 = por %p249, %p250
      %s253 = sadd.s32 %s252, 1
      %p256 = scmp.eq.s32.totalorder %s29, 1
      %p257 = scmp.ne.s32.totalorder %s252, %s254
      %p258 = scmp.eq.s32.totalorder %s29, 0
      %p259 = por %p257, %p258
      %p260 = scmp.ne.s32.totalorder %s252, %s254
      %p261 = scmp.eq.s32.totalorder %s34, 1
      %p262 = por %p260, %p261
      %p263 = scmp.ne.s32.totalorder %s254, %s255
      %p264 = scmp.eq.s32.totalorder %s34, 0
      %p265 = por %p263, %p264
      %p266 = scmp.ne.s32.totalorder %s254, %s255
      %p267 = scmp.eq.s32.totalorder %s35, 1
      %p268 = por %p266, %p267
      %p270 = scmp.ne.s32.totalorder %s255, %s269
      %p271 = scmp.eq.s32.totalorder %s35, 0
      %p272 = por %p270, %p271
      %s274 = sadd.s32 %s273, 1
      %p277 = scmp.eq.s32.totalorder %s29, 1
      %p278 = scmp.ne.s32.totalorder %s273, %s275
      %p279 = scmp.eq.s32.totalorder %s29, 0
      %p280 = por %p278, %p279
      %p281 = scmp.ne.s32.totalorder %s273, %s275
      %p282 = scmp.eq.s32.totalorder %s34, 1
      %p283 = por %p281, %p282
      %p284 = scmp.ne.s32.totalorder %s275, %s276
      %p285 = scmp.eq.s32.totalorder %s34, 0
      %p286 = por %p284, %p285
      %p287 = scmp.ne.s32.totalorder %s275, %s276
      %p288 = scmp.eq.s32.totalorder %s35, 1
      %p289 = por %p287, %p288
      %p291 = scmp.ne.s32.totalorder %s276, %s290
      %p292 = scmp.eq.s32.totalorder %s35, 0
      %p293 = por %p291, %p292
      %s295 = sadd.s32 %s294, 1
      %p298 = scmp.eq.s32.totalorder %s29, 1
      %p299 = scmp.ne.s32.totalorder %s294, %s296
      %p300 = scmp.eq.s32.totalorder %s29, 0
      %p301 = por %p299, %p300
      %p302 = scmp.ne.s32.totalorder %s294, %s296
      %p303 = scmp.eq.s32.totalorder %s34, 1
      %p304 = por %p302, %p303
      %p305 = scmp.ne.s32.totalorder %s296, %s297
      %p306 = scmp.eq.s32.totalorder %s34, 0
      %p307 = por %p305, %p306
      %p308 = scmp.ne.s32.totalorder %s296, %s297
      %p309 = scmp.eq.s32.totalorder %s35, 1
      %p310 = por %p308, %p309
      %p312 = scmp.ne.s32.totalorder %s297, %s311
      %p313 = scmp.eq.s32.totalorder %s35, 0
      %p314 = por %p312, %p313
      %s316 = sadd.s32 %s315, 1
      %p319 = scmp.eq.s32.totalorder %s29, 1
      %p320 = scmp.ne.s32.totalorder %s315, %s317
      %p321 = scmp.eq.s32.totalorder %s29, 0
      %p322 = por %p320, %p321
      %p323 = scmp.ne.s32.totalorder %s315, %s317
      %p324 = scmp.eq.s32.totalorder %s34, 1
      %p325 = por %p323, %p324
      %p326 = scmp.ne.s32.totalorder %s317, %s318
      %p327 = scmp.eq.s32.totalorder %s34, 0
      %p328 = por %p326, %p327
      %p329 = scmp.ne.s32.totalorder %s317, %s318
      %p330 = scmp.eq.s32.totalorder %s35, 1
      %p331 = por %p329, %p330
      %p333 = scmp.ne.s32.totalorder %s318, %s332
      %p334 = scmp.eq.s32.totalorder %s35, 0
      %p335 = por %p333, %p334
      %s337 = sadd.s32 %s336, 1
      %p340 = scmp.eq.s32.totalorder %s29, 1
      %p341 = scmp.ne.s32.totalorder %s336, %s338
      %p342 = scmp.eq.s32.totalorder %s29, 0
      %p343 = por %p341, %p342
      %p344 = scmp.ne.s32.totalorder %s336, %s338
      %p345 = scmp.eq.s32.totalorder %s34, 1
      %p346 = por %p344, %p345
      %p347 = scmp.ne.s32.totalorder %s338, %s339
      %p348 = scmp.eq.s32.totalorder %s34, 0
      %p349 = por %p347, %p348
      %p350 = scmp.ne.s32.totalorder %s338, %s339
      %p351 = scmp.eq.s32.totalorder %s35, 1
      %p352 = por %p350, %p351
      %p354 = scmp.ne.s32.totalorder %s339, %s353
      %p355 = scmp.eq.s32.totalorder %s35, 0
      %p356 = por %p354, %p355
      %s358 = sadd.s32 %s357, 1
      %p361 = scmp.eq.s32.totalorder %s29, 1
      %p362 = scmp.ne.s32.totalorder %s357, %s359
      %p363 = scmp.eq.s32.totalorder %s29, 0
      %p364 = por %p362, %p363
      %p365 = scmp.ne.s32.totalorder %s357, %s359
      %p366 = scmp.eq.s32.totalorder %s34, 1
      %p367 = por %p365, %p366
      %p368 = scmp.ne.s32.totalorder %s359, %s360
      %p369 = scmp.eq.s32.totalorder %s34, 0
      %p370 = por %p368, %p369
      %p371 = scmp.ne.s32.totalorder %s359, %s360
      %p372 = scmp.eq.s32.totalorder %s35, 1
      %p373 = por %p371, %p372
      %p375 = scmp.ne.s32.totalorder %s360, %s374
      %p376 = scmp.eq.s32.totalorder %s35, 0
      %p377 = por %p375, %p376
      %s379 = sadd.s32 %s378, 1
      %p382 = scmp.eq.s32.totalorder %s29, 1
      %p383 = scmp.ne.s32.totalorder %s378, %s380
      %p384 = scmp.eq.s32.totalorder %s29, 0
      %p385 = por %p383, %p384
      %p386 = scmp.ne.s32.totalorder %s378, %s380
      %p387 = scmp.eq.s32.totalorder %s34, 1
      %p388 = por %p386, %p387
      %p389 = scmp.ne.s32.totalorder %s380, %s381
      %p390 = scmp.eq.s32.totalorder %s34, 0
      %p391 = por %p389, %p390
      %p392 = scmp.ne.s32.totalorder %s380, %s381
      %p393 = scmp.eq.s32.totalorder %s35, 1
      %p394 = por %p392, %p393
      %p396 = scmp.ne.s32.totalorder %s381, %s395
      %p397 = scmp.eq.s32.totalorder %s35, 0
      %p398 = por %p396, %p397
      %s400 = sadd.s32 %s399, 1
      %p403 = scmp.eq.s32.totalorder %s29, 1
      %p404 = scmp.ne.s32.totalorder %s399, %s401
      %p405 = scmp.eq.s32.totalorder %s29, 0
      %p406 = por %p404, %p405
      %p407 = scmp.ne.s32.totalorder %s399, %s401
      %p408 = scmp.eq.s32.totalorder %s34, 1
      %p409 = por %p407, %p408
      %p410 = scmp.ne.s32.totalorder %s401, %s402
      %p411 = scmp.eq.s32.totalorder %s34, 0
      %p412 = por %p410, %p411
      %p413 = scmp.ne.s32.totalorder %s401, %s402
      %p414 = scmp.eq.s32.totalorder %s35, 1
      %p415 = por %p413, %p414
      %p417 = scmp.ne.s32.totalorder %s402, %s416
      %p418 = scmp.eq.s32.totalorder %s35, 0
      %p419 = por %p417, %p418
      %s421 = sadd.s32 %s420, 1
      %p424 = scmp.eq.s32.totalorder %s29, 1
      %p425 = scmp.ne.s32.totalorder %s420, %s422
      %p426 = scmp.eq.s32.totalorder %s29, 0
      %p427 = por %p425, %p426
      %p428 = scmp.ne.s32.totalorder %s420, %s422
      %p429 = scmp.eq.s32.totalorder %s34, 1
      %p430 = por %p428, %p429
      %p431 = scmp.ne.s32.totalorder %s422, %s423
      %p432 = scmp.eq.s32.totalorder %s34, 0
      %p433 = por %p431, %p432
      %p434 = scmp.ne.s32.totalorder %s422, %s423
      %p435 = scmp.eq.s32.totalorder %s35, 1
      %p436 = por %p434, %p435
      %p438 = scmp.ne.s32.totalorder %s423, %s437
      %p439 = scmp.eq.s32.totalorder %s35, 0
      %p440 = por %p438, %p439
      %s442 = sadd.s32 %s441, 1
      %p445 = scmp.eq.s32.totalorder %s29, 1
      %p446 = scmp.ne.s32.totalorder %s441, %s443
      %p447 = scmp.eq.s32.totalorder %s29, 0
      %p448 = por %p446, %p447
      %p449 = scmp.ne.s32.totalorder %s441, %s443
      %p450 = scmp.eq.s32.totalorder %s34, 1
      %p451 = por %p449, %p450
      %p452 = scmp.ne.s32.totalorder %s443, %s444
      %p453 = scmp.eq.s32.totalorder %s34, 0
      %p454 = por %p452, %p453
      %p455 = scmp.ne.s32.totalorder %s443, %s444
      %p456 = scmp.eq.s32.totalorder %s35, 1
      %p457 = por %p455, %p456
      %p459 = scmp.ne.s32.totalorder %s444, %s458
      %p460 = scmp.eq.s32.totalorder %s35, 0
      %p461 = por %p459, %p460
      %s462 = ssub.s32 %s29, %s36
      %p463 = scmp.eq.s32.totalorder %s462, 0
      %s465 = sadd.s32 %s464, 1
      %s466 = scalar_select %p463, %s464, %s465
      %p469 = pneg %p463
      %p470 = scmp.eq.s32.totalorder %s29, 1
      %p471 = por %p469, %p470
      %p472 = scmp.ne.s32.totalorder %s464, %s467
      %p473 = scmp.eq.s32.totalorder %s29, 0
      %p474 = por %p472, %p473
      %p475 = scmp.ne.s32.totalorder %s464, %s467
      %p476 = scmp.eq.s32.totalorder %s34, 1
      %p477 = por %p475, %p476
      %p478 = scmp.ne.s32.totalorder %s467, %s468
      %p479 = scmp.eq.s32.totalorder %s34, 0
      %p480 = por %p478, %p479
      %p481 = scmp.ne.s32.totalorder %s467, %s468
      %p482 = scmp.eq.s32.totalorder %s35, 1
      %p483 = por %p481, %p482
      %p485 = scmp.ne.s32.totalorder %s468, %s484
      %p486 = scmp.eq.s32.totalorder %s35, 0
      %p487 = por %p485, %p486
      %p488 = scmp.le.s32.totalorder 1, %s29
      %p489 = scmp.lt.s32.totalorder %s29, 3
      %p490 = pnand %p488, %p489
      %p491 = pneg %p490
      // Predicated region
      $region9: #{vit_forward.1} parent=5 // pred_check
        _
      $region10: #{vit_forward.1} parent=5 // pred_check_branch
        %493 = sbr.rel (%p490) target = $region12
      $region11: #{vit_forward.1} parent=5 // pred_region
        %s494 = ssub.s32 %s29, 1
        // Predicated region
        $region13: #{vit_forward.1} parent=11 // pred_check
          %p495 = pneg %p76
        $region14: #{vit_forward.1} parent=11 // pred_check_branch
          %497 = sbr.rel (%p495) target = $region16
        $region15: #{vit_forward.1} parent=11 // pred_region
          _
        $region16: #{vit_forward.1} parent=11 // pred_fallthru
          _
        // Predicated region
        $region17: #{vit_forward.1} parent=11 // pred_check
          %p498 = pneg %p97
        $region18: #{vit_forward.1} parent=11 // pred_check_branch
          %500 = sbr.rel (%p498) target = $region20
        $region19: #{vit_forward.1} parent=11 // pred_region
          _
        $region20: #{vit_forward.1} parent=11 // pred_fallthru
          _
        // Predicated region
        $region21: #{vit_forward.1} parent=11 // pred_check
          %p501 = pneg %p118
        $region22: #{vit_forward.1} parent=11 // pred_check_branch
          %503 = sbr.rel (%p501) target = $region24
        $region23: #{vit_forward.1} parent=11 // pred_region
          _
        $region24: #{vit_forward.1} parent=11 // pred_fallthru
          _
        // Predicated region
        $region25: #{vit_forward.1} parent=11 // pred_check
          %p504 = pneg %p139
        $region26: #{vit_forward.1} parent=11 // pred_check_branch
          %506 = sbr.rel (%p504) target = $region28
        $region27: #{vit_forward.1} parent=11 // pred_region
          _
        $region28: #{vit_forward.1} parent=11 // pred_fallthru
          _
        // Predicated region
        $region29: #{vit_forward.1} parent=11 // pred_check
          %p507 = pneg %p160
        $region30: #{vit_forward.1} parent=11 // pred_check_branch
          %509 = sbr.rel (%p507) target = $region32
        $region31: #{vit_forward.1} parent=11 // pred_region
          _
        $region32: #{vit_forward.1} parent=11 // pred_fallthru
          _
        // Predicated region
        $region33: #{vit_forward.1} parent=11 // pred_check
          %p510 = pneg %p181
        $region34: #{vit_forward.1} parent=11 // pred_check_branch
          %512 = sbr.rel (%p510) target = $region36
        $region35: #{vit_forward.1} parent=11 // pred_region
          _
        $region36: #{vit_forward.1} parent=11 // pred_fallthru
          _
        // Predicated region
        $region37: #{vit_forward.1} parent=11 // pred_check
          %p513 = pneg %p202
        $region38: #{vit_forward.1} parent=11 // pred_check_branch
          %515 = sbr.rel (%p513) target = $region40
        $region39: #{vit_forward.1} parent=11 // pred_region
          _
        $region40: #{vit_forward.1} parent=11 // pred_fallthru
          _
        // Predicated region
        $region41: #{vit_forward.1} parent=11 // pred_check
          %p516 = pneg %p223
        $region42: #{vit_forward.1} parent=11 // pred_check_branch
          %518 = sbr.rel (%p516) target = $region44
        $region43: #{vit_forward.1} parent=11 // pred_region
          _
        $region44: #{vit_forward.1} parent=11 // pred_fallthru
          _
        // Predicated region
        $region45: #{vit_forward.1} parent=11 // pred_check
          %p519 = pneg %p244
        $region46: #{vit_forward.1} parent=11 // pred_check_branch
          %521 = sbr.rel (%p519) target = $region48
        $region47: #{vit_forward.1} parent=11 // pred_region
          _
        $region48: #{vit_forward.1} parent=11 // pred_fallthru
          _
        // Predicated region
        $region49: #{vit_forward.1} parent=11 // pred_check
          %p522 = pneg %p265
        $region50: #{vit_forward.1} parent=11 // pred_check_branch
          %524 = sbr.rel (%p522) target = $region52
        $region51: #{vit_forward.1} parent=11 // pred_region
          _
        $region52: #{vit_forward.1} parent=11 // pred_fallthru
          _
        // Predicated region
        $region53: #{vit_forward.1} parent=11 // pred_check
          %p525 = pneg %p286
        $region54: #{vit_forward.1} parent=11 // pred_check_branch
          %527 = sbr.rel (%p525) target = $region56
        $region55: #{vit_forward.1} parent=11 // pred_region
          _
        $region56: #{vit_forward.1} parent=11 // pred_fallthru
          _
        // Predicated region
        $region57: #{vit_forward.1} parent=11 // pred_check
          %p528 = pneg %p307
        $region58: #{vit_forward.1} parent=11 // pred_check_branch
          %530 = sbr.rel (%p528) target = $region60
        $region59: #{vit_forward.1} parent=11 // pred_region
          _
        $region60: #{vit_forward.1} parent=11 // pred_fallthru
          _
        // Predicated region
        $region61: #{vit_forward.1} parent=11 // pred_check
          %p531 = pneg %p328
        $region62: #{vit_forward.1} parent=11 // pred_check_branch
          %533 = sbr.rel (%p531) target = $region64
        $region63: #{vit_forward.1} parent=11 // pred_region
          _
        $region64: #{vit_forward.1} parent=11 // pred_fallthru
          _
        // Predicated region
        $region65: #{vit_forward.1} parent=11 // pred_check
          %p534 = pneg %p349
        $region66: #{vit_forward.1} parent=11 // pred_check_branch
          %536 = sbr.rel (%p534) target = $region68
        $region67: #{vit_forward.1} parent=11 // pred_region
          _
        $region68: #{vit_forward.1} parent=11 // pred_fallthru
          _
        // Predicated region
        $region69: #{vit_forward.1} parent=11 // pred_check
          %p537 = pneg %p370
        $region70: #{vit_forward.1} parent=11 // pred_check_branch
          %539 = sbr.rel (%p537) target = $region72
        $region71: #{vit_forward.1} parent=11 // pred_region
          _
        $region72: #{vit_forward.1} parent=11 // pred_fallthru
          _
        // Predicated region
        $region73: #{vit_forward.1} parent=11 // pred_check
          %p540 = pneg %p391
        $region74: #{vit_forward.1} parent=11 // pred_check_branch
          %542 = sbr.rel (%p540) target = $region76
        $region75: #{vit_forward.1} parent=11 // pred_region
          _
        $region76: #{vit_forward.1} parent=11 // pred_fallthru
          _
        // Predicated region
        $region77: #{vit_forward.1} parent=11 // pred_check
          %p543 = pneg %p412
        $region78: #{vit_forward.1} parent=11 // pred_check_branch
          %545 = sbr.rel (%p543) target = $region80
        $region79: #{vit_forward.1} parent=11 // pred_region
          _
        $region80: #{vit_forward.1} parent=11 // pred_fallthru
          _
        // Predicated region
        $region81: #{vit_forward.1} parent=11 // pred_check
          %p546 = pneg %p433
        $region82: #{vit_forward.1} parent=11 // pred_check_branch
          %548 = sbr.rel (%p546) target = $region84
        $region83: #{vit_forward.1} parent=11 // pred_region
          _
        $region84: #{vit_forward.1} parent=11 // pred_fallthru
          _
        // Predicated region
        $region85: #{vit_forward.1} parent=11 // pred_check
          %p549 = pneg %p454
        $region86: #{vit_forward.1} parent=11 // pred_check_branch
          %551 = sbr.rel (%p549) target = $region88
        $region87: #{vit_forward.1} parent=11 // pred_region
          _
        $region88: #{vit_forward.1} parent=11 // pred_fallthru
          _
      $region12: #{vit_forward.1} parent=5 // pred_fallthru
        _
      %p552 = scmp.lt.s32.totalorder %s29, 2
      // Predicated region
      $region89: #{vit_forward.1} parent=5 // pred_check
        %p553 = pneg %p552
      $region90: #{vit_forward.1} parent=5 // pred_check_branch
        %555 = sbr.rel (%p553) target = $region92
      $region91: #{vit_forward.1} parent=5 // pred_region
        // Predicated region
        $region93: #{vit_forward.1} parent=91 // pred_check
          %p556 = pneg %p49
        $region94: #{vit_forward.1} parent=91 // pred_check_branch
          %558 = sbr.rel (%p556) target = $region96
        $region95: #{vit_forward.1} parent=91 // pred_region
          %p559 = scmp.lt.s32.totalorder %s29, 1
          %s560 = scalar_select %p559, %s29, 1
          %s561 = smul.addr %s560, 12
          %s562 = smul.addr %s561, 4
          %s563 = scalar_lea.vmem %s0, %s562
        $region96: #{vit_forward.1} parent=91 // pred_fallthru
          _
      $region92: #{vit_forward.1} parent=5 // pred_fallthru
        _
      %p564 = scmp.le.s32.totalorder 1, %s29
      %p565 = scmp.lt.s32.totalorder %s29, 3
      %p566 = pnand %p564, %p565
      %p567 = pneg %p566
      // Predicated region
      $region97: #{vit_forward.1} parent=5 // pred_check
        _
      $region98: #{vit_forward.1} parent=5 // pred_check_branch
        %569 = sbr.rel (%p566) target = $region100
      $region99: #{vit_forward.1} parent=5 // pred_region
        %s570 = ssub.s32 %s29, 1
        %p571 = scmp.lt.s32.totalorder %s34, 1
        %s572 = scalar_select %p571, %s34, 1
        %s573 = smul.addr %s572, 12
        %s574 = smul.addr %s573, 4
        %s575 = scalar_lea.vmem %s0, %s574
        %p576 = pneg %p55
        %p577 = pneg %p52
        %p578 = pneg %p76
        %p579 = pneg %p73
        %p580 = pneg %p97
        %p581 = pneg %p94
        %p582 = pneg %p118
        %p583 = pneg %p115
        %p584 = pneg %p139
        %p585 = pneg %p136
        %p586 = pneg %p160
        %p587 = pneg %p157
        %p588 = pneg %p181
        %p589 = pneg %p178
        %p590 = pneg %p202
        %p591 = pneg %p199
        %p592 = pneg %p223
        %p593 = pneg %p220
        %p594 = pneg %p244
        %p595 = pneg %p241
        %p596 = pneg %p265
        %p597 = pneg %p262
        %p598 = pneg %p286
        %p599 = pneg %p283
        %p600 = pneg %p307
        %p601 = pneg %p304
        %p602 = pneg %p328
        %p603 = pneg %p325
        %p604 = pneg %p349
        %p605 = pneg %p346
        %p606 = pneg %p370
        %p607 = pneg %p367
        %p608 = pneg %p391
        %p609 = pneg %p388
        %p610 = pneg %p412
        %p611 = pneg %p409
        %p612 = pneg %p433
        %p613 = pneg %p430
        %p614 = pneg %p454
        %p615 = pneg %p451
        %p616 = pneg %p480
        %p617 = pneg %p477
        %s618 = sand.u32 %s467, 1
        %s619 = scalar_lea.sflag [#allocation3], %s618
        %s620 = sand.u32 %s467, 1
        %s621 = smul.addr %s620, 4
        %s622 = scalar_lea.vmem [#allocation2], %s621
        %p623 = scmp.lt.s32.totalorder %s34, 1
        %s624 = scalar_select %p623, %s34, 1
        %s625 = smul.addr %s624, 12
        %s626 = smul.addr %s625, 4
        %s627 = scalar_lea.vmem %s0, %s626
        %v629 = vld [vmem:[%s627] sm:$0xf]
        %v630 = vld [vmem:[%s627 + $0x4] sm:$0xf]
        %v631 = vld [vmem:[%s627 + $0x8] sm:$0xf]
        %v632 = vld [vmem:[%s627 + $0xc] sm:$0xf]
        %v633 = vld [vmem:[%s627 + $0x10] sm:$0xf]
        %v634 = vld [vmem:[%s627 + $0x14] sm:$0xf]
        %v635 = vld [vmem:[%s627 + $0x18] sm:$0xf]
        %v636 = vld [vmem:[%s627 + $0x1c] sm:$0xf]
        %v637 = vld [vmem:[%s627 + $0x20] sm:$0xf]
        %v638 = vld [vmem:[%s627 + $0x24] sm:$0xf]
        %v639 = vld [vmem:[%s627 + $0x28] sm:$0xf]
        %v640 = vld [vmem:[%s627 + $0x2c] sm:$0xf]
        %v641 = vld [vmem:[%s3] sm:$0xf]
        %v642 = vld [vmem:[%s3 + $0x4] sm:$0xf]
        %v643 = vld [vmem:[%s3 + $0x8] sm:$0xf]
        %v644 = vld [vmem:[%s3 + $0xc] sm:$0xf]
        %v645 = vld [vmem:[%s3 + $0x10] sm:$0xf]
        %v646 = vld [vmem:[%s3 + $0x14] sm:$0xf]
        %v647 = vld [vmem:[%s3 + $0x18] sm:$0xf]
        %v648 = vld [vmem:[%s3 + $0x1c] sm:$0xf]
        %v649 = vld [vmem:[%s1] sm:$0xff]
        %v650 = vld [vmem:[%s1 + $0x8] sm:$0xff]
        %v651 = vld [vmem:[%s1 + $0x10] sm:$0xff]
        %v652 = vld [vmem:[%s1 + $0x18] sm:$0xff]
        %v653 = vld [vmem:[%s1 + $0x20] sm:$0xff]
        %v654 = vld [vmem:[%s1 + $0x28] sm:$0xff]
        %v655 = vld [vmem:[%s1 + $0x30] sm:$0xff]
        %v656 = vld [vmem:[%s1 + $0x38] sm:$0xff]
        %v657 = vld [vmem:[%s1 + $0x40] sm:$0xff]
        %v658 = vld [vmem:[%s1 + $0x48] sm:$0xff]
        %v659 = vld [vmem:[%s1 + $0x50] sm:$0xff]
        %v660 = vld [vmem:[%s1 + $0x58] sm:$0xff]
        %v673 = vunpack.c.l.b16 %v629
        %v674 = vunpack.c.l.b16 %v630
        %v675 = vunpack.c.l.b16 %v631
        %v676 = vunpack.c.l.b16 %v632
        %v677 = vunpack.c.l.b16 %v633
        %v678 = vunpack.c.l.b16 %v634
        %v679 = vunpack.c.l.b16 %v635
        %v680 = vunpack.c.l.b16 %v636
        %v681 = vunpack.c.l.b16 %v637
        %v682 = vunpack.c.l.b16 %v638
        %v683 = vunpack.c.l.b16 %v639
        %v684 = vunpack.c.l.b16 %v640
        %v685 = vpack.c.b16 %v674, %v673
        %v686 = vpack.c.b16 %v676, %v675
        %v687 = vpack.c.b16 %v678, %v677
        %v688 = vpack.c.b16 %v680, %v679
        %v689 = vpack.c.b16 %v682, %v681
        %v690 = vpack.c.b16 %v684, %v683
        %v699 = vunpack.c.l.b16 %v641
        %v700 = vunpack.c.l.b16 %v642
        %v701 = vunpack.c.l.b16 %v643
        %v702 = vunpack.c.l.b16 %v644
        %v703 = vunpack.c.l.b16 %v645
        %v704 = vunpack.c.l.b16 %v646
        %v705 = vunpack.c.l.b16 %v647
        %v706 = vunpack.c.l.b16 %v648
        %v707 = vpack.c.b16 %v700, %v699
        %v708 = vpack.c.b16 %v702, %v701
        %v709 = vpack.c.b16 %v704, %v703
        %v710 = vpack.c.b16 %v706, %v705
        %vm715 = vcmask 523264
        %v717 = vsel %vm715, %v685, 0
        %v720 = vsel %vm715, %v686, 0
        %v723 = vsel %vm715, %v687, 0
        %v726 = vsel %vm715, %v688, 0
        %v729 = vsel %vm715, %v689, 0
        %v732 = vsel %vm715, %v690, 0
        %734 = vmatpush.bf16.msra.mxu0 0
        %735 = vmatpush.bf16.msra.mxu0 0
        %736 = vmatpush.bf16.msra.mxu0 0
        %737 = vmatpush.bf16.msra.mxu0 0
        %738 = vmatpush.bf16.msra.mxu0 %v710
        %739 = vmatpush.bf16.msra.mxu0 %v709
        %740 = vmatpush.bf16.msra.mxu0 %v708
        %741 = vmatpush.bf16.msra.mxu0 %v707
        %742 = vmatmul.bf16.gmra.mxu0 %v717
        %v743 = vpop.f32.mrf.mxu0
        %v744 = vadd.f32 %v649, %v743
        %v745 = vpop.f32.mrf.mxu0
        %v746 = vadd.f32 %v650, %v745
        %747 = vmatmul.bf16.gmra.mxu0 %v720
        %v748 = vpop.f32.mrf.mxu0
        %v749 = vadd.f32 %v651, %v748
        %v750 = vpop.f32.mrf.mxu0
        %v751 = vadd.f32 %v652, %v750
        %752 = vmatmul.bf16.gmra.mxu0 %v723
        %v753 = vpop.f32.mrf.mxu0
        %v754 = vadd.f32 %v653, %v753
        %v755 = vpop.f32.mrf.mxu0
        %v756 = vadd.f32 %v654, %v755
        %757 = vmatmul.bf16.gmra.mxu0 %v726
        %v758 = vpop.f32.mrf.mxu0
        %v759 = vadd.f32 %v655, %v758
        %v760 = vpop.f32.mrf.mxu0
        %v761 = vadd.f32 %v656, %v760
        %762 = vmatmul.bf16.gmra.mxu0 %v729
        %v763 = vpop.f32.mrf.mxu0
        %v764 = vadd.f32 %v657, %v763
        %v765 = vpop.f32.mrf.mxu0
        %v766 = vadd.f32 %v658, %v765
        %767 = vmatmul.bf16.gmra.mxu0 %v732
        %v768 = vpop.f32.mrf.mxu0
        %v769 = vadd.f32 %v659, %v768
        %v770 = vpop.f32.mrf.mxu0
        %v771 = vadd.f32 %v660, %v770
        %772 = vdwg.mxu0
        %v773 = vld [vmem:[%s2] sm:$0xff]
        %v774 = vld [vmem:[%s2 + $0x8] sm:$0xff]
        %v775 = vld [vmem:[%s2 + $0x10] sm:$0xff]
        %v776 = vld [vmem:[%s2 + $0x18] sm:$0xff]
        %v777 = vld [vmem:[%s2 + $0x20] sm:$0xff]
        %v778 = vld [vmem:[%s2 + $0x28] sm:$0xff]
        %v779 = vld [vmem:[%s2 + $0x30] sm:$0xff]
        %v780 = vld [vmem:[%s2 + $0x38] sm:$0xff]
        %v781 = vld [vmem:[%s2 + $0x40] sm:$0xff]
        %v782 = vld [vmem:[%s2 + $0x48] sm:$0xff]
        %v783 = vld [vmem:[%s2 + $0x50] sm:$0xff]
        %v784 = vld [vmem:[%s2 + $0x58] sm:$0xff]
        %v785 = vld [vmem:[%s4] sm:$0x1]
        %v786 = vld [vmem:[%s5] sm:$0x1]
        %vm787 = vcmask 261120
        %v788 = vsel %vm787, %v744, 0.0
        %789 = vadd.xlane.f32.xlu0 %v788
        %v790 = vpop.xlane.xlu0 %789
        %v791 = vsel %vm787, %v746, 0.0
        %792 = vadd.xlane.f32.xlu0 %v791
        %v793 = vpop.xlane.xlu0 %792
        %v794 = vsel %vm787, %v749, 0.0
        %795 = vadd.xlane.f32.xlu0 %v794
        %v796 = vpop.xlane.xlu0 %795
        %v797 = vsel %vm787, %v751, 0.0
        %798 = vadd.xlane.f32.xlu0 %v797
        %v799 = vpop.xlane.xlu0 %798
        %v800 = vsel %vm787, %v754, 0.0
        %801 = vadd.xlane.f32.xlu0 %v800
        %v802 = vpop.xlane.xlu0 %801
        %v803 = vsel %vm787, %v756, 0.0
        %804 = vadd.xlane.f32.xlu0 %v803
        %v805 = vpop.xlane.xlu0 %804
        %v806 = vsel %vm787, %v759, 0.0
        %807 = vadd.xlane.f32.xlu0 %v806
        %v808 = vpop.xlane.xlu0 %807
        %v809 = vsel %vm787, %v761, 0.0
        %810 = vadd.xlane.f32.xlu0 %v809
        %v811 = vpop.xlane.xlu0 %810
        %v812 = vsel %vm787, %v764, 0.0
        %813 = vadd.xlane.f32.xlu0 %v812
        %v814 = vpop.xlane.xlu0 %813
        %v815 = vsel %vm787, %v766, 0.0
        %816 = vadd.xlane.f32.xlu0 %v815
        %v817 = vpop.xlane.xlu0 %816
        %v818 = vsel %vm787, %v769, 0.0
        %819 = vadd.xlane.f32.xlu0 %v818
        %v820 = vpop.xlane.xlu0 %819
        %v821 = vsel %vm787, %v771, 0.0
        %822 = vadd.xlane.f32.xlu0 %v821
        %v823 = vpop.xlane.xlu0 %822
        %v824 = vrcp.pop 32.0
        %v825 = vmul.f32 32.0, %v824
        %v826 = vsub.f32 1.0, %v825
        %v827 = vmul.f32 %v824, %v826
        %v828 = vadd.f32 %v824, %v827
        %vm829 = vweird.f32 %v824
        %v830 = vsel %vm829, %v824, %v828
        %v831 = vmul.f32 %v790, %v830
        %v832 = vmul.f32 %v793, %v830
        %v833 = vmul.f32 %v796, %v830
        %v834 = vmul.f32 %v799, %v830
        %v835 = vmul.f32 %v802, %v830
        %v836 = vmul.f32 %v805, %v830
        %v837 = vmul.f32 %v808, %v830
        %v838 = vmul.f32 %v811, %v830
        %v839 = vmul.f32 %v814, %v830
        %v840 = vmul.f32 %v817, %v830
        %v841 = vmul.f32 %v820, %v830
        %v842 = vmul.f32 %v823, %v830
        %v843 = vmul.f32 %v744, %v744
        %v844 = vmul.f32 %v746, %v746
        %v845 = vmul.f32 %v749, %v749
        %v846 = vmul.f32 %v751, %v751
        %v847 = vmul.f32 %v754, %v754
        %v848 = vmul.f32 %v756, %v756
        %v849 = vmul.f32 %v759, %v759
        %v850 = vmul.f32 %v761, %v761
        %v851 = vmul.f32 %v764, %v764
        %v852 = vmul.f32 %v766, %v766
        %v853 = vmul.f32 %v769, %v769
        %v854 = vmul.f32 %v771, %v771
        %v855 = vsel %vm787, %v843, 0.0
        %856 = vadd.xlane.f32.xlu0 %v855
        %v857 = vpop.xlane.xlu0 %856
        %v858 = vsel %vm787, %v844, 0.0
        %859 = vadd.xlane.f32.xlu0 %v858
        %v860 = vpop.xlane.xlu0 %859
        %v861 = vsel %vm787, %v845, 0.0
        %862 = vadd.xlane.f32.xlu0 %v861
        %v863 = vpop.xlane.xlu0 %862
        %v864 = vsel %vm787, %v846, 0.0
        %865 = vadd.xlane.f32.xlu0 %v864
        %v866 = vpop.xlane.xlu0 %865
        %v867 = vsel %vm787, %v847, 0.0
        %868 = vadd.xlane.f32.xlu0 %v867
        %v869 = vpop.xlane.xlu0 %868
        %v870 = vsel %vm787, %v848, 0.0
        %871 = vadd.xlane.f32.xlu0 %v870
        %v872 = vpop.xlane.xlu0 %871
        %v873 = vsel %vm787, %v849, 0.0
        %874 = vadd.xlane.f32.xlu0 %v873
        %v875 = vpop.xlane.xlu0 %874
        %v876 = vsel %vm787, %v850, 0.0
        %877 = vadd.xlane.f32.xlu0 %v876
        %v878 = vpop.xlane.xlu0 %877
        %v879 = vsel %vm787, %v851, 0.0
        %880 = vadd.xlane.f32.xlu0 %v879
        %v881 = vpop.xlane.xlu0 %880
        %v882 = vsel %vm787, %v852, 0.0
        %883 = vadd.xlane.f32.xlu0 %v882
        %v884 = vpop.xlane.xlu0 %883
        %v885 = vsel %vm787, %v853, 0.0
        %886 = vadd.xlane.f32.xlu0 %v885
        %v887 = vpop.xlane.xlu0 %886
        %v888 = vsel %vm787, %v854, 0.0
        %889 = vadd.xlane.f32.xlu0 %v888
        %v890 = vpop.xlane.xlu0 %889
        %v891 = vmul.f32 %v857, %v830
        %v892 = vmul.f32 %v860, %v830
        %v893 = vmul.f32 %v863, %v830
        %v894 = vmul.f32 %v866, %v830
        %v895 = vmul.f32 %v869, %v830
        %v896 = vmul.f32 %v872, %v830
        %v897 = vmul.f32 %v875, %v830
        %v898 = vmul.f32 %v878, %v830
        %v899 = vmul.f32 %v881, %v830
        %v900 = vmul.f32 %v884, %v830
        %v901 = vmul.f32 %v887, %v830
        %v902 = vmul.f32 %v890, %v830
        %v903 = vsub.f32 %v744, %v831
        %v904 = vsub.f32 %v746, %v832
        %v905 = vsub.f32 %v749, %v833
        %v906 = vsub.f32 %v751, %v834
        %v907 = vsub.f32 %v754, %v835
        %v908 = vsub.f32 %v756, %v836
        %v909 = vsub.f32 %v759, %v837
        %v910 = vsub.f32 %v761, %v838
        %v911 = vsub.f32 %v764, %v839
        %v912 = vsub.f32 %v766, %v840
        %v913 = vsub.f32 %v769, %v841
        %v914 = vsub.f32 %v771, %v842
        %v915 = vmul.f32 %v831, %v831
        %v916 = vmul.f32 %v832, %v832
        %v917 = vmul.f32 %v833, %v833
        %v918 = vmul.f32 %v834, %v834
        %v919 = vmul.f32 %v835, %v835
        %v920 = vmul.f32 %v836, %v836
        %v921 = vmul.f32 %v837, %v837
        %v922 = vmul.f32 %v838, %v838
        %v923 = vmul.f32 %v839, %v839
        %v924 = vmul.f32 %v840, %v840
        %v925 = vmul.f32 %v841, %v841
        %v926 = vmul.f32 %v842, %v842
        %v927 = vsub.f32 %v891, %v915
        %v928 = vsub.f32 %v892, %v916
        %v929 = vsub.f32 %v893, %v917
        %v930 = vsub.f32 %v894, %v918
        %v931 = vsub.f32 %v895, %v919
        %v932 = vsub.f32 %v896, %v920
        %v933 = vsub.f32 %v897, %v921
        %v934 = vsub.f32 %v898, %v922
        %v935 = vsub.f32 %v899, %v923
        %v936 = vsub.f32 %v900, %v924
        %v937 = vsub.f32 %v901, %v925
        %v938 = vsub.f32 %v902, %v926
        %v939 = vadd.f32 %v927, 1e-05
        %v940 = vadd.f32 %v928, 1e-05
        %v941 = vadd.f32 %v929, 1e-05
        %v942 = vadd.f32 %v930, 1e-05
        %v943 = vadd.f32 %v931, 1e-05
        %v944 = vadd.f32 %v932, 1e-05
        %v945 = vadd.f32 %v933, 1e-05
        %v946 = vadd.f32 %v934, 1e-05
        %v947 = vadd.f32 %v935, 1e-05
        %v948 = vadd.f32 %v936, 1e-05
        %v949 = vadd.f32 %v937, 1e-05
        %v950 = vadd.f32 %v938, 1e-05
        %v951 = vrsqrt.pop %v939
        %v952 = vmul.f32 %v951, %v939
        %v953 = vmul.f32 %v952, %v951
        %v954 = vmul.f32 0.5, %v953
        %v955 = vsub.f32 1.5, %v954
        %v956 = vmul.f32 %v951, %v955
        %vm957 = vweird.f32 %v939
        %vm958 = vweird.f32 %v951
        %vm959 = vmor %vm957, %vm958
        %v960 = vsel %vm959, %v951, %v956
        %v961 = vrsqrt.pop %v940
        %v962 = vmul.f32 %v961, %v940
        %v963 = vmul.f32 %v962, %v961
        %v964 = vmul.f32 0.5, %v963
        %v965 = vsub.f32 1.5, %v964
        %v966 = vmul.f32 %v961, %v965
        %vm967 = vweird.f32 %v940
        %vm968 = vweird.f32 %v961
        %vm969 = vmor %vm967, %vm968
        %v970 = vsel %vm969, %v961, %v966
        %v971 = vrsqrt.pop %v941
        %v972 = vmul.f32 %v971, %v941
        %v973 = vmul.f32 %v972, %v971
        %v974 = vmul.f32 0.5, %v973
        %v975 = vsub.f32 1.5, %v974
        %v976 = vmul.f32 %v971, %v975
        %vm977 = vweird.f32 %v941
        %vm978 = vweird.f32 %v971
        %vm979 = vmor %vm977, %vm978
        %v980 = vsel %vm979, %v971, %v976
        %v981 = vrsqrt.pop %v942
        %v982 = vmul.f32 %v981, %v942
        %v983 = vmul.f32 %v982, %v981
        %v984 = vmul.f32 0.5, %v983
        %v985 = vsub.f32 1.5, %v984
        %v986 = vmul.f32 %v981, %v985
        %vm987 = vweird.f32 %v942
        %vm988 = vweird.f32 %v981
        %vm989 = vmor %vm987, %vm988
        %v990 = vsel %vm989, %v981, %v986
        %v991 = vrsqrt.pop %v943
        %v992 = vmul.f32 %v991, %v943
        %v993 = vmul.f32 %v992, %v991
        %v994 = vmul.f32 0.5, %v993
        %v995 = vsub.f32 1.5, %v994
        %v996 = vmul.f32 %v991, %v995
        %vm997 = vweird.f32 %v943
        %vm998 = vweird.f32 %v991
        %vm999 = vmor %vm997, %vm998
        %v1000 = vsel %vm999, %v991, %v996
        %v1001 = vrsqrt.pop %v944
        %v1002 = vmul.f32 %v1001, %v944
        %v1003 = vmul.f32 %v1002, %v1001
        %v1004 = vmul.f32 0.5, %v1003
        %v1005 = vsub.f32 1.5, %v1004
        %v1006 = vmul.f32 %v1001, %v1005
        %vm1007 = vweird.f32 %v944
        %vm1008 = vweird.f32 %v1001
        %vm1009 = vmor %vm1007, %vm1008
        %v1010 = vsel %vm1009, %v1001, %v1006
        %v1011 = vrsqrt.pop %v945
        %v1012 = vmul.f32 %v1011, %v945
        %v1013 = vmul.f32 %v1012, %v1011
        %v1014 = vmul.f32 0.5, %v1013
        %v1015 = vsub.f32 1.5, %v1014
        %v1016 = vmul.f32 %v1011, %v1015
        %vm1017 = vweird.f32 %v945
        %vm1018 = vweird.f32 %v1011
        %vm1019 = vmor %vm1017, %vm1018
        %v1020 = vsel %vm1019, %v1011, %v1016
        %v1021 = vrsqrt.pop %v946
        %v1022 = vmul.f32 %v1021, %v946
        %v1023 = vmul.f32 %v1022, %v1021
        %v1024 = vmul.f32 0.5, %v1023
        %v1025 = vsub.f32 1.5, %v1024
        %v1026 = vmul.f32 %v1021, %v1025
        %vm1027 = vweird.f32 %v946
        %vm1028 = vweird.f32 %v1021
        %vm1029 = vmor %vm1027, %vm1028
        %v1030 = vsel %vm1029, %v1021, %v1026
        %v1031 = vrsqrt.pop %v947
        %v1032 = vmul.f32 %v1031, %v947
        %v1033 = vmul.f32 %v1032, %v1031
        %v1034 = vmul.f32 0.5, %v1033
        %v1035 = vsub.f32 1.5, %v1034
        %v1036 = vmul.f32 %v1031, %v1035
        %vm1037 = vweird.f32 %v947
        %vm1038 = vweird.f32 %v1031
        %vm1039 = vmor %vm1037, %vm1038
        %v1040 = vsel %vm1039, %v1031, %v1036
        %v1041 = vrsqrt.pop %v948
        %v1042 = vmul.f32 %v1041, %v948
        %v1043 = vmul.f32 %v1042, %v1041
        %v1044 = vmul.f32 0.5, %v1043
        %v1045 = vsub.f32 1.5, %v1044
        %v1046 = vmul.f32 %v1041, %v1045
        %vm1047 = vweird.f32 %v948
        %vm1048 = vweird.f32 %v1041
        %vm1049 = vmor %vm1047, %vm1048
        %v1050 = vsel %vm1049, %v1041, %v1046
        %v1051 = vrsqrt.pop %v949
        %v1052 = vmul.f32 %v1051, %v949
        %v1053 = vmul.f32 %v1052, %v1051
        %v1054 = vmul.f32 0.5, %v1053
        %v1055 = vsub.f32 1.5, %v1054
        %v1056 = vmul.f32 %v1051, %v1055
        %vm1057 = vweird.f32 %v949
        %vm1058 = vweird.f32 %v1051
        %vm1059 = vmor %vm1057, %vm1058
        %v1060 = vsel %vm1059, %v1051, %v1056
        %v1061 = vrsqrt.pop %v950
        %v1062 = vmul.f32 %v1061, %v950
        %v1063 = vmul.f32 %v1062, %v1061
        %v1064 = vmul.f32 0.5, %v1063
        %v1065 = vsub.f32 1.5, %v1064
        %v1066 = vmul.f32 %v1061, %v1065
        %vm1067 = vweird.f32 %v950
        %vm1068 = vweird.f32 %v1061
        %vm1069 = vmor %vm1067, %vm1068
        %v1070 = vsel %vm1069, %v1061, %v1066
        %v1071 = vmul.f32 %v903, %v960
        %v1072 = vmul.f32 %v904, %v970
        %v1073 = vmul.f32 %v905, %v980
        %v1074 = vmul.f32 %v906, %v990
        %v1075 = vmul.f32 %v907, %v1000
        %v1076 = vmul.f32 %v908, %v1010
        %v1077 = vmul.f32 %v909, %v1020
        %v1078 = vmul.f32 %v910, %v1030
        %v1079 = vmul.f32 %v911, %v1040
        %v1080 = vmul.f32 %v912, %v1050
        %v1081 = vmul.f32 %v913, %v1060
        %v1082 = vmul.f32 %v914, %v1070
        %v1084 = vperm.slane %v785, 0
        %v1086 = vmul.f32 %v1071, %v1084
        %v1087 = vmul.f32 %v1072, %v1084
        %v1088 = vmul.f32 %v1073, %v1084
        %v1089 = vmul.f32 %v1074, %v1084
        %v1090 = vmul.f32 %v1075, %v1084
        %v1091 = vmul.f32 %v1076, %v1084
        %v1092 = vmul.f32 %v1077, %v1084
        %v1093 = vmul.f32 %v1078, %v1084
        %v1094 = vmul.f32 %v1079, %v1084
        %v1095 = vmul.f32 %v1080, %v1084
        %v1096 = vmul.f32 %v1081, %v1084
        %v1097 = vmul.f32 %v1082, %v1084
        %v1099 = vperm.slane %v786, 0
        %v1101 = vadd.f32 %v1086, %v1099
        %v1102 = vadd.f32 %v1087, %v1099
        %v1103 = vadd.f32 %v1088, %v1099
        %v1104 = vadd.f32 %v1089, %v1099
        %v1105 = vadd.f32 %v1090, %v1099
        %v1106 = vadd.f32 %v1091, %v1099
        %v1107 = vadd.f32 %v1092, %v1099
        %v1108 = vadd.f32 %v1093, %v1099
        %v1109 = vadd.f32 %v1094, %v1099
        %v1110 = vadd.f32 %v1095, %v1099
        %v1111 = vadd.f32 %v1096, %v1099
        %v1112 = vadd.f32 %v1097, %v1099
        %v1113 = vpack.c.bf16 %v1102, %v1101
        %v1114 = vpack.c.bf16 %v1104, %v1103
        %v1115 = vpack.c.bf16 %v1106, %v1105
        %v1116 = vpack.c.bf16 %v1108, %v1107
        %v1117 = vpack.c.bf16 %v1110, %v1109
        %v1118 = vpack.c.bf16 %v1112, %v1111
        %v1119 = vld [vmem:[%s6] sm:$0xf]
        %v1120 = vld [vmem:[%s6 + $0x4] sm:$0xf]
        %v1121 = vld [vmem:[%s6 + $0x8] sm:$0xf]
        %v1122 = vld [vmem:[%s6 + $0xc] sm:$0xf]
        %v1123 = vld [vmem:[%s7] sm:$0x1]
        %v1125 = vperm.slane %v1123, 0
        %v1131 = vunpack.c.l.b16 %v1119
        %v1132 = vunpack.c.l.b16 %v1120
        %v1133 = vunpack.c.l.b16 %v1121
        %v1134 = vunpack.c.l.b16 %v1122
        %v1135 = vpack.c.b16 %v1132, %v1131
        %v1136 = vpack.c.b16 %v1134, %v1133
        %v1140 = vsel %vm787, %v1113, 0
        %v1143 = vsel %vm787, %v1114, 0
        %v1146 = vsel %vm787, %v1115, 0
        %v1149 = vsel %vm787, %v1116, 0
        %v1152 = vsel %vm787, %v1117, 0
        %v1155 = vsel %vm787, %v1118, 0
        %1157 = vmatpush.bf16.msra.mxu0 0
        %1158 = vmatpush.bf16.msra.mxu0 0
        %1159 = vmatpush.bf16.msra.mxu0 0
        %1160 = vmatpush.bf16.msra.mxu0 0
        %1161 = vmatpush.bf16.msra.mxu0 0
        %1162 = vmatpush.bf16.msra.mxu0 0
        %1163 = vmatpush.bf16.msra.mxu0 %v1136
        %1164 = vmatpush.bf16.msra.mxu0 %v1135
        %1165 = vmatmul.bf16.gmra.mxu0 %v1140
        %v1166 = vpop.f32.mrf.mxu0
        %v1167 = vadd.f32 %v1125, %v1166
        %v1168 = vpop.f32.mrf.mxu0
        %v1169 = vadd.f32 %v1125, %v1168
        %1170 = vmatmul.bf16.gmra.mxu0 %v1143
        %v1171 = vpop.f32.mrf.mxu0
        %v1172 = vadd.f32 %v1125, %v1171
        %v1173 = vpop.f32.mrf.mxu0
        %v1174 = vadd.f32 %v1125, %v1173
        %1175 = vmatmul.bf16.gmra.mxu0 %v1146
        %v1176 = vpop.f32.mrf.mxu0
        %v1177 = vadd.f32 %v1125, %v1176
        %v1178 = vpop.f32.mrf.mxu0
        %v1179 = vadd.f32 %v1125, %v1178
        %1180 = vmatmul.bf16.gmra.mxu0 %v1149
        %v1181 = vpop.f32.mrf.mxu0
        %v1182 = vadd.f32 %v1125, %v1181
        %v1183 = vpop.f32.mrf.mxu0
        %v1184 = vadd.f32 %v1125, %v1183
        %1185 = vmatmul.bf16.gmra.mxu0 %v1152
        %v1186 = vpop.f32.mrf.mxu0
        %v1187 = vadd.f32 %v1125, %v1186
        %v1188 = vpop.f32.mrf.mxu0
        %v1189 = vadd.f32 %v1125, %v1188
        %1190 = vmatmul.bf16.gmra.mxu0 %v1155
        %v1191 = vpop.f32.mrf.mxu0
        %v1192 = vadd.f32 %v1125, %v1191
        %v1193 = vpop.f32.mrf.mxu0
        %v1194 = vadd.f32 %v1125, %v1193
        %1195 = vdwg.mxu0
        %v1196 = vpack.c.bf16 %v1167, %v1167
        %v1197 = vpack.c.bf16 %v1169, %v1169
        %v1198 = vpack.c.bf16 %v1172, %v1172
        %v1199 = vpack.c.bf16 %v1174, %v1174
        %v1200 = vpack.c.bf16 %v1177, %v1177
        %v1201 = vpack.c.bf16 %v1179, %v1179
        %v1202 = vpack.c.bf16 %v1182, %v1182
        %v1203 = vpack.c.bf16 %v1184, %v1184
        %v1204 = vpack.c.bf16 %v1187, %v1187
        %v1205 = vpack.c.bf16 %v1189, %v1189
        %v1206 = vpack.c.bf16 %v1192, %v1192
        %v1207 = vpack.c.bf16 %v1194, %v1194
        %v1220 = vunpack.c.l.b16 %v1196
        %v1221 = vunpack.c.l.b16 %v1197
        %v1222 = vunpack.c.l.b16 %v1198
        %v1223 = vunpack.c.l.b16 %v1199
        %v1224 = vunpack.c.l.b16 %v1200
        %v1225 = vunpack.c.l.b16 %v1201
        %v1226 = vunpack.c.l.b16 %v1202
        %v1227 = vunpack.c.l.b16 %v1203
        %v1228 = vunpack.c.l.b16 %v1204
        %v1229 = vunpack.c.l.b16 %v1205
        %v1230 = vunpack.c.l.b16 %v1206
        %v1231 = vunpack.c.l.b16 %v1207
        %v1232 = vpack.c.b16 %v1221, %v1220
        %v1233 = vpack.c.b16 %v1223, %v1222
        %v1234 = vpack.c.b16 %v1225, %v1224
        %v1235 = vpack.c.b16 %v1227, %v1226
        %v1236 = vpack.c.b16 %v1229, %v1228
        %v1237 = vpack.c.b16 %v1231, %v1230
        %1238 = vrot.lane.b32.xlu0 %v1232, 96
        %v1239 = vpop.permute.xlu0 %1238
        %1240 = vrot.lane.b32.xlu0 %v1233, 96
        %v1241 = vpop.permute.xlu0 %1240
        %1242 = vrot.lane.b32.xlu0 %v1234, 96
        %v1243 = vpop.permute.xlu0 %1242
        %1244 = vrot.lane.b32.xlu0 %v1235, 96
        %v1245 = vpop.permute.xlu0 %1244
        %1246 = vrot.lane.b32.xlu0 %v1236, 96
        %v1247 = vpop.permute.xlu0 %1246
        %1248 = vrot.lane.b32.xlu0 %v1237, 96
        %v1249 = vpop.permute.xlu0 %1248
        %vm1250 = vcmask 64512
        %v1252 = vsel %vm1250, %v1232, 0
        %v1255 = vsel %vm1250, %v1233, 0
        %v1258 = vsel %vm1250, %v1234, 0
        %v1261 = vsel %vm1250, %v1235, 0
        %v1264 = vsel %vm1250, %v1236, 0
        %v1267 = vsel %vm1250, %v1237, 0
        %v1270 = vsel %vm1250, %v1239, 0
        %v1273 = vsel %vm1250, %v1241, 0
        %v1276 = vsel %vm1250, %v1243, 0
        %v1279 = vsel %vm1250, %v1245, 0
        %v1282 = vsel %vm1250, %v1247, 0
        %v1285 = vsel %vm1250, %v1249, 0
        %1287 = vmatpush.bf16.xpose.msra.mxu0 0
        %1288 = vmatpush.bf16.xpose.msra.mxu0 0
        %1289 = vmatpush.bf16.xpose.msra.mxu0 %v1285
        %1290 = vmatpush.bf16.xpose.msra.mxu0 %v1282
        %1291 = vmatpush.bf16.xpose.msra.mxu0 %v1279
        %1292 = vmatpush.bf16.xpose.msra.mxu0 %v1276
        %1293 = vmatpush.bf16.xpose.msra.mxu0 %v1273
        %1294 = vmatpush.bf16.xpose.msra.mxu0 %v1270
        %1295 = vmatmul.bf16.gmra.mxu0 %v1252
        %v1296 = vpop.f32.mrf.mxu0
        %v1297 = vadd.f32 %v773, %v1296
        %v1298 = vpop.f32.mrf.mxu0
        %v1299 = vadd.f32 %v774, %v1298
        %1300 = vmatmul.bf16.gmra.mxu0 %v1255
        %v1301 = vpop.f32.mrf.mxu0
        %v1302 = vadd.f32 %v775, %v1301
        %v1303 = vpop.f32.mrf.mxu0
        %v1304 = vadd.f32 %v776, %v1303
        %1305 = vmatmul.bf16.gmra.mxu0 %v1258
        %v1306 = vpop.f32.mrf.mxu0
        %v1307 = vadd.f32 %v777, %v1306
        %v1308 = vpop.f32.mrf.mxu0
        %v1309 = vadd.f32 %v778, %v1308
        %1310 = vmatmul.bf16.gmra.mxu0 %v1261
        %v1311 = vpop.f32.mrf.mxu0
        %v1312 = vadd.f32 %v779, %v1311
        %v1313 = vpop.f32.mrf.mxu0
        %v1314 = vadd.f32 %v780, %v1313
        %1315 = vmatmul.bf16.gmra.mxu0 %v1264
        %v1316 = vpop.f32.mrf.mxu0
        %v1317 = vadd.f32 %v781, %v1316
        %v1318 = vpop.f32.mrf.mxu0
        %v1319 = vadd.f32 %v782, %v1318
        %1320 = vmatmul.bf16.gmra.mxu0 %v1267
        %v1321 = vpop.f32.mrf.mxu0
        %v1322 = vadd.f32 %v783, %v1321
        %v1323 = vpop.f32.mrf.mxu0
        %v1324 = vadd.f32 %v784, %v1323
        %1325 = vdwg.mxu0
        %vm1326 = vcmask 785408
        %v1327 = vsel %vm1326, %v1297, -inf
        %1328 = vmax.xlane.f32.xlu0 %v1327
        %v1329 = vpop.xlane.xlu0 %1328
        %v1330 = vsel %vm1326, %v1299, -inf
        %1331 = vmax.xlane.f32.xlu0 %v1330
        %v1332 = vpop.xlane.xlu0 %1331
        %v1333 = vsel %vm1326, %v1302, -inf
        %1334 = vmax.xlane.f32.xlu0 %v1333
        %v1335 = vpop.xlane.xlu0 %1334
        %v1336 = vsel %vm1326, %v1304, -inf
        %1337 = vmax.xlane.f32.xlu0 %v1336
        %v1338 = vpop.xlane.xlu0 %1337
        %v1339 = vsel %vm1326, %v1307, -inf
        %1340 = vmax.xlane.f32.xlu0 %v1339
        %v1341 = vpop.xlane.xlu0 %1340
        %v1342 = vsel %vm1326, %v1309, -inf
        %1343 = vmax.xlane.f32.xlu0 %v1342
        %v1344 = vpop.xlane.xlu0 %1343
        %v1345 = vsel %vm1326, %v1312, -inf
        %1346 = vmax.xlane.f32.xlu0 %v1345
        %v1347 = vpop.xlane.xlu0 %1346
        %v1348 = vsel %vm1326, %v1314, -inf
        %1349 = vmax.xlane.f32.xlu0 %v1348
        %v1350 = vpop.xlane.xlu0 %1349
        %v1351 = vsel %vm1326, %v1317, -inf
        %1352 = vmax.xlane.f32.xlu0 %v1351
        %v1353 = vpop.xlane.xlu0 %1352
        %v1354 = vsel %vm1326, %v1319, -inf
        %1355 = vmax.xlane.f32.xlu0 %v1354
        %v1356 = vpop.xlane.xlu0 %1355
        %v1357 = vsel %vm1326, %v1322, -inf
        %1358 = vmax.xlane.f32.xlu0 %v1357
        %v1359 = vpop.xlane.xlu0 %1358
        %v1360 = vsel %vm1326, %v1324, -inf
        %1361 = vmax.xlane.f32.xlu0 %v1360
        %v1362 = vpop.xlane.xlu0 %1361
        %v1363 = vsub.f32 %v1297, %v1329
        %v1364 = vsub.f32 %v1299, %v1332
        %v1365 = vsub.f32 %v1302, %v1335
        %v1366 = vsub.f32 %v1304, %v1338
        %v1367 = vsub.f32 %v1307, %v1341
        %v1368 = vsub.f32 %v1309, %v1344
        %v1369 = vsub.f32 %v1312, %v1347
        %v1370 = vsub.f32 %v1314, %v1350
        %v1371 = vsub.f32 %v1317, %v1353
        %v1372 = vsub.f32 %v1319, %v1356
        %v1373 = vsub.f32 %v1322, %v1359
        %v1374 = vsub.f32 %v1324, %v1362
        %v1375 = vmul.f32 %v1363, 1.442695
        %v1376 = vpow.pop %v1375
        %v1377 = vmul.f32 %v1364, 1.442695
        %v1378 = vpow.pop %v1377
        %v1379 = vmul.f32 %v1365, 1.442695
        %v1380 = vpow.pop %v1379
        %v1381 = vmul.f32 %v1366, 1.442695
        %v1382 = vpow.pop %v1381
        %v1383 = vmul.f32 %v1367, 1.442695
        %v1384 = vpow.pop %v1383
        %v1385 = vmul.f32 %v1368, 1.442695
        %v1386 = vpow.pop %v1385
        %v1387 = vmul.f32 %v1369, 1.442695
        %v1388 = vpow.pop %v1387
        %v1389 = vmul.f32 %v1370, 1.442695
        %v1390 = vpow.pop %v1389
        %v1391 = vmul.f32 %v1371, 1.442695
        %v1392 = vpow.pop %v1391
        %v1393 = vmul.f32 %v1372, 1.442695
        %v1394 = vpow.pop %v1393
        %v1395 = vmul.f32 %v1373, 1.442695
        %v1396 = vpow.pop %v1395
        %v1397 = vmul.f32 %v1374, 1.442695
        %v1398 = vpow.pop %v1397
        %v1399 = vsel %vm1326, %v1376, 0.0
        %1400 = vadd.xlane.f32.xlu0 %v1399
        %v1401 = vpop.xlane.xlu0 %1400
        %v1402 = vsel %vm1326, %v1378, 0.0
        %1403 = vadd.xlane.f32.xlu0 %v1402
        %v1404 = vpop.xlane.xlu0 %1403
        %v1405 = vsel %vm1326, %v1380, 0.0
        %1406 = vadd.xlane.f32.xlu0 %v1405
        %v1407 = vpop.xlane.xlu0 %1406
        %v1408 = vsel %vm1326, %v1382, 0.0
        %1409 = vadd.xlane.f32.xlu0 %v1408
        %v1410 = vpop.xlane.xlu0 %1409
        %v1411 = vsel %vm1326, %v1384, 0.0
        %1412 = vadd.xlane.f32.xlu0 %v1411
        %v1413 = vpop.xlane.xlu0 %1412
        %v1414 = vsel %vm1326, %v1386, 0.0
        %1415 = vadd.xlane.f32.xlu0 %v1414
        %v1416 = vpop.xlane.xlu0 %1415
        %v1417 = vsel %vm1326, %v1388, 0.0
        %1418 = vadd.xlane.f32.xlu0 %v1417
        %v1419 = vpop.xlane.xlu0 %1418
        %v1420 = vsel %vm1326, %v1390, 0.0
        %1421 = vadd.xlane.f32.xlu0 %v1420
        %v1422 = vpop.xlane.xlu0 %1421
        %v1423 = vsel %vm1326, %v1392, 0.0
        %1424 = vadd.xlane.f32.xlu0 %v1423
        %v1425 = vpop.xlane.xlu0 %1424
        %v1426 = vsel %vm1326, %v1394, 0.0
        %1427 = vadd.xlane.f32.xlu0 %v1426
        %v1428 = vpop.xlane.xlu0 %1427
        %v1429 = vsel %vm1326, %v1396, 0.0
        %1430 = vadd.xlane.f32.xlu0 %v1429
        %v1431 = vpop.xlane.xlu0 %1430
        %v1432 = vsel %vm1326, %v1398, 0.0
        %1433 = vadd.xlane.f32.xlu0 %v1432
        %v1434 = vpop.xlane.xlu0 %1433
        %v1435 = vrcp.pop %v1401
        %v1436 = vrcp.pop %v1404
        %v1437 = vrcp.pop %v1407
        %v1438 = vrcp.pop %v1410
        %v1439 = vrcp.pop %v1413
        %v1440 = vrcp.pop %v1416
        %v1441 = vrcp.pop %v1419
        %v1442 = vrcp.pop %v1422
        %v1443 = vrcp.pop %v1425
        %v1444 = vrcp.pop %v1428
        %v1445 = vrcp.pop %v1431
        %v1446 = vrcp.pop %v1434
        %v1447 = vpack.c.bf16 %v1378, %v1376
        %v1448 = vpack.c.bf16 %v1382, %v1380
        %v1449 = vpack.c.bf16 %v1386, %v1384
        %v1450 = vpack.c.bf16 %v1390, %v1388
        %v1451 = vpack.c.bf16 %v1394, %v1392
        %v1452 = vpack.c.bf16 %v1398, %v1396
        %1453 = vrot.lane.b32.xlu0 %v1232, 64
        %v1454 = vpop.permute.xlu0 %1453
        %1455 = vrot.lane.b32.xlu0 %v1233, 64
        %v1456 = vpop.permute.xlu0 %1455
        %1457 = vrot.lane.b32.xlu0 %v1234, 64
        %v1458 = vpop.permute.xlu0 %1457
        %1459 = vrot.lane.b32.xlu0 %v1235, 64
        %v1460 = vpop.permute.xlu0 %1459
        %1461 = vrot.lane.b32.xlu0 %v1236, 64
        %v1462 = vpop.permute.xlu0 %1461
        %1463 = vrot.lane.b32.xlu0 %v1237, 64
        %v1464 = vpop.permute.xlu0 %1463
        %v1472 = vsel %vm1326, %v1447, 0
        %v1475 = vsel %vm1326, %v1448, 0
        %v1478 = vsel %vm1326, %v1449, 0
        %v1481 = vsel %vm1326, %v1450, 0
        %v1484 = vsel %vm1326, %v1451, 0
        %v1487 = vsel %vm1326, %v1452, 0
        %1489 = vmatpush.bf16.msra.mxu0 0
        %1490 = vmatpush.bf16.msra.mxu0 0
        %1491 = vmatpush.bf16.msra.mxu0 %v1464
        %1492 = vmatpush.bf16.msra.mxu0 %v1462
        %1493 = vmatpush.bf16.msra.mxu0 %v1460
        %1494 = vmatpush.bf16.msra.mxu0 %v1458
        %1495 = vmatpush.bf16.msra.mxu0 %v1456
        %1496 = vmatpush.bf16.msra.mxu0 %v1454
        %1497 = vmatmul.bf16.gmra.mxu0 %v1472
        %v1498 = vpop.f32.mrf.mxu0
        %v1499 = vadd.f32 0.0, %v1498
        %v1500 = vpop.f32.mrf.mxu0
        %v1501 = vadd.f32 0.0, %v1500
        %1502 = vmatmul.bf16.gmra.mxu0 %v1475
        %v1503 = vpop.f32.mrf.mxu0
        %v1504 = vadd.f32 0.0, %v1503
        %v1505 = vpop.f32.mrf.mxu0
        %v1506 = vadd.f32 0.0, %v1505
        %1507 = vmatmul.bf16.gmra.mxu0 %v1478
        %v1508 = vpop.f32.mrf.mxu0
        %v1509 = vadd.f32 0.0, %v1508
        %v1510 = vpop.f32.mrf.mxu0
        %v1511 = vadd.f32 0.0, %v1510
        %1512 = vmatmul.bf16.gmra.mxu0 %v1481
        %v1513 = vpop.f32.mrf.mxu0
        %v1514 = vadd.f32 0.0, %v1513
        %v1515 = vpop.f32.mrf.mxu0
        %v1516 = vadd.f32 0.0, %v1515
        %1517 = vmatmul.bf16.gmra.mxu0 %v1484
        %v1518 = vpop.f32.mrf.mxu0
        %v1519 = vadd.f32 0.0, %v1518
        %v1520 = vpop.f32.mrf.mxu0
        %v1521 = vadd.f32 0.0, %v1520
        %1522 = vmatmul.bf16.gmra.mxu0 %v1487
        %v1523 = vpop.f32.mrf.mxu0
        %v1524 = vadd.f32 0.0, %v1523
        %v1525 = vpop.f32.mrf.mxu0
        %v1526 = vadd.f32 0.0, %v1525
        %1527 = vdwg.mxu0
        %v1528 = vmul.f32 %v1499, %v1435
        %v1529 = vmul.f32 %v1501, %v1436
        %v1530 = vmul.f32 %v1504, %v1437
        %v1531 = vmul.f32 %v1506, %v1438
        %v1532 = vmul.f32 %v1509, %v1439
        %v1533 = vmul.f32 %v1511, %v1440
        %v1534 = vmul.f32 %v1514, %v1441
        %v1535 = vmul.f32 %v1516, %v1442
        %v1536 = vmul.f32 %v1519, %v1443
        %v1537 = vmul.f32 %v1521, %v1444
        %v1538 = vmul.f32 %v1524, %v1445
        %v1539 = vmul.f32 %v1526, %v1446
        %1540 = vrot.lane.b32.xlu0 %v1232, 120
        %v1541 = vpop.permute.xlu0 %1540
        %1542 = vrot.lane.b32.xlu0 %v1233, 120
        %v1543 = vpop.permute.xlu0 %1542
        %1544 = vrot.lane.b32.xlu0 %v1234, 120
        %v1545 = vpop.permute.xlu0 %1544
        %1546 = vrot.lane.b32.xlu0 %v1235, 120
        %v1547 = vpop.permute.xlu0 %1546
        %1548 = vrot.lane.b32.xlu0 %v1236, 120
        %v1549 = vpop.permute.xlu0 %1548
        %1550 = vrot.lane.b32.xlu0 %v1237, 120
        %v1551 = vpop.permute.xlu0 %1550
        %1552 = vrot.lane.b32.xlu0 %v1232, 88
        %v1553 = vpop.permute.xlu0 %1552
        %1554 = vrot.lane.b32.xlu0 %v1233, 88
        %v1555 = vpop.permute.xlu0 %1554
        %1556 = vrot.lane.b32.xlu0 %v1234, 88
        %v1557 = vpop.permute.xlu0 %1556
        %1558 = vrot.lane.b32.xlu0 %v1235, 88
        %v1559 = vpop.permute.xlu0 %1558
        %1560 = vrot.lane.b32.xlu0 %v1236, 88
        %v1561 = vpop.permute.xlu0 %1560
        %1562 = vrot.lane.b32.xlu0 %v1237, 88
        %v1563 = vpop.permute.xlu0 %1562
        %v1565 = vsel %vm1250, %v1541, 0
        %v1568 = vsel %vm1250, %v1543, 0
        %v1571 = vsel %vm1250, %v1545, 0
        %v1574 = vsel %vm1250, %v1547, 0
        %v1577 = vsel %vm1250, %v1549, 0
        %v1580 = vsel %vm1250, %v1551, 0
        %v1583 = vsel %vm1250, %v1553, 0
        %v1586 = vsel %vm1250, %v1555, 0
        %v1589 = vsel %vm1250, %v1557, 0
        %v1592 = vsel %vm1250, %v1559, 0
        %v1595 = vsel %vm1250, %v1561, 0
        %v1598 = vsel %vm1250, %v1563, 0
        %1600 = vmatpush.bf16.xpose.msra.mxu0 0
        %1601 = vmatpush.bf16.xpose.msra.mxu0 0
        %1602 = vmatpush.bf16.xpose.msra.mxu0 %v1598
        %1603 = vmatpush.bf16.xpose.msra.mxu0 %v1595
        %1604 = vmatpush.bf16.xpose.msra.mxu0 %v1592
        %1605 = vmatpush.bf16.xpose.msra.mxu0 %v1589
        %1606 = vmatpush.bf16.xpose.msra.mxu0 %v1586
        %1607 = vmatpush.bf16.xpose.msra.mxu0 %v1583
        %1608 = vmatmul.bf16.gmra.mxu0 %v1565
        %v1609 = vpop.f32.mrf.mxu0
        %v1610 = vadd.f32 %v773, %v1609
        %v1611 = vpop.f32.mrf.mxu0
        %v1612 = vadd.f32 %v774, %v1611
        %1613 = vmatmul.bf16.gmra.mxu0 %v1568
        %v1614 = vpop.f32.mrf.mxu0
        %v1615 = vadd.f32 %v775, %v1614
        %v1616 = vpop.f32.mrf.mxu0
        %v1617 = vadd.f32 %v776, %v1616
        %1618 = vmatmul.bf16.gmra.mxu0 %v1571
        %v1619 = vpop.f32.mrf.mxu0
        %v1620 = vadd.f32 %v777, %v1619
        %v1621 = vpop.f32.mrf.mxu0
        %v1622 = vadd.f32 %v778, %v1621
        %1623 = vmatmul.bf16.gmra.mxu0 %v1574
        %v1624 = vpop.f32.mrf.mxu0
        %v1625 = vadd.f32 %v779, %v1624
        %v1626 = vpop.f32.mrf.mxu0
        %v1627 = vadd.f32 %v780, %v1626
        %1628 = vmatmul.bf16.gmra.mxu0 %v1577
        %v1629 = vpop.f32.mrf.mxu0
        %v1630 = vadd.f32 %v781, %v1629
        %v1631 = vpop.f32.mrf.mxu0
        %v1632 = vadd.f32 %v782, %v1631
        %1633 = vmatmul.bf16.gmra.mxu0 %v1580
        %v1634 = vpop.f32.mrf.mxu0
        %v1635 = vadd.f32 %v783, %v1634
        %v1636 = vpop.f32.mrf.mxu0
        %v1637 = vadd.f32 %v784, %v1636
        %1638 = vdwg.mxu0
        %v1639 = vsel %vm1326, %v1610, -inf
        %1640 = vmax.xlane.f32.xlu0 %v1639
        %v1641 = vpop.xlane.xlu0 %1640
        %v1642 = vsel %vm1326, %v1612, -inf
        %1643 = vmax.xlane.f32.xlu0 %v1642
        %v1644 = vpop.xlane.xlu0 %1643
        %v1645 = vsel %vm1326, %v1615, -inf
        %1646 = vmax.xlane.f32.xlu0 %v1645
        %v1647 = vpop.xlane.xlu0 %1646
        %v1648 = vsel %vm1326, %v1617, -inf
        %1649 = vmax.xlane.f32.xlu0 %v1648
        %v1650 = vpop.xlane.xlu0 %1649
        %v1651 = vsel %vm1326, %v1620, -inf
        %1652 = vmax.xlane.f32.xlu0 %v1651
        %v1653 = vpop.xlane.xlu0 %1652
        %v1654 = vsel %vm1326, %v1622, -inf
        %1655 = vmax.xlane.f32.xlu0 %v1654
        %v1656 = vpop.xlane.xlu0 %1655
        %v1657 = vsel %vm1326, %v1625, -inf
        %1658 = vmax.xlane.f32.xlu0 %v1657
        %v1659 = vpop.xlane.xlu0 %1658
        %v1660 = vsel %vm1326, %v1627, -inf
        %1661 = vmax.xlane.f32.xlu0 %v1660
        %v1662 = vpop.xlane.xlu0 %1661
        %v1663 = vsel %vm1326, %v1630, -inf
        %1664 = vmax.xlane.f32.xlu0 %v1663
        %v1665 = vpop.xlane.xlu0 %1664
        %v1666 = vsel %vm1326, %v1632, -inf
        %1667 = vmax.xlane.f32.xlu0 %v1666
        %v1668 = vpop.xlane.xlu0 %1667
        %v1669 = vsel %vm1326, %v1635, -inf
        %1670 = vmax.xlane.f32.xlu0 %v1669
        %v1671 = vpop.xlane.xlu0 %1670
        %v1672 = vsel %vm1326, %v1637, -inf
        %1673 = vmax.xlane.f32.xlu0 %v1672
        %v1674 = vpop.xlane.xlu0 %1673
        %v1675 = vsub.f32 %v1610, %v1641
        %v1676 = vsub.f32 %v1612, %v1644
        %v1677 = vsub.f32 %v1615, %v1647
        %v1678 = vsub.f32 %v1617, %v1650
        %v1679 = vsub.f32 %v1620, %v1653
        %v1680 = vsub.f32 %v1622, %v1656
        %v1681 = vsub.f32 %v1625, %v1659
        %v1682 = vsub.f32 %v1627, %v1662
        %v1683 = vsub.f32 %v1630, %v1665
        %v1684 = vsub.f32 %v1632, %v1668
        %v1685 = vsub.f32 %v1635, %v1671
        %v1686 = vsub.f32 %v1637, %v1674
        %v1687 = vmul.f32 %v1675, 1.442695
        %v1688 = vpow.pop %v1687
        %v1689 = vmul.f32 %v1676, 1.442695
        %v1690 = vpow.pop %v1689
        %v1691 = vmul.f32 %v1677, 1.442695
        %v1692 = vpow.pop %v1691
        %v1693 = vmul.f32 %v1678, 1.442695
        %v1694 = vpow.pop %v1693
        %v1695 = vmul.f32 %v1679, 1.442695
        %v1696 = vpow.pop %v1695
        %v1697 = vmul.f32 %v1680, 1.442695
        %v1698 = vpow.pop %v1697
        %v1699 = vmul.f32 %v1681, 1.442695
        %v1700 = vpow.pop %v1699
        %v1701 = vmul.f32 %v1682, 1.442695
        %v1702 = vpow.pop %v1701
        %v1703 = vmul.f32 %v1683, 1.442695
        %v1704 = vpow.pop %v1703
        %v1705 = vmul.f32 %v1684, 1.442695
        %v1706 = vpow.pop %v1705
        %v1707 = vmul.f32 %v1685, 1.442695
        %v1708 = vpow.pop %v1707
        %v1709 = vmul.f32 %v1686, 1.442695
        %v1710 = vpow.pop %v1709
        %v1711 = vsel %vm1326, %v1688, 0.0
        %1712 = vadd.xlane.f32.xlu0 %v1711
        %v1713 = vpop.xlane.xlu0 %1712
        %v1714 = vsel %vm1326, %v1690, 0.0
        %1715 = vadd.xlane.f32.xlu0 %v1714
        %v1716 = vpop.xlane.xlu0 %1715
        %v1717 = vsel %vm1326, %v1692, 0.0
        %1718 = vadd.xlane.f32.xlu0 %v1717
        %v1719 = vpop.xlane.xlu0 %1718
        %v1720 = vsel %vm1326, %v1694, 0.0
        %1721 = vadd.xlane.f32.xlu0 %v1720
        %v1722 = vpop.xlane.xlu0 %1721
        %v1723 = vsel %vm1326, %v1696, 0.0
        %1724 = vadd.xlane.f32.xlu0 %v1723
        %v1725 = vpop.xlane.xlu0 %1724
        %v1726 = vsel %vm1326, %v1698, 0.0
        %1727 = vadd.xlane.f32.xlu0 %v1726
        %v1728 = vpop.xlane.xlu0 %1727
        %v1729 = vsel %vm1326, %v1700, 0.0
        %1730 = vadd.xlane.f32.xlu0 %v1729
        %v1731 = vpop.xlane.xlu0 %1730
        %v1732 = vsel %vm1326, %v1702, 0.0
        %1733 = vadd.xlane.f32.xlu0 %v1732
        %v1734 = vpop.xlane.xlu0 %1733
        %v1735 = vsel %vm1326, %v1704, 0.0
        %1736 = vadd.xlane.f32.xlu0 %v1735
        %v1737 = vpop.xlane.xlu0 %1736
        %v1738 = vsel %vm1326, %v1706, 0.0
        %1739 = vadd.xlane.f32.xlu0 %v1738
        %v1740 = vpop.xlane.xlu0 %1739
        %v1741 = vsel %vm1326, %v1708, 0.0
        %1742 = vadd.xlane.f32.xlu0 %v1741
        %v1743 = vpop.xlane.xlu0 %1742
        %v1744 = vsel %vm1326, %v1710, 0.0
        %1745 = vadd.xlane.f32.xlu0 %v1744
        %v1746 = vpop.xlane.xlu0 %1745
        %v1747 = vrcp.pop %v1713
        %v1748 = vrcp.pop %v1716
        %v1749 = vrcp.pop %v1719
        %v1750 = vrcp.pop %v1722
        %v1751 = vrcp.pop %v1725
        %v1752 = vrcp.pop %v1728
        %v1753 = vrcp.pop %v1731
        %v1754 = vrcp.pop %v1734
        %v1755 = vrcp.pop %v1737
        %v1756 = vrcp.pop %v1740
        %v1757 = vrcp.pop %v1743
        %v1758 = vrcp.pop %v1746
        %v1759 = vpack.c.bf16 %v1690, %v1688
        %v1760 = vpack.c.bf16 %v1694, %v1692
        %v1761 = vpack.c.bf16 %v1698, %v1696
        %v1762 = vpack.c.bf16 %v1702, %v1700
        %v1763 = vpack.c.bf16 %v1706, %v1704
        %v1764 = vpack.c.bf16 %v1710, %v1708
        %1765 = vrot.lane.b32.xlu0 %v1232, 56
        %v1766 = vpop.permute.xlu0 %1765
        %1767 = vrot.lane.b32.xlu0 %v1233, 56
        %v1768 = vpop.permute.xlu0 %1767
        %1769 = vrot.lane.b32.xlu0 %v1234, 56
        %v1770 = vpop.permute.xlu0 %1769
        %1771 = vrot.lane.b32.xlu0 %v1235, 56
        %v1772 = vpop.permute.xlu0 %1771
        %1773 = vrot.lane.b32.xlu0 %v1236, 56
        %v1774 = vpop.permute.xlu0 %1773
        %1775 = vrot.lane.b32.xlu0 %v1237, 56
        %v1776 = vpop.permute.xlu0 %1775
        %v1784 = vsel %vm1326, %v1759, 0
        %v1787 = vsel %vm1326, %v1760, 0
        %v1790 = vsel %vm1326, %v1761, 0
        %v1793 = vsel %vm1326, %v1762, 0
        %v1796 = vsel %vm1326, %v1763, 0
        %v1799 = vsel %vm1326, %v1764, 0
        %1801 = vmatpush.bf16.msra.mxu0 0
        %1802 = vmatpush.bf16.msra.mxu0 0
        %1803 = vmatpush.bf16.msra.mxu0 %v1776
        %1804 = vmatpush.bf16.msra.mxu0 %v1774
        %1805 = vmatpush.bf16.msra.mxu0 %v1772
        %1806 = vmatpush.bf16.msra.mxu0 %v1770
        %1807 = vmatpush.bf16.msra.mxu0 %v1768
        %1808 = vmatpush.bf16.msra.mxu0 %v1766
        %1809 = vmatmul.bf16.gmra.mxu0 %v1784
        %v1810 = vpop.f32.mrf.mxu0
        %v1811 = vadd.f32 0.0, %v1810
        %v1812 = vpop.f32.mrf.mxu0
        %v1813 = vadd.f32 0.0, %v1812
        %1814 = vmatmul.bf16.gmra.mxu0 %v1787
        %v1815 = vpop.f32.mrf.mxu0
        %v1816 = vadd.f32 0.0, %v1815
        %v1817 = vpop.f32.mrf.mxu0
        %v1818 = vadd.f32 0.0, %v1817
        %1819 = vmatmul.bf16.gmra.mxu0 %v1790
        %v1820 = vpop.f32.mrf.mxu0
        %v1821 = vadd.f32 0.0, %v1820
        %v1822 = vpop.f32.mrf.mxu0
        %v1823 = vadd.f32 0.0, %v1822
        %1824 = vmatmul.bf16.gmra.mxu0 %v1793
        %v1825 = vpop.f32.mrf.mxu0
        %v1826 = vadd.f32 0.0, %v1825
        %v1827 = vpop.f32.mrf.mxu0
        %v1828 = vadd.f32 0.0, %v1827
        %1829 = vmatmul.bf16.gmra.mxu0 %v1796
        %v1830 = vpop.f32.mrf.mxu0
        %v1831 = vadd.f32 0.0, %v1830
        %v1832 = vpop.f32.mrf.mxu0
        %v1833 = vadd.f32 0.0, %v1832
        %1834 = vmatmul.bf16.gmra.mxu0 %v1799
        %v1835 = vpop.f32.mrf.mxu0
        %v1836 = vadd.f32 0.0, %v1835
        %v1837 = vpop.f32.mrf.mxu0
        %v1838 = vadd.f32 0.0, %v1837
        %1839 = vdwg.mxu0
        %v1840 = vmul.f32 %v1811, %v1747
        %v1841 = vmul.f32 %v1813, %v1748
        %v1842 = vmul.f32 %v1816, %v1749
        %v1843 = vmul.f32 %v1818, %v1750
        %v1844 = vmul.f32 %v1821, %v1751
        %v1845 = vmul.f32 %v1823, %v1752
        %v1846 = vmul.f32 %v1826, %v1753
        %v1847 = vmul.f32 %v1828, %v1754
        %v1848 = vmul.f32 %v1831, %v1755
        %v1849 = vmul.f32 %v1833, %v1756
        %v1850 = vmul.f32 %v1836, %v1757
        %v1851 = vmul.f32 %v1838, %v1758
        %1852 = vrot.lane.b32.xlu0 %v1232, 112
        %v1853 = vpop.permute.xlu0 %1852
        %1854 = vrot.lane.b32.xlu0 %v1233, 112
        %v1855 = vpop.permute.xlu0 %1854
        %1856 = vrot.lane.b32.xlu0 %v1234, 112
        %v1857 = vpop.permute.xlu0 %1856
        %1858 = vrot.lane.b32.xlu0 %v1235, 112
        %v1859 = vpop.permute.xlu0 %1858
        %1860 = vrot.lane.b32.xlu0 %v1236, 112
        %v1861 = vpop.permute.xlu0 %1860
        %1862 = vrot.lane.b32.xlu0 %v1237, 112
        %v1863 = vpop.permute.xlu0 %1862
        %1864 = vrot.lane.b32.xlu0 %v1232, 80
        %v1865 = vpop.permute.xlu0 %1864
        %1866 = vrot.lane.b32.xlu0 %v1233, 80
        %v1867 = vpop.permute.xlu0 %1866
        %1868 = vrot.lane.b32.xlu0 %v1234, 80
        %v1869 = vpop.permute.xlu0 %1868
        %1870 = vrot.lane.b32.xlu0 %v1235, 80
        %v1871 = vpop.permute.xlu0 %1870
        %1872 = vrot.lane.b32.xlu0 %v1236, 80
        %v1873 = vpop.permute.xlu0 %1872
        %1874 = vrot.lane.b32.xlu0 %v1237, 80
        %v1875 = vpop.permute.xlu0 %1874
        %v1877 = vsel %vm1250, %v1853, 0
        %v1880 = vsel %vm1250, %v1855, 0
        %v1883 = vsel %vm1250, %v1857, 0
        %v1886 = vsel %vm1250, %v1859, 0
        %v1889 = vsel %vm1250, %v1861, 0
        %v1892 = vsel %vm1250, %v1863, 0
        %v1895 = vsel %vm1250, %v1865, 0
        %v1898 = vsel %vm1250, %v1867, 0
        %v1901 = vsel %vm1250, %v1869, 0
        %v1904 = vsel %vm1250, %v1871, 0
        %v1907 = vsel %vm1250, %v1873, 0
        %v1910 = vsel %vm1250, %v1875, 0
        %1912 = vmatpush.bf16.xpose.msra.mxu0 0
        %1913 = vmatpush.bf16.xpose.msra.mxu0 0
        %1914 = vmatpush.bf16.xpose.msra.mxu0 %v1910
        %1915 = vmatpush.bf16.xpose.msra.mxu0 %v1907
        %1916 = vmatpush.bf16.xpose.msra.mxu0 %v1904
        %1917 = vmatpush.bf16.xpose.msra.mxu0 %v1901
        %1918 = vmatpush.bf16.xpose.msra.mxu0 %v1898
        %1919 = vmatpush.bf16.xpose.msra.mxu0 %v1895
        %1920 = vmatmul.bf16.gmra.mxu0 %v1877
        %v1921 = vpop.f32.mrf.mxu0
        %v1922 = vadd.f32 %v773, %v1921
        %v1923 = vpop.f32.mrf.mxu0
        %v1924 = vadd.f32 %v774, %v1923
        %1925 = vmatmul.bf16.gmra.mxu0 %v1880
        %v1926 = vpop.f32.mrf.mxu0
        %v1927 = vadd.f32 %v775, %v1926
        %v1928 = vpop.f32.mrf.mxu0
        %v1929 = vadd.f32 %v776, %v1928
        %1930 = vmatmul.bf16.gmra.mxu0 %v1883
        %v1931 = vpop.f32.mrf.mxu0
        %v1932 = vadd.f32 %v777, %v1931
        %v1933 = vpop.f32.mrf.mxu0
        %v1934 = vadd.f32 %v778, %v1933
        %1935 = vmatmul.bf16.gmra.mxu0 %v1886
        %v1936 = vpop.f32.mrf.mxu0
        %v1937 = vadd.f32 %v779, %v1936
        %v1938 = vpop.f32.mrf.mxu0
        %v1939 = vadd.f32 %v780, %v1938
        %1940 = vmatmul.bf16.gmra.mxu0 %v1889
        %v1941 = vpop.f32.mrf.mxu0
        %v1942 = vadd.f32 %v781, %v1941
        %v1943 = vpop.f32.mrf.mxu0
        %v1944 = vadd.f32 %v782, %v1943
        %1945 = vmatmul.bf16.gmra.mxu0 %v1892
        %v1946 = vpop.f32.mrf.mxu0
        %v1947 = vadd.f32 %v783, %v1946
        %v1948 = vpop.f32.mrf.mxu0
        %v1949 = vadd.f32 %v784, %v1948
        %1950 = vdwg.mxu0
        %v1951 = vsel %vm1326, %v1922, -inf
        %1952 = vmax.xlane.f32.xlu0 %v1951
        %v1953 = vpop.xlane.xlu0 %1952
        %v1954 = vsel %vm1326, %v1924, -inf
        %1955 = vmax.xlane.f32.xlu0 %v1954
        %v1956 = vpop.xlane.xlu0 %1955
        %v1957 = vsel %vm1326, %v1927, -inf
        %1958 = vmax.xlane.f32.xlu0 %v1957
        %v1959 = vpop.xlane.xlu0 %1958
        %v1960 = vsel %vm1326, %v1929, -inf
        %1961 = vmax.xlane.f32.xlu0 %v1960
        %v1962 = vpop.xlane.xlu0 %1961
        %v1963 = vsel %vm1326, %v1932, -inf
        %1964 = vmax.xlane.f32.xlu0 %v1963
        %v1965 = vpop.xlane.xlu0 %1964
        %v1966 = vsel %vm1326, %v1934, -inf
        %1967 = vmax.xlane.f32.xlu0 %v1966
        %v1968 = vpop.xlane.xlu0 %1967
        %v1969 = vsel %vm1326, %v1937, -inf
        %1970 = vmax.xlane.f32.xlu0 %v1969
        %v1971 = vpop.xlane.xlu0 %1970
        %v1972 = vsel %vm1326, %v1939, -inf
        %1973 = vmax.xlane.f32.xlu0 %v1972
        %v1974 = vpop.xlane.xlu0 %1973
        %v1975 = vsel %vm1326, %v1942, -inf
        %1976 = vmax.xlane.f32.xlu0 %v1975
        %v1977 = vpop.xlane.xlu0 %1976
        %v1978 = vsel %vm1326, %v1944, -inf
        %1979 = vmax.xlane.f32.xlu0 %v1978
        %v1980 = vpop.xlane.xlu0 %1979
        %v1981 = vsel %vm1326, %v1947, -inf
        %1982 = vmax.xlane.f32.xlu0 %v1981
        %v1983 = vpop.xlane.xlu0 %1982
        %v1984 = vsel %vm1326, %v1949, -inf
        %1985 = vmax.xlane.f32.xlu0 %v1984
        %v1986 = vpop.xlane.xlu0 %1985
        %v1987 = vsub.f32 %v1922, %v1953
        %v1988 = vsub.f32 %v1924, %v1956
        %v1989 = vsub.f32 %v1927, %v1959
        %v1990 = vsub.f32 %v1929, %v1962
        %v1991 = vsub.f32 %v1932, %v1965
        %v1992 = vsub.f32 %v1934, %v1968
        %v1993 = vsub.f32 %v1937, %v1971
        %v1994 = vsub.f32 %v1939, %v1974
        %v1995 = vsub.f32 %v1942, %v1977
        %v1996 = vsub.f32 %v1944, %v1980
        %v1997 = vsub.f32 %v1947, %v1983
        %v1998 = vsub.f32 %v1949, %v1986
        %v1999 = vmul.f32 %v1987, 1.442695
        %v2000 = vpow.pop %v1999
        %v2001 = vmul.f32 %v1988, 1.442695
        %v2002 = vpow.pop %v2001
        %v2003 = vmul.f32 %v1989, 1.442695
        %v2004 = vpow.pop %v2003
        %v2005 = vmul.f32 %v1990, 1.442695
        %v2006 = vpow.pop %v2005
        %v2007 = vmul.f32 %v1991, 1.442695
        %v2008 = vpow.pop %v2007
        %v2009 = vmul.f32 %v1992, 1.442695
        %v2010 = vpow.pop %v2009
        %v2011 = vmul.f32 %v1993, 1.442695
        %v2012 = vpow.pop %v2011
        %v2013 = vmul.f32 %v1994, 1.442695
        %v2014 = vpow.pop %v2013
        %v2015 = vmul.f32 %v1995, 1.442695
        %v2016 = vpow.pop %v2015
        %v2017 = vmul.f32 %v1996, 1.442695
        %v2018 = vpow.pop %v2017
        %v2019 = vmul.f32 %v1997, 1.442695
        %v2020 = vpow.pop %v2019
        %v2021 = vmul.f32 %v1998, 1.442695
        %v2022 = vpow.pop %v2021
        %v2023 = vsel %vm1326, %v2000, 0.0
        %2024 = vadd.xlane.f32.xlu0 %v2023
        %v2025 = vpop.xlane.xlu0 %2024
        %v2026 = vsel %vm1326, %v2002, 0.0
        %2027 = vadd.xlane.f32.xlu0 %v2026
        %v2028 = vpop.xlane.xlu0 %2027
        %v2029 = vsel %vm1326, %v2004, 0.0
        %2030 = vadd.xlane.f32.xlu0 %v2029
        %v2031 = vpop.xlane.xlu0 %2030
        %v2032 = vsel %vm1326, %v2006, 0.0
        %2033 = vadd.xlane.f32.xlu0 %v2032
        %v2034 = vpop.xlane.xlu0 %2033
        %v2035 = vsel %vm1326, %v2008, 0.0
        %2036 = vadd.xlane.f32.xlu0 %v2035
        %v2037 = vpop.xlane.xlu0 %2036
        %v2038 = vsel %vm1326, %v2010, 0.0
        %2039 = vadd.xlane.f32.xlu0 %v2038
        %v2040 = vpop.xlane.xlu0 %2039
        %v2041 = vsel %vm1326, %v2012, 0.0
        %2042 = vadd.xlane.f32.xlu0 %v2041
        %v2043 = vpop.xlane.xlu0 %2042
        %v2044 = vsel %vm1326, %v2014, 0.0
        %2045 = vadd.xlane.f32.xlu0 %v2044
        %v2046 = vpop.xlane.xlu0 %2045
        %v2047 = vsel %vm1326, %v2016, 0.0
        %2048 = vadd.xlane.f32.xlu0 %v2047
        %v2049 = vpop.xlane.xlu0 %2048
        %v2050 = vsel %vm1326, %v2018, 0.0
        %2051 = vadd.xlane.f32.xlu0 %v2050
        %v2052 = vpop.xlane.xlu0 %2051
        %v2053 = vsel %vm1326, %v2020, 0.0
        %2054 = vadd.xlane.f32.xlu0 %v2053
        %v2055 = vpop.xlane.xlu0 %2054
        %v2056 = vsel %vm1326, %v2022, 0.0
        %2057 = vadd.xlane.f32.xlu0 %v2056
        %v2058 = vpop.xlane.xlu0 %2057
        %v2059 = vrcp.pop %v2025
        %v2060 = vrcp.pop %v2028
        %v2061 = vrcp.pop %v2031
        %v2062 = vrcp.pop %v2034
        %v2063 = vrcp.pop %v2037
        %v2064 = vrcp.pop %v2040
        %v2065 = vrcp.pop %v2043
        %v2066 = vrcp.pop %v2046
        %v2067 = vrcp.pop %v2049
        %v2068 = vrcp.pop %v2052
        %v2069 = vrcp.pop %v2055
        %v2070 = vrcp.pop %v2058
        %v2071 = vpack.c.bf16 %v2002, %v2000
        %v2072 = vpack.c.bf16 %v2006, %v2004
        %v2073 = vpack.c.bf16 %v2010, %v2008
        %v2074 = vpack.c.bf16 %v2014, %v2012
        %v2075 = vpack.c.bf16 %v2018, %v2016
        %v2076 = vpack.c.bf16 %v2022, %v2020
        %2077 = vrot.lane.b32.xlu0 %v1232, 48
        %v2078 = vpop.permute.xlu0 %2077
        %2079 = vrot.lane.b32.xlu0 %v1233, 48
        %v2080 = vpop.permute.xlu0 %2079
        %2081 = vrot.lane.b32.xlu0 %v1234, 48
        %v2082 = vpop.permute.xlu0 %2081
        %2083 = vrot.lane.b32.xlu0 %v1235, 48
        %v2084 = vpop.permute.xlu0 %2083
        %2085 = vrot.lane.b32.xlu0 %v1236, 48
        %v2086 = vpop.permute.xlu0 %2085
        %2087 = vrot.lane.b32.xlu0 %v1237, 48
        %v2088 = vpop.permute.xlu0 %2087
        %v2096 = vsel %vm1326, %v2071, 0
        %v2099 = vsel %vm1326, %v2072, 0
        %v2102 = vsel %vm1326, %v2073, 0
        %v2105 = vsel %vm1326, %v2074, 0
        %v2108 = vsel %vm1326, %v2075, 0
        %v2111 = vsel %vm1326, %v2076, 0
        %2113 = vmatpush.bf16.msra.mxu0 0
        %2114 = vmatpush.bf16.msra.mxu0 0
        %2115 = vmatpush.bf16.msra.mxu0 %v2088
        %2116 = vmatpush.bf16.msra.mxu0 %v2086
        %2117 = vmatpush.bf16.msra.mxu0 %v2084
        %2118 = vmatpush.bf16.msra.mxu0 %v2082
        %2119 = vmatpush.bf16.msra.mxu0 %v2080
        %2120 = vmatpush.bf16.msra.mxu0 %v2078
        %2121 = vmatmul.bf16.gmra.mxu0 %v2096
        %v2122 = vpop.f32.mrf.mxu0
        %v2123 = vadd.f32 0.0, %v2122
        %v2124 = vpop.f32.mrf.mxu0
        %v2125 = vadd.f32 0.0, %v2124
        %2126 = vmatmul.bf16.gmra.mxu0 %v2099
        %v2127 = vpop.f32.mrf.mxu0
        %v2128 = vadd.f32 0.0, %v2127
        %v2129 = vpop.f32.mrf.mxu0
        %v2130 = vadd.f32 0.0, %v2129
        %2131 = vmatmul.bf16.gmra.mxu0 %v2102
        %v2132 = vpop.f32.mrf.mxu0
        %v2133 = vadd.f32 0.0, %v2132
        %v2134 = vpop.f32.mrf.mxu0
        %v2135 = vadd.f32 0.0, %v2134
        %2136 = vmatmul.bf16.gmra.mxu0 %v2105
        %v2137 = vpop.f32.mrf.mxu0
        %v2138 = vadd.f32 0.0, %v2137
        %v2139 = vpop.f32.mrf.mxu0
        %v2140 = vadd.f32 0.0, %v2139
        %2141 = vmatmul.bf16.gmra.mxu0 %v2108
        %v2142 = vpop.f32.mrf.mxu0
        %v2143 = vadd.f32 0.0, %v2142
        %v2144 = vpop.f32.mrf.mxu0
        %v2145 = vadd.f32 0.0, %v2144
        %2146 = vmatmul.bf16.gmra.mxu0 %v2111
        %v2147 = vpop.f32.mrf.mxu0
        %v2148 = vadd.f32 0.0, %v2147
        %v2149 = vpop.f32.mrf.mxu0
        %v2150 = vadd.f32 0.0, %v2149
        %2151 = vdwg.mxu0
        %v2152 = vmul.f32 %v2123, %v2059
        %v2153 = vmul.f32 %v2125, %v2060
        %v2154 = vmul.f32 %v2128, %v2061
        %v2155 = vmul.f32 %v2130, %v2062
        %v2156 = vmul.f32 %v2133, %v2063
        %v2157 = vmul.f32 %v2135, %v2064
        %v2158 = vmul.f32 %v2138, %v2065
        %v2159 = vmul.f32 %v2140, %v2066
        %v2160 = vmul.f32 %v2143, %v2067
        %v2161 = vmul.f32 %v2145, %v2068
        %v2162 = vmul.f32 %v2148, %v2069
        %v2163 = vmul.f32 %v2150, %v2070
        %2164 = vrot.lane.b32.xlu0 %v1232, 104
        %v2165 = vpop.permute.xlu0 %2164
        %2166 = vrot.lane.b32.xlu0 %v1233, 104
        %v2167 = vpop.permute.xlu0 %2166
        %2168 = vrot.lane.b32.xlu0 %v1234, 104
        %v2169 = vpop.permute.xlu0 %2168
        %2170 = vrot.lane.b32.xlu0 %v1235, 104
        %v2171 = vpop.permute.xlu0 %2170
        %2172 = vrot.lane.b32.xlu0 %v1236, 104
        %v2173 = vpop.permute.xlu0 %2172
        %2174 = vrot.lane.b32.xlu0 %v1237, 104
        %v2175 = vpop.permute.xlu0 %2174
        %2176 = vrot.lane.b32.xlu0 %v1232, 72
        %v2177 = vpop.permute.xlu0 %2176
        %2178 = vrot.lane.b32.xlu0 %v1233, 72
        %v2179 = vpop.permute.xlu0 %2178
        %2180 = vrot.lane.b32.xlu0 %v1234, 72
        %v2181 = vpop.permute.xlu0 %2180
        %2182 = vrot.lane.b32.xlu0 %v1235, 72
        %v2183 = vpop.permute.xlu0 %2182
        %2184 = vrot.lane.b32.xlu0 %v1236, 72
        %v2185 = vpop.permute.xlu0 %2184
        %2186 = vrot.lane.b32.xlu0 %v1237, 72
        %v2187 = vpop.permute.xlu0 %2186
        %v2189 = vsel %vm1250, %v2165, 0
        %v2192 = vsel %vm1250, %v2167, 0
        %v2195 = vsel %vm1250, %v2169, 0
        %v2198 = vsel %vm1250, %v2171, 0
        %v2201 = vsel %vm1250, %v2173, 0
        %v2204 = vsel %vm1250, %v2175, 0
        %v2207 = vsel %vm1250, %v2177, 0
        %v2210 = vsel %vm1250, %v2179, 0
        %v2213 = vsel %vm1250, %v2181, 0
        %v2216 = vsel %vm1250, %v2183, 0
        %v2219 = vsel %vm1250, %v2185, 0
        %v2222 = vsel %vm1250, %v2187, 0
        %2224 = vmatpush.bf16.xpose.msra.mxu0 0
        %2225 = vmatpush.bf16.xpose.msra.mxu0 0
        %2226 = vmatpush.bf16.xpose.msra.mxu0 %v2222
        %2227 = vmatpush.bf16.xpose.msra.mxu0 %v2219
        %2228 = vmatpush.bf16.xpose.msra.mxu0 %v2216
        %2229 = vmatpush.bf16.xpose.msra.mxu0 %v2213
        %2230 = vmatpush.bf16.xpose.msra.mxu0 %v2210
        %2231 = vmatpush.bf16.xpose.msra.mxu0 %v2207
        %2232 = vmatmul.bf16.gmra.mxu0 %v2189
        %v2233 = vpop.f32.mrf.mxu0
        %v2234 = vadd.f32 %v773, %v2233
        %v2235 = vpop.f32.mrf.mxu0
        %v2236 = vadd.f32 %v774, %v2235
        %2237 = vmatmul.bf16.gmra.mxu0 %v2192
        %v2238 = vpop.f32.mrf.mxu0
        %v2239 = vadd.f32 %v775, %v2238
        %v2240 = vpop.f32.mrf.mxu0
        %v2241 = vadd.f32 %v776, %v2240
        %2242 = vmatmul.bf16.gmra.mxu0 %v2195
        %v2243 = vpop.f32.mrf.mxu0
        %v2244 = vadd.f32 %v777, %v2243
        %v2245 = vpop.f32.mrf.mxu0
        %v2246 = vadd.f32 %v778, %v2245
        %2247 = vmatmul.bf16.gmra.mxu0 %v2198
        %v2248 = vpop.f32.mrf.mxu0
        %v2249 = vadd.f32 %v779, %v2248
        %v2250 = vpop.f32.mrf.mxu0
        %v2251 = vadd.f32 %v780, %v2250
        %2252 = vmatmul.bf16.gmra.mxu0 %v2201
        %v2253 = vpop.f32.mrf.mxu0
        %v2254 = vadd.f32 %v781, %v2253
        %v2255 = vpop.f32.mrf.mxu0
        %v2256 = vadd.f32 %v782, %v2255
        %2257 = vmatmul.bf16.gmra.mxu0 %v2204
        %v2258 = vpop.f32.mrf.mxu0
        %v2259 = vadd.f32 %v783, %v2258
        %v2260 = vpop.f32.mrf.mxu0
        %v2261 = vadd.f32 %v784, %v2260
        %2262 = vdwg.mxu0
        %v2263 = vsel %vm1326, %v2234, -inf
        %2264 = vmax.xlane.f32.xlu0 %v2263
        %v2265 = vpop.xlane.xlu0 %2264
        %v2266 = vsel %vm1326, %v2236, -inf
        %2267 = vmax.xlane.f32.xlu0 %v2266
        %v2268 = vpop.xlane.xlu0 %2267
        %v2269 = vsel %vm1326, %v2239, -inf
        %2270 = vmax.xlane.f32.xlu0 %v2269
        %v2271 = vpop.xlane.xlu0 %2270
        %v2272 = vsel %vm1326, %v2241, -inf
        %2273 = vmax.xlane.f32.xlu0 %v2272
        %v2274 = vpop.xlane.xlu0 %2273
        %v2275 = vsel %vm1326, %v2244, -inf
        %2276 = vmax.xlane.f32.xlu0 %v2275
        %v2277 = vpop.xlane.xlu0 %2276
        %v2278 = vsel %vm1326, %v2246, -inf
        %2279 = vmax.xlane.f32.xlu0 %v2278
        %v2280 = vpop.xlane.xlu0 %2279
        %v2281 = vsel %vm1326, %v2249, -inf
        %2282 = vmax.xlane.f32.xlu0 %v2281
        %v2283 = vpop.xlane.xlu0 %2282
        %v2284 = vsel %vm1326, %v2251, -inf
        %2285 = vmax.xlane.f32.xlu0 %v2284
        %v2286 = vpop.xlane.xlu0 %2285
        %v2287 = vsel %vm1326, %v2254, -inf
        %2288 = vmax.xlane.f32.xlu0 %v2287
        %v2289 = vpop.xlane.xlu0 %2288
        %v2290 = vsel %vm1326, %v2256, -inf
        %2291 = vmax.xlane.f32.xlu0 %v2290
        %v2292 = vpop.xlane.xlu0 %2291
        %v2293 = vsel %vm1326, %v2259, -inf
        %2294 = vmax.xlane.f32.xlu0 %v2293
        %v2295 = vpop.xlane.xlu0 %2294
        %v2296 = vsel %vm1326, %v2261, -inf
        %2297 = vmax.xlane.f32.xlu0 %v2296
        %v2298 = vpop.xlane.xlu0 %2297
        %v2299 = vsub.f32 %v2234, %v2265
        %v2300 = vsub.f32 %v2236, %v2268
        %v2301 = vsub.f32 %v2239, %v2271
        %v2302 = vsub.f32 %v2241, %v2274
        %v2303 = vsub.f32 %v2244, %v2277
        %v2304 = vsub.f32 %v2246, %v2280
        %v2305 = vsub.f32 %v2249, %v2283
        %v2306 = vsub.f32 %v2251, %v2286
        %v2307 = vsub.f32 %v2254, %v2289
        %v2308 = vsub.f32 %v2256, %v2292
        %v2309 = vsub.f32 %v2259, %v2295
        %v2310 = vsub.f32 %v2261, %v2298
        %v2311 = vmul.f32 %v2299, 1.442695
        %v2312 = vpow.pop %v2311
        %v2313 = vmul.f32 %v2300, 1.442695
        %v2314 = vpow.pop %v2313
        %v2315 = vmul.f32 %v2301, 1.442695
        %v2316 = vpow.pop %v2315
        %v2317 = vmul.f32 %v2302, 1.442695
        %v2318 = vpow.pop %v2317
        %v2319 = vmul.f32 %v2303, 1.442695
        %v2320 = vpow.pop %v2319
        %v2321 = vmul.f32 %v2304, 1.442695
        %v2322 = vpow.pop %v2321
        %v2323 = vmul.f32 %v2305, 1.442695
        %v2324 = vpow.pop %v2323
        %v2325 = vmul.f32 %v2306, 1.442695
        %v2326 = vpow.pop %v2325
        %v2327 = vmul.f32 %v2307, 1.442695
        %v2328 = vpow.pop %v2327
        %v2329 = vmul.f32 %v2308, 1.442695
        %v2330 = vpow.pop %v2329
        %v2331 = vmul.f32 %v2309, 1.442695
        %v2332 = vpow.pop %v2331
        %v2333 = vmul.f32 %v2310, 1.442695
        %v2334 = vpow.pop %v2333
        %v2335 = vsel %vm1326, %v2312, 0.0
        %2336 = vadd.xlane.f32.xlu0 %v2335
        %v2337 = vpop.xlane.xlu0 %2336
        %v2338 = vsel %vm1326, %v2314, 0.0
        %2339 = vadd.xlane.f32.xlu0 %v2338
        %v2340 = vpop.xlane.xlu0 %2339
        %v2341 = vsel %vm1326, %v2316, 0.0
        %2342 = vadd.xlane.f32.xlu0 %v2341
        %v2343 = vpop.xlane.xlu0 %2342
        %v2344 = vsel %vm1326, %v2318, 0.0
        %2345 = vadd.xlane.f32.xlu0 %v2344
        %v2346 = vpop.xlane.xlu0 %2345
        %v2347 = vsel %vm1326, %v2320, 0.0
        %2348 = vadd.xlane.f32.xlu0 %v2347
        %v2349 = vpop.xlane.xlu0 %2348
        %v2350 = vsel %vm1326, %v2322, 0.0
        %2351 = vadd.xlane.f32.xlu0 %v2350
        %v2352 = vpop.xlane.xlu0 %2351
        %v2353 = vsel %vm1326, %v2324, 0.0
        %2354 = vadd.xlane.f32.xlu0 %v2353
        %v2355 = vpop.xlane.xlu0 %2354
        %v2356 = vsel %vm1326, %v2326, 0.0
        %2357 = vadd.xlane.f32.xlu0 %v2356
        %v2358 = vpop.xlane.xlu0 %2357
        %v2359 = vsel %vm1326, %v2328, 0.0
        %2360 = vadd.xlane.f32.xlu0 %v2359
        %v2361 = vpop.xlane.xlu0 %2360
        %v2362 = vsel %vm1326, %v2330, 0.0
        %2363 = vadd.xlane.f32.xlu0 %v2362
        %v2364 = vpop.xlane.xlu0 %2363
        %v2365 = vsel %vm1326, %v2332, 0.0
        %2366 = vadd.xlane.f32.xlu0 %v2365
        %v2367 = vpop.xlane.xlu0 %2366
        %v2368 = vsel %vm1326, %v2334, 0.0
        %2369 = vadd.xlane.f32.xlu0 %v2368
        %v2370 = vpop.xlane.xlu0 %2369
        %v2371 = vrcp.pop %v2337
        %v2372 = vrcp.pop %v2340
        %v2373 = vrcp.pop %v2343
        %v2374 = vrcp.pop %v2346
        %v2375 = vrcp.pop %v2349
        %v2376 = vrcp.pop %v2352
        %v2377 = vrcp.pop %v2355
        %v2378 = vrcp.pop %v2358
        %v2379 = vrcp.pop %v2361
        %v2380 = vrcp.pop %v2364
        %v2381 = vrcp.pop %v2367
        %v2382 = vrcp.pop %v2370
        %v2383 = vpack.c.bf16 %v2314, %v2312
        %v2384 = vpack.c.bf16 %v2318, %v2316
        %v2385 = vpack.c.bf16 %v2322, %v2320
        %v2386 = vpack.c.bf16 %v2326, %v2324
        %v2387 = vpack.c.bf16 %v2330, %v2328
        %v2388 = vpack.c.bf16 %v2334, %v2332
        %2389 = vrot.lane.b32.xlu0 %v1232, 40
        %v2390 = vpop.permute.xlu0 %2389
        %2391 = vrot.lane.b32.xlu0 %v1233, 40
        %v2392 = vpop.permute.xlu0 %2391
        %2393 = vrot.lane.b32.xlu0 %v1234, 40
        %v2394 = vpop.permute.xlu0 %2393
        %2395 = vrot.lane.b32.xlu0 %v1235, 40
        %v2396 = vpop.permute.xlu0 %2395
        %2397 = vrot.lane.b32.xlu0 %v1236, 40
        %v2398 = vpop.permute.xlu0 %2397
        %2399 = vrot.lane.b32.xlu0 %v1237, 40
        %v2400 = vpop.permute.xlu0 %2399
        %v2408 = vsel %vm1326, %v2383, 0
        %v2411 = vsel %vm1326, %v2384, 0
        %v2414 = vsel %vm1326, %v2385, 0
        %v2417 = vsel %vm1326, %v2386, 0
        %v2420 = vsel %vm1326, %v2387, 0
        %v2423 = vsel %vm1326, %v2388, 0
        %2425 = vmatpush.bf16.msra.mxu0 0
        %2426 = vmatpush.bf16.msra.mxu0 0
        %2427 = vmatpush.bf16.msra.mxu0 %v2400
        %2428 = vmatpush.bf16.msra.mxu0 %v2398
        %2429 = vmatpush.bf16.msra.mxu0 %v2396
        %2430 = vmatpush.bf16.msra.mxu0 %v2394
        %2431 = vmatpush.bf16.msra.mxu0 %v2392
        %2432 = vmatpush.bf16.msra.mxu0 %v2390
        %2433 = vmatmul.bf16.gmra.mxu0 %v2408
        %v2434 = vpop.f32.mrf.mxu0
        %v2435 = vadd.f32 0.0, %v2434
        %v2436 = vpop.f32.mrf.mxu0
        %v2437 = vadd.f32 0.0, %v2436
        %2438 = vmatmul.bf16.gmra.mxu0 %v2411
        %v2439 = vpop.f32.mrf.mxu0
        %v2440 = vadd.f32 0.0, %v2439
        %v2441 = vpop.f32.mrf.mxu0
        %v2442 = vadd.f32 0.0, %v2441
        %2443 = vmatmul.bf16.gmra.mxu0 %v2414
        %v2444 = vpop.f32.mrf.mxu0
        %v2445 = vadd.f32 0.0, %v2444
        %v2446 = vpop.f32.mrf.mxu0
        %v2447 = vadd.f32 0.0, %v2446
        %2448 = vmatmul.bf16.gmra.mxu0 %v2417
        %v2449 = vpop.f32.mrf.mxu0
        %v2450 = vadd.f32 0.0, %v2449
        %v2451 = vpop.f32.mrf.mxu0
        %v2452 = vadd.f32 0.0, %v2451
        %2453 = vmatmul.bf16.gmra.mxu0 %v2420
        %v2454 = vpop.f32.mrf.mxu0
        %v2455 = vadd.f32 0.0, %v2454
        %v2456 = vpop.f32.mrf.mxu0
        %v2457 = vadd.f32 0.0, %v2456
        %2458 = vmatmul.bf16.gmra.mxu0 %v2423
        %v2459 = vpop.f32.mrf.mxu0
        %v2460 = vadd.f32 0.0, %v2459
        %v2461 = vpop.f32.mrf.mxu0
        %v2462 = vadd.f32 0.0, %v2461
        %2463 = vdwg.mxu0
        %v2464 = vmul.f32 %v2435, %v2371
        %v2465 = vmul.f32 %v2437, %v2372
        %v2466 = vmul.f32 %v2440, %v2373
        %v2467 = vmul.f32 %v2442, %v2374
        %v2468 = vmul.f32 %v2445, %v2375
        %v2469 = vmul.f32 %v2447, %v2376
        %v2470 = vmul.f32 %v2450, %v2377
        %v2471 = vmul.f32 %v2452, %v2378
        %v2472 = vmul.f32 %v2455, %v2379
        %v2473 = vmul.f32 %v2457, %v2380
        %v2474 = vmul.f32 %v2460, %v2381
        %v2475 = vmul.f32 %v2462, %v2382
        %2488 = vrot.lane.b32.xlu0 %v1840, 8
        %v2489 = vpop.permute.xlu0 %2488
        %2490 = vrot.lane.b32.xlu0 %v1841, 8
        %v2491 = vpop.permute.xlu0 %2490
        %2492 = vrot.lane.b32.xlu0 %v1842, 8
        %v2493 = vpop.permute.xlu0 %2492
        %2494 = vrot.lane.b32.xlu0 %v1843, 8
        %v2495 = vpop.permute.xlu0 %2494
        %2496 = vrot.lane.b32.xlu0 %v1844, 8
        %v2497 = vpop.permute.xlu0 %2496
        %2498 = vrot.lane.b32.xlu0 %v1845, 8
        %v2499 = vpop.permute.xlu0 %2498
        %2500 = vrot.lane.b32.xlu0 %v1846, 8
        %v2501 = vpop.permute.xlu0 %2500
        %2502 = vrot.lane.b32.xlu0 %v1847, 8
        %v2503 = vpop.permute.xlu0 %2502
        %2504 = vrot.lane.b32.xlu0 %v1848, 8
        %v2505 = vpop.permute.xlu0 %2504
        %2506 = vrot.lane.b32.xlu0 %v1849, 8
        %v2507 = vpop.permute.xlu0 %2506
        %2508 = vrot.lane.b32.xlu0 %v1850, 8
        %v2509 = vpop.permute.xlu0 %2508
        %2510 = vrot.lane.b32.xlu0 %v1851, 8
        %v2511 = vpop.permute.xlu0 %2510
        %2536 = vrot.lane.b32.xlu0 %v2152, 16
        %v2537 = vpop.permute.xlu0 %2536
        %2538 = vrot.lane.b32.xlu0 %v2153, 16
        %v2539 = vpop.permute.xlu0 %2538
        %2540 = vrot.lane.b32.xlu0 %v2154, 16
        %v2541 = vpop.permute.xlu0 %2540
        %2542 = vrot.lane.b32.xlu0 %v2155, 16
        %v2543 = vpop.permute.xlu0 %2542
        %2544 = vrot.lane.b32.xlu0 %v2156, 16
        %v2545 = vpop.permute.xlu0 %2544
        %2546 = vrot.lane.b32.xlu0 %v2157, 16
        %v2547 = vpop.permute.xlu0 %2546
        %2548 = vrot.lane.b32.xlu0 %v2158, 16
        %v2549 = vpop.permute.xlu0 %2548
        %2550 = vrot.lane.b32.xlu0 %v2159, 16
        %v2551 = vpop.permute.xlu0 %2550
        %2552 = vrot.lane.b32.xlu0 %v2160, 16
        %v2553 = vpop.permute.xlu0 %2552
        %2554 = vrot.lane.b32.xlu0 %v2161, 16
        %v2555 = vpop.permute.xlu0 %2554
        %2556 = vrot.lane.b32.xlu0 %v2162, 16
        %v2557 = vpop.permute.xlu0 %2556
        %2558 = vrot.lane.b32.xlu0 %v2163, 16
        %v2559 = vpop.permute.xlu0 %2558
        %2584 = vrot.lane.b32.xlu0 %v2464, 24
        %v2585 = vpop.permute.xlu0 %2584
        %2586 = vrot.lane.b32.xlu0 %v2465, 24
        %v2587 = vpop.permute.xlu0 %2586
        %2588 = vrot.lane.b32.xlu0 %v2466, 24
        %v2589 = vpop.permute.xlu0 %2588
        %2590 = vrot.lane.b32.xlu0 %v2467, 24
        %v2591 = vpop.permute.xlu0 %2590
        %2592 = vrot.lane.b32.xlu0 %v2468, 24
        %v2593 = vpop.permute.xlu0 %2592
        %2594 = vrot.lane.b32.xlu0 %v2469, 24
        %v2595 = vpop.permute.xlu0 %2594
        %2596 = vrot.lane.b32.xlu0 %v2470, 24
        %v2597 = vpop.permute.xlu0 %2596
        %2598 = vrot.lane.b32.xlu0 %v2471, 24
        %v2599 = vpop.permute.xlu0 %2598
        %2600 = vrot.lane.b32.xlu0 %v2472, 24
        %v2601 = vpop.permute.xlu0 %2600
        %2602 = vrot.lane.b32.xlu0 %v2473, 24
        %v2603 = vpop.permute.xlu0 %2602
        %2604 = vrot.lane.b32.xlu0 %v2474, 24
        %v2605 = vpop.permute.xlu0 %2604
        %2606 = vrot.lane.b32.xlu0 %v2475, 24
        %v2607 = vpop.permute.xlu0 %2606
        %v2620 = vsel %vm1250, %v1528, %v2489
        %v2621 = vsel %vm1250, %v1529, %v2491
        %v2622 = vsel %vm1250, %v1530, %v2493
        %v2623 = vsel %vm1250, %v1531, %v2495
        %v2624 = vsel %vm1250, %v1532, %v2497
        %v2625 = vsel %vm1250, %v1533, %v2499
        %v2626 = vsel %vm1250, %v1534, %v2501
        %v2627 = vsel %vm1250, %v1535, %v2503
        %v2628 = vsel %vm1250, %v1536, %v2505
        %v2629 = vsel %vm1250, %v1537, %v2507
        %v2630 = vsel %vm1250, %v1538, %v2509
        %v2631 = vsel %vm1250, %v1539, %v2511
        %vm2632 = vcmask 130048
        %v2633 = vsel %vm2632, %v2620, %v2537
        %v2634 = vsel %vm2632, %v2621, %v2539
        %v2635 = vsel %vm2632, %v2622, %v2541
        %v2636 = vsel %vm2632, %v2623, %v2543
        %v2637 = vsel %vm2632, %v2624, %v2545
        %v2638 = vsel %vm2632, %v2625, %v2547
        %v2639 = vsel %vm2632, %v2626, %v2549
        %v2640 = vsel %vm2632, %v2627, %v2551
        %v2641 = vsel %vm2632, %v2628, %v2553
        %v2642 = vsel %vm2632, %v2629, %v2555
        %v2643 = vsel %vm2632, %v2630, %v2557
        %v2644 = vsel %vm2632, %v2631, %v2559
        %vm2645 = vcmask 195584
        %v2646 = vsel %vm2645, %v2633, %v2585
        %v2647 = vsel %vm2645, %v2634, %v2587
        %v2648 = vsel %vm2645, %v2635, %v2589
        %v2649 = vsel %vm2645, %v2636, %v2591
        %v2650 = vsel %vm2645, %v2637, %v2593
        %v2651 = vsel %vm2645, %v2638, %v2595
        %v2652 = vsel %vm2645, %v2639, %v2597
        %v2653 = vsel %vm2645, %v2640, %v2599
        %v2654 = vsel %vm2645, %v2641, %v2601
        %v2655 = vsel %vm2645, %v2642, %v2603
        %v2656 = vsel %vm2645, %v2643, %v2605
        %v2657 = vsel %vm2645, %v2644, %v2607
        %v2658 = vpack.c.bf16 %v2647, %v2646
        %v2659 = vpack.c.bf16 %v2649, %v2648
        %v2660 = vpack.c.bf16 %v2651, %v2650
        %v2661 = vpack.c.bf16 %v2653, %v2652
        %v2662 = vpack.c.bf16 %v2655, %v2654
        %v2663 = vpack.c.bf16 %v2657, %v2656
        %v2664 = vld [vmem:[%s9] sm:$0x1]
        %v2666 = vperm.slane %v2664, 0
        %v2668 = vadd.f32 %v744, %v2666
        %v2669 = vadd.f32 %v746, %v2666
        %v2670 = vadd.f32 %v749, %v2666
        %v2671 = vadd.f32 %v751, %v2666
        %v2672 = vadd.f32 %v754, %v2666
        %v2673 = vadd.f32 %v756, %v2666
        %v2674 = vadd.f32 %v759, %v2666
        %v2675 = vadd.f32 %v761, %v2666
        %v2676 = vadd.f32 %v764, %v2666
        %v2677 = vadd.f32 %v766, %v2666
        %v2678 = vadd.f32 %v769, %v2666
        %v2679 = vadd.f32 %v771, %v2666
        %v2680 = vld [vmem:[%s8] sm:$0xf]
        %v2681 = vld [vmem:[%s8 + $0x4] sm:$0xf]
        %v2682 = vld [vmem:[%s8 + $0x8] sm:$0xf]
        %v2683 = vld [vmem:[%s8 + $0xc] sm:$0xf]
        %v2688 = vunpack.c.l.b16 %v2680
        %v2689 = vunpack.c.l.b16 %v2681
        %v2690 = vunpack.c.l.b16 %v2682
        %v2691 = vunpack.c.l.b16 %v2683
        %v2692 = vpack.c.b16 %v2689, %v2688
        %v2693 = vpack.c.b16 %v2691, %v2690
        %v2697 = vsel %vm787, %v2658, 0
        %v2700 = vsel %vm787, %v2659, 0
        %v2703 = vsel %vm787, %v2660, 0
        %v2706 = vsel %vm787, %v2661, 0
        %v2709 = vsel %vm787, %v2662, 0
        %v2712 = vsel %vm787, %v2663, 0
        %2714 = vmatpush.bf16.msra.mxu0 0
        %2715 = vmatpush.bf16.msra.mxu0 0
        %2716 = vmatpush.bf16.msra.mxu0 0
        %2717 = vmatpush.bf16.msra.mxu0 0
        %2718 = vmatpush.bf16.msra.mxu0 0
        %2719 = vmatpush.bf16.msra.mxu0 0
        %2720 = vmatpush.bf16.msra.mxu0 %v2693
        %2721 = vmatpush.bf16.msra.mxu0 %v2692
        %2722 = vmatmul.bf16.gmra.mxu0 %v2697
        %v2723 = vpop.f32.mrf.mxu0
        %v2724 = vadd.f32 0.0, %v2723
        %v2725 = vpop.f32.mrf.mxu0
        %v2726 = vadd.f32 0.0, %v2725
        %2727 = vmatmul.bf16.gmra.mxu0 %v2700
        %v2728 = vpop.f32.mrf.mxu0
        %v2729 = vadd.f32 0.0, %v2728
        %v2730 = vpop.f32.mrf.mxu0
        %v2731 = vadd.f32 0.0, %v2730
        %2732 = vmatmul.bf16.gmra.mxu0 %v2703
        %v2733 = vpop.f32.mrf.mxu0
        %v2734 = vadd.f32 0.0, %v2733
        %v2735 = vpop.f32.mrf.mxu0
        %v2736 = vadd.f32 0.0, %v2735
        %2737 = vmatmul.bf16.gmra.mxu0 %v2706
        %v2738 = vpop.f32.mrf.mxu0
        %v2739 = vadd.f32 0.0, %v2738
        %v2740 = vpop.f32.mrf.mxu0
        %v2741 = vadd.f32 0.0, %v2740
        %2742 = vmatmul.bf16.gmra.mxu0 %v2709
        %v2743 = vpop.f32.mrf.mxu0
        %v2744 = vadd.f32 0.0, %v2743
        %v2745 = vpop.f32.mrf.mxu0
        %v2746 = vadd.f32 0.0, %v2745
        %2747 = vmatmul.bf16.gmra.mxu0 %v2712
        %v2748 = vpop.f32.mrf.mxu0
        %v2749 = vadd.f32 0.0, %v2748
        %v2750 = vpop.f32.mrf.mxu0
        %v2751 = vadd.f32 0.0, %v2750
        %2752 = vdwg.mxu0
        %v2753 = vadd.f32 %v2668, %v2724
        %v2754 = vadd.f32 %v2669, %v2726
        %v2755 = vadd.f32 %v2670, %v2729
        %v2756 = vadd.f32 %v2671, %v2731
        %v2757 = vadd.f32 %v2672, %v2734
        %v2758 = vadd.f32 %v2673, %v2736
        %v2759 = vadd.f32 %v2674, %v2739
        %v2760 = vadd.f32 %v2675, %v2741
        %v2761 = vadd.f32 %v2676, %v2744
        %v2762 = vadd.f32 %v2677, %v2746
        %v2763 = vadd.f32 %v2678, %v2749
        %v2764 = vadd.f32 %v2679, %v2751
        %v2765 = vld [vmem:[%s10] sm:$0x1]
        %v2766 = vld [vmem:[%s11] sm:$0x1]
        %v2767 = vsel %vm787, %v2753, 0.0
        %2768 = vadd.xlane.f32.xlu0 %v2767
        %v2769 = vpop.xlane.xlu0 %2768
        %v2770 = vsel %vm787, %v2754, 0.0
        %2771 = vadd.xlane.f32.xlu0 %v2770
        %v2772 = vpop.xlane.xlu0 %2771
        %v2773 = vsel %vm787, %v2755, 0.0
        %2774 = vadd.xlane.f32.xlu0 %v2773
        %v2775 = vpop.xlane.xlu0 %2774
        %v2776 = vsel %vm787, %v2756, 0.0
        %2777 = vadd.xlane.f32.xlu0 %v2776
        %v2778 = vpop.xlane.xlu0 %2777
        %v2779 = vsel %vm787, %v2757, 0.0
        %2780 = vadd.xlane.f32.xlu0 %v2779
        %v2781 = vpop.xlane.xlu0 %2780
        %v2782 = vsel %vm787, %v2758, 0.0
        %2783 = vadd.xlane.f32.xlu0 %v2782
        %v2784 = vpop.xlane.xlu0 %2783
        %v2785 = vsel %vm787, %v2759, 0.0
        %2786 = vadd.xlane.f32.xlu0 %v2785
        %v2787 = vpop.xlane.xlu0 %2786
        %v2788 = vsel %vm787, %v2760, 0.0
        %2789 = vadd.xlane.f32.xlu0 %v2788
        %v2790 = vpop.xlane.xlu0 %2789
        %v2791 = vsel %vm787, %v2761, 0.0
        %2792 = vadd.xlane.f32.xlu0 %v2791
        %v2793 = vpop.xlane.xlu0 %2792
        %v2794 = vsel %vm787, %v2762, 0.0
        %2795 = vadd.xlane.f32.xlu0 %v2794
        %v2796 = vpop.xlane.xlu0 %2795
        %v2797 = vsel %vm787, %v2763, 0.0
        %2798 = vadd.xlane.f32.xlu0 %v2797
        %v2799 = vpop.xlane.xlu0 %2798
        %v2800 = vsel %vm787, %v2764, 0.0
        %2801 = vadd.xlane.f32.xlu0 %v2800
        %v2802 = vpop.xlane.xlu0 %2801
        %v2803 = vmul.f32 %v2769, %v830
        %v2804 = vmul.f32 %v2772, %v830
        %v2805 = vmul.f32 %v2775, %v830
        %v2806 = vmul.f32 %v2778, %v830
        %v2807 = vmul.f32 %v2781, %v830
        %v2808 = vmul.f32 %v2784, %v830
        %v2809 = vmul.f32 %v2787, %v830
        %v2810 = vmul.f32 %v2790, %v830
        %v2811 = vmul.f32 %v2793, %v830
        %v2812 = vmul.f32 %v2796, %v830
        %v2813 = vmul.f32 %v2799, %v830
        %v2814 = vmul.f32 %v2802, %v830
        %v2815 = vmul.f32 %v2753, %v2753
        %v2816 = vmul.f32 %v2754, %v2754
        %v2817 = vmul.f32 %v2755, %v2755
        %v2818 = vmul.f32 %v2756, %v2756
        %v2819 = vmul.f32 %v2757, %v2757
        %v2820 = vmul.f32 %v2758, %v2758
        %v2821 = vmul.f32 %v2759, %v2759
        %v2822 = vmul.f32 %v2760, %v2760
        %v2823 = vmul.f32 %v2761, %v2761
        %v2824 = vmul.f32 %v2762, %v2762
        %v2825 = vmul.f32 %v2763, %v2763
        %v2826 = vmul.f32 %v2764, %v2764
        %v2827 = vsel %vm787, %v2815, 0.0
        %2828 = vadd.xlane.f32.xlu0 %v2827
        %v2829 = vpop.xlane.xlu0 %2828
        %v2830 = vsel %vm787, %v2816, 0.0
        %2831 = vadd.xlane.f32.xlu0 %v2830
        %v2832 = vpop.xlane.xlu0 %2831
        %v2833 = vsel %vm787, %v2817, 0.0
        %2834 = vadd.xlane.f32.xlu0 %v2833
        %v2835 = vpop.xlane.xlu0 %2834
        %v2836 = vsel %vm787, %v2818, 0.0
        %2837 = vadd.xlane.f32.xlu0 %v2836
        %v2838 = vpop.xlane.xlu0 %2837
        %v2839 = vsel %vm787, %v2819, 0.0
        %2840 = vadd.xlane.f32.xlu0 %v2839
        %v2841 = vpop.xlane.xlu0 %2840
        %v2842 = vsel %vm787, %v2820, 0.0
        %2843 = vadd.xlane.f32.xlu0 %v2842
        %v2844 = vpop.xlane.xlu0 %2843
        %v2845 = vsel %vm787, %v2821, 0.0
        %2846 = vadd.xlane.f32.xlu0 %v2845
        %v2847 = vpop.xlane.xlu0 %2846
        %v2848 = vsel %vm787, %v2822, 0.0
        %2849 = vadd.xlane.f32.xlu0 %v2848
        %v2850 = vpop.xlane.xlu0 %2849
        %v2851 = vsel %vm787, %v2823, 0.0
        %2852 = vadd.xlane.f32.xlu0 %v2851
        %v2853 = vpop.xlane.xlu0 %2852
        %v2854 = vsel %vm787, %v2824, 0.0
        %2855 = vadd.xlane.f32.xlu0 %v2854
        %v2856 = vpop.xlane.xlu0 %2855
        %v2857 = vsel %vm787, %v2825, 0.0
        %2858 = vadd.xlane.f32.xlu0 %v2857
        %v2859 = vpop.xlane.xlu0 %2858
        %v2860 = vsel %vm787, %v2826, 0.0
        %2861 = vadd.xlane.f32.xlu0 %v2860
        %v2862 = vpop.xlane.xlu0 %2861
        %v2863 = vmul.f32 %v2829, %v830
        %v2864 = vmul.f32 %v2832, %v830
        %v2865 = vmul.f32 %v2835, %v830
        %v2866 = vmul.f32 %v2838, %v830
        %v2867 = vmul.f32 %v2841, %v830
        %v2868 = vmul.f32 %v2844, %v830
        %v2869 = vmul.f32 %v2847, %v830
        %v2870 = vmul.f32 %v2850, %v830
        %v2871 = vmul.f32 %v2853, %v830
        %v2872 = vmul.f32 %v2856, %v830
        %v2873 = vmul.f32 %v2859, %v830
        %v2874 = vmul.f32 %v2862, %v830
        %v2875 = vsub.f32 %v2753, %v2803
        %v2876 = vsub.f32 %v2754, %v2804
        %v2877 = vsub.f32 %v2755, %v2805
        %v2878 = vsub.f32 %v2756, %v2806
        %v2879 = vsub.f32 %v2757, %v2807
        %v2880 = vsub.f32 %v2758, %v2808
        %v2881 = vsub.f32 %v2759, %v2809
        %v2882 = vsub.f32 %v2760, %v2810
        %v2883 = vsub.f32 %v2761, %v2811
        %v2884 = vsub.f32 %v2762, %v2812
        %v2885 = vsub.f32 %v2763, %v2813
        %v2886 = vsub.f32 %v2764, %v2814
        %v2887 = vmul.f32 %v2803, %v2803
        %v2888 = vmul.f32 %v2804, %v2804
        %v2889 = vmul.f32 %v2805, %v2805
        %v2890 = vmul.f32 %v2806, %v2806
        %v2891 = vmul.f32 %v2807, %v2807
        %v2892 = vmul.f32 %v2808, %v2808
        %v2893 = vmul.f32 %v2809, %v2809
        %v2894 = vmul.f32 %v2810, %v2810
        %v2895 = vmul.f32 %v2811, %v2811
        %v2896 = vmul.f32 %v2812, %v2812
        %v2897 = vmul.f32 %v2813, %v2813
        %v2898 = vmul.f32 %v2814, %v2814
        %v2899 = vsub.f32 %v2863, %v2887
        %v2900 = vsub.f32 %v2864, %v2888
        %v2901 = vsub.f32 %v2865, %v2889
        %v2902 = vsub.f32 %v2866, %v2890
        %v2903 = vsub.f32 %v2867, %v2891
        %v2904 = vsub.f32 %v2868, %v2892
        %v2905 = vsub.f32 %v2869, %v2893
        %v2906 = vsub.f32 %v2870, %v2894
        %v2907 = vsub.f32 %v2871, %v2895
        %v2908 = vsub.f32 %v2872, %v2896
        %v2909 = vsub.f32 %v2873, %v2897
        %v2910 = vsub.f32 %v2874, %v2898
        %v2911 = vadd.f32 %v2899, 1e-05
        %v2912 = vadd.f32 %v2900, 1e-05
        %v2913 = vadd.f32 %v2901, 1e-05
        %v2914 = vadd.f32 %v2902, 1e-05
        %v2915 = vadd.f32 %v2903, 1e-05
        %v2916 = vadd.f32 %v2904, 1e-05
        %v2917 = vadd.f32 %v2905, 1e-05
        %v2918 = vadd.f32 %v2906, 1e-05
        %v2919 = vadd.f32 %v2907, 1e-05
        %v2920 = vadd.f32 %v2908, 1e-05
        %v2921 = vadd.f32 %v2909, 1e-05
        %v2922 = vadd.f32 %v2910, 1e-05
        %v2923 = vrsqrt.pop %v2911
        %v2924 = vmul.f32 %v2923, %v2911
        %v2925 = vmul.f32 %v2924, %v2923
        %v2926 = vmul.f32 0.5, %v2925
        %v2927 = vsub.f32 1.5, %v2926
        %v2928 = vmul.f32 %v2923, %v2927
        %vm2929 = vweird.f32 %v2911
        %vm2930 = vweird.f32 %v2923
        %vm2931 = vmor %vm2929, %vm2930
        %v2932 = vsel %vm2931, %v2923, %v2928
        %v2933 = vrsqrt.pop %v2912
        %v2934 = vmul.f32 %v2933, %v2912
        %v2935 = vmul.f32 %v2934, %v2933
        %v2936 = vmul.f32 0.5, %v2935
        %v2937 = vsub.f32 1.5, %v2936
        %v2938 = vmul.f32 %v2933, %v2937
        %vm2939 = vweird.f32 %v2912
        %vm2940 = vweird.f32 %v2933
        %vm2941 = vmor %vm2939, %vm2940
        %v2942 = vsel %vm2941, %v2933, %v2938
        %v2943 = vrsqrt.pop %v2913
        %v2944 = vmul.f32 %v2943, %v2913
        %v2945 = vmul.f32 %v2944, %v2943
        %v2946 = vmul.f32 0.5, %v2945
        %v2947 = vsub.f32 1.5, %v2946
        %v2948 = vmul.f32 %v2943, %v2947
        %vm2949 = vweird.f32 %v2913
        %vm2950 = vweird.f32 %v2943
        %vm2951 = vmor %vm2949, %vm2950
        %v2952 = vsel %vm2951, %v2943, %v2948
        %v2953 = vrsqrt.pop %v2914
        %v2954 = vmul.f32 %v2953, %v2914
        %v2955 = vmul.f32 %v2954, %v2953
        %v2956 = vmul.f32 0.5, %v2955
        %v2957 = vsub.f32 1.5, %v2956
        %v2958 = vmul.f32 %v2953, %v2957
        %vm2959 = vweird.f32 %v2914
        %vm2960 = vweird.f32 %v2953
        %vm2961 = vmor %vm2959, %vm2960
        %v2962 = vsel %vm2961, %v2953, %v2958
        %v2963 = vrsqrt.pop %v2915
        %v2964 = vmul.f32 %v2963, %v2915
        %v2965 = vmul.f32 %v2964, %v2963
        %v2966 = vmul.f32 0.5, %v2965
        %v2967 = vsub.f32 1.5, %v2966
        %v2968 = vmul.f32 %v2963, %v2967
        %vm2969 = vweird.f32 %v2915
        %vm2970 = vweird.f32 %v2963
        %vm2971 = vmor %vm2969, %vm2970
        %v2972 = vsel %vm2971, %v2963, %v2968
        %v2973 = vrsqrt.pop %v2916
        %v2974 = vmul.f32 %v2973, %v2916
        %v2975 = vmul.f32 %v2974, %v2973
        %v2976 = vmul.f32 0.5, %v2975
        %v2977 = vsub.f32 1.5, %v2976
        %v2978 = vmul.f32 %v2973, %v2977
        %vm2979 = vweird.f32 %v2916
        %vm2980 = vweird.f32 %v2973
        %vm2981 = vmor %vm2979, %vm2980
        %v2982 = vsel %vm2981, %v2973, %v2978
        %v2983 = vrsqrt.pop %v2917
        %v2984 = vmul.f32 %v2983, %v2917
        %v2985 = vmul.f32 %v2984, %v2983
        %v2986 = vmul.f32 0.5, %v2985
        %v2987 = vsub.f32 1.5, %v2986
        %v2988 = vmul.f32 %v2983, %v2987
        %vm2989 = vweird.f32 %v2917
        %vm2990 = vweird.f32 %v2983
        %vm2991 = vmor %vm2989, %vm2990
        %v2992 = vsel %vm2991, %v2983, %v2988
        %v2993 = vrsqrt.pop %v2918
        %v2994 = vmul.f32 %v2993, %v2918
        %v2995 = vmul.f32 %v2994, %v2993
        %v2996 = vmul.f32 0.5, %v2995
        %v2997 = vsub.f32 1.5, %v2996
        %v2998 = vmul.f32 %v2993, %v2997
        %vm2999 = vweird.f32 %v2918
        %vm3000 = vweird.f32 %v2993
        %vm3001 = vmor %vm2999, %vm3000
        %v3002 = vsel %vm3001, %v2993, %v2998
        %v3003 = vrsqrt.pop %v2919
        %v3004 = vmul.f32 %v3003, %v2919
        %v3005 = vmul.f32 %v3004, %v3003
        %v3006 = vmul.f32 0.5, %v3005
        %v3007 = vsub.f32 1.5, %v3006
        %v3008 = vmul.f32 %v3003, %v3007
        %vm3009 = vweird.f32 %v2919
        %vm3010 = vweird.f32 %v3003
        %vm3011 = vmor %vm3009, %vm3010
        %v3012 = vsel %vm3011, %v3003, %v3008
        %v3013 = vrsqrt.pop %v2920
        %v3014 = vmul.f32 %v3013, %v2920
        %v3015 = vmul.f32 %v3014, %v3013
        %v3016 = vmul.f32 0.5, %v3015
        %v3017 = vsub.f32 1.5, %v3016
        %v3018 = vmul.f32 %v3013, %v3017
        %vm3019 = vweird.f32 %v2920
        %vm3020 = vweird.f32 %v3013
        %vm3021 = vmor %vm3019, %vm3020
        %v3022 = vsel %vm3021, %v3013, %v3018
        %v3023 = vrsqrt.pop %v2921
        %v3024 = vmul.f32 %v3023, %v2921
        %v3025 = vmul.f32 %v3024, %v3023
        %v3026 = vmul.f32 0.5, %v3025
        %v3027 = vsub.f32 1.5, %v3026
        %v3028 = vmul.f32 %v3023, %v3027
        %vm3029 = vweird.f32 %v2921
        %vm3030 = vweird.f32 %v3023
        %vm3031 = vmor %vm3029, %vm3030
        %v3032 = vsel %vm3031, %v3023, %v3028
        %v3033 = vrsqrt.pop %v2922
        %v3034 = vmul.f32 %v3033, %v2922
        %v3035 = vmul.f32 %v3034, %v3033
        %v3036 = vmul.f32 0.5, %v3035
        %v3037 = vsub.f32 1.5, %v3036
        %v3038 = vmul.f32 %v3033, %v3037
        %vm3039 = vweird.f32 %v2922
        %vm3040 = vweird.f32 %v3033
        %vm3041 = vmor %vm3039, %vm3040
        %v3042 = vsel %vm3041, %v3033, %v3038
        %v3043 = vmul.f32 %v2875, %v2932
        %v3044 = vmul.f32 %v2876, %v2942
        %v3045 = vmul.f32 %v2877, %v2952
        %v3046 = vmul.f32 %v2878, %v2962
        %v3047 = vmul.f32 %v2879, %v2972
        %v3048 = vmul.f32 %v2880, %v2982
        %v3049 = vmul.f32 %v2881, %v2992
        %v3050 = vmul.f32 %v2882, %v3002
        %v3051 = vmul.f32 %v2883, %v3012
        %v3052 = vmul.f32 %v2884, %v3022
        %v3053 = vmul.f32 %v2885, %v3032
        %v3054 = vmul.f32 %v2886, %v3042
        %v3056 = vperm.slane %v2765, 0
        %v3058 = vmul.f32 %v3043, %v3056
        %v3059 = vmul.f32 %v3044, %v3056
        %v3060 = vmul.f32 %v3045, %v3056
        %v3061 = vmul.f32 %v3046, %v3056
        %v3062 = vmul.f32 %v3047, %v3056
        %v3063 = vmul.f32 %v3048, %v3056
        %v3064 = vmul.f32 %v3049, %v3056
        %v3065 = vmul.f32 %v3050, %v3056
        %v3066 = vmul.f32 %v3051, %v3056
        %v3067 = vmul.f32 %v3052, %v3056
        %v3068 = vmul.f32 %v3053, %v3056
        %v3069 = vmul.f32 %v3054, %v3056
        %v3071 = vperm.slane %v2766, 0
        %v3073 = vadd.f32 %v3058, %v3071
        %v3074 = vadd.f32 %v3059, %v3071
        %v3075 = vadd.f32 %v3060, %v3071
        %v3076 = vadd.f32 %v3061, %v3071
        %v3077 = vadd.f32 %v3062, %v3071
        %v3078 = vadd.f32 %v3063, %v3071
        %v3079 = vadd.f32 %v3064, %v3071
        %v3080 = vadd.f32 %v3065, %v3071
        %v3081 = vadd.f32 %v3066, %v3071
        %v3082 = vadd.f32 %v3067, %v3071
        %v3083 = vadd.f32 %v3068, %v3071
        %v3084 = vadd.f32 %v3069, %v3071
        %v3085 = vpack.c.bf16 %v3074, %v3073
        %v3086 = vpack.c.bf16 %v3076, %v3075
        %v3087 = vpack.c.bf16 %v3078, %v3077
        %v3088 = vpack.c.bf16 %v3080, %v3079
        %v3089 = vpack.c.bf16 %v3082, %v3081
        %v3090 = vpack.c.bf16 %v3084, %v3083
        %v3091 = vld [vmem:[%s12] sm:$0xf]
        %v3092 = vld [vmem:[%s12 + $0x4] sm:$0xf]
        %v3093 = vld [vmem:[%s12 + $0x8] sm:$0xf]
        %v3094 = vld [vmem:[%s12 + $0xc] sm:$0xf]
        %v3095 = vld [vmem:[%s13] sm:$0x1]
        %v3097 = vperm.slane %v3095, 0
        %v3103 = vunpack.c.l.b16 %v3091
        %v3104 = vunpack.c.l.b16 %v3092
        %v3105 = vunpack.c.l.b16 %v3093
        %v3106 = vunpack.c.l.b16 %v3094
        %v3107 = vpack.c.b16 %v3104, %v3103
        %v3108 = vpack.c.b16 %v3106, %v3105
        %v3112 = vsel %vm787, %v3085, 0
        %v3115 = vsel %vm787, %v3086, 0
        %v3118 = vsel %vm787, %v3087, 0
        %v3121 = vsel %vm787, %v3088, 0
        %v3124 = vsel %vm787, %v3089, 0
        %v3127 = vsel %vm787, %v3090, 0
        %3129 = vmatpush.bf16.msra.mxu0 0
        %3130 = vmatpush.bf16.msra.mxu0 0
        %3131 = vmatpush.bf16.msra.mxu0 0
        %3132 = vmatpush.bf16.msra.mxu0 0
        %3133 = vmatpush.bf16.msra.mxu0 0
        %3134 = vmatpush.bf16.msra.mxu0 0
        %3135 = vmatpush.bf16.msra.mxu0 %v3108
        %3136 = vmatpush.bf16.msra.mxu0 %v3107
        %3137 = vmatmul.bf16.gmra.mxu0 %v3112
        %v3138 = vpop.f32.mrf.mxu0
        %v3139 = vadd.f32 %v3097, %v3138
        %v3140 = vpop.f32.mrf.mxu0
        %v3141 = vadd.f32 %v3097, %v3140
        %3142 = vmatmul.bf16.gmra.mxu0 %v3115
        %v3143 = vpop.f32.mrf.mxu0
        %v3144 = vadd.f32 %v3097, %v3143
        %v3145 = vpop.f32.mrf.mxu0
        %v3146 = vadd.f32 %v3097, %v3145
        %3147 = vmatmul.bf16.gmra.mxu0 %v3118
        %v3148 = vpop.f32.mrf.mxu0
        %v3149 = vadd.f32 %v3097, %v3148
        %v3150 = vpop.f32.mrf.mxu0
        %v3151 = vadd.f32 %v3097, %v3150
        %3152 = vmatmul.bf16.gmra.mxu0 %v3121
        %v3153 = vpop.f32.mrf.mxu0
        %v3154 = vadd.f32 %v3097, %v3153
        %v3155 = vpop.f32.mrf.mxu0
        %v3156 = vadd.f32 %v3097, %v3155
        %3157 = vmatmul.bf16.gmra.mxu0 %v3124
        %v3158 = vpop.f32.mrf.mxu0
        %v3159 = vadd.f32 %v3097, %v3158
        %v3160 = vpop.f32.mrf.mxu0
        %v3161 = vadd.f32 %v3097, %v3160
        %3162 = vmatmul.bf16.gmra.mxu0 %v3127
        %v3163 = vpop.f32.mrf.mxu0
        %v3164 = vadd.f32 %v3097, %v3163
        %v3165 = vpop.f32.mrf.mxu0
        %v3166 = vadd.f32 %v3097, %v3165
        %3167 = vdwg.mxu0
        %v3168 = vmul.f32 %v3139, 0.5
        %v3169 = vmul.f32 %v3141, 0.5
        %v3170 = vmul.f32 %v3144, 0.5
        %v3171 = vmul.f32 %v3146, 0.5
        %v3172 = vmul.f32 %v3149, 0.5
        %v3173 = vmul.f32 %v3151, 0.5
        %v3174 = vmul.f32 %v3154, 0.5
        %v3175 = vmul.f32 %v3156, 0.5
        %v3176 = vmul.f32 %v3159, 0.5
        %v3177 = vmul.f32 %v3161, 0.5
        %v3178 = vmul.f32 %v3164, 0.5
        %v3179 = vmul.f32 %v3166, 0.5
        %v3180 = vmul.f32 %v3139, 0.70710677
        %v3181 = vmul.f32 %v3141, 0.70710677
        %v3182 = vmul.f32 %v3144, 0.70710677
        %v3183 = vmul.f32 %v3146, 0.70710677
        %v3184 = vmul.f32 %v3149, 0.70710677
        %v3185 = vmul.f32 %v3151, 0.70710677
        %v3186 = vmul.f32 %v3154, 0.70710677
        %v3187 = vmul.f32 %v3156, 0.70710677
        %v3188 = vmul.f32 %v3159, 0.70710677
        %v3189 = vmul.f32 %v3161, 0.70710677
        %v3190 = vmul.f32 %v3164, 0.70710677
        %v3191 = vmul.f32 %v3166, 0.70710677
        %v3192 = vmul.f32 %v3180, %v3180
        %v3193 = vmin.f32 16.0, %v3192
        %v3194 = vmul.f32 %v3193, 2.1237322e-06
        %v3195 = vadd.f32 %v3194, 0.00028619796
        %v3196 = vmul.f32 %v3193, %v3195
        %v3197 = vadd.f32 %v3196, 0.0036580483
        %v3198 = vmul.f32 %v3193, %v3197
        %v3199 = vadd.f32 %v3198, 0.05243302
        %v3200 = vmul.f32 %v3193, %v3199
        %v3201 = vadd.f32 %v3200, 0.18741608
        %v3202 = vmul.f32 %v3193, %v3201
        %v3203 = vadd.f32 %v3202, 1.1283791
        %v3204 = vmul.f32 %v3180, %v3203
        %v3205 = vmul.f32 %v3193, 3.8918573e-05
        %v3206 = vadd.f32 %v3205, 0.001143296
        %v3207 = vmul.f32 %v3193, %v3206
        %v3208 = vadd.f32 %v3207, 0.014752088
        %v3209 = vmul.f32 %v3193, %v3208
        %v3210 = vadd.f32 %v3209, 0.112945676
        %v3211 = vmul.f32 %v3193, %v3210
        %v3212 = vadd.f32 %v3211, 0.4994258
        %v3213 = vmul.f32 %v3193, %v3212
        %v3214 = vadd.f32 %v3213, 1.0
        %v3215 = vrcp.pop %v3214
        %v3216 = vmul.f32 %v3214, %v3215
        %v3217 = vsub.f32 1.0, %v3216
        %v3218 = vmul.f32 %v3215, %v3217
        %v3219 = vadd.f32 %v3215, %v3218
        %vm3220 = vweird.f32 %v3214
        %vm3221 = vweird.f32 %v3215
        %vm3222 = vmor %vm3220, %vm3221
        %v3223 = vsel %vm3222, %v3215, %v3219
        %v3224 = vand.u32 2147483647, %v3214
        %vm3225 = vcmp.eq.f32.partialorder %v3224, 8.507059e+37
        %v3226 = vand.u32 %v3214, 2147483648
        %v3227 = vor.u32 1.1754944e-38, %v3226
        %v3228 = vsel %vm3225, %v3227, %v3223
        %v3229 = vmul.f32 %v3204, %v3228
        %v3230 = vmin.f32 %v3229, 1.0
        %v3231 = vmax.f32 %v3230, -1.0
        %v3232 = vmul.f32 %v3181, %v3181
        %v3233 = vmin.f32 16.0, %v3232
        %v3234 = vmul.f32 %v3233, 2.1237322e-06
        %v3235 = vadd.f32 %v3234, 0.00028619796
        %v3236 = vmul.f32 %v3233, %v3235
        %v3237 = vadd.f32 %v3236, 0.0036580483
        %v3238 = vmul.f32 %v3233, %v3237
        %v3239 = vadd.f32 %v3238, 0.05243302
        %v3240 = vmul.f32 %v3233, %v3239
        %v3241 = vadd.f32 %v3240, 0.18741608
        %v3242 = vmul.f32 %v3233, %v3241
        %v3243 = vadd.f32 %v3242, 1.1283791
        %v3244 = vmul.f32 %v3181, %v3243
        %v3245 = vmul.f32 %v3233, 3.8918573e-05
        %v3246 = vadd.f32 %v3245, 0.001143296
        %v3247 = vmul.f32 %v3233, %v3246
        %v3248 = vadd.f32 %v3247, 0.014752088
        %v3249 = vmul.f32 %v3233, %v3248
        %v3250 = vadd.f32 %v3249, 0.112945676
        %v3251 = vmul.f32 %v3233, %v3250
        %v3252 = vadd.f32 %v3251, 0.4994258
        %v3253 = vmul.f32 %v3233, %v3252
        %v3254 = vadd.f32 %v3253, 1.0
        %v3255 = vrcp.pop %v3254
        %v3256 = vmul.f32 %v3254, %v3255
        %v3257 = vsub.f32 1.0, %v3256
        %v3258 = vmul.f32 %v3255, %v3257
        %v3259 = vadd.f32 %v3255, %v3258
        %vm3260 = vweird.f32 %v3254
        %vm3261 = vweird.f32 %v3255
        %vm3262 = vmor %vm3260, %vm3261
        %v3263 = vsel %vm3262, %v3255, %v3259
        %v3264 = vand.u32 2147483647, %v3254
        %vm3265 = vcmp.eq.f32.partialorder %v3264, 8.507059e+37
        %v3266 = vand.u32 %v3254, 2147483648
        %v3267 = vor.u32 1.1754944e-38, %v3266
        %v3268 = vsel %vm3265, %v3267, %v3263
        %v3269 = vmul.f32 %v3244, %v3268
        %v3270 = vmin.f32 %v3269, 1.0
        %v3271 = vmax.f32 %v3270, -1.0
        %v3272 = vmul.f32 %v3182, %v3182
        %v3273 = vmin.f32 16.0, %v3272
        %v3274 = vmul.f32 %v3273, 2.1237322e-06
        %v3275 = vadd.f32 %v3274, 0.00028619796
        %v3276 = vmul.f32 %v3273, %v3275
        %v3277 = vadd.f32 %v3276, 0.0036580483
        %v3278 = vmul.f32 %v3273, %v3277
        %v3279 = vadd.f32 %v3278, 0.05243302
        %v3280 = vmul.f32 %v3273, %v3279
        %v3281 = vadd.f32 %v3280, 0.18741608
        %v3282 = vmul.f32 %v3273, %v3281
        %v3283 = vadd.f32 %v3282, 1.1283791
        %v3284 = vmul.f32 %v3182, %v3283
        %v3285 = vmul.f32 %v3273, 3.8918573e-05
        %v3286 = vadd.f32 %v3285, 0.001143296
        %v3287 = vmul.f32 %v3273, %v3286
        %v3288 = vadd.f32 %v3287, 0.014752088
        %v3289 = vmul.f32 %v3273, %v3288
        %v3290 = vadd.f32 %v3289, 0.112945676
        %v3291 = vmul.f32 %v3273, %v3290
        %v3292 = vadd.f32 %v3291, 0.4994258
        %v3293 = vmul.f32 %v3273, %v3292
        %v3294 = vadd.f32 %v3293, 1.0
        %v3295 = vrcp.pop %v3294
        %v3296 = vmul.f32 %v3294, %v3295
        %v3297 = vsub.f32 1.0, %v3296
        %v3298 = vmul.f32 %v3295, %v3297
        %v3299 = vadd.f32 %v3295, %v3298
        %vm3300 = vweird.f32 %v3294
        %vm3301 = vweird.f32 %v3295
        %vm3302 = vmor %vm3300, %vm3301
        %v3303 = vsel %vm3302, %v3295, %v3299
        %v3304 = vand.u32 2147483647, %v3294
        %vm3305 = vcmp.eq.f32.partialorder %v3304, 8.507059e+37
        %v3306 = vand.u32 %v3294, 2147483648
        %v3307 = vor.u32 1.1754944e-38, %v3306
        %v3308 = vsel %vm3305, %v3307, %v3303
        %v3309 = vmul.f32 %v3284, %v3308
        %v3310 = vmin.f32 %v3309, 1.0
        %v3311 = vmax.f32 %v3310, -1.0
        %v3312 = vmul.f32 %v3183, %v3183
        %v3313 = vmin.f32 16.0, %v3312
        %v3314 = vmul.f32 %v3313, 2.1237322e-06
        %v3315 = vadd.f32 %v3314, 0.00028619796
        %v3316 = vmul.f32 %v3313, %v3315
        %v3317 = vadd.f32 %v3316, 0.0036580483
        %v3318 = vmul.f32 %v3313, %v3317
        %v3319 = vadd.f32 %v3318, 0.05243302
        %v3320 = vmul.f32 %v3313, %v3319
        %v3321 = vadd.f32 %v3320, 0.18741608
        %v3322 = vmul.f32 %v3313, %v3321
        %v3323 = vadd.f32 %v3322, 1.1283791
        %v3324 = vmul.f32 %v3183, %v3323
        %v3325 = vmul.f32 %v3313, 3.8918573e-05
        %v3326 = vadd.f32 %v3325, 0.001143296
        %v3327 = vmul.f32 %v3313, %v3326
        %v3328 = vadd.f32 %v3327, 0.014752088
        %v3329 = vmul.f32 %v3313, %v3328
        %v3330 = vadd.f32 %v3329, 0.112945676
        %v3331 = vmul.f32 %v3313, %v3330
        %v3332 = vadd.f32 %v3331, 0.4994258
        %v3333 = vmul.f32 %v3313, %v3332
        %v3334 = vadd.f32 %v3333, 1.0
        %v3335 = vrcp.pop %v3334
        %v3336 = vmul.f32 %v3334, %v3335
        %v3337 = vsub.f32 1.0, %v3336
        %v3338 = vmul.f32 %v3335, %v3337
        %v3339 = vadd.f32 %v3335, %v3338
        %vm3340 = vweird.f32 %v3334
        %vm3341 = vweird.f32 %v3335
        %vm3342 = vmor %vm3340, %vm3341
        %v3343 = vsel %vm3342, %v3335, %v3339
        %v3344 = vand.u32 2147483647, %v3334
        %vm3345 = vcmp.eq.f32.partialorder %v3344, 8.507059e+37
        %v3346 = vand.u32 %v3334, 2147483648
        %v3347 = vor.u32 1.1754944e-38, %v3346
        %v3348 = vsel %vm3345, %v3347, %v3343
        %v3349 = vmul.f32 %v3324, %v3348
        %v3350 = vmin.f32 %v3349, 1.0
        %v3351 = vmax.f32 %v3350, -1.0
        %v3352 = vmul.f32 %v3184, %v3184
        %v3353 = vmin.f32 16.0, %v3352
        %v3354 = vmul.f32 %v3353, 2.1237322e-06
        %v3355 = vadd.f32 %v3354, 0.00028619796
        %v3356 = vmul.f32 %v3353, %v3355
        %v3357 = vadd.f32 %v3356, 0.0036580483
        %v3358 = vmul.f32 %v3353, %v3357
        %v3359 = vadd.f32 %v3358, 0.05243302
        %v3360 = vmul.f32 %v3353, %v3359
        %v3361 = vadd.f32 %v3360, 0.18741608
        %v3362 = vmul.f32 %v3353, %v3361
        %v3363 = vadd.f32 %v3362, 1.1283791
        %v3364 = vmul.f32 %v3184, %v3363
        %v3365 = vmul.f32 %v3353, 3.8918573e-05
        %v3366 = vadd.f32 %v3365, 0.001143296
        %v3367 = vmul.f32 %v3353, %v3366
        %v3368 = vadd.f32 %v3367, 0.014752088
        %v3369 = vmul.f32 %v3353, %v3368
        %v3370 = vadd.f32 %v3369, 0.112945676
        %v3371 = vmul.f32 %v3353, %v3370
        %v3372 = vadd.f32 %v3371, 0.4994258
        %v3373 = vmul.f32 %v3353, %v3372
        %v3374 = vadd.f32 %v3373, 1.0
        %v3375 = vrcp.pop %v3374
        %v3376 = vmul.f32 %v3374, %v3375
        %v3377 = vsub.f32 1.0, %v3376
        %v3378 = vmul.f32 %v3375, %v3377
        %v3379 = vadd.f32 %v3375, %v3378
        %vm3380 = vweird.f32 %v3374
        %vm3381 = vweird.f32 %v3375
        %vm3382 = vmor %vm3380, %vm3381
        %v3383 = vsel %vm3382, %v3375, %v3379
        %v3384 = vand.u32 2147483647, %v3374
        %vm3385 = vcmp.eq.f32.partialorder %v3384, 8.507059e+37
        %v3386 = vand.u32 %v3374, 2147483648
        %v3387 = vor.u32 1.1754944e-38, %v3386
        %v3388 = vsel %vm3385, %v3387, %v3383
        %v3389 = vmul.f32 %v3364, %v3388
        %v3390 = vmin.f32 %v3389, 1.0
        %v3391 = vmax.f32 %v3390, -1.0
        %v3392 = vmul.f32 %v3185, %v3185
        %v3393 = vmin.f32 16.0, %v3392
        %v3394 = vmul.f32 %v3393, 2.1237322e-06
        %v3395 = vadd.f32 %v3394, 0.00028619796
        %v3396 = vmul.f32 %v3393, %v3395
        %v3397 = vadd.f32 %v3396, 0.0036580483
        %v3398 = vmul.f32 %v3393, %v3397
        %v3399 = vadd.f32 %v3398, 0.05243302
        %v3400 = vmul.f32 %v3393, %v3399
        %v3401 = vadd.f32 %v3400, 0.18741608
        %v3402 = vmul.f32 %v3393, %v3401
        %v3403 = vadd.f32 %v3402, 1.1283791
        %v3404 = vmul.f32 %v3185, %v3403
        %v3405 = vmul.f32 %v3393, 3.8918573e-05
        %v3406 = vadd.f32 %v3405, 0.001143296
        %v3407 = vmul.f32 %v3393, %v3406
        %v3408 = vadd.f32 %v3407, 0.014752088
        %v3409 = vmul.f32 %v3393, %v3408
        %v3410 = vadd.f32 %v3409, 0.112945676
        %v3411 = vmul.f32 %v3393, %v3410
        %v3412 = vadd.f32 %v3411, 0.4994258
        %v3413 = vmul.f32 %v3393, %v3412
        %v3414 = vadd.f32 %v3413, 1.0
        %v3415 = vrcp.pop %v3414
        %v3416 = vmul.f32 %v3414, %v3415
        %v3417 = vsub.f32 1.0, %v3416
        %v3418 = vmul.f32 %v3415, %v3417
        %v3419 = vadd.f32 %v3415, %v3418
        %vm3420 = vweird.f32 %v3414
        %vm3421 = vweird.f32 %v3415
        %vm3422 = vmor %vm3420, %vm3421
        %v3423 = vsel %vm3422, %v3415, %v3419
        %v3424 = vand.u32 2147483647, %v3414
        %vm3425 = vcmp.eq.f32.partialorder %v3424, 8.507059e+37
        %v3426 = vand.u32 %v3414, 2147483648
        %v3427 = vor.u32 1.1754944e-38, %v3426
        %v3428 = vsel %vm3425, %v3427, %v3423
        %v3429 = vmul.f32 %v3404, %v3428
        %v3430 = vmin.f32 %v3429, 1.0
        %v3431 = vmax.f32 %v3430, -1.0
        %v3432 = vmul.f32 %v3186, %v3186
        %v3433 = vmin.f32 16.0, %v3432
        %v3434 = vmul.f32 %v3433, 2.1237322e-06
        %v3435 = vadd.f32 %v3434, 0.00028619796
        %v3436 = vmul.f32 %v3433, %v3435
        %v3437 = vadd.f32 %v3436, 0.0036580483
        %v3438 = vmul.f32 %v3433, %v3437
        %v3439 = vadd.f32 %v3438, 0.05243302
        %v3440 = vmul.f32 %v3433, %v3439
        %v3441 = vadd.f32 %v3440, 0.18741608
        %v3442 = vmul.f32 %v3433, %v3441
        %v3443 = vadd.f32 %v3442, 1.1283791
        %v3444 = vmul.f32 %v3186, %v3443
        %v3445 = vmul.f32 %v3433, 3.8918573e-05
        %v3446 = vadd.f32 %v3445, 0.001143296
        %v3447 = vmul.f32 %v3433, %v3446
        %v3448 = vadd.f32 %v3447, 0.014752088
        %v3449 = vmul.f32 %v3433, %v3448
        %v3450 = vadd.f32 %v3449, 0.112945676
        %v3451 = vmul.f32 %v3433, %v3450
        %v3452 = vadd.f32 %v3451, 0.4994258
        %v3453 = vmul.f32 %v3433, %v3452
        %v3454 = vadd.f32 %v3453, 1.0
        %v3455 = vrcp.pop %v3454
        %v3456 = vmul.f32 %v3454, %v3455
        %v3457 = vsub.f32 1.0, %v3456
        %v3458 = vmul.f32 %v3455, %v3457
        %v3459 = vadd.f32 %v3455, %v3458
        %vm3460 = vweird.f32 %v3454
        %vm3461 = vweird.f32 %v3455
        %vm3462 = vmor %vm3460, %vm3461
        %v3463 = vsel %vm3462, %v3455, %v3459
        %v3464 = vand.u32 2147483647, %v3454
        %vm3465 = vcmp.eq.f32.partialorder %v3464, 8.507059e+37
        %v3466 = vand.u32 %v3454, 2147483648
        %v3467 = vor.u32 1.1754944e-38, %v3466
        %v3468 = vsel %vm3465, %v3467, %v3463
        %v3469 = vmul.f32 %v3444, %v3468
        %v3470 = vmin.f32 %v3469, 1.0
        %v3471 = vmax.f32 %v3470, -1.0
        %v3472 = vmul.f32 %v3187, %v3187
        %v3473 = vmin.f32 16.0, %v3472
        %v3474 = vmul.f32 %v3473, 2.1237322e-06
        %v3475 = vadd.f32 %v3474, 0.00028619796
        %v3476 = vmul.f32 %v3473, %v3475
        %v3477 = vadd.f32 %v3476, 0.0036580483
        %v3478 = vmul.f32 %v3473, %v3477
        %v3479 = vadd.f32 %v3478, 0.05243302
        %v3480 = vmul.f32 %v3473, %v3479
        %v3481 = vadd.f32 %v3480, 0.18741608
        %v3482 = vmul.f32 %v3473, %v3481
        %v3483 = vadd.f32 %v3482, 1.1283791
        %v3484 = vmul.f32 %v3187, %v3483
        %v3485 = vmul.f32 %v3473, 3.8918573e-05
        %v3486 = vadd.f32 %v3485, 0.001143296
        %v3487 = vmul.f32 %v3473, %v3486
        %v3488 = vadd.f32 %v3487, 0.014752088
        %v3489 = vmul.f32 %v3473, %v3488
        %v3490 = vadd.f32 %v3489, 0.112945676
        %v3491 = vmul.f32 %v3473, %v3490
        %v3492 = vadd.f32 %v3491, 0.4994258
        %v3493 = vmul.f32 %v3473, %v3492
        %v3494 = vadd.f32 %v3493, 1.0
        %v3495 = vrcp.pop %v3494
        %v3496 = vmul.f32 %v3494, %v3495
        %v3497 = vsub.f32 1.0, %v3496
        %v3498 = vmul.f32 %v3495, %v3497
        %v3499 = vadd.f32 %v3495, %v3498
        %vm3500 = vweird.f32 %v3494
        %vm3501 = vweird.f32 %v3495
        %vm3502 = vmor %vm3500, %vm3501
        %v3503 = vsel %vm3502, %v3495, %v3499
        %v3504 = vand.u32 2147483647, %v3494
        %vm3505 = vcmp.eq.f32.partialorder %v3504, 8.507059e+37
        %v3506 = vand.u32 %v3494, 2147483648
        %v3507 = vor.u32 1.1754944e-38, %v3506
        %v3508 = vsel %vm3505, %v3507, %v3503
        %v3509 = vmul.f32 %v3484, %v3508
        %v3510 = vmin.f32 %v3509, 1.0
        %v3511 = vmax.f32 %v3510, -1.0
        %v3512 = vmul.f32 %v3188, %v3188
        %v3513 = vmin.f32 16.0, %v3512
        %v3514 = vmul.f32 %v3513, 2.1237322e-06
        %v3515 = vadd.f32 %v3514, 0.00028619796
        %v3516 = vmul.f32 %v3513, %v3515
        %v3517 = vadd.f32 %v3516, 0.0036580483
        %v3518 = vmul.f32 %v3513, %v3517
        %v3519 = vadd.f32 %v3518, 0.05243302
        %v3520 = vmul.f32 %v3513, %v3519
        %v3521 = vadd.f32 %v3520, 0.18741608
        %v3522 = vmul.f32 %v3513, %v3521
        %v3523 = vadd.f32 %v3522, 1.1283791
        %v3524 = vmul.f32 %v3188, %v3523
        %v3525 = vmul.f32 %v3513, 3.8918573e-05
        %v3526 = vadd.f32 %v3525, 0.001143296
        %v3527 = vmul.f32 %v3513, %v3526
        %v3528 = vadd.f32 %v3527, 0.014752088
        %v3529 = vmul.f32 %v3513, %v3528
        %v3530 = vadd.f32 %v3529, 0.112945676
        %v3531 = vmul.f32 %v3513, %v3530
        %v3532 = vadd.f32 %v3531, 0.4994258
        %v3533 = vmul.f32 %v3513, %v3532
        %v3534 = vadd.f32 %v3533, 1.0
        %v3535 = vrcp.pop %v3534
        %v3536 = vmul.f32 %v3534, %v3535
        %v3537 = vsub.f32 1.0, %v3536
        %v3538 = vmul.f32 %v3535, %v3537
        %v3539 = vadd.f32 %v3535, %v3538
        %vm3540 = vweird.f32 %v3534
        %vm3541 = vweird.f32 %v3535
        %vm3542 = vmor %vm3540, %vm3541
        %v3543 = vsel %vm3542, %v3535, %v3539
        %v3544 = vand.u32 2147483647, %v3534
        %vm3545 = vcmp.eq.f32.partialorder %v3544, 8.507059e+37
        %v3546 = vand.u32 %v3534, 2147483648
        %v3547 = vor.u32 1.1754944e-38, %v3546
        %v3548 = vsel %vm3545, %v3547, %v3543
        %v3549 = vmul.f32 %v3524, %v3548
        %v3550 = vmin.f32 %v3549, 1.0
        %v3551 = vmax.f32 %v3550, -1.0
        %v3552 = vmul.f32 %v3189, %v3189
        %v3553 = vmin.f32 16.0, %v3552
        %v3554 = vmul.f32 %v3553, 2.1237322e-06
        %v3555 = vadd.f32 %v3554, 0.00028619796
        %v3556 = vmul.f32 %v3553, %v3555
        %v3557 = vadd.f32 %v3556, 0.0036580483
        %v3558 = vmul.f32 %v3553, %v3557
        %v3559 = vadd.f32 %v3558, 0.05243302
        %v3560 = vmul.f32 %v3553, %v3559
        %v3561 = vadd.f32 %v3560, 0.18741608
        %v3562 = vmul.f32 %v3553, %v3561
        %v3563 = vadd.f32 %v3562, 1.1283791
        %v3564 = vmul.f32 %v3189, %v3563
        %v3565 = vmul.f32 %v3553, 3.8918573e-05
        %v3566 = vadd.f32 %v3565, 0.001143296
        %v3567 = vmul.f32 %v3553, %v3566
        %v3568 = vadd.f32 %v3567, 0.014752088
        %v3569 = vmul.f32 %v3553, %v3568
        %v3570 = vadd.f32 %v3569, 0.112945676
        %v3571 = vmul.f32 %v3553, %v3570
        %v3572 = vadd.f32 %v3571, 0.4994258
        %v3573 = vmul.f32 %v3553, %v3572
        %v3574 = vadd.f32 %v3573, 1.0
        %v3575 = vrcp.pop %v3574
        %v3576 = vmul.f32 %v3574, %v3575
        %v3577 = vsub.f32 1.0, %v3576
        %v3578 = vmul.f32 %v3575, %v3577
        %v3579 = vadd.f32 %v3575, %v3578
        %vm3580 = vweird.f32 %v3574
        %vm3581 = vweird.f32 %v3575
        %vm3582 = vmor %vm3580, %vm3581
        %v3583 = vsel %vm3582, %v3575, %v3579
        %v3584 = vand.u32 2147483647, %v3574
        %vm3585 = vcmp.eq.f32.partialorder %v3584, 8.507059e+37
        %v3586 = vand.u32 %v3574, 2147483648
        %v3587 = vor.u32 1.1754944e-38, %v3586
        %v3588 = vsel %vm3585, %v3587, %v3583
        %v3589 = vmul.f32 %v3564, %v3588
        %v3590 = vmin.f32 %v3589, 1.0
        %v3591 = vmax.f32 %v3590, -1.0
        %v3592 = vmul.f32 %v3190, %v3190
        %v3593 = vmin.f32 16.0, %v3592
        %v3594 = vmul.f32 %v3593, 2.1237322e-06
        %v3595 = vadd.f32 %v3594, 0.00028619796
        %v3596 = vmul.f32 %v3593, %v3595
        %v3597 = vadd.f32 %v3596, 0.0036580483
        %v3598 = vmul.f32 %v3593, %v3597
        %v3599 = vadd.f32 %v3598, 0.05243302
        %v3600 = vmul.f32 %v3593, %v3599
        %v3601 = vadd.f32 %v3600, 0.18741608
        %v3602 = vmul.f32 %v3593, %v3601
        %v3603 = vadd.f32 %v3602, 1.1283791
        %v3604 = vmul.f32 %v3190, %v3603
        %v3605 = vmul.f32 %v3593, 3.8918573e-05
        %v3606 = vadd.f32 %v3605, 0.001143296
        %v3607 = vmul.f32 %v3593, %v3606
        %v3608 = vadd.f32 %v3607, 0.014752088
        %v3609 = vmul.f32 %v3593, %v3608
        %v3610 = vadd.f32 %v3609, 0.112945676
        %v3611 = vmul.f32 %v3593, %v3610
        %v3612 = vadd.f32 %v3611, 0.4994258
        %v3613 = vmul.f32 %v3593, %v3612
        %v3614 = vadd.f32 %v3613, 1.0
        %v3615 = vrcp.pop %v3614
        %v3616 = vmul.f32 %v3614, %v3615
        %v3617 = vsub.f32 1.0, %v3616
        %v3618 = vmul.f32 %v3615, %v3617
        %v3619 = vadd.f32 %v3615, %v3618
        %vm3620 = vweird.f32 %v3614
        %vm3621 = vweird.f32 %v3615
        %vm3622 = vmor %vm3620, %vm3621
        %v3623 = vsel %vm3622, %v3615, %v3619
        %v3624 = vand.u32 2147483647, %v3614
        %vm3625 = vcmp.eq.f32.partialorder %v3624, 8.507059e+37
        %v3626 = vand.u32 %v3614, 2147483648
        %v3627 = vor.u32 1.1754944e-38, %v3626
        %v3628 = vsel %vm3625, %v3627, %v3623
        %v3629 = vmul.f32 %v3604, %v3628
        %v3630 = vmin.f32 %v3629, 1.0
        %v3631 = vmax.f32 %v3630, -1.0
        %v3632 = vmul.f32 %v3191, %v3191
        %v3633 = vmin.f32 16.0, %v3632
        %v3634 = vmul.f32 %v3633, 2.1237322e-06
        %v3635 = vadd.f32 %v3634, 0.00028619796
        %v3636 = vmul.f32 %v3633, %v3635
        %v3637 = vadd.f32 %v3636, 0.0036580483
        %v3638 = vmul.f32 %v3633, %v3637
        %v3639 = vadd.f32 %v3638, 0.05243302
        %v3640 = vmul.f32 %v3633, %v3639
        %v3641 = vadd.f32 %v3640, 0.18741608
        %v3642 = vmul.f32 %v3633, %v3641
        %v3643 = vadd.f32 %v3642, 1.1283791
        %v3644 = vmul.f32 %v3191, %v3643
        %v3645 = vmul.f32 %v3633, 3.8918573e-05
        %v3646 = vadd.f32 %v3645, 0.001143296
        %v3647 = vmul.f32 %v3633, %v3646
        %v3648 = vadd.f32 %v3647, 0.014752088
        %v3649 = vmul.f32 %v3633, %v3648
        %v3650 = vadd.f32 %v3649, 0.112945676
        %v3651 = vmul.f32 %v3633, %v3650
        %v3652 = vadd.f32 %v3651, 0.4994258
        %v3653 = vmul.f32 %v3633, %v3652
        %v3654 = vadd.f32 %v3653, 1.0
        %v3655 = vrcp.pop %v3654
        %v3656 = vmul.f32 %v3654, %v3655
        %v3657 = vsub.f32 1.0, %v3656
        %v3658 = vmul.f32 %v3655, %v3657
        %v3659 = vadd.f32 %v3655, %v3658
        %vm3660 = vweird.f32 %v3654
        %vm3661 = vweird.f32 %v3655
        %vm3662 = vmor %vm3660, %vm3661
        %v3663 = vsel %vm3662, %v3655, %v3659
        %v3664 = vand.u32 2147483647, %v3654
        %vm3665 = vcmp.eq.f32.partialorder %v3664, 8.507059e+37
        %v3666 = vand.u32 %v3654, 2147483648
        %v3667 = vor.u32 1.1754944e-38, %v3666
        %v3668 = vsel %vm3665, %v3667, %v3663
        %v3669 = vmul.f32 %v3644, %v3668
        %v3670 = vmin.f32 %v3669, 1.0
        %v3671 = vmax.f32 %v3670, -1.0
        %v3672 = vadd.f32 %v3231, 1.0
        %v3673 = vadd.f32 %v3271, 1.0
        %v3674 = vadd.f32 %v3311, 1.0
        %v3675 = vadd.f32 %v3351, 1.0
        %v3676 = vadd.f32 %v3391, 1.0
        %v3677 = vadd.f32 %v3431, 1.0
        %v3678 = vadd.f32 %v3471, 1.0
        %v3679 = vadd.f32 %v3511, 1.0
        %v3680 = vadd.f32 %v3551, 1.0
        %v3681 = vadd.f32 %v3591, 1.0
        %v3682 = vadd.f32 %v3631, 1.0
        %v3683 = vadd.f32 %v3671, 1.0
        %v3684 = vmul.f32 %v3168, %v3672
        %v3685 = vmul.f32 %v3169, %v3673
        %v3686 = vmul.f32 %v3170, %v3674
        %v3687 = vmul.f32 %v3171, %v3675
        %v3688 = vmul.f32 %v3172, %v3676
        %v3689 = vmul.f32 %v3173, %v3677
        %v3690 = vmul.f32 %v3174, %v3678
        %v3691 = vmul.f32 %v3175, %v3679
        %v3692 = vmul.f32 %v3176, %v3680
        %v3693 = vmul.f32 %v3177, %v3681
        %v3694 = vmul.f32 %v3178, %v3682
        %v3695 = vmul.f32 %v3179, %v3683
        %v3696 = vld [vmem:[%s15] sm:$0x1]
        %v3698 = vperm.slane %v3696, 0
        %v3700 = vadd.f32 %v2753, %v3698
        %v3701 = vadd.f32 %v2754, %v3698
        %v3702 = vadd.f32 %v2755, %v3698
        %v3703 = vadd.f32 %v2756, %v3698
        %v3704 = vadd.f32 %v2757, %v3698
        %v3705 = vadd.f32 %v2758, %v3698
        %v3706 = vadd.f32 %v2759, %v3698
        %v3707 = vadd.f32 %v2760, %v3698
        %v3708 = vadd.f32 %v2761, %v3698
        %v3709 = vadd.f32 %v2762, %v3698
        %v3710 = vadd.f32 %v2763, %v3698
        %v3711 = vadd.f32 %v2764, %v3698
        %v3712 = vpack.c.bf16 %v3685, %v3684
        %v3713 = vpack.c.bf16 %v3687, %v3686
        %v3714 = vpack.c.bf16 %v3689, %v3688
        %v3715 = vpack.c.bf16 %v3691, %v3690
        %v3716 = vpack.c.bf16 %v3693, %v3692
        %v3717 = vpack.c.bf16 %v3695, %v3694
        %v3718 = vld [vmem:[%s14] sm:$0xf]
        %v3719 = vld [vmem:[%s14 + $0x4] sm:$0xf]
        %v3720 = vld [vmem:[%s14 + $0x8] sm:$0xf]
        %v3721 = vld [vmem:[%s14 + $0xc] sm:$0xf]
        %v3722 = vld [vmem:[%s14 + $0x10] sm:$0xf]
        %v3723 = vld [vmem:[%s14 + $0x14] sm:$0xf]
        %v3724 = vld [vmem:[%s14 + $0x18] sm:$0xf]
        %v3725 = vld [vmem:[%s14 + $0x1c] sm:$0xf]
        %v3734 = vunpack.c.l.b16 %v3718
        %v3735 = vunpack.c.l.b16 %v3719
        %v3736 = vunpack.c.l.b16 %v3720
        %v3737 = vunpack.c.l.b16 %v3721
        %v3738 = vunpack.c.l.b16 %v3722
        %v3739 = vunpack.c.l.b16 %v3723
        %v3740 = vunpack.c.l.b16 %v3724
        %v3741 = vunpack.c.l.b16 %v3725
        %v3742 = vpack.c.b16 %v3735, %v3734
        %v3743 = vpack.c.b16 %v3737, %v3736
        %v3744 = vpack.c.b16 %v3739, %v3738
        %v3745 = vpack.c.b16 %v3741, %v3740
        %v3751 = vsel %vm715, %v3712, 0
        %v3754 = vsel %vm715, %v3713, 0
        %v3757 = vsel %vm715, %v3714, 0
        %v3760 = vsel %vm715, %v3715, 0
        %v3763 = vsel %vm715, %v3716, 0
        %v3766 = vsel %vm715, %v3717, 0
        %3768 = vmatpush.bf16.msra.mxu0 0
        %3769 = vmatpush.bf16.msra.mxu0 0
        %3770 = vmatpush.bf16.msra.mxu0 0
        %3771 = vmatpush.bf16.msra.mxu0 0
        %3772 = vmatpush.bf16.msra.mxu0 %v3745
        %3773 = vmatpush.bf16.msra.mxu0 %v3744
        %3774 = vmatpush.bf16.msra.mxu0 %v3743
        %3775 = vmatpush.bf16.msra.mxu0 %v3742
        %3776 = vmatmul.bf16.gmra.mxu0 %v3751
        %v3777 = vpop.f32.mrf.mxu0
        %v3778 = vadd.f32 0.0, %v3777
        %v3779 = vpop.f32.mrf.mxu0
        %v3780 = vadd.f32 0.0, %v3779
        %3781 = vmatmul.bf16.gmra.mxu0 %v3754
        %v3782 = vpop.f32.mrf.mxu0
        %v3783 = vadd.f32 0.0, %v3782
        %v3784 = vpop.f32.mrf.mxu0
        %v3785 = vadd.f32 0.0, %v3784
        %3786 = vmatmul.bf16.gmra.mxu0 %v3757
        %v3787 = vpop.f32.mrf.mxu0
        %v3788 = vadd.f32 0.0, %v3787
        %v3789 = vpop.f32.mrf.mxu0
        %v3790 = vadd.f32 0.0, %v3789
        %3791 = vmatmul.bf16.gmra.mxu0 %v3760
        %v3792 = vpop.f32.mrf.mxu0
        %v3793 = vadd.f32 0.0, %v3792
        %v3794 = vpop.f32.mrf.mxu0
        %v3795 = vadd.f32 0.0, %v3794
        %3796 = vmatmul.bf16.gmra.mxu0 %v3763
        %v3797 = vpop.f32.mrf.mxu0
        %v3798 = vadd.f32 0.0, %v3797
        %v3799 = vpop.f32.mrf.mxu0
        %v3800 = vadd.f32 0.0, %v3799
        %3801 = vmatmul.bf16.gmra.mxu0 %v3766
        %v3802 = vpop.f32.mrf.mxu0
        %v3803 = vadd.f32 0.0, %v3802
        %v3804 = vpop.f32.mrf.mxu0
        %v3805 = vadd.f32 0.0, %v3804
        %3806 = vdwg.mxu0
        %v3807 = vadd.f32 %v3700, %v3778
        %v3808 = vadd.f32 %v3701, %v3780
        %v3809 = vadd.f32 %v3702, %v3783
        %v3810 = vadd.f32 %v3703, %v3785
        %v3811 = vadd.f32 %v3704, %v3788
        %v3812 = vadd.f32 %v3705, %v3790
        %v3813 = vadd.f32 %v3706, %v3793
        %v3814 = vadd.f32 %v3707, %v3795
        %v3815 = vadd.f32 %v3708, %v3798
        %v3816 = vadd.f32 %v3709, %v3800
        %v3817 = vadd.f32 %v3710, %v3803
        %v3818 = vadd.f32 %v3711, %v3805
        %s3819 = scalar_lea.vmem %s4, 1
        %v3820 = vld [vmem:[%s3819] sm:$0x1]
        %s3821 = scalar_lea.vmem %s5, 1
        %v3822 = vld [vmem:[%s3821] sm:$0x1]
        %v3823 = vsel %vm787, %v3807, 0.0
        %3824 = vadd.xlane.f32.xlu0 %v3823
        %v3825 = vpop.xlane.xlu0 %3824
        %v3826 = vsel %vm787, %v3808, 0.0
        %3827 = vadd.xlane.f32.xlu0 %v3826
        %v3828 = vpop.xlane.xlu0 %3827
        %v3829 = vsel %vm787, %v3809, 0.0
        %3830 = vadd.xlane.f32.xlu0 %v3829
        %v3831 = vpop.xlane.xlu0 %3830
        %v3832 = vsel %vm787, %v3810, 0.0
        %3833 = vadd.xlane.f32.xlu0 %v3832
        %v3834 = vpop.xlane.xlu0 %3833
        %v3835 = vsel %vm787, %v3811, 0.0
        %3836 = vadd.xlane.f32.xlu0 %v3835
        %v3837 = vpop.xlane.xlu0 %3836
        %v3838 = vsel %vm787, %v3812, 0.0
        %3839 = vadd.xlane.f32.xlu0 %v3838
        %v3840 = vpop.xlane.xlu0 %3839
        %v3841 = vsel %vm787, %v3813, 0.0
        %3842 = vadd.xlane.f32.xlu0 %v3841
        %v3843 = vpop.xlane.xlu0 %3842
        %v3844 = vsel %vm787, %v3814, 0.0
        %3845 = vadd.xlane.f32.xlu0 %v3844
        %v3846 = vpop.xlane.xlu0 %3845
        %v3847 = vsel %vm787, %v3815, 0.0
        %3848 = vadd.xlane.f32.xlu0 %v3847
        %v3849 = vpop.xlane.xlu0 %3848
        %v3850 = vsel %vm787, %v3816, 0.0
        %3851 = vadd.xlane.f32.xlu0 %v3850
        %v3852 = vpop.xlane.xlu0 %3851
        %v3853 = vsel %vm787, %v3817, 0.0
        %3854 = vadd.xlane.f32.xlu0 %v3853
        %v3855 = vpop.xlane.xlu0 %3854
        %v3856 = vsel %vm787, %v3818, 0.0
        %3857 = vadd.xlane.f32.xlu0 %v3856
        %v3858 = vpop.xlane.xlu0 %3857
        %v3859 = vmul.f32 %v3825, %v830
        %v3860 = vmul.f32 %v3828, %v830
        %v3861 = vmul.f32 %v3831, %v830
        %v3862 = vmul.f32 %v3834, %v830
        %v3863 = vmul.f32 %v3837, %v830
        %v3864 = vmul.f32 %v3840, %v830
        %v3865 = vmul.f32 %v3843, %v830
        %v3866 = vmul.f32 %v3846, %v830
        %v3867 = vmul.f32 %v3849, %v830
        %v3868 = vmul.f32 %v3852, %v830
        %v3869 = vmul.f32 %v3855, %v830
        %v3870 = vmul.f32 %v3858, %v830
        %v3871 = vmul.f32 %v3807, %v3807
        %v3872 = vmul.f32 %v3808, %v3808
        %v3873 = vmul.f32 %v3809, %v3809
        %v3874 = vmul.f32 %v3810, %v3810
        %v3875 = vmul.f32 %v3811, %v3811
        %v3876 = vmul.f32 %v3812, %v3812
        %v3877 = vmul.f32 %v3813, %v3813
        %v3878 = vmul.f32 %v3814, %v3814
        %v3879 = vmul.f32 %v3815, %v3815
        %v3880 = vmul.f32 %v3816, %v3816
        %v3881 = vmul.f32 %v3817, %v3817
        %v3882 = vmul.f32 %v3818, %v3818
        %v3883 = vsel %vm787, %v3871, 0.0
        %3884 = vadd.xlane.f32.xlu0 %v3883
        %v3885 = vpop.xlane.xlu0 %3884
        %v3886 = vsel %vm787, %v3872, 0.0
        %3887 = vadd.xlane.f32.xlu0 %v3886
        %v3888 = vpop.xlane.xlu0 %3887
        %v3889 = vsel %vm787, %v3873, 0.0
        %3890 = vadd.xlane.f32.xlu0 %v3889
        %v3891 = vpop.xlane.xlu0 %3890
        %v3892 = vsel %vm787, %v3874, 0.0
        %3893 = vadd.xlane.f32.xlu0 %v3892
        %v3894 = vpop.xlane.xlu0 %3893
        %v3895 = vsel %vm787, %v3875, 0.0
        %3896 = vadd.xlane.f32.xlu0 %v3895
        %v3897 = vpop.xlane.xlu0 %3896
        %v3898 = vsel %vm787, %v3876, 0.0
        %3899 = vadd.xlane.f32.xlu0 %v3898
        %v3900 = vpop.xlane.xlu0 %3899
        %v3901 = vsel %vm787, %v3877, 0.0
        %3902 = vadd.xlane.f32.xlu0 %v3901
        %v3903 = vpop.xlane.xlu0 %3902
        %v3904 = vsel %vm787, %v3878, 0.0
        %3905 = vadd.xlane.f32.xlu0 %v3904
        %v3906 = vpop.xlane.xlu0 %3905
        %v3907 = vsel %vm787, %v3879, 0.0
        %3908 = vadd.xlane.f32.xlu0 %v3907
        %v3909 = vpop.xlane.xlu0 %3908
        %v3910 = vsel %vm787, %v3880, 0.0
        %3911 = vadd.xlane.f32.xlu0 %v3910
        %v3912 = vpop.xlane.xlu0 %3911
        %v3913 = vsel %vm787, %v3881, 0.0
        %3914 = vadd.xlane.f32.xlu0 %v3913
        %v3915 = vpop.xlane.xlu0 %3914
        %v3916 = vsel %vm787, %v3882, 0.0
        %3917 = vadd.xlane.f32.xlu0 %v3916
        %v3918 = vpop.xlane.xlu0 %3917
        %v3919 = vmul.f32 %v3885, %v830
        %v3920 = vmul.f32 %v3888, %v830
        %v3921 = vmul.f32 %v3891, %v830
        %v3922 = vmul.f32 %v3894, %v830
        %v3923 = vmul.f32 %v3897, %v830
        %v3924 = vmul.f32 %v3900, %v830
        %v3925 = vmul.f32 %v3903, %v830
        %v3926 = vmul.f32 %v3906, %v830
        %v3927 = vmul.f32 %v3909, %v830
        %v3928 = vmul.f32 %v3912, %v830
        %v3929 = vmul.f32 %v3915, %v830
        %v3930 = vmul.f32 %v3918, %v830
        %v3931 = vsub.f32 %v3807, %v3859
        %v3932 = vsub.f32 %v3808, %v3860
        %v3933 = vsub.f32 %v3809, %v3861
        %v3934 = vsub.f32 %v3810, %v3862
        %v3935 = vsub.f32 %v3811, %v3863
        %v3936 = vsub.f32 %v3812, %v3864
        %v3937 = vsub.f32 %v3813, %v3865
        %v3938 = vsub.f32 %v3814, %v3866
        %v3939 = vsub.f32 %v3815, %v3867
        %v3940 = vsub.f32 %v3816, %v3868
        %v3941 = vsub.f32 %v3817, %v3869
        %v3942 = vsub.f32 %v3818, %v3870
        %v3943 = vmul.f32 %v3859, %v3859
        %v3944 = vmul.f32 %v3860, %v3860
        %v3945 = vmul.f32 %v3861, %v3861
        %v3946 = vmul.f32 %v3862, %v3862
        %v3947 = vmul.f32 %v3863, %v3863
        %v3948 = vmul.f32 %v3864, %v3864
        %v3949 = vmul.f32 %v3865, %v3865
        %v3950 = vmul.f32 %v3866, %v3866
        %v3951 = vmul.f32 %v3867, %v3867
        %v3952 = vmul.f32 %v3868, %v3868
        %v3953 = vmul.f32 %v3869, %v3869
        %v3954 = vmul.f32 %v3870, %v3870
        %v3955 = vsub.f32 %v3919, %v3943
        %v3956 = vsub.f32 %v3920, %v3944
        %v3957 = vsub.f32 %v3921, %v3945
        %v3958 = vsub.f32 %v3922, %v3946
        %v3959 = vsub.f32 %v3923, %v3947
        %v3960 = vsub.f32 %v3924, %v3948
        %v3961 = vsub.f32 %v3925, %v3949
        %v3962 = vsub.f32 %v3926, %v3950
        %v3963 = vsub.f32 %v3927, %v3951
        %v3964 = vsub.f32 %v3928, %v3952
        %v3965 = vsub.f32 %v3929, %v3953
        %v3966 = vsub.f32 %v3930, %v3954
        %v3967 = vadd.f32 %v3955, 1e-05
        %v3968 = vadd.f32 %v3956, 1e-05
        %v3969 = vadd.f32 %v3957, 1e-05
        %v3970 = vadd.f32 %v3958, 1e-05
        %v3971 = vadd.f32 %v3959, 1e-05
        %v3972 = vadd.f32 %v3960, 1e-05
        %v3973 = vadd.f32 %v3961, 1e-05
        %v3974 = vadd.f32 %v3962, 1e-05
        %v3975 = vadd.f32 %v3963, 1e-05
        %v3976 = vadd.f32 %v3964, 1e-05
        %v3977 = vadd.f32 %v3965, 1e-05
        %v3978 = vadd.f32 %v3966, 1e-05
        %v3979 = vrsqrt.pop %v3967
        %v3980 = vmul.f32 %v3979, %v3967
        %v3981 = vmul.f32 %v3980, %v3979
        %v3982 = vmul.f32 0.5, %v3981
        %v3983 = vsub.f32 1.5, %v3982
        %v3984 = vmul.f32 %v3979, %v3983
        %vm3985 = vweird.f32 %v3967
        %vm3986 = vweird.f32 %v3979
        %vm3987 = vmor %vm3985, %vm3986
        %v3988 = vsel %vm3987, %v3979, %v3984
        %v3989 = vrsqrt.pop %v3968
        %v3990 = vmul.f32 %v3989, %v3968
        %v3991 = vmul.f32 %v3990, %v3989
        %v3992 = vmul.f32 0.5, %v3991
        %v3993 = vsub.f32 1.5, %v3992
        %v3994 = vmul.f32 %v3989, %v3993
        %vm3995 = vweird.f32 %v3968
        %vm3996 = vweird.f32 %v3989
        %vm3997 = vmor %vm3995, %vm3996
        %v3998 = vsel %vm3997, %v3989, %v3994
        %v3999 = vrsqrt.pop %v3969
        %v4000 = vmul.f32 %v3999, %v3969
        %v4001 = vmul.f32 %v4000, %v3999
        %v4002 = vmul.f32 0.5, %v4001
        %v4003 = vsub.f32 1.5, %v4002
        %v4004 = vmul.f32 %v3999, %v4003
        %vm4005 = vweird.f32 %v3969
        %vm4006 = vweird.f32 %v3999
        %vm4007 = vmor %vm4005, %vm4006
        %v4008 = vsel %vm4007, %v3999, %v4004
        %v4009 = vrsqrt.pop %v3970
        %v4010 = vmul.f32 %v4009, %v3970
        %v4011 = vmul.f32 %v4010, %v4009
        %v4012 = vmul.f32 0.5, %v4011
        %v4013 = vsub.f32 1.5, %v4012
        %v4014 = vmul.f32 %v4009, %v4013
        %vm4015 = vweird.f32 %v3970
        %vm4016 = vweird.f32 %v4009
        %vm4017 = vmor %vm4015, %vm4016
        %v4018 = vsel %vm4017, %v4009, %v4014
        %v4019 = vrsqrt.pop %v3971
        %v4020 = vmul.f32 %v4019, %v3971
        %v4021 = vmul.f32 %v4020, %v4019
        %v4022 = vmul.f32 0.5, %v4021
        %v4023 = vsub.f32 1.5, %v4022
        %v4024 = vmul.f32 %v4019, %v4023
        %vm4025 = vweird.f32 %v3971
        %vm4026 = vweird.f32 %v4019
        %vm4027 = vmor %vm4025, %vm4026
        %v4028 = vsel %vm4027, %v4019, %v4024
        %v4029 = vrsqrt.pop %v3972
        %v4030 = vmul.f32 %v4029, %v3972
        %v4031 = vmul.f32 %v4030, %v4029
        %v4032 = vmul.f32 0.5, %v4031
        %v4033 = vsub.f32 1.5, %v4032
        %v4034 = vmul.f32 %v4029, %v4033
        %vm4035 = vweird.f32 %v3972
        %vm4036 = vweird.f32 %v4029
        %vm4037 = vmor %vm4035, %vm4036
        %v4038 = vsel %vm4037, %v4029, %v4034
        %v4039 = vrsqrt.pop %v3973
        %v4040 = vmul.f32 %v4039, %v3973
        %v4041 = vmul.f32 %v4040, %v4039
        %v4042 = vmul.f32 0.5, %v4041
        %v4043 = vsub.f32 1.5, %v4042
        %v4044 = vmul.f32 %v4039, %v4043
        %vm4045 = vweird.f32 %v3973
        %vm4046 = vweird.f32 %v4039
        %vm4047 = vmor %vm4045, %vm4046
        %v4048 = vsel %vm4047, %v4039, %v4044
        %v4049 = vrsqrt.pop %v3974
        %v4050 = vmul.f32 %v4049, %v3974
        %v4051 = vmul.f32 %v4050, %v4049
        %v4052 = vmul.f32 0.5, %v4051
        %v4053 = vsub.f32 1.5, %v4052
        %v4054 = vmul.f32 %v4049, %v4053
        %vm4055 = vweird.f32 %v3974
        %vm4056 = vweird.f32 %v4049
        %vm4057 = vmor %vm4055, %vm4056
        %v4058 = vsel %vm4057, %v4049, %v4054
        %v4059 = vrsqrt.pop %v3975
        %v4060 = vmul.f32 %v4059, %v3975
        %v4061 = vmul.f32 %v4060, %v4059
        %v4062 = vmul.f32 0.5, %v4061
        %v4063 = vsub.f32 1.5, %v4062
        %v4064 = vmul.f32 %v4059, %v4063
        %vm4065 = vweird.f32 %v3975
        %vm4066 = vweird.f32 %v4059
        %vm4067 = vmor %vm4065, %vm4066
        %v4068 = vsel %vm4067, %v4059, %v4064
        %v4069 = vrsqrt.pop %v3976
        %v4070 = vmul.f32 %v4069, %v3976
        %v4071 = vmul.f32 %v4070, %v4069
        %v4072 = vmul.f32 0.5, %v4071
        %v4073 = vsub.f32 1.5, %v4072
        %v4074 = vmul.f32 %v4069, %v4073
        %vm4075 = vweird.f32 %v3976
        %vm4076 = vweird.f32 %v4069
        %vm4077 = vmor %vm4075, %vm4076
        %v4078 = vsel %vm4077, %v4069, %v4074
        %v4079 = vrsqrt.pop %v3977
        %v4080 = vmul.f32 %v4079, %v3977
        %v4081 = vmul.f32 %v4080, %v4079
        %v4082 = vmul.f32 0.5, %v4081
        %v4083 = vsub.f32 1.5, %v4082
        %v4084 = vmul.f32 %v4079, %v4083
        %vm4085 = vweird.f32 %v3977
        %vm4086 = vweird.f32 %v4079
        %vm4087 = vmor %vm4085, %vm4086
        %v4088 = vsel %vm4087, %v4079, %v4084
        %v4089 = vrsqrt.pop %v3978
        %v4090 = vmul.f32 %v4089, %v3978
        %v4091 = vmul.f32 %v4090, %v4089
        %v4092 = vmul.f32 0.5, %v4091
        %v4093 = vsub.f32 1.5, %v4092
        %v4094 = vmul.f32 %v4089, %v4093
        %vm4095 = vweird.f32 %v3978
        %vm4096 = vweird.f32 %v4089
        %vm4097 = vmor %vm4095, %vm4096
        %v4098 = vsel %vm4097, %v4089, %v4094
        %v4099 = vmul.f32 %v3931, %v3988
        %v4100 = vmul.f32 %v3932, %v3998
        %v4101 = vmul.f32 %v3933, %v4008
        %v4102 = vmul.f32 %v3934, %v4018
        %v4103 = vmul.f32 %v3935, %v4028
        %v4104 = vmul.f32 %v3936, %v4038
        %v4105 = vmul.f32 %v3937, %v4048
        %v4106 = vmul.f32 %v3938, %v4058
        %v4107 = vmul.f32 %v3939, %v4068
        %v4108 = vmul.f32 %v3940, %v4078
        %v4109 = vmul.f32 %v3941, %v4088
        %v4110 = vmul.f32 %v3942, %v4098
        %v4112 = vperm.slane %v3820, 0
        %v4114 = vmul.f32 %v4099, %v4112
        %v4115 = vmul.f32 %v4100, %v4112
        %v4116 = vmul.f32 %v4101, %v4112
        %v4117 = vmul.f32 %v4102, %v4112
        %v4118 = vmul.f32 %v4103, %v4112
        %v4119 = vmul.f32 %v4104, %v4112
        %v4120 = vmul.f32 %v4105, %v4112
        %v4121 = vmul.f32 %v4106, %v4112
        %v4122 = vmul.f32 %v4107, %v4112
        %v4123 = vmul.f32 %v4108, %v4112
        %v4124 = vmul.f32 %v4109, %v4112
        %v4125 = vmul.f32 %v4110, %v4112
        %v4127 = vperm.slane %v3822, 0
        %v4129 = vadd.f32 %v4114, %v4127
        %v4130 = vadd.f32 %v4115, %v4127
        %v4131 = vadd.f32 %v4116, %v4127
        %v4132 = vadd.f32 %v4117, %v4127
        %v4133 = vadd.f32 %v4118, %v4127
        %v4134 = vadd.f32 %v4119, %v4127
        %v4135 = vadd.f32 %v4120, %v4127
        %v4136 = vadd.f32 %v4121, %v4127
        %v4137 = vadd.f32 %v4122, %v4127
        %v4138 = vadd.f32 %v4123, %v4127
        %v4139 = vadd.f32 %v4124, %v4127
        %v4140 = vadd.f32 %v4125, %v4127
        %v4141 = vpack.c.bf16 %v4130, %v4129
        %v4142 = vpack.c.bf16 %v4132, %v4131
        %v4143 = vpack.c.bf16 %v4134, %v4133
        %v4144 = vpack.c.bf16 %v4136, %v4135
        %v4145 = vpack.c.bf16 %v4138, %v4137
        %v4146 = vpack.c.bf16 %v4140, %v4139
        %s4147 = scalar_lea.vmem %s6, 16
        %v4148 = vld [vmem:[%s4147] sm:$0xf]
        %v4149 = vld [vmem:[%s4147 + $0x4] sm:$0xf]
        %v4150 = vld [vmem:[%s4147 + $0x8] sm:$0xf]
        %v4151 = vld [vmem:[%s4147 + $0xc] sm:$0xf]
        %s4152 = scalar_lea.vmem %s7, 1
        %v4153 = vld [vmem:[%s4152] sm:$0x1]
        %v4155 = vperm.slane %v4153, 0
        %v4161 = vunpack.c.l.b16 %v4148
        %v4162 = vunpack.c.l.b16 %v4149
        %v4163 = vunpack.c.l.b16 %v4150
        %v4164 = vunpack.c.l.b16 %v4151
        %v4165 = vpack.c.b16 %v4162, %v4161
        %v4166 = vpack.c.b16 %v4164, %v4163
        %v4170 = vsel %vm787, %v4141, 0
        %v4173 = vsel %vm787, %v4142, 0
        %v4176 = vsel %vm787, %v4143, 0
        %v4179 = vsel %vm787, %v4144, 0
        %v4182 = vsel %vm787, %v4145, 0
        %v4185 = vsel %vm787, %v4146, 0
        %4187 = vmatpush.bf16.msra.mxu0 0
        %4188 = vmatpush.bf16.msra.mxu0 0
        %4189 = vmatpush.bf16.msra.mxu0 0
        %4190 = vmatpush.bf16.msra.mxu0 0
        %4191 = vmatpush.bf16.msra.mxu0 0
        %4192 = vmatpush.bf16.msra.mxu0 0
        %4193 = vmatpush.bf16.msra.mxu0 %v4166
        %4194 = vmatpush.bf16.msra.mxu0 %v4165
        %4195 = vmatmul.bf16.gmra.mxu0 %v4170
        %v4196 = vpop.f32.mrf.mxu0
        %v4197 = vadd.f32 %v4155, %v4196
        %v4198 = vpop.f32.mrf.mxu0
        %v4199 = vadd.f32 %v4155, %v4198
        %4200 = vmatmul.bf16.gmra.mxu0 %v4173
        %v4201 = vpop.f32.mrf.mxu0
        %v4202 = vadd.f32 %v4155, %v4201
        %v4203 = vpop.f32.mrf.mxu0
        %v4204 = vadd.f32 %v4155, %v4203
        %4205 = vmatmul.bf16.gmra.mxu0 %v4176
        %v4206 = vpop.f32.mrf.mxu0
        %v4207 = vadd.f32 %v4155, %v4206
        %v4208 = vpop.f32.mrf.mxu0
        %v4209 = vadd.f32 %v4155, %v4208
        %4210 = vmatmul.bf16.gmra.mxu0 %v4179
        %v4211 = vpop.f32.mrf.mxu0
        %v4212 = vadd.f32 %v4155, %v4211
        %v4213 = vpop.f32.mrf.mxu0
        %v4214 = vadd.f32 %v4155, %v4213
        %4215 = vmatmul.bf16.gmra.mxu0 %v4182
        %v4216 = vpop.f32.mrf.mxu0
        %v4217 = vadd.f32 %v4155, %v4216
        %v4218 = vpop.f32.mrf.mxu0
        %v4219 = vadd.f32 %v4155, %v4218
        %4220 = vmatmul.bf16.gmra.mxu0 %v4185
        %v4221 = vpop.f32.mrf.mxu0
        %v4222 = vadd.f32 %v4155, %v4221
        %v4223 = vpop.f32.mrf.mxu0
        %v4224 = vadd.f32 %v4155, %v4223
        %4225 = vdwg.mxu0
        %v4226 = vpack.c.bf16 %v4197, %v4197
        %v4227 = vpack.c.bf16 %v4199, %v4199
        %v4228 = vpack.c.bf16 %v4202, %v4202
        %v4229 = vpack.c.bf16 %v4204, %v4204
        %v4230 = vpack.c.bf16 %v4207, %v4207
        %v4231 = vpack.c.bf16 %v4209, %v4209
        %v4232 = vpack.c.bf16 %v4212, %v4212
        %v4233 = vpack.c.bf16 %v4214, %v4214
        %v4234 = vpack.c.bf16 %v4217, %v4217
        %v4235 = vpack.c.bf16 %v4219, %v4219
        %v4236 = vpack.c.bf16 %v4222, %v4222
        %v4237 = vpack.c.bf16 %v4224, %v4224
        %v4250 = vunpack.c.l.b16 %v4226
        %v4251 = vunpack.c.l.b16 %v4227
        %v4252 = vunpack.c.l.b16 %v4228
        %v4253 = vunpack.c.l.b16 %v4229
        %v4254 = vunpack.c.l.b16 %v4230
        %v4255 = vunpack.c.l.b16 %v4231
        %v4256 = vunpack.c.l.b16 %v4232
        %v4257 = vunpack.c.l.b16 %v4233
        %v4258 = vunpack.c.l.b16 %v4234
        %v4259 = vunpack.c.l.b16 %v4235
        %v4260 = vunpack.c.l.b16 %v4236
        %v4261 = vunpack.c.l.b16 %v4237
        %v4262 = vpack.c.b16 %v4251, %v4250
        %v4263 = vpack.c.b16 %v4253, %v4252
        %v4264 = vpack.c.b16 %v4255, %v4254
        %v4265 = vpack.c.b16 %v4257, %v4256
        %v4266 = vpack.c.b16 %v4259, %v4258
        %v4267 = vpack.c.b16 %v4261, %v4260
        %4268 = vrot.lane.b32.xlu0 %v4262, 96
        %v4269 = vpop.permute.xlu0 %4268
        %4270 = vrot.lane.b32.xlu0 %v4263, 96
        %v4271 = vpop.permute.xlu0 %4270
        %4272 = vrot.lane.b32.xlu0 %v4264, 96
        %v4273 = vpop.permute.xlu0 %4272
        %4274 = vrot.lane.b32.xlu0 %v4265, 96
        %v4275 = vpop.permute.xlu0 %4274
        %4276 = vrot.lane.b32.xlu0 %v4266, 96
        %v4277 = vpop.permute.xlu0 %4276
        %4278 = vrot.lane.b32.xlu0 %v4267, 96
        %v4279 = vpop.permute.xlu0 %4278
        %v4281 = vsel %vm1250, %v4262, 0
        %v4284 = vsel %vm1250, %v4263, 0
        %v4287 = vsel %vm1250, %v4264, 0
        %v4290 = vsel %vm1250, %v4265, 0
        %v4293 = vsel %vm1250, %v4266, 0
        %v4296 = vsel %vm1250, %v4267, 0
        %v4299 = vsel %vm1250, %v4269, 0
        %v4302 = vsel %vm1250, %v4271, 0
        %v4305 = vsel %vm1250, %v4273, 0
        %v4308 = vsel %vm1250, %v4275, 0
        %v4311 = vsel %vm1250, %v4277, 0
        %v4314 = vsel %vm1250, %v4279, 0
        %4316 = vmatpush.bf16.xpose.msra.mxu0 0
        %4317 = vmatpush.bf16.xpose.msra.mxu0 0
        %4318 = vmatpush.bf16.xpose.msra.mxu0 %v4314
        %4319 = vmatpush.bf16.xpose.msra.mxu0 %v4311
        %4320 = vmatpush.bf16.xpose.msra.mxu0 %v4308
        %4321 = vmatpush.bf16.xpose.msra.mxu0 %v4305
        %4322 = vmatpush.bf16.xpose.msra.mxu0 %v4302
        %4323 = vmatpush.bf16.xpose.msra.mxu0 %v4299
        %4324 = vmatmul.bf16.gmra.mxu0 %v4281
        %v4325 = vpop.f32.mrf.mxu0
        %v4326 = vadd.f32 %v773, %v4325
        %v4327 = vpop.f32.mrf.mxu0
        %v4328 = vadd.f32 %v774, %v4327
        %4329 = vmatmul.bf16.gmra.mxu0 %v4284
        %v4330 = vpop.f32.mrf.mxu0
        %v4331 = vadd.f32 %v775, %v4330
        %v4332 = vpop.f32.mrf.mxu0
        %v4333 = vadd.f32 %v776, %v4332
        %4334 = vmatmul.bf16.gmra.mxu0 %v4287
        %v4335 = vpop.f32.mrf.mxu0
        %v4336 = vadd.f32 %v777, %v4335
        %v4337 = vpop.f32.mrf.mxu0
        %v4338 = vadd.f32 %v778, %v4337
        %4339 = vmatmul.bf16.gmra.mxu0 %v4290
        %v4340 = vpop.f32.mrf.mxu0
        %v4341 = vadd.f32 %v779, %v4340
        %v4342 = vpop.f32.mrf.mxu0
        %v4343 = vadd.f32 %v780, %v4342
        %4344 = vmatmul.bf16.gmra.mxu0 %v4293
        %v4345 = vpop.f32.mrf.mxu0
        %v4346 = vadd.f32 %v781, %v4345
        %v4347 = vpop.f32.mrf.mxu0
        %v4348 = vadd.f32 %v782, %v4347
        %4349 = vmatmul.bf16.gmra.mxu0 %v4296
        %v4350 = vpop.f32.mrf.mxu0
        %v4351 = vadd.f32 %v783, %v4350
        %v4352 = vpop.f32.mrf.mxu0
        %v4353 = vadd.f32 %v784, %v4352
        %4354 = vdwg.mxu0
        %v4355 = vsel %vm1326, %v4326, -inf
        %4356 = vmax.xlane.f32.xlu0 %v4355
        %v4357 = vpop.xlane.xlu0 %4356
        %v4358 = vsel %vm1326, %v4328, -inf
        %4359 = vmax.xlane.f32.xlu0 %v4358
        %v4360 = vpop.xlane.xlu0 %4359
        %v4361 = vsel %vm1326, %v4331, -inf
        %4362 = vmax.xlane.f32.xlu0 %v4361
        %v4363 = vpop.xlane.xlu0 %4362
        %v4364 = vsel %vm1326, %v4333, -inf
        %4365 = vmax.xlane.f32.xlu0 %v4364
        %v4366 = vpop.xlane.xlu0 %4365
        %v4367 = vsel %vm1326, %v4336, -inf
        %4368 = vmax.xlane.f32.xlu0 %v4367
        %v4369 = vpop.xlane.xlu0 %4368
        %v4370 = vsel %vm1326, %v4338, -inf
        %4371 = vmax.xlane.f32.xlu0 %v4370
        %v4372 = vpop.xlane.xlu0 %4371
        %v4373 = vsel %vm1326, %v4341, -inf
        %4374 = vmax.xlane.f32.xlu0 %v4373
        %v4375 = vpop.xlane.xlu0 %4374
        %v4376 = vsel %vm1326, %v4343, -inf
        %4377 = vmax.xlane.f32.xlu0 %v4376
        %v4378 = vpop.xlane.xlu0 %4377
        %v4379 = vsel %vm1326, %v4346, -inf
        %4380 = vmax.xlane.f32.xlu0 %v4379
        %v4381 = vpop.xlane.xlu0 %4380
        %v4382 = vsel %vm1326, %v4348, -inf
        %4383 = vmax.xlane.f32.xlu0 %v4382
        %v4384 = vpop.xlane.xlu0 %4383
        %v4385 = vsel %vm1326, %v4351, -inf
        %4386 = vmax.xlane.f32.xlu0 %v4385
        %v4387 = vpop.xlane.xlu0 %4386
        %v4388 = vsel %vm1326, %v4353, -inf
        %4389 = vmax.xlane.f32.xlu0 %v4388
        %v4390 = vpop.xlane.xlu0 %4389
        %v4391 = vsub.f32 %v4326, %v4357
        %v4392 = vsub.f32 %v4328, %v4360
        %v4393 = vsub.f32 %v4331, %v4363
        %v4394 = vsub.f32 %v4333, %v4366
        %v4395 = vsub.f32 %v4336, %v4369
        %v4396 = vsub.f32 %v4338, %v4372
        %v4397 = vsub.f32 %v4341, %v4375
        %v4398 = vsub.f32 %v4343, %v4378
        %v4399 = vsub.f32 %v4346, %v4381
        %v4400 = vsub.f32 %v4348, %v4384
        %v4401 = vsub.f32 %v4351, %v4387
        %v4402 = vsub.f32 %v4353, %v4390
        %v4403 = vmul.f32 %v4391, 1.442695
        %v4404 = vpow.pop %v4403
        %v4405 = vmul.f32 %v4392, 1.442695
        %v4406 = vpow.pop %v4405
        %v4407 = vmul.f32 %v4393, 1.442695
        %v4408 = vpow.pop %v4407
        %v4409 = vmul.f32 %v4394, 1.442695
        %v4410 = vpow.pop %v4409
        %v4411 = vmul.f32 %v4395, 1.442695
        %v4412 = vpow.pop %v4411
        %v4413 = vmul.f32 %v4396, 1.442695
        %v4414 = vpow.pop %v4413
        %v4415 = vmul.f32 %v4397, 1.442695
        %v4416 = vpow.pop %v4415
        %v4417 = vmul.f32 %v4398, 1.442695
        %v4418 = vpow.pop %v4417
        %v4419 = vmul.f32 %v4399, 1.442695
        %v4420 = vpow.pop %v4419
        %v4421 = vmul.f32 %v4400, 1.442695
        %v4422 = vpow.pop %v4421
        %v4423 = vmul.f32 %v4401, 1.442695
        %v4424 = vpow.pop %v4423
        %v4425 = vmul.f32 %v4402, 1.442695
        %v4426 = vpow.pop %v4425
        %v4427 = vsel %vm1326, %v4404, 0.0
        %4428 = vadd.xlane.f32.xlu0 %v4427
        %v4429 = vpop.xlane.xlu0 %4428
        %v4430 = vsel %vm1326, %v4406, 0.0
        %4431 = vadd.xlane.f32.xlu0 %v4430
        %v4432 = vpop.xlane.xlu0 %4431
        %v4433 = vsel %vm1326, %v4408, 0.0
        %4434 = vadd.xlane.f32.xlu0 %v4433
        %v4435 = vpop.xlane.xlu0 %4434
        %v4436 = vsel %vm1326, %v4410, 0.0
        %4437 = vadd.xlane.f32.xlu0 %v4436
        %v4438 = vpop.xlane.xlu0 %4437
        %v4439 = vsel %vm1326, %v4412, 0.0
        %4440 = vadd.xlane.f32.xlu0 %v4439
        %v4441 = vpop.xlane.xlu0 %4440
        %v4442 = vsel %vm1326, %v4414, 0.0
        %4443 = vadd.xlane.f32.xlu0 %v4442
        %v4444 = vpop.xlane.xlu0 %4443
        %v4445 = vsel %vm1326, %v4416, 0.0
        %4446 = vadd.xlane.f32.xlu0 %v4445
        %v4447 = vpop.xlane.xlu0 %4446
        %v4448 = vsel %vm1326, %v4418, 0.0
        %4449 = vadd.xlane.f32.xlu0 %v4448
        %v4450 = vpop.xlane.xlu0 %4449
        %v4451 = vsel %vm1326, %v4420, 0.0
        %4452 = vadd.xlane.f32.xlu0 %v4451
        %v4453 = vpop.xlane.xlu0 %4452
        %v4454 = vsel %vm1326, %v4422, 0.0
        %4455 = vadd.xlane.f32.xlu0 %v4454
        %v4456 = vpop.xlane.xlu0 %4455
        %v4457 = vsel %vm1326, %v4424, 0.0
        %4458 = vadd.xlane.f32.xlu0 %v4457
        %v4459 = vpop.xlane.xlu0 %4458
        %v4460 = vsel %vm1326, %v4426, 0.0
        %4461 = vadd.xlane.f32.xlu0 %v4460
        %v4462 = vpop.xlane.xlu0 %4461
        %v4463 = vrcp.pop %v4429
        %v4464 = vrcp.pop %v4432
        %v4465 = vrcp.pop %v4435
        %v4466 = vrcp.pop %v4438
        %v4467 = vrcp.pop %v4441
        %v4468 = vrcp.pop %v4444
        %v4469 = vrcp.pop %v4447
        %v4470 = vrcp.pop %v4450
        %v4471 = vrcp.pop %v4453
        %v4472 = vrcp.pop %v4456
        %v4473 = vrcp.pop %v4459
        %v4474 = vrcp.pop %v4462
        %v4475 = vpack.c.bf16 %v4406, %v4404
        %v4476 = vpack.c.bf16 %v4410, %v4408
        %v4477 = vpack.c.bf16 %v4414, %v4412
        %v4478 = vpack.c.bf16 %v4418, %v4416
        %v4479 = vpack.c.bf16 %v4422, %v4420
        %v4480 = vpack.c.bf16 %v4426, %v4424
        %4481 = vrot.lane.b32.xlu0 %v4262, 64
        %v4482 = vpop.permute.xlu0 %4481
        %4483 = vrot.lane.b32.xlu0 %v4263, 64
        %v4484 = vpop.permute.xlu0 %4483
        %4485 = vrot.lane.b32.xlu0 %v4264, 64
        %v4486 = vpop.permute.xlu0 %4485
        %4487 = vrot.lane.b32.xlu0 %v4265, 64
        %v4488 = vpop.permute.xlu0 %4487
        %4489 = vrot.lane.b32.xlu0 %v4266, 64
        %v4490 = vpop.permute.xlu0 %4489
        %4491 = vrot.lane.b32.xlu0 %v4267, 64
        %v4492 = vpop.permute.xlu0 %4491
        %v4500 = vsel %vm1326, %v4475, 0
        %v4503 = vsel %vm1326, %v4476, 0
        %v4506 = vsel %vm1326, %v4477, 0
        %v4509 = vsel %vm1326, %v4478, 0
        %v4512 = vsel %vm1326, %v4479, 0
        %v4515 = vsel %vm1326, %v4480, 0
        %4517 = vmatpush.bf16.msra.mxu0 0
        %4518 = vmatpush.bf16.msra.mxu0 0
        %4519 = vmatpush.bf16.msra.mxu0 %v4492
        %4520 = vmatpush.bf16.msra.mxu0 %v4490
        %4521 = vmatpush.bf16.msra.mxu0 %v4488
        %4522 = vmatpush.bf16.msra.mxu0 %v4486
        %4523 = vmatpush.bf16.msra.mxu0 %v4484
        %4524 = vmatpush.bf16.msra.mxu0 %v4482
        %4525 = vmatmul.bf16.gmra.mxu0 %v4500
        %v4526 = vpop.f32.mrf.mxu0
        %v4527 = vadd.f32 0.0, %v4526
        %v4528 = vpop.f32.mrf.mxu0
        %v4529 = vadd.f32 0.0, %v4528
        %4530 = vmatmul.bf16.gmra.mxu0 %v4503
        %v4531 = vpop.f32.mrf.mxu0
        %v4532 = vadd.f32 0.0, %v4531
        %v4533 = vpop.f32.mrf.mxu0
        %v4534 = vadd.f32 0.0, %v4533
        %4535 = vmatmul.bf16.gmra.mxu0 %v4506
        %v4536 = vpop.f32.mrf.mxu0
        %v4537 = vadd.f32 0.0, %v4536
        %v4538 = vpop.f32.mrf.mxu0
        %v4539 = vadd.f32 0.0, %v4538
        %4540 = vmatmul.bf16.gmra.mxu0 %v4509
        %v4541 = vpop.f32.mrf.mxu0
        %v4542 = vadd.f32 0.0, %v4541
        %v4543 = vpop.f32.mrf.mxu0
        %v4544 = vadd.f32 0.0, %v4543
        %4545 = vmatmul.bf16.gmra.mxu0 %v4512
        %v4546 = vpop.f32.mrf.mxu0
        %v4547 = vadd.f32 0.0, %v4546
        %v4548 = vpop.f32.mrf.mxu0
        %v4549 = vadd.f32 0.0, %v4548
        %4550 = vmatmul.bf16.gmra.mxu0 %v4515
        %v4551 = vpop.f32.mrf.mxu0
        %v4552 = vadd.f32 0.0, %v4551
        %v4553 = vpop.f32.mrf.mxu0
        %v4554 = vadd.f32 0.0, %v4553
        %4555 = vdwg.mxu0
        %v4556 = vmul.f32 %v4527, %v4463
        %v4557 = vmul.f32 %v4529, %v4464
        %v4558 = vmul.f32 %v4532, %v4465
        %v4559 = vmul.f32 %v4534, %v4466
        %v4560 = vmul.f32 %v4537, %v4467
        %v4561 = vmul.f32 %v4539, %v4468
        %v4562 = vmul.f32 %v4542, %v4469
        %v4563 = vmul.f32 %v4544, %v4470
        %v4564 = vmul.f32 %v4547, %v4471
        %v4565 = vmul.f32 %v4549, %v4472
        %v4566 = vmul.f32 %v4552, %v4473
        %v4567 = vmul.f32 %v4554, %v4474
        %4568 = vrot.lane.b32.xlu0 %v4262, 120
        %v4569 = vpop.permute.xlu0 %4568
        %4570 = vrot.lane.b32.xlu0 %v4263, 120
        %v4571 = vpop.permute.xlu0 %4570
        %4572 = vrot.lane.b32.xlu0 %v4264, 120
        %v4573 = vpop.permute.xlu0 %4572
        %4574 = vrot.lane.b32.xlu0 %v4265, 120
        %v4575 = vpop.permute.xlu0 %4574
        %4576 = vrot.lane.b32.xlu0 %v4266, 120
        %v4577 = vpop.permute.xlu0 %4576
        %4578 = vrot.lane.b32.xlu0 %v4267, 120
        %v4579 = vpop.permute.xlu0 %4578
        %4580 = vrot.lane.b32.xlu0 %v4262, 88
        %v4581 = vpop.permute.xlu0 %4580
        %4582 = vrot.lane.b32.xlu0 %v4263, 88
        %v4583 = vpop.permute.xlu0 %4582
        %4584 = vrot.lane.b32.xlu0 %v4264, 88
        %v4585 = vpop.permute.xlu0 %4584
        %4586 = vrot.lane.b32.xlu0 %v4265, 88
        %v4587 = vpop.permute.xlu0 %4586
        %4588 = vrot.lane.b32.xlu0 %v4266, 88
        %v4589 = vpop.permute.xlu0 %4588
        %4590 = vrot.lane.b32.xlu0 %v4267, 88
        %v4591 = vpop.permute.xlu0 %4590
        %v4593 = vsel %vm1250, %v4569, 0
        %v4596 = vsel %vm1250, %v4571, 0
        %v4599 = vsel %vm1250, %v4573, 0
        %v4602 = vsel %vm1250, %v4575, 0
        %v4605 = vsel %vm1250, %v4577, 0
        %v4608 = vsel %vm1250, %v4579, 0
        %v4611 = vsel %vm1250, %v4581, 0
        %v4614 = vsel %vm1250, %v4583, 0
        %v4617 = vsel %vm1250, %v4585, 0
        %v4620 = vsel %vm1250, %v4587, 0
        %v4623 = vsel %vm1250, %v4589, 0
        %v4626 = vsel %vm1250, %v4591, 0
        %4628 = vmatpush.bf16.xpose.msra.mxu0 0
        %4629 = vmatpush.bf16.xpose.msra.mxu0 0
        %4630 = vmatpush.bf16.xpose.msra.mxu0 %v4626
        %4631 = vmatpush.bf16.xpose.msra.mxu0 %v4623
        %4632 = vmatpush.bf16.xpose.msra.mxu0 %v4620
        %4633 = vmatpush.bf16.xpose.msra.mxu0 %v4617
        %4634 = vmatpush.bf16.xpose.msra.mxu0 %v4614
        %4635 = vmatpush.bf16.xpose.msra.mxu0 %v4611
        %4636 = vmatmul.bf16.gmra.mxu0 %v4593
        %v4637 = vpop.f32.mrf.mxu0
        %v4638 = vadd.f32 %v773, %v4637
        %v4639 = vpop.f32.mrf.mxu0
        %v4640 = vadd.f32 %v774, %v4639
        %4641 = vmatmul.bf16.gmra.mxu0 %v4596
        %v4642 = vpop.f32.mrf.mxu0
        %v4643 = vadd.f32 %v775, %v4642
        %v4644 = vpop.f32.mrf.mxu0
        %v4645 = vadd.f32 %v776, %v4644
        %4646 = vmatmul.bf16.gmra.mxu0 %v4599
        %v4647 = vpop.f32.mrf.mxu0
        %v4648 = vadd.f32 %v777, %v4647
        %v4649 = vpop.f32.mrf.mxu0
        %v4650 = vadd.f32 %v778, %v4649
        %4651 = vmatmul.bf16.gmra.mxu0 %v4602
        %v4652 = vpop.f32.mrf.mxu0
        %v4653 = vadd.f32 %v779, %v4652
        %v4654 = vpop.f32.mrf.mxu0
        %v4655 = vadd.f32 %v780, %v4654
        %4656 = vmatmul.bf16.gmra.mxu0 %v4605
        %v4657 = vpop.f32.mrf.mxu0
        %v4658 = vadd.f32 %v781, %v4657
        %v4659 = vpop.f32.mrf.mxu0
        %v4660 = vadd.f32 %v782, %v4659
        %4661 = vmatmul.bf16.gmra.mxu0 %v4608
        %v4662 = vpop.f32.mrf.mxu0
        %v4663 = vadd.f32 %v783, %v4662
        %v4664 = vpop.f32.mrf.mxu0
        %v4665 = vadd.f32 %v784, %v4664
        %4666 = vdwg.mxu0
        %v4667 = vsel %vm1326, %v4638, -inf
        %4668 = vmax.xlane.f32.xlu0 %v4667
        %v4669 = vpop.xlane.xlu0 %4668
        %v4670 = vsel %vm1326, %v4640, -inf
        %4671 = vmax.xlane.f32.xlu0 %v4670
        %v4672 = vpop.xlane.xlu0 %4671
        %v4673 = vsel %vm1326, %v4643, -inf
        %4674 = vmax.xlane.f32.xlu0 %v4673
        %v4675 = vpop.xlane.xlu0 %4674
        %v4676 = vsel %vm1326, %v4645, -inf
        %4677 = vmax.xlane.f32.xlu0 %v4676
        %v4678 = vpop.xlane.xlu0 %4677
        %v4679 = vsel %vm1326, %v4648, -inf
        %4680 = vmax.xlane.f32.xlu0 %v4679
        %v4681 = vpop.xlane.xlu0 %4680
        %v4682 = vsel %vm1326, %v4650, -inf
        %4683 = vmax.xlane.f32.xlu0 %v4682
        %v4684 = vpop.xlane.xlu0 %4683
        %v4685 = vsel %vm1326, %v4653, -inf
        %4686 = vmax.xlane.f32.xlu0 %v4685
        %v4687 = vpop.xlane.xlu0 %4686
        %v4688 = vsel %vm1326, %v4655, -inf
        %4689 = vmax.xlane.f32.xlu0 %v4688
        %v4690 = vpop.xlane.xlu0 %4689
        %v4691 = vsel %vm1326, %v4658, -inf
        %4692 = vmax.xlane.f32.xlu0 %v4691
        %v4693 = vpop.xlane.xlu0 %4692
        %v4694 = vsel %vm1326, %v4660, -inf
        %4695 = vmax.xlane.f32.xlu0 %v4694
        %v4696 = vpop.xlane.xlu0 %4695
        %v4697 = vsel %vm1326, %v4663, -inf
        %4698 = vmax.xlane.f32.xlu0 %v4697
        %v4699 = vpop.xlane.xlu0 %4698
        %v4700 = vsel %vm1326, %v4665, -inf
        %4701 = vmax.xlane.f32.xlu0 %v4700
        %v4702 = vpop.xlane.xlu0 %4701
        %v4703 = vsub.f32 %v4638, %v4669
        %v4704 = vsub.f32 %v4640, %v4672
        %v4705 = vsub.f32 %v4643, %v4675
        %v4706 = vsub.f32 %v4645, %v4678
        %v4707 = vsub.f32 %v4648, %v4681
        %v4708 = vsub.f32 %v4650, %v4684
        %v4709 = vsub.f32 %v4653, %v4687
        %v4710 = vsub.f32 %v4655, %v4690
        %v4711 = vsub.f32 %v4658, %v4693
        %v4712 = vsub.f32 %v4660, %v4696
        %v4713 = vsub.f32 %v4663, %v4699
        %v4714 = vsub.f32 %v4665, %v4702
        %v4715 = vmul.f32 %v4703, 1.442695
        %v4716 = vpow.pop %v4715
        %v4717 = vmul.f32 %v4704, 1.442695
        %v4718 = vpow.pop %v4717
        %v4719 = vmul.f32 %v4705, 1.442695
        %v4720 = vpow.pop %v4719
        %v4721 = vmul.f32 %v4706, 1.442695
        %v4722 = vpow.pop %v4721
        %v4723 = vmul.f32 %v4707, 1.442695
        %v4724 = vpow.pop %v4723
        %v4725 = vmul.f32 %v4708, 1.442695
        %v4726 = vpow.pop %v4725
        %v4727 = vmul.f32 %v4709, 1.442695
        %v4728 = vpow.pop %v4727
        %v4729 = vmul.f32 %v4710, 1.442695
        %v4730 = vpow.pop %v4729
        %v4731 = vmul.f32 %v4711, 1.442695
        %v4732 = vpow.pop %v4731
        %v4733 = vmul.f32 %v4712, 1.442695
        %v4734 = vpow.pop %v4733
        %v4735 = vmul.f32 %v4713, 1.442695
        %v4736 = vpow.pop %v4735
        %v4737 = vmul.f32 %v4714, 1.442695
        %v4738 = vpow.pop %v4737
        %v4739 = vsel %vm1326, %v4716, 0.0
        %4740 = vadd.xlane.f32.xlu0 %v4739
        %v4741 = vpop.xlane.xlu0 %4740
        %v4742 = vsel %vm1326, %v4718, 0.0
        %4743 = vadd.xlane.f32.xlu0 %v4742
        %v4744 = vpop.xlane.xlu0 %4743
        %v4745 = vsel %vm1326, %v4720, 0.0
        %4746 = vadd.xlane.f32.xlu0 %v4745
        %v4747 = vpop.xlane.xlu0 %4746
        %v4748 = vsel %vm1326, %v4722, 0.0
        %4749 = vadd.xlane.f32.xlu0 %v4748
        %v4750 = vpop.xlane.xlu0 %4749
        %v4751 = vsel %vm1326, %v4724, 0.0
        %4752 = vadd.xlane.f32.xlu0 %v4751
        %v4753 = vpop.xlane.xlu0 %4752
        %v4754 = vsel %vm1326, %v4726, 0.0
        %4755 = vadd.xlane.f32.xlu0 %v4754
        %v4756 = vpop.xlane.xlu0 %4755
        %v4757 = vsel %vm1326, %v4728, 0.0
        %4758 = vadd.xlane.f32.xlu0 %v4757
        %v4759 = vpop.xlane.xlu0 %4758
        %v4760 = vsel %vm1326, %v4730, 0.0
        %4761 = vadd.xlane.f32.xlu0 %v4760
        %v4762 = vpop.xlane.xlu0 %4761
        %v4763 = vsel %vm1326, %v4732, 0.0
        %4764 = vadd.xlane.f32.xlu0 %v4763
        %v4765 = vpop.xlane.xlu0 %4764
        %v4766 = vsel %vm1326, %v4734, 0.0
        %4767 = vadd.xlane.f32.xlu0 %v4766
        %v4768 = vpop.xlane.xlu0 %4767
        %v4769 = vsel %vm1326, %v4736, 0.0
        %4770 = vadd.xlane.f32.xlu0 %v4769
        %v4771 = vpop.xlane.xlu0 %4770
        %v4772 = vsel %vm1326, %v4738, 0.0
        %4773 = vadd.xlane.f32.xlu0 %v4772
        %v4774 = vpop.xlane.xlu0 %4773
        %v4775 = vrcp.pop %v4741
        %v4776 = vrcp.pop %v4744
        %v4777 = vrcp.pop %v4747
        %v4778 = vrcp.pop %v4750
        %v4779 = vrcp.pop %v4753
        %v4780 = vrcp.pop %v4756
        %v4781 = vrcp.pop %v4759
        %v4782 = vrcp.pop %v4762
        %v4783 = vrcp.pop %v4765
        %v4784 = vrcp.pop %v4768
        %v4785 = vrcp.pop %v4771
        %v4786 = vrcp.pop %v4774
        %v4787 = vpack.c.bf16 %v4718, %v4716
        %v4788 = vpack.c.bf16 %v4722, %v4720
        %v4789 = vpack.c.bf16 %v4726, %v4724
        %v4790 = vpack.c.bf16 %v4730, %v4728
        %v4791 = vpack.c.bf16 %v4734, %v4732
        %v4792 = vpack.c.bf16 %v4738, %v4736
        %4793 = vrot.lane.b32.xlu0 %v4262, 56
        %v4794 = vpop.permute.xlu0 %4793
        %4795 = vrot.lane.b32.xlu0 %v4263, 56
        %v4796 = vpop.permute.xlu0 %4795
        %4797 = vrot.lane.b32.xlu0 %v4264, 56
        %v4798 = vpop.permute.xlu0 %4797
        %4799 = vrot.lane.b32.xlu0 %v4265, 56
        %v4800 = vpop.permute.xlu0 %4799
        %4801 = vrot.lane.b32.xlu0 %v4266, 56
        %v4802 = vpop.permute.xlu0 %4801
        %4803 = vrot.lane.b32.xlu0 %v4267, 56
        %v4804 = vpop.permute.xlu0 %4803
        %v4812 = vsel %vm1326, %v4787, 0
        %v4815 = vsel %vm1326, %v4788, 0
        %v4818 = vsel %vm1326, %v4789, 0
        %v4821 = vsel %vm1326, %v4790, 0
        %v4824 = vsel %vm1326, %v4791, 0
        %v4827 = vsel %vm1326, %v4792, 0
        %4829 = vmatpush.bf16.msra.mxu0 0
        %4830 = vmatpush.bf16.msra.mxu0 0
        %4831 = vmatpush.bf16.msra.mxu0 %v4804
        %4832 = vmatpush.bf16.msra.mxu0 %v4802
        %4833 = vmatpush.bf16.msra.mxu0 %v4800
        %4834 = vmatpush.bf16.msra.mxu0 %v4798
        %4835 = vmatpush.bf16.msra.mxu0 %v4796
        %4836 = vmatpush.bf16.msra.mxu0 %v4794
        %4837 = vmatmul.bf16.gmra.mxu0 %v4812
        %v4838 = vpop.f32.mrf.mxu0
        %v4839 = vadd.f32 0.0, %v4838
        %v4840 = vpop.f32.mrf.mxu0
        %v4841 = vadd.f32 0.0, %v4840
        %4842 = vmatmul.bf16.gmra.mxu0 %v4815
        %v4843 = vpop.f32.mrf.mxu0
        %v4844 = vadd.f32 0.0, %v4843
        %v4845 = vpop.f32.mrf.mxu0
        %v4846 = vadd.f32 0.0, %v4845
        %4847 = vmatmul.bf16.gmra.mxu0 %v4818
        %v4848 = vpop.f32.mrf.mxu0
        %v4849 = vadd.f32 0.0, %v4848
        %v4850 = vpop.f32.mrf.mxu0
        %v4851 = vadd.f32 0.0, %v4850
        %4852 = vmatmul.bf16.gmra.mxu0 %v4821
        %v4853 = vpop.f32.mrf.mxu0
        %v4854 = vadd.f32 0.0, %v4853
        %v4855 = vpop.f32.mrf.mxu0
        %v4856 = vadd.f32 0.0, %v4855
        %4857 = vmatmul.bf16.gmra.mxu0 %v4824
        %v4858 = vpop.f32.mrf.mxu0
        %v4859 = vadd.f32 0.0, %v4858
        %v4860 = vpop.f32.mrf.mxu0
        %v4861 = vadd.f32 0.0, %v4860
        %4862 = vmatmul.bf16.gmra.mxu0 %v4827
        %v4863 = vpop.f32.mrf.mxu0
        %v4864 = vadd.f32 0.0, %v4863
        %v4865 = vpop.f32.mrf.mxu0
        %v4866 = vadd.f32 0.0, %v4865
        %4867 = vdwg.mxu0
        %v4868 = vmul.f32 %v4839, %v4775
        %v4869 = vmul.f32 %v4841, %v4776
        %v4870 = vmul.f32 %v4844, %v4777
        %v4871 = vmul.f32 %v4846, %v4778
        %v4872 = vmul.f32 %v4849, %v4779
        %v4873 = vmul.f32 %v4851, %v4780
        %v4874 = vmul.f32 %v4854, %v4781
        %v4875 = vmul.f32 %v4856, %v4782
        %v4876 = vmul.f32 %v4859, %v4783
        %v4877 = vmul.f32 %v4861, %v4784
        %v4878 = vmul.f32 %v4864, %v4785
        %v4879 = vmul.f32 %v4866, %v4786
        %4880 = vrot.lane.b32.xlu0 %v4262, 112
        %v4881 = vpop.permute.xlu0 %4880
        %4882 = vrot.lane.b32.xlu0 %v4263, 112
        %v4883 = vpop.permute.xlu0 %4882
        %4884 = vrot.lane.b32.xlu0 %v4264, 112
        %v4885 = vpop.permute.xlu0 %4884
        %4886 = vrot.lane.b32.xlu0 %v4265, 112
        %v4887 = vpop.permute.xlu0 %4886
        %4888 = vrot.lane.b32.xlu0 %v4266, 112
        %v4889 = vpop.permute.xlu0 %4888
        %4890 = vrot.lane.b32.xlu0 %v4267, 112
        %v4891 = vpop.permute.xlu0 %4890
        %4892 = vrot.lane.b32.xlu0 %v4262, 80
        %v4893 = vpop.permute.xlu0 %4892
        %4894 = vrot.lane.b32.xlu0 %v4263, 80
        %v4895 = vpop.permute.xlu0 %4894
        %4896 = vrot.lane.b32.xlu0 %v4264, 80
        %v4897 = vpop.permute.xlu0 %4896
        %4898 = vrot.lane.b32.xlu0 %v4265, 80
        %v4899 = vpop.permute.xlu0 %4898
        %4900 = vrot.lane.b32.xlu0 %v4266, 80
        %v4901 = vpop.permute.xlu0 %4900
        %4902 = vrot.lane.b32.xlu0 %v4267, 80
        %v4903 = vpop.permute.xlu0 %4902
        %v4905 = vsel %vm1250, %v4881, 0
        %v4908 = vsel %vm1250, %v4883, 0
        %v4911 = vsel %vm1250, %v4885, 0
        %v4914 = vsel %vm1250, %v4887, 0
        %v4917 = vsel %vm1250, %v4889, 0
        %v4920 = vsel %vm1250, %v4891, 0
        %v4923 = vsel %vm1250, %v4893, 0
        %v4926 = vsel %vm1250, %v4895, 0
        %v4929 = vsel %vm1250, %v4897, 0
        %v4932 = vsel %vm1250, %v4899, 0
        %v4935 = vsel %vm1250, %v4901, 0
        %v4938 = vsel %vm1250, %v4903, 0
        %4940 = vmatpush.bf16.xpose.msra.mxu0 0
        %4941 = vmatpush.bf16.xpose.msra.mxu0 0
        %4942 = vmatpush.bf16.xpose.msra.mxu0 %v4938
        %4943 = vmatpush.bf16.xpose.msra.mxu0 %v4935
        %4944 = vmatpush.bf16.xpose.msra.mxu0 %v4932
        %4945 = vmatpush.bf16.xpose.msra.mxu0 %v4929
        %4946 = vmatpush.bf16.xpose.msra.mxu0 %v4926
        %4947 = vmatpush.bf16.xpose.msra.mxu0 %v4923
        %4948 = vmatmul.bf16.gmra.mxu0 %v4905
        %v4949 = vpop.f32.mrf.mxu0
        %v4950 = vadd.f32 %v773, %v4949
        %v4951 = vpop.f32.mrf.mxu0
        %v4952 = vadd.f32 %v774, %v4951
        %4953 = vmatmul.bf16.gmra.mxu0 %v4908
        %v4954 = vpop.f32.mrf.mxu0
        %v4955 = vadd.f32 %v775, %v4954
        %v4956 = vpop.f32.mrf.mxu0
        %v4957 = vadd.f32 %v776, %v4956
        %4958 = vmatmul.bf16.gmra.mxu0 %v4911
        %v4959 = vpop.f32.mrf.mxu0
        %v4960 = vadd.f32 %v777, %v4959
        %v4961 = vpop.f32.mrf.mxu0
        %v4962 = vadd.f32 %v778, %v4961
        %4963 = vmatmul.bf16.gmra.mxu0 %v4914
        %v4964 = vpop.f32.mrf.mxu0
        %v4965 = vadd.f32 %v779, %v4964
        %v4966 = vpop.f32.mrf.mxu0
        %v4967 = vadd.f32 %v780, %v4966
        %4968 = vmatmul.bf16.gmra.mxu0 %v4917
        %v4969 = vpop.f32.mrf.mxu0
        %v4970 = vadd.f32 %v781, %v4969
        %v4971 = vpop.f32.mrf.mxu0
        %v4972 = vadd.f32 %v782, %v4971
        %4973 = vmatmul.bf16.gmra.mxu0 %v4920
        %v4974 = vpop.f32.mrf.mxu0
        %v4975 = vadd.f32 %v783, %v4974
        %v4976 = vpop.f32.mrf.mxu0
        %v4977 = vadd.f32 %v784, %v4976
        %4978 = vdwg.mxu0
        %v4979 = vsel %vm1326, %v4950, -inf
        %4980 = vmax.xlane.f32.xlu0 %v4979
        %v4981 = vpop.xlane.xlu0 %4980
        %v4982 = vsel %vm1326, %v4952, -inf
        %4983 = vmax.xlane.f32.xlu0 %v4982
        %v4984 = vpop.xlane.xlu0 %4983
        %v4985 = vsel %vm1326, %v4955, -inf
        %4986 = vmax.xlane.f32.xlu0 %v4985
        %v4987 = vpop.xlane.xlu0 %4986
        %v4988 = vsel %vm1326, %v4957, -inf
        %4989 = vmax.xlane.f32.xlu0 %v4988
        %v4990 = vpop.xlane.xlu0 %4989
        %v4991 = vsel %vm1326, %v4960, -inf
        %4992 = vmax.xlane.f32.xlu0 %v4991
        %v4993 = vpop.xlane.xlu0 %4992
        %v4994 = vsel %vm1326, %v4962, -inf
        %4995 = vmax.xlane.f32.xlu0 %v4994
        %v4996 = vpop.xlane.xlu0 %4995
        %v4997 = vsel %vm1326, %v4965, -inf
        %4998 = vmax.xlane.f32.xlu0 %v4997
        %v4999 = vpop.xlane.xlu0 %4998
        %v5000 = vsel %vm1326, %v4967, -inf
        %5001 = vmax.xlane.f32.xlu0 %v5000
        %v5002 = vpop.xlane.xlu0 %5001
        %v5003 = vsel %vm1326, %v4970, -inf
        %5004 = vmax.xlane.f32.xlu0 %v5003
        %v5005 = vpop.xlane.xlu0 %5004
        %v5006 = vsel %vm1326, %v4972, -inf
        %5007 = vmax.xlane.f32.xlu0 %v5006
        %v5008 = vpop.xlane.xlu0 %5007
        %v5009 = vsel %vm1326, %v4975, -inf
        %5010 = vmax.xlane.f32.xlu0 %v5009
        %v5011 = vpop.xlane.xlu0 %5010
        %v5012 = vsel %vm1326, %v4977, -inf
        %5013 = vmax.xlane.f32.xlu0 %v5012
        %v5014 = vpop.xlane.xlu0 %5013
        %v5015 = vsub.f32 %v4950, %v4981
        %v5016 = vsub.f32 %v4952, %v4984
        %v5017 = vsub.f32 %v4955, %v4987
        %v5018 = vsub.f32 %v4957, %v4990
        %v5019 = vsub.f32 %v4960, %v4993
        %v5020 = vsub.f32 %v4962, %v4996
        %v5021 = vsub.f32 %v4965, %v4999
        %v5022 = vsub.f32 %v4967, %v5002
        %v5023 = vsub.f32 %v4970, %v5005
        %v5024 = vsub.f32 %v4972, %v5008
        %v5025 = vsub.f32 %v4975, %v5011
        %v5026 = vsub.f32 %v4977, %v5014
        %v5027 = vmul.f32 %v5015, 1.442695
        %v5028 = vpow.pop %v5027
        %v5029 = vmul.f32 %v5016, 1.442695
        %v5030 = vpow.pop %v5029
        %v5031 = vmul.f32 %v5017, 1.442695
        %v5032 = vpow.pop %v5031
        %v5033 = vmul.f32 %v5018, 1.442695
        %v5034 = vpow.pop %v5033
        %v5035 = vmul.f32 %v5019, 1.442695
        %v5036 = vpow.pop %v5035
        %v5037 = vmul.f32 %v5020, 1.442695
        %v5038 = vpow.pop %v5037
        %v5039 = vmul.f32 %v5021, 1.442695
        %v5040 = vpow.pop %v5039
        %v5041 = vmul.f32 %v5022, 1.442695
        %v5042 = vpow.pop %v5041
        %v5043 = vmul.f32 %v5023, 1.442695
        %v5044 = vpow.pop %v5043
        %v5045 = vmul.f32 %v5024, 1.442695
        %v5046 = vpow.pop %v5045
        %v5047 = vmul.f32 %v5025, 1.442695
        %v5048 = vpow.pop %v5047
        %v5049 = vmul.f32 %v5026, 1.442695
        %v5050 = vpow.pop %v5049
        %v5051 = vsel %vm1326, %v5028, 0.0
        %5052 = vadd.xlane.f32.xlu0 %v5051
        %v5053 = vpop.xlane.xlu0 %5052
        %v5054 = vsel %vm1326, %v5030, 0.0
        %5055 = vadd.xlane.f32.xlu0 %v5054
        %v5056 = vpop.xlane.xlu0 %5055
        %v5057 = vsel %vm1326, %v5032, 0.0
        %5058 = vadd.xlane.f32.xlu0 %v5057
        %v5059 = vpop.xlane.xlu0 %5058
        %v5060 = vsel %vm1326, %v5034, 0.0
        %5061 = vadd.xlane.f32.xlu0 %v5060
        %v5062 = vpop.xlane.xlu0 %5061
        %v5063 = vsel %vm1326, %v5036, 0.0
        %5064 = vadd.xlane.f32.xlu0 %v5063
        %v5065 = vpop.xlane.xlu0 %5064
        %v5066 = vsel %vm1326, %v5038, 0.0
        %5067 = vadd.xlane.f32.xlu0 %v5066
        %v5068 = vpop.xlane.xlu0 %5067
        %v5069 = vsel %vm1326, %v5040, 0.0
        %5070 = vadd.xlane.f32.xlu0 %v5069
        %v5071 = vpop.xlane.xlu0 %5070
        %v5072 = vsel %vm1326, %v5042, 0.0
        %5073 = vadd.xlane.f32.xlu0 %v5072
        %v5074 = vpop.xlane.xlu0 %5073
        %v5075 = vsel %vm1326, %v5044, 0.0
        %5076 = vadd.xlane.f32.xlu0 %v5075
        %v5077 = vpop.xlane.xlu0 %5076
        %v5078 = vsel %vm1326, %v5046, 0.0
        %5079 = vadd.xlane.f32.xlu0 %v5078
        %v5080 = vpop.xlane.xlu0 %5079
        %v5081 = vsel %vm1326, %v5048, 0.0
        %5082 = vadd.xlane.f32.xlu0 %v5081
        %v5083 = vpop.xlane.xlu0 %5082
        %v5084 = vsel %vm1326, %v5050, 0.0
        %5085 = vadd.xlane.f32.xlu0 %v5084
        %v5086 = vpop.xlane.xlu0 %5085
        %v5087 = vrcp.pop %v5053
        %v5088 = vrcp.pop %v5056
        %v5089 = vrcp.pop %v5059
        %v5090 = vrcp.pop %v5062
        %v5091 = vrcp.pop %v5065
        %v5092 = vrcp.pop %v5068
        %v5093 = vrcp.pop %v5071
        %v5094 = vrcp.pop %v5074
        %v5095 = vrcp.pop %v5077
        %v5096 = vrcp.pop %v5080
        %v5097 = vrcp.pop %v5083
        %v5098 = vrcp.pop %v5086
        %v5099 = vpack.c.bf16 %v5030, %v5028
        %v5100 = vpack.c.bf16 %v5034, %v5032
        %v5101 = vpack.c.bf16 %v5038, %v5036
        %v5102 = vpack.c.bf16 %v5042, %v5040
        %v5103 = vpack.c.bf16 %v5046, %v5044
        %v5104 = vpack.c.bf16 %v5050, %v5048
        %5105 = vrot.lane.b32.xlu0 %v4262, 48
        %v5106 = vpop.permute.xlu0 %5105
        %5107 = vrot.lane.b32.xlu0 %v4263, 48
        %v5108 = vpop.permute.xlu0 %5107
        %5109 = vrot.lane.b32.xlu0 %v4264, 48
        %v5110 = vpop.permute.xlu0 %5109
        %5111 = vrot.lane.b32.xlu0 %v4265, 48
        %v5112 = vpop.permute.xlu0 %5111
        %5113 = vrot.lane.b32.xlu0 %v4266, 48
        %v5114 = vpop.permute.xlu0 %5113
        %5115 = vrot.lane.b32.xlu0 %v4267, 48
        %v5116 = vpop.permute.xlu0 %5115
        %v5124 = vsel %vm1326, %v5099, 0
        %v5127 = vsel %vm1326, %v5100, 0
        %v5130 = vsel %vm1326, %v5101, 0
        %v5133 = vsel %vm1326, %v5102, 0
        %v5136 = vsel %vm1326, %v5103, 0
        %v5139 = vsel %vm1326, %v5104, 0
        %5141 = vmatpush.bf16.msra.mxu0 0
        %5142 = vmatpush.bf16.msra.mxu0 0
        %5143 = vmatpush.bf16.msra.mxu0 %v5116
        %5144 = vmatpush.bf16.msra.mxu0 %v5114
        %5145 = vmatpush.bf16.msra.mxu0 %v5112
        %5146 = vmatpush.bf16.msra.mxu0 %v5110
        %5147 = vmatpush.bf16.msra.mxu0 %v5108
        %5148 = vmatpush.bf16.msra.mxu0 %v5106
        %5149 = vmatmul.bf16.gmra.mxu0 %v5124
        %v5150 = vpop.f32.mrf.mxu0
        %v5151 = vadd.f32 0.0, %v5150
        %v5152 = vpop.f32.mrf.mxu0
        %v5153 = vadd.f32 0.0, %v5152
        %5154 = vmatmul.bf16.gmra.mxu0 %v5127
        %v5155 = vpop.f32.mrf.mxu0
        %v5156 = vadd.f32 0.0, %v5155
        %v5157 = vpop.f32.mrf.mxu0
        %v5158 = vadd.f32 0.0, %v5157
        %5159 = vmatmul.bf16.gmra.mxu0 %v5130
        %v5160 = vpop.f32.mrf.mxu0
        %v5161 = vadd.f32 0.0, %v5160
        %v5162 = vpop.f32.mrf.mxu0
        %v5163 = vadd.f32 0.0, %v5162
        %5164 = vmatmul.bf16.gmra.mxu0 %v5133
        %v5165 = vpop.f32.mrf.mxu0
        %v5166 = vadd.f32 0.0, %v5165
        %v5167 = vpop.f32.mrf.mxu0
        %v5168 = vadd.f32 0.0, %v5167
        %5169 = vmatmul.bf16.gmra.mxu0 %v5136
        %v5170 = vpop.f32.mrf.mxu0
        %v5171 = vadd.f32 0.0, %v5170
        %v5172 = vpop.f32.mrf.mxu0
        %v5173 = vadd.f32 0.0, %v5172
        %5174 = vmatmul.bf16.gmra.mxu0 %v5139
        %v5175 = vpop.f32.mrf.mxu0
        %v5176 = vadd.f32 0.0, %v5175
        %v5177 = vpop.f32.mrf.mxu0
        %v5178 = vadd.f32 0.0, %v5177
        %5179 = vdwg.mxu0
        %v5180 = vmul.f32 %v5151, %v5087
        %v5181 = vmul.f32 %v5153, %v5088
        %v5182 = vmul.f32 %v5156, %v5089
        %v5183 = vmul.f32 %v5158, %v5090
        %v5184 = vmul.f32 %v5161, %v5091
        %v5185 = vmul.f32 %v5163, %v5092
        %v5186 = vmul.f32 %v5166, %v5093
        %v5187 = vmul.f32 %v5168, %v5094
        %v5188 = vmul.f32 %v5171, %v5095
        %v5189 = vmul.f32 %v5173, %v5096
        %v5190 = vmul.f32 %v5176, %v5097
        %v5191 = vmul.f32 %v5178, %v5098
        %5192 = vrot.lane.b32.xlu0 %v4262, 104
        %v5193 = vpop.permute.xlu0 %5192
        %5194 = vrot.lane.b32.xlu0 %v4263, 104
        %v5195 = vpop.permute.xlu0 %5194
        %5196 = vrot.lane.b32.xlu0 %v4264, 104
        %v5197 = vpop.permute.xlu0 %5196
        %5198 = vrot.lane.b32.xlu0 %v4265, 104
        %v5199 = vpop.permute.xlu0 %5198
        %5200 = vrot.lane.b32.xlu0 %v4266, 104
        %v5201 = vpop.permute.xlu0 %5200
        %5202 = vrot.lane.b32.xlu0 %v4267, 104
        %v5203 = vpop.permute.xlu0 %5202
        %5204 = vrot.lane.b32.xlu0 %v4262, 72
        %v5205 = vpop.permute.xlu0 %5204
        %5206 = vrot.lane.b32.xlu0 %v4263, 72
        %v5207 = vpop.permute.xlu0 %5206
        %5208 = vrot.lane.b32.xlu0 %v4264, 72
        %v5209 = vpop.permute.xlu0 %5208
        %5210 = vrot.lane.b32.xlu0 %v4265, 72
        %v5211 = vpop.permute.xlu0 %5210
        %5212 = vrot.lane.b32.xlu0 %v4266, 72
        %v5213 = vpop.permute.xlu0 %5212
        %5214 = vrot.lane.b32.xlu0 %v4267, 72
        %v5215 = vpop.permute.xlu0 %5214
        %v5217 = vsel %vm1250, %v5193, 0
        %v5220 = vsel %vm1250, %v5195, 0
        %v5223 = vsel %vm1250, %v5197, 0
        %v5226 = vsel %vm1250, %v5199, 0
        %v5229 = vsel %vm1250, %v5201, 0
        %v5232 = vsel %vm1250, %v5203, 0
        %v5235 = vsel %vm1250, %v5205, 0
        %v5238 = vsel %vm1250, %v5207, 0
        %v5241 = vsel %vm1250, %v5209, 0
        %v5244 = vsel %vm1250, %v5211, 0
        %v5247 = vsel %vm1250, %v5213, 0
        %v5250 = vsel %vm1250, %v5215, 0
        %5252 = vmatpush.bf16.xpose.msra.mxu0 0
        %5253 = vmatpush.bf16.xpose.msra.mxu0 0
        %5254 = vmatpush.bf16.xpose.msra.mxu0 %v5250
        %5255 = vmatpush.bf16.xpose.msra.mxu0 %v5247
        %5256 = vmatpush.bf16.xpose.msra.mxu0 %v5244
        %5257 = vmatpush.bf16.xpose.msra.mxu0 %v5241
        %5258 = vmatpush.bf16.xpose.msra.mxu0 %v5238
        %5259 = vmatpush.bf16.xpose.msra.mxu0 %v5235
        %5260 = vmatmul.bf16.gmra.mxu0 %v5217
        %v5261 = vpop.f32.mrf.mxu0
        %v5262 = vadd.f32 %v773, %v5261
        %v5263 = vpop.f32.mrf.mxu0
        %v5264 = vadd.f32 %v774, %v5263
        %5265 = vmatmul.bf16.gmra.mxu0 %v5220
        %v5266 = vpop.f32.mrf.mxu0
        %v5267 = vadd.f32 %v775, %v5266
        %v5268 = vpop.f32.mrf.mxu0
        %v5269 = vadd.f32 %v776, %v5268
        %5270 = vmatmul.bf16.gmra.mxu0 %v5223
        %v5271 = vpop.f32.mrf.mxu0
        %v5272 = vadd.f32 %v777, %v5271
        %v5273 = vpop.f32.mrf.mxu0
        %v5274 = vadd.f32 %v778, %v5273
        %5275 = vmatmul.bf16.gmra.mxu0 %v5226
        %v5276 = vpop.f32.mrf.mxu0
        %v5277 = vadd.f32 %v779, %v5276
        %v5278 = vpop.f32.mrf.mxu0
        %v5279 = vadd.f32 %v780, %v5278
        %5280 = vmatmul.bf16.gmra.mxu0 %v5229
        %v5281 = vpop.f32.mrf.mxu0
        %v5282 = vadd.f32 %v781, %v5281
        %v5283 = vpop.f32.mrf.mxu0
        %v5284 = vadd.f32 %v782, %v5283
        %5285 = vmatmul.bf16.gmra.mxu0 %v5232
        %v5286 = vpop.f32.mrf.mxu0
        %v5287 = vadd.f32 %v783, %v5286
        %v5288 = vpop.f32.mrf.mxu0
        %v5289 = vadd.f32 %v784, %v5288
        %5290 = vdwg.mxu0
        %v5291 = vsel %vm1326, %v5262, -inf
        %5292 = vmax.xlane.f32.xlu0 %v5291
        %v5293 = vpop.xlane.xlu0 %5292
        %v5294 = vsel %vm1326, %v5264, -inf
        %5295 = vmax.xlane.f32.xlu0 %v5294
        %v5296 = vpop.xlane.xlu0 %5295
        %v5297 = vsel %vm1326, %v5267, -inf
        %5298 = vmax.xlane.f32.xlu0 %v5297
        %v5299 = vpop.xlane.xlu0 %5298
        %v5300 = vsel %vm1326, %v5269, -inf
        %5301 = vmax.xlane.f32.xlu0 %v5300
        %v5302 = vpop.xlane.xlu0 %5301
        %v5303 = vsel %vm1326, %v5272, -inf
        %5304 = vmax.xlane.f32.xlu0 %v5303
        %v5305 = vpop.xlane.xlu0 %5304
        %v5306 = vsel %vm1326, %v5274, -inf
        %5307 = vmax.xlane.f32.xlu0 %v5306
        %v5308 = vpop.xlane.xlu0 %5307
        %v5309 = vsel %vm1326, %v5277, -inf
        %5310 = vmax.xlane.f32.xlu0 %v5309
        %v5311 = vpop.xlane.xlu0 %5310
        %v5312 = vsel %vm1326, %v5279, -inf
        %5313 = vmax.xlane.f32.xlu0 %v5312
        %v5314 = vpop.xlane.xlu0 %5313
        %v5315 = vsel %vm1326, %v5282, -inf
        %5316 = vmax.xlane.f32.xlu0 %v5315
        %v5317 = vpop.xlane.xlu0 %5316
        %v5318 = vsel %vm1326, %v5284, -inf
        %5319 = vmax.xlane.f32.xlu0 %v5318
        %v5320 = vpop.xlane.xlu0 %5319
        %v5321 = vsel %vm1326, %v5287, -inf
        %5322 = vmax.xlane.f32.xlu0 %v5321
        %v5323 = vpop.xlane.xlu0 %5322
        %v5324 = vsel %vm1326, %v5289, -inf
        %5325 = vmax.xlane.f32.xlu0 %v5324
        %v5326 = vpop.xlane.xlu0 %5325
        %v5327 = vsub.f32 %v5262, %v5293
        %v5328 = vsub.f32 %v5264, %v5296
        %v5329 = vsub.f32 %v5267, %v5299
        %v5330 = vsub.f32 %v5269, %v5302
        %v5331 = vsub.f32 %v5272, %v5305
        %v5332 = vsub.f32 %v5274, %v5308
        %v5333 = vsub.f32 %v5277, %v5311
        %v5334 = vsub.f32 %v5279, %v5314
        %v5335 = vsub.f32 %v5282, %v5317
        %v5336 = vsub.f32 %v5284, %v5320
        %v5337 = vsub.f32 %v5287, %v5323
        %v5338 = vsub.f32 %v5289, %v5326
        %v5339 = vmul.f32 %v5327, 1.442695
        %v5340 = vpow.pop %v5339
        %v5341 = vmul.f32 %v5328, 1.442695
        %v5342 = vpow.pop %v5341
        %v5343 = vmul.f32 %v5329, 1.442695
        %v5344 = vpow.pop %v5343
        %v5345 = vmul.f32 %v5330, 1.442695
        %v5346 = vpow.pop %v5345
        %v5347 = vmul.f32 %v5331, 1.442695
        %v5348 = vpow.pop %v5347
        %v5349 = vmul.f32 %v5332, 1.442695
        %v5350 = vpow.pop %v5349
        %v5351 = vmul.f32 %v5333, 1.442695
        %v5352 = vpow.pop %v5351
        %v5353 = vmul.f32 %v5334, 1.442695
        %v5354 = vpow.pop %v5353
        %v5355 = vmul.f32 %v5335, 1.442695
        %v5356 = vpow.pop %v5355
        %v5357 = vmul.f32 %v5336, 1.442695
        %v5358 = vpow.pop %v5357
        %v5359 = vmul.f32 %v5337, 1.442695
        %v5360 = vpow.pop %v5359
        %v5361 = vmul.f32 %v5338, 1.442695
        %v5362 = vpow.pop %v5361
        %v5363 = vsel %vm1326, %v5340, 0.0
        %5364 = vadd.xlane.f32.xlu0 %v5363
        %v5365 = vpop.xlane.xlu0 %5364
        %v5366 = vsel %vm1326, %v5342, 0.0
        %5367 = vadd.xlane.f32.xlu0 %v5366
        %v5368 = vpop.xlane.xlu0 %5367
        %v5369 = vsel %vm1326, %v5344, 0.0
        %5370 = vadd.xlane.f32.xlu0 %v5369
        %v5371 = vpop.xlane.xlu0 %5370
        %v5372 = vsel %vm1326, %v5346, 0.0
        %5373 = vadd.xlane.f32.xlu0 %v5372
        %v5374 = vpop.xlane.xlu0 %5373
        %v5375 = vsel %vm1326, %v5348, 0.0
        %5376 = vadd.xlane.f32.xlu0 %v5375
        %v5377 = vpop.xlane.xlu0 %5376
        %v5378 = vsel %vm1326, %v5350, 0.0
        %5379 = vadd.xlane.f32.xlu0 %v5378
        %v5380 = vpop.xlane.xlu0 %5379
        %v5381 = vsel %vm1326, %v5352, 0.0
        %5382 = vadd.xlane.f32.xlu0 %v5381
        %v5383 = vpop.xlane.xlu0 %5382
        %v5384 = vsel %vm1326, %v5354, 0.0
        %5385 = vadd.xlane.f32.xlu0 %v5384
        %v5386 = vpop.xlane.xlu0 %5385
        %v5387 = vsel %vm1326, %v5356, 0.0
        %5388 = vadd.xlane.f32.xlu0 %v5387
        %v5389 = vpop.xlane.xlu0 %5388
        %v5390 = vsel %vm1326, %v5358, 0.0
        %5391 = vadd.xlane.f32.xlu0 %v5390
        %v5392 = vpop.xlane.xlu0 %5391
        %v5393 = vsel %vm1326, %v5360, 0.0
        %5394 = vadd.xlane.f32.xlu0 %v5393
        %v5395 = vpop.xlane.xlu0 %5394
        %v5396 = vsel %vm1326, %v5362, 0.0
        %5397 = vadd.xlane.f32.xlu0 %v5396
        %v5398 = vpop.xlane.xlu0 %5397
        %v5399 = vrcp.pop %v5365
        %v5400 = vrcp.pop %v5368
        %v5401 = vrcp.pop %v5371
        %v5402 = vrcp.pop %v5374
        %v5403 = vrcp.pop %v5377
        %v5404 = vrcp.pop %v5380
        %v5405 = vrcp.pop %v5383
        %v5406 = vrcp.pop %v5386
        %v5407 = vrcp.pop %v5389
        %v5408 = vrcp.pop %v5392
        %v5409 = vrcp.pop %v5395
        %v5410 = vrcp.pop %v5398
        %v5411 = vpack.c.bf16 %v5342, %v5340
        %v5412 = vpack.c.bf16 %v5346, %v5344
        %v5413 = vpack.c.bf16 %v5350, %v5348
        %v5414 = vpack.c.bf16 %v5354, %v5352
        %v5415 = vpack.c.bf16 %v5358, %v5356
        %v5416 = vpack.c.bf16 %v5362, %v5360
        %5417 = vrot.lane.b32.xlu0 %v4262, 40
        %v5418 = vpop.permute.xlu0 %5417
        %5419 = vrot.lane.b32.xlu0 %v4263, 40
        %v5420 = vpop.permute.xlu0 %5419
        %5421 = vrot.lane.b32.xlu0 %v4264, 40
        %v5422 = vpop.permute.xlu0 %5421
        %5423 = vrot.lane.b32.xlu0 %v4265, 40
        %v5424 = vpop.permute.xlu0 %5423
        %5425 = vrot.lane.b32.xlu0 %v4266, 40
        %v5426 = vpop.permute.xlu0 %5425
        %5427 = vrot.lane.b32.xlu0 %v4267, 40
        %v5428 = vpop.permute.xlu0 %5427
        %v5436 = vsel %vm1326, %v5411, 0
        %v5439 = vsel %vm1326, %v5412, 0
        %v5442 = vsel %vm1326, %v5413, 0
        %v5445 = vsel %vm1326, %v5414, 0
        %v5448 = vsel %vm1326, %v5415, 0
        %v5451 = vsel %vm1326, %v5416, 0
        %5453 = vmatpush.bf16.msra.mxu0 0
        %5454 = vmatpush.bf16.msra.mxu0 0
        %5455 = vmatpush.bf16.msra.mxu0 %v5428
        %5456 = vmatpush.bf16.msra.mxu0 %v5426
        %5457 = vmatpush.bf16.msra.mxu0 %v5424
        %5458 = vmatpush.bf16.msra.mxu0 %v5422
        %5459 = vmatpush.bf16.msra.mxu0 %v5420
        %5460 = vmatpush.bf16.msra.mxu0 %v5418
        %5461 = vmatmul.bf16.gmra.mxu0 %v5436
        %v5462 = vpop.f32.mrf.mxu0
        %v5463 = vadd.f32 0.0, %v5462
        %v5464 = vpop.f32.mrf.mxu0
        %v5465 = vadd.f32 0.0, %v5464
        %5466 = vmatmul.bf16.gmra.mxu0 %v5439
        %v5467 = vpop.f32.mrf.mxu0
        %v5468 = vadd.f32 0.0, %v5467
        %v5469 = vpop.f32.mrf.mxu0
        %v5470 = vadd.f32 0.0, %v5469
        %5471 = vmatmul.bf16.gmra.mxu0 %v5442
        %v5472 = vpop.f32.mrf.mxu0
        %v5473 = vadd.f32 0.0, %v5472
        %v5474 = vpop.f32.mrf.mxu0
        %v5475 = vadd.f32 0.0, %v5474
        %5476 = vmatmul.bf16.gmra.mxu0 %v5445
        %v5477 = vpop.f32.mrf.mxu0
        %v5478 = vadd.f32 0.0, %v5477
        %v5479 = vpop.f32.mrf.mxu0
        %v5480 = vadd.f32 0.0, %v5479
        %5481 = vmatmul.bf16.gmra.mxu0 %v5448
        %v5482 = vpop.f32.mrf.mxu0
        %v5483 = vadd.f32 0.0, %v5482
        %v5484 = vpop.f32.mrf.mxu0
        %v5485 = vadd.f32 0.0, %v5484
        %5486 = vmatmul.bf16.gmra.mxu0 %v5451
        %v5487 = vpop.f32.mrf.mxu0
        %v5488 = vadd.f32 0.0, %v5487
        %v5489 = vpop.f32.mrf.mxu0
        %v5490 = vadd.f32 0.0, %v5489
        %5491 = vdwg.mxu0
        %v5492 = vmul.f32 %v5463, %v5399
        %v5493 = vmul.f32 %v5465, %v5400
        %v5494 = vmul.f32 %v5468, %v5401
        %v5495 = vmul.f32 %v5470, %v5402
        %v5496 = vmul.f32 %v5473, %v5403
        %v5497 = vmul.f32 %v5475, %v5404
        %v5498 = vmul.f32 %v5478, %v5405
        %v5499 = vmul.f32 %v5480, %v5406
        %v5500 = vmul.f32 %v5483, %v5407
        %v5501 = vmul.f32 %v5485, %v5408
        %v5502 = vmul.f32 %v5488, %v5409
        %v5503 = vmul.f32 %v5490, %v5410
        %5516 = vrot.lane.b32.xlu0 %v4868, 8
        %v5517 = vpop.permute.xlu0 %5516
        %5518 = vrot.lane.b32.xlu0 %v4869, 8
        %v5519 = vpop.permute.xlu0 %5518
        %5520 = vrot.lane.b32.xlu0 %v4870, 8
        %v5521 = vpop.permute.xlu0 %5520
        %5522 = vrot.lane.b32.xlu0 %v4871, 8
        %v5523 = vpop.permute.xlu0 %5522
        %5524 = vrot.lane.b32.xlu0 %v4872, 8
        %v5525 = vpop.permute.xlu0 %5524
        %5526 = vrot.lane.b32.xlu0 %v4873, 8
        %v5527 = vpop.permute.xlu0 %5526
        %5528 = vrot.lane.b32.xlu0 %v4874, 8
        %v5529 = vpop.permute.xlu0 %5528
        %5530 = vrot.lane.b32.xlu0 %v4875, 8
        %v5531 = vpop.permute.xlu0 %5530
        %5532 = vrot.lane.b32.xlu0 %v4876, 8
        %v5533 = vpop.permute.xlu0 %5532
        %5534 = vrot.lane.b32.xlu0 %v4877, 8
        %v5535 = vpop.permute.xlu0 %5534
        %5536 = vrot.lane.b32.xlu0 %v4878, 8
        %v5537 = vpop.permute.xlu0 %5536
        %5538 = vrot.lane.b32.xlu0 %v4879, 8
        %v5539 = vpop.permute.xlu0 %5538
        %5564 = vrot.lane.b32.xlu0 %v5180, 16
        %v5565 = vpop.permute.xlu0 %5564
        %5566 = vrot.lane.b32.xlu0 %v5181, 16
        %v5567 = vpop.permute.xlu0 %5566
        %5568 = vrot.lane.b32.xlu0 %v5182, 16
        %v5569 = vpop.permute.xlu0 %5568
        %5570 = vrot.lane.b32.xlu0 %v5183, 16
        %v5571 = vpop.permute.xlu0 %5570
        %5572 = vrot.lane.b32.xlu0 %v5184, 16
        %v5573 = vpop.permute.xlu0 %5572
        %5574 = vrot.lane.b32.xlu0 %v5185, 16
        %v5575 = vpop.permute.xlu0 %5574
        %5576 = vrot.lane.b32.xlu0 %v5186, 16
        %v5577 = vpop.permute.xlu0 %5576
        %5578 = vrot.lane.b32.xlu0 %v5187, 16
        %v5579 = vpop.permute.xlu0 %5578
        %5580 = vrot.lane.b32.xlu0 %v5188, 16
        %v5581 = vpop.permute.xlu0 %5580
        %5582 = vrot.lane.b32.xlu0 %v5189, 16
        %v5583 = vpop.permute.xlu0 %5582
        %5584 = vrot.lane.b32.xlu0 %v5190, 16
        %v5585 = vpop.permute.xlu0 %5584
        %5586 = vrot.lane.b32.xlu0 %v5191, 16
        %v5587 = vpop.permute.xlu0 %5586
        %5612 = vrot.lane.b32.xlu0 %v5492, 24
        %v5613 = vpop.permute.xlu0 %5612
        %5614 = vrot.lane.b32.xlu0 %v5493, 24
        %v5615 = vpop.permute.xlu0 %5614
        %5616 = vrot.lane.b32.xlu0 %v5494, 24
        %v5617 = vpop.permute.xlu0 %5616
        %5618 = vrot.lane.b32.xlu0 %v5495, 24
        %v5619 = vpop.permute.xlu0 %5618
        %5620 = vrot.lane.b32.xlu0 %v5496, 24
        %v5621 = vpop.permute.xlu0 %5620
        %5622 = vrot.lane.b32.xlu0 %v5497, 24
        %v5623 = vpop.permute.xlu0 %5622
        %5624 = vrot.lane.b32.xlu0 %v5498, 24
        %v5625 = vpop.permute.xlu0 %5624
        %5626 = vrot.lane.b32.xlu0 %v5499, 24
        %v5627 = vpop.permute.xlu0 %5626
        %5628 = vrot.lane.b32.xlu0 %v5500, 24
        %v5629 = vpop.permute.xlu0 %5628
        %5630 = vrot.lane.b32.xlu0 %v5501, 24
        %v5631 = vpop.permute.xlu0 %5630
        %5632 = vrot.lane.b32.xlu0 %v5502, 24
        %v5633 = vpop.permute.xlu0 %5632
        %5634 = vrot.lane.b32.xlu0 %v5503, 24
        %v5635 = vpop.permute.xlu0 %5634
        %v5648 = vsel %vm1250, %v4556, %v5517
        %v5649 = vsel %vm1250, %v4557, %v5519
        %v5650 = vsel %vm1250, %v4558, %v5521
        %v5651 = vsel %vm1250, %v4559, %v5523
        %v5652 = vsel %vm1250, %v4560, %v5525
        %v5653 = vsel %vm1250, %v4561, %v5527
        %v5654 = vsel %vm1250, %v4562, %v5529
        %v5655 = vsel %vm1250, %v4563, %v5531
        %v5656 = vsel %vm1250, %v4564, %v5533
        %v5657 = vsel %vm1250, %v4565, %v5535
        %v5658 = vsel %vm1250, %v4566, %v5537
        %v5659 = vsel %vm1250, %v4567, %v5539
        %v5660 = vsel %vm2632, %v5648, %v5565
        %v5661 = vsel %vm2632, %v5649, %v5567
        %v5662 = vsel %vm2632, %v5650, %v5569
        %v5663 = vsel %vm2632, %v5651, %v5571
        %v5664 = vsel %vm2632, %v5652, %v5573
        %v5665 = vsel %vm2632, %v5653, %v5575
        %v5666 = vsel %vm2632, %v5654, %v5577
        %v5667 = vsel %vm2632, %v5655, %v5579
        %v5668 = vsel %vm2632, %v5656, %v5581
        %v5669 = vsel %vm2632, %v5657, %v5583
        %v5670 = vsel %vm2632, %v5658, %v5585
        %v5671 = vsel %vm2632, %v5659, %v5587
        %v5672 = vsel %vm2645, %v5660, %v5613
        %v5673 = vsel %vm2645, %v5661, %v5615
        %v5674 = vsel %vm2645, %v5662, %v5617
        %v5675 = vsel %vm2645, %v5663, %v5619
        %v5676 = vsel %vm2645, %v5664, %v5621
        %v5677 = vsel %vm2645, %v5665, %v5623
        %v5678 = vsel %vm2645, %v5666, %v5625
        %v5679 = vsel %vm2645, %v5667, %v5627
        %v5680 = vsel %vm2645, %v5668, %v5629
        %v5681 = vsel %vm2645, %v5669, %v5631
        %v5682 = vsel %vm2645, %v5670, %v5633
        %v5683 = vsel %vm2645, %v5671, %v5635
        %v5684 = vpack.c.bf16 %v5673, %v5672
        %v5685 = vpack.c.bf16 %v5675, %v5674
        %v5686 = vpack.c.bf16 %v5677, %v5676
        %v5687 = vpack.c.bf16 %v5679, %v5678
        %v5688 = vpack.c.bf16 %v5681, %v5680
        %v5689 = vpack.c.bf16 %v5683, %v5682
        %s5690 = scalar_lea.vmem %s9, 1
        %v5691 = vld [vmem:[%s5690] sm:$0x1]
        %v5693 = vperm.slane %v5691, 0
        %v5695 = vadd.f32 %v3807, %v5693
        %v5696 = vadd.f32 %v3808, %v5693
        %v5697 = vadd.f32 %v3809, %v5693
        %v5698 = vadd.f32 %v3810, %v5693
        %v5699 = vadd.f32 %v3811, %v5693
        %v5700 = vadd.f32 %v3812, %v5693
        %v5701 = vadd.f32 %v3813, %v5693
        %v5702 = vadd.f32 %v3814, %v5693
        %v5703 = vadd.f32 %v3815, %v5693
        %v5704 = vadd.f32 %v3816, %v5693
        %v5705 = vadd.f32 %v3817, %v5693
        %v5706 = vadd.f32 %v3818, %v5693
        %s5707 = scalar_lea.vmem %s8, 16
        %v5708 = vld [vmem:[%s5707] sm:$0xf]
        %v5709 = vld [vmem:[%s5707 + $0x4] sm:$0xf]
        %v5710 = vld [vmem:[%s5707 + $0x8] sm:$0xf]
        %v5711 = vld [vmem:[%s5707 + $0xc] sm:$0xf]
        %v5716 = vunpack.c.l.b16 %v5708
        %v5717 = vunpack.c.l.b16 %v5709
        %v5718 = vunpack.c.l.b16 %v5710
        %v5719 = vunpack.c.l.b16 %v5711
        %v5720 = vpack.c.b16 %v5717, %v5716
        %v5721 = vpack.c.b16 %v5719, %v5718
        %v5725 = vsel %vm787, %v5684, 0
        %v5728 = vsel %vm787, %v5685, 0
        %v5731 = vsel %vm787, %v5686, 0
        %v5734 = vsel %vm787, %v5687, 0
        %v5737 = vsel %vm787, %v5688, 0
        %v5740 = vsel %vm787, %v5689, 0
        %5742 = vmatpush.bf16.msra.mxu0 0
        %5743 = vmatpush.bf16.msra.mxu0 0
        %5744 = vmatpush.bf16.msra.mxu0 0
        %5745 = vmatpush.bf16.msra.mxu0 0
        %5746 = vmatpush.bf16.msra.mxu0 0
        %5747 = vmatpush.bf16.msra.mxu0 0
        %5748 = vmatpush.bf16.msra.mxu0 %v5721
        %5749 = vmatpush.bf16.msra.mxu0 %v5720
        %5750 = vmatmul.bf16.gmra.mxu0 %v5725
        %v5751 = vpop.f32.mrf.mxu0
        %v5752 = vadd.f32 0.0, %v5751
        %v5753 = vpop.f32.mrf.mxu0
        %v5754 = vadd.f32 0.0, %v5753
        %5755 = vmatmul.bf16.gmra.mxu0 %v5728
        %v5756 = vpop.f32.mrf.mxu0
        %v5757 = vadd.f32 0.0, %v5756
        %v5758 = vpop.f32.mrf.mxu0
        %v5759 = vadd.f32 0.0, %v5758
        %5760 = vmatmul.bf16.gmra.mxu0 %v5731
        %v5761 = vpop.f32.mrf.mxu0
        %v5762 = vadd.f32 0.0, %v5761
        %v5763 = vpop.f32.mrf.mxu0
        %v5764 = vadd.f32 0.0, %v5763
        %5765 = vmatmul.bf16.gmra.mxu0 %v5734
        %v5766 = vpop.f32.mrf.mxu0
        %v5767 = vadd.f32 0.0, %v5766
        %v5768 = vpop.f32.mrf.mxu0
        %v5769 = vadd.f32 0.0, %v5768
        %5770 = vmatmul.bf16.gmra.mxu0 %v5737
        %v5771 = vpop.f32.mrf.mxu0
        %v5772 = vadd.f32 0.0, %v5771
        %v5773 = vpop.f32.mrf.mxu0
        %v5774 = vadd.f32 0.0, %v5773
        %5775 = vmatmul.bf16.gmra.mxu0 %v5740
        %v5776 = vpop.f32.mrf.mxu0
        %v5777 = vadd.f32 0.0, %v5776
        %v5778 = vpop.f32.mrf.mxu0
        %v5779 = vadd.f32 0.0, %v5778
        %5780 = vdwg.mxu0
        %v5781 = vadd.f32 %v5695, %v5752
        %v5782 = vadd.f32 %v5696, %v5754
        %v5783 = vadd.f32 %v5697, %v5757
        %v5784 = vadd.f32 %v5698, %v5759
        %v5785 = vadd.f32 %v5699, %v5762
        %v5786 = vadd.f32 %v5700, %v5764
        %v5787 = vadd.f32 %v5701, %v5767
        %v5788 = vadd.f32 %v5702, %v5769
        %v5789 = vadd.f32 %v5703, %v5772
        %v5790 = vadd.f32 %v5704, %v5774
        %v5791 = vadd.f32 %v5705, %v5777
        %v5792 = vadd.f32 %v5706, %v5779
        %s5793 = scalar_lea.vmem %s10, 1
        %v5794 = vld [vmem:[%s5793] sm:$0x1]
        %s5795 = scalar_lea.vmem %s11, 1
        %v5796 = vld [vmem:[%s5795] sm:$0x1]
        %v5797 = vsel %vm787, %v5781, 0.0
        %5798 = vadd.xlane.f32.xlu0 %v5797
        %v5799 = vpop.xlane.xlu0 %5798
        %v5800 = vsel %vm787, %v5782, 0.0
        %5801 = vadd.xlane.f32.xlu0 %v5800
        %v5802 = vpop.xlane.xlu0 %5801
        %v5803 = vsel %vm787, %v5783, 0.0
        %5804 = vadd.xlane.f32.xlu0 %v5803
        %v5805 = vpop.xlane.xlu0 %5804
        %v5806 = vsel %vm787, %v5784, 0.0
        %5807 = vadd.xlane.f32.xlu0 %v5806
        %v5808 = vpop.xlane.xlu0 %5807
        %v5809 = vsel %vm787, %v5785, 0.0
        %5810 = vadd.xlane.f32.xlu0 %v5809
        %v5811 = vpop.xlane.xlu0 %5810
        %v5812 = vsel %vm787, %v5786, 0.0
        %5813 = vadd.xlane.f32.xlu0 %v5812
        %v5814 = vpop.xlane.xlu0 %5813
        %v5815 = vsel %vm787, %v5787, 0.0
        %5816 = vadd.xlane.f32.xlu0 %v5815
        %v5817 = vpop.xlane.xlu0 %5816
        %v5818 = vsel %vm787, %v5788, 0.0
        %5819 = vadd.xlane.f32.xlu0 %v5818
        %v5820 = vpop.xlane.xlu0 %5819
        %v5821 = vsel %vm787, %v5789, 0.0
        %5822 = vadd.xlane.f32.xlu0 %v5821
        %v5823 = vpop.xlane.xlu0 %5822
        %v5824 = vsel %vm787, %v5790, 0.0
        %5825 = vadd.xlane.f32.xlu0 %v5824
        %v5826 = vpop.xlane.xlu0 %5825
        %v5827 = vsel %vm787, %v5791, 0.0
        %5828 = vadd.xlane.f32.xlu0 %v5827
        %v5829 = vpop.xlane.xlu0 %5828
        %v5830 = vsel %vm787, %v5792, 0.0
        %5831 = vadd.xlane.f32.xlu0 %v5830
        %v5832 = vpop.xlane.xlu0 %5831
        %v5833 = vmul.f32 %v5799, %v830
        %v5834 = vmul.f32 %v5802, %v830
        %v5835 = vmul.f32 %v5805, %v830
        %v5836 = vmul.f32 %v5808, %v830
        %v5837 = vmul.f32 %v5811, %v830
        %v5838 = vmul.f32 %v5814, %v830
        %v5839 = vmul.f32 %v5817, %v830
        %v5840 = vmul.f32 %v5820, %v830
        %v5841 = vmul.f32 %v5823, %v830
        %v5842 = vmul.f32 %v5826, %v830
        %v5843 = vmul.f32 %v5829, %v830
        %v5844 = vmul.f32 %v5832, %v830
        %v5845 = vmul.f32 %v5781, %v5781
        %v5846 = vmul.f32 %v5782, %v5782
        %v5847 = vmul.f32 %v5783, %v5783
        %v5848 = vmul.f32 %v5784, %v5784
        %v5849 = vmul.f32 %v5785, %v5785
        %v5850 = vmul.f32 %v5786, %v5786
        %v5851 = vmul.f32 %v5787, %v5787
        %v5852 = vmul.f32 %v5788, %v5788
        %v5853 = vmul.f32 %v5789, %v5789
        %v5854 = vmul.f32 %v5790, %v5790
        %v5855 = vmul.f32 %v5791, %v5791
        %v5856 = vmul.f32 %v5792, %v5792
        %v5857 = vsel %vm787, %v5845, 0.0
        %5858 = vadd.xlane.f32.xlu0 %v5857
        %v5859 = vpop.xlane.xlu0 %5858
        %v5860 = vsel %vm787, %v5846, 0.0
        %5861 = vadd.xlane.f32.xlu0 %v5860
        %v5862 = vpop.xlane.xlu0 %5861
        %v5863 = vsel %vm787, %v5847, 0.0
        %5864 = vadd.xlane.f32.xlu0 %v5863
        %v5865 = vpop.xlane.xlu0 %5864
        %v5866 = vsel %vm787, %v5848, 0.0
        %5867 = vadd.xlane.f32.xlu0 %v5866
        %v5868 = vpop.xlane.xlu0 %5867
        %v5869 = vsel %vm787, %v5849, 0.0
        %5870 = vadd.xlane.f32.xlu0 %v5869
        %v5871 = vpop.xlane.xlu0 %5870
        %v5872 = vsel %vm787, %v5850, 0.0
        %5873 = vadd.xlane.f32.xlu0 %v5872
        %v5874 = vpop.xlane.xlu0 %5873
        %v5875 = vsel %vm787, %v5851, 0.0
        %5876 = vadd.xlane.f32.xlu0 %v5875
        %v5877 = vpop.xlane.xlu0 %5876
        %v5878 = vsel %vm787, %v5852, 0.0
        %5879 = vadd.xlane.f32.xlu0 %v5878
        %v5880 = vpop.xlane.xlu0 %5879
        %v5881 = vsel %vm787, %v5853, 0.0
        %5882 = vadd.xlane.f32.xlu0 %v5881
        %v5883 = vpop.xlane.xlu0 %5882
        %v5884 = vsel %vm787, %v5854, 0.0
        %5885 = vadd.xlane.f32.xlu0 %v5884
        %v5886 = vpop.xlane.xlu0 %5885
        %v5887 = vsel %vm787, %v5855, 0.0
        %5888 = vadd.xlane.f32.xlu0 %v5887
        %v5889 = vpop.xlane.xlu0 %5888
        %v5890 = vsel %vm787, %v5856, 0.0
        %5891 = vadd.xlane.f32.xlu0 %v5890
        %v5892 = vpop.xlane.xlu0 %5891
        %v5893 = vmul.f32 %v5859, %v830
        %v5894 = vmul.f32 %v5862, %v830
        %v5895 = vmul.f32 %v5865, %v830
        %v5896 = vmul.f32 %v5868, %v830
        %v5897 = vmul.f32 %v5871, %v830
        %v5898 = vmul.f32 %v5874, %v830
        %v5899 = vmul.f32 %v5877, %v830
        %v5900 = vmul.f32 %v5880, %v830
        %v5901 = vmul.f32 %v5883, %v830
        %v5902 = vmul.f32 %v5886, %v830
        %v5903 = vmul.f32 %v5889, %v830
        %v5904 = vmul.f32 %v5892, %v830
        %v5905 = vsub.f32 %v5781, %v5833
        %v5906 = vsub.f32 %v5782, %v5834
        %v5907 = vsub.f32 %v5783, %v5835
        %v5908 = vsub.f32 %v5784, %v5836
        %v5909 = vsub.f32 %v5785, %v5837
        %v5910 = vsub.f32 %v5786, %v5838
        %v5911 = vsub.f32 %v5787, %v5839
        %v5912 = vsub.f32 %v5788, %v5840
        %v5913 = vsub.f32 %v5789, %v5841
        %v5914 = vsub.f32 %v5790, %v5842
        %v5915 = vsub.f32 %v5791, %v5843
        %v5916 = vsub.f32 %v5792, %v5844
        %v5917 = vmul.f32 %v5833, %v5833
        %v5918 = vmul.f32 %v5834, %v5834
        %v5919 = vmul.f32 %v5835, %v5835
        %v5920 = vmul.f32 %v5836, %v5836
        %v5921 = vmul.f32 %v5837, %v5837
        %v5922 = vmul.f32 %v5838, %v5838
        %v5923 = vmul.f32 %v5839, %v5839
        %v5924 = vmul.f32 %v5840, %v5840
        %v5925 = vmul.f32 %v5841, %v5841
        %v5926 = vmul.f32 %v5842, %v5842
        %v5927 = vmul.f32 %v5843, %v5843
        %v5928 = vmul.f32 %v5844, %v5844
        %v5929 = vsub.f32 %v5893, %v5917
        %v5930 = vsub.f32 %v5894, %v5918
        %v5931 = vsub.f32 %v5895, %v5919
        %v5932 = vsub.f32 %v5896, %v5920
        %v5933 = vsub.f32 %v5897, %v5921
        %v5934 = vsub.f32 %v5898, %v5922
        %v5935 = vsub.f32 %v5899, %v5923
        %v5936 = vsub.f32 %v5900, %v5924
        %v5937 = vsub.f32 %v5901, %v5925
        %v5938 = vsub.f32 %v5902, %v5926
        %v5939 = vsub.f32 %v5903, %v5927
        %v5940 = vsub.f32 %v5904, %v5928
        %v5941 = vadd.f32 %v5929, 1e-05
        %v5942 = vadd.f32 %v5930, 1e-05
        %v5943 = vadd.f32 %v5931, 1e-05
        %v5944 = vadd.f32 %v5932, 1e-05
        %v5945 = vadd.f32 %v5933, 1e-05
        %v5946 = vadd.f32 %v5934, 1e-05
        %v5947 = vadd.f32 %v5935, 1e-05
        %v5948 = vadd.f32 %v5936, 1e-05
        %v5949 = vadd.f32 %v5937, 1e-05
        %v5950 = vadd.f32 %v5938, 1e-05
        %v5951 = vadd.f32 %v5939, 1e-05
        %v5952 = vadd.f32 %v5940, 1e-05
        %v5953 = vrsqrt.pop %v5941
        %v5954 = vmul.f32 %v5953, %v5941
        %v5955 = vmul.f32 %v5954, %v5953
        %v5956 = vmul.f32 0.5, %v5955
        %v5957 = vsub.f32 1.5, %v5956
        %v5958 = vmul.f32 %v5953, %v5957
        %vm5959 = vweird.f32 %v5941
        %vm5960 = vweird.f32 %v5953
        %vm5961 = vmor %vm5959, %vm5960
        %v5962 = vsel %vm5961, %v5953, %v5958
        %v5963 = vrsqrt.pop %v5942
        %v5964 = vmul.f32 %v5963, %v5942
        %v5965 = vmul.f32 %v5964, %v5963
        %v5966 = vmul.f32 0.5, %v5965
        %v5967 = vsub.f32 1.5, %v5966
        %v5968 = vmul.f32 %v5963, %v5967
        %vm5969 = vweird.f32 %v5942
        %vm5970 = vweird.f32 %v5963
        %vm5971 = vmor %vm5969, %vm5970
        %v5972 = vsel %vm5971, %v5963, %v5968
        %v5973 = vrsqrt.pop %v5943
        %v5974 = vmul.f32 %v5973, %v5943
        %v5975 = vmul.f32 %v5974, %v5973
        %v5976 = vmul.f32 0.5, %v5975
        %v5977 = vsub.f32 1.5, %v5976
        %v5978 = vmul.f32 %v5973, %v5977
        %vm5979 = vweird.f32 %v5943
        %vm5980 = vweird.f32 %v5973
        %vm5981 = vmor %vm5979, %vm5980
        %v5982 = vsel %vm5981, %v5973, %v5978
        %v5983 = vrsqrt.pop %v5944
        %v5984 = vmul.f32 %v5983, %v5944
        %v5985 = vmul.f32 %v5984, %v5983
        %v5986 = vmul.f32 0.5, %v5985
        %v5987 = vsub.f32 1.5, %v5986
        %v5988 = vmul.f32 %v5983, %v5987
        %vm5989 = vweird.f32 %v5944
        %vm5990 = vweird.f32 %v5983
        %vm5991 = vmor %vm5989, %vm5990
        %v5992 = vsel %vm5991, %v5983, %v5988
        %v5993 = vrsqrt.pop %v5945
        %v5994 = vmul.f32 %v5993, %v5945
        %v5995 = vmul.f32 %v5994, %v5993
        %v5996 = vmul.f32 0.5, %v5995
        %v5997 = vsub.f32 1.5, %v5996
        %v5998 = vmul.f32 %v5993, %v5997
        %vm5999 = vweird.f32 %v5945
        %vm6000 = vweird.f32 %v5993
        %vm6001 = vmor %vm5999, %vm6000
        %v6002 = vsel %vm6001, %v5993, %v5998
        %v6003 = vrsqrt.pop %v5946
        %v6004 = vmul.f32 %v6003, %v5946
        %v6005 = vmul.f32 %v6004, %v6003
        %v6006 = vmul.f32 0.5, %v6005
        %v6007 = vsub.f32 1.5, %v6006
        %v6008 = vmul.f32 %v6003, %v6007
        %vm6009 = vweird.f32 %v5946
        %vm6010 = vweird.f32 %v6003
        %vm6011 = vmor %vm6009, %vm6010
        %v6012 = vsel %vm6011, %v6003, %v6008
        %v6013 = vrsqrt.pop %v5947
        %v6014 = vmul.f32 %v6013, %v5947
        %v6015 = vmul.f32 %v6014, %v6013
        %v6016 = vmul.f32 0.5, %v6015
        %v6017 = vsub.f32 1.5, %v6016
        %v6018 = vmul.f32 %v6013, %v6017
        %vm6019 = vweird.f32 %v5947
        %vm6020 = vweird.f32 %v6013
        %vm6021 = vmor %vm6019, %vm6020
        %v6022 = vsel %vm6021, %v6013, %v6018
        %v6023 = vrsqrt.pop %v5948
        %v6024 = vmul.f32 %v6023, %v5948
        %v6025 = vmul.f32 %v6024, %v6023
        %v6026 = vmul.f32 0.5, %v6025
        %v6027 = vsub.f32 1.5, %v6026
        %v6028 = vmul.f32 %v6023, %v6027
        %vm6029 = vweird.f32 %v5948
        %vm6030 = vweird.f32 %v6023
        %vm6031 = vmor %vm6029, %vm6030
        %v6032 = vsel %vm6031, %v6023, %v6028
        %v6033 = vrsqrt.pop %v5949
        %v6034 = vmul.f32 %v6033, %v5949
        %v6035 = vmul.f32 %v6034, %v6033
        %v6036 = vmul.f32 0.5, %v6035
        %v6037 = vsub.f32 1.5, %v6036
        %v6038 = vmul.f32 %v6033, %v6037
        %vm6039 = vweird.f32 %v5949
        %vm6040 = vweird.f32 %v6033
        %vm6041 = vmor %vm6039, %vm6040
        %v6042 = vsel %vm6041, %v6033, %v6038
        %v6043 = vrsqrt.pop %v5950
        %v6044 = vmul.f32 %v6043, %v5950
        %v6045 = vmul.f32 %v6044, %v6043
        %v6046 = vmul.f32 0.5, %v6045
        %v6047 = vsub.f32 1.5, %v6046
        %v6048 = vmul.f32 %v6043, %v6047
        %vm6049 = vweird.f32 %v5950
        %vm6050 = vweird.f32 %v6043
        %vm6051 = vmor %vm6049, %vm6050
        %v6052 = vsel %vm6051, %v6043, %v6048
        %v6053 = vrsqrt.pop %v5951
        %v6054 = vmul.f32 %v6053, %v5951
        %v6055 = vmul.f32 %v6054, %v6053
        %v6056 = vmul.f32 0.5, %v6055
        %v6057 = vsub.f32 1.5, %v6056
        %v6058 = vmul.f32 %v6053, %v6057
        %vm6059 = vweird.f32 %v5951
        %vm6060 = vweird.f32 %v6053
        %vm6061 = vmor %vm6059, %vm6060
        %v6062 = vsel %vm6061, %v6053, %v6058
        %v6063 = vrsqrt.pop %v5952
        %v6064 = vmul.f32 %v6063, %v5952
        %v6065 = vmul.f32 %v6064, %v6063
        %v6066 = vmul.f32 0.5, %v6065
        %v6067 = vsub.f32 1.5, %v6066
        %v6068 = vmul.f32 %v6063, %v6067
        %vm6069 = vweird.f32 %v5952
        %vm6070 = vweird.f32 %v6063
        %vm6071 = vmor %vm6069, %vm6070
        %v6072 = vsel %vm6071, %v6063, %v6068
        %v6073 = vmul.f32 %v5905, %v5962
        %v6074 = vmul.f32 %v5906, %v5972
        %v6075 = vmul.f32 %v5907, %v5982
        %v6076 = vmul.f32 %v5908, %v5992
        %v6077 = vmul.f32 %v5909, %v6002
        %v6078 = vmul.f32 %v5910, %v6012
        %v6079 = vmul.f32 %v5911, %v6022
        %v6080 = vmul.f32 %v5912, %v6032
        %v6081 = vmul.f32 %v5913, %v6042
        %v6082 = vmul.f32 %v5914, %v6052
        %v6083 = vmul.f32 %v5915, %v6062
        %v6084 = vmul.f32 %v5916, %v6072
        %v6086 = vperm.slane %v5794, 0
        %v6088 = vmul.f32 %v6073, %v6086
        %v6089 = vmul.f32 %v6074, %v6086
        %v6090 = vmul.f32 %v6075, %v6086
        %v6091 = vmul.f32 %v6076, %v6086
        %v6092 = vmul.f32 %v6077, %v6086
        %v6093 = vmul.f32 %v6078, %v6086
        %v6094 = vmul.f32 %v6079, %v6086
        %v6095 = vmul.f32 %v6080, %v6086
        %v6096 = vmul.f32 %v6081, %v6086
        %v6097 = vmul.f32 %v6082, %v6086
        %v6098 = vmul.f32 %v6083, %v6086
        %v6099 = vmul.f32 %v6084, %v6086
        %v6101 = vperm.slane %v5796, 0
        %v6103 = vadd.f32 %v6088, %v6101
        %v6104 = vadd.f32 %v6089, %v6101
        %v6105 = vadd.f32 %v6090, %v6101
        %v6106 = vadd.f32 %v6091, %v6101
        %v6107 = vadd.f32 %v6092, %v6101
        %v6108 = vadd.f32 %v6093, %v6101
        %v6109 = vadd.f32 %v6094, %v6101
        %v6110 = vadd.f32 %v6095, %v6101
        %v6111 = vadd.f32 %v6096, %v6101
        %v6112 = vadd.f32 %v6097, %v6101
        %v6113 = vadd.f32 %v6098, %v6101
        %v6114 = vadd.f32 %v6099, %v6101
        %v6115 = vpack.c.bf16 %v6104, %v6103
        %v6116 = vpack.c.bf16 %v6106, %v6105
        %v6117 = vpack.c.bf16 %v6108, %v6107
        %v6118 = vpack.c.bf16 %v6110, %v6109
        %v6119 = vpack.c.bf16 %v6112, %v6111
        %v6120 = vpack.c.bf16 %v6114, %v6113
        %s6121 = scalar_lea.vmem %s12, 16
        %v6122 = vld [vmem:[%s6121] sm:$0xf]
        %v6123 = vld [vmem:[%s6121 + $0x4] sm:$0xf]
        %v6124 = vld [vmem:[%s6121 + $0x8] sm:$0xf]
        %v6125 = vld [vmem:[%s6121 + $0xc] sm:$0xf]
        %s6126 = scalar_lea.vmem %s13, 1
        %v6127 = vld [vmem:[%s6126] sm:$0x1]
        %v6129 = vperm.slane %v6127, 0
        %v6135 = vunpack.c.l.b16 %v6122
        %v6136 = vunpack.c.l.b16 %v6123
        %v6137 = vunpack.c.l.b16 %v6124
        %v6138 = vunpack.c.l.b16 %v6125
        %v6139 = vpack.c.b16 %v6136, %v6135
        %v6140 = vpack.c.b16 %v6138, %v6137
        %v6144 = vsel %vm787, %v6115, 0
        %v6147 = vsel %vm787, %v6116, 0
        %v6150 = vsel %vm787, %v6117, 0
        %v6153 = vsel %vm787, %v6118, 0
        %v6156 = vsel %vm787, %v6119, 0
        %v6159 = vsel %vm787, %v6120, 0
        %6161 = vmatpush.bf16.msra.mxu0 0
        %6162 = vmatpush.bf16.msra.mxu0 0
        %6163 = vmatpush.bf16.msra.mxu0 0
        %6164 = vmatpush.bf16.msra.mxu0 0
        %6165 = vmatpush.bf16.msra.mxu0 0
        %6166 = vmatpush.bf16.msra.mxu0 0
        %6167 = vmatpush.bf16.msra.mxu0 %v6140
        %6168 = vmatpush.bf16.msra.mxu0 %v6139
        %6169 = vmatmul.bf16.gmra.mxu0 %v6144
        %v6170 = vpop.f32.mrf.mxu0
        %v6171 = vadd.f32 %v6129, %v6170
        %v6172 = vpop.f32.mrf.mxu0
        %v6173 = vadd.f32 %v6129, %v6172
        %6174 = vmatmul.bf16.gmra.mxu0 %v6147
        %v6175 = vpop.f32.mrf.mxu0
        %v6176 = vadd.f32 %v6129, %v6175
        %v6177 = vpop.f32.mrf.mxu0
        %v6178 = vadd.f32 %v6129, %v6177
        %6179 = vmatmul.bf16.gmra.mxu0 %v6150
        %v6180 = vpop.f32.mrf.mxu0
        %v6181 = vadd.f32 %v6129, %v6180
        %v6182 = vpop.f32.mrf.mxu0
        %v6183 = vadd.f32 %v6129, %v6182
        %6184 = vmatmul.bf16.gmra.mxu0 %v6153
        %v6185 = vpop.f32.mrf.mxu0
        %v6186 = vadd.f32 %v6129, %v6185
        %v6187 = vpop.f32.mrf.mxu0
        %v6188 = vadd.f32 %v6129, %v6187
        %6189 = vmatmul.bf16.gmra.mxu0 %v6156
        %v6190 = vpop.f32.mrf.mxu0
        %v6191 = vadd.f32 %v6129, %v6190
        %v6192 = vpop.f32.mrf.mxu0
        %v6193 = vadd.f32 %v6129, %v6192
        %6194 = vmatmul.bf16.gmra.mxu0 %v6159
        %v6195 = vpop.f32.mrf.mxu0
        %v6196 = vadd.f32 %v6129, %v6195
        %v6197 = vpop.f32.mrf.mxu0
        %v6198 = vadd.f32 %v6129, %v6197
        %6199 = vdwg.mxu0
        %v6200 = vmul.f32 %v6171, 0.5
        %v6201 = vmul.f32 %v6173, 0.5
        %v6202 = vmul.f32 %v6176, 0.5
        %v6203 = vmul.f32 %v6178, 0.5
        %v6204 = vmul.f32 %v6181, 0.5
        %v6205 = vmul.f32 %v6183, 0.5
        %v6206 = vmul.f32 %v6186, 0.5
        %v6207 = vmul.f32 %v6188, 0.5
        %v6208 = vmul.f32 %v6191, 0.5
        %v6209 = vmul.f32 %v6193, 0.5
        %v6210 = vmul.f32 %v6196, 0.5
        %v6211 = vmul.f32 %v6198, 0.5
        %v6212 = vmul.f32 %v6171, 0.70710677
        %v6213 = vmul.f32 %v6173, 0.70710677
        %v6214 = vmul.f32 %v6176, 0.70710677
        %v6215 = vmul.f32 %v6178, 0.70710677
        %v6216 = vmul.f32 %v6181, 0.70710677
        %v6217 = vmul.f32 %v6183, 0.70710677
        %v6218 = vmul.f32 %v6186, 0.70710677
        %v6219 = vmul.f32 %v6188, 0.70710677
        %v6220 = vmul.f32 %v6191, 0.70710677
        %v6221 = vmul.f32 %v6193, 0.70710677
        %v6222 = vmul.f32 %v6196, 0.70710677
        %v6223 = vmul.f32 %v6198, 0.70710677
        %v6224 = vmul.f32 %v6212, %v6212
        %v6225 = vmin.f32 16.0, %v6224
        %v6226 = vmul.f32 %v6225, 2.1237322e-06
        %v6227 = vadd.f32 %v6226, 0.00028619796
        %v6228 = vmul.f32 %v6225, %v6227
        %v6229 = vadd.f32 %v6228, 0.0036580483
        %v6230 = vmul.f32 %v6225, %v6229
        %v6231 = vadd.f32 %v6230, 0.05243302
        %v6232 = vmul.f32 %v6225, %v6231
        %v6233 = vadd.f32 %v6232, 0.18741608
        %v6234 = vmul.f32 %v6225, %v6233
        %v6235 = vadd.f32 %v6234, 1.1283791
        %v6236 = vmul.f32 %v6212, %v6235
        %v6237 = vmul.f32 %v6225, 3.8918573e-05
        %v6238 = vadd.f32 %v6237, 0.001143296
        %v6239 = vmul.f32 %v6225, %v6238
        %v6240 = vadd.f32 %v6239, 0.014752088
        %v6241 = vmul.f32 %v6225, %v6240
        %v6242 = vadd.f32 %v6241, 0.112945676
        %v6243 = vmul.f32 %v6225, %v6242
        %v6244 = vadd.f32 %v6243, 0.4994258
        %v6245 = vmul.f32 %v6225, %v6244
        %v6246 = vadd.f32 %v6245, 1.0
        %v6247 = vrcp.pop %v6246
        %v6248 = vmul.f32 %v6246, %v6247
        %v6249 = vsub.f32 1.0, %v6248
        %v6250 = vmul.f32 %v6247, %v6249
        %v6251 = vadd.f32 %v6247, %v6250
        %vm6252 = vweird.f32 %v6246
        %vm6253 = vweird.f32 %v6247
        %vm6254 = vmor %vm6252, %vm6253
        %v6255 = vsel %vm6254, %v6247, %v6251
        %v6256 = vand.u32 2147483647, %v6246
        %vm6257 = vcmp.eq.f32.partialorder %v6256, 8.507059e+37
        %v6258 = vand.u32 %v6246, 2147483648
        %v6259 = vor.u32 1.1754944e-38, %v6258
        %v6260 = vsel %vm6257, %v6259, %v6255
        %v6261 = vmul.f32 %v6236, %v6260
        %v6262 = vmin.f32 %v6261, 1.0
        %v6263 = vmax.f32 %v6262, -1.0
        %v6264 = vmul.f32 %v6213, %v6213
        %v6265 = vmin.f32 16.0, %v6264
        %v6266 = vmul.f32 %v6265, 2.1237322e-06
        %v6267 = vadd.f32 %v6266, 0.00028619796
        %v6268 = vmul.f32 %v6265, %v6267
        %v6269 = vadd.f32 %v6268, 0.0036580483
        %v6270 = vmul.f32 %v6265, %v6269
        %v6271 = vadd.f32 %v6270, 0.05243302
        %v6272 = vmul.f32 %v6265, %v6271
        %v6273 = vadd.f32 %v6272, 0.18741608
        %v6274 = vmul.f32 %v6265, %v6273
        %v6275 = vadd.f32 %v6274, 1.1283791
        %v6276 = vmul.f32 %v6213, %v6275
        %v6277 = vmul.f32 %v6265, 3.8918573e-05
        %v6278 = vadd.f32 %v6277, 0.001143296
        %v6279 = vmul.f32 %v6265, %v6278
        %v6280 = vadd.f32 %v6279, 0.014752088
        %v6281 = vmul.f32 %v6265, %v6280
        %v6282 = vadd.f32 %v6281, 0.112945676
        %v6283 = vmul.f32 %v6265, %v6282
        %v6284 = vadd.f32 %v6283, 0.4994258
        %v6285 = vmul.f32 %v6265, %v6284
        %v6286 = vadd.f32 %v6285, 1.0
        %v6287 = vrcp.pop %v6286
        %v6288 = vmul.f32 %v6286, %v6287
        %v6289 = vsub.f32 1.0, %v6288
        %v6290 = vmul.f32 %v6287, %v6289
        %v6291 = vadd.f32 %v6287, %v6290
        %vm6292 = vweird.f32 %v6286
        %vm6293 = vweird.f32 %v6287
        %vm6294 = vmor %vm6292, %vm6293
        %v6295 = vsel %vm6294, %v6287, %v6291
        %v6296 = vand.u32 2147483647, %v6286
        %vm6297 = vcmp.eq.f32.partialorder %v6296, 8.507059e+37
        %v6298 = vand.u32 %v6286, 2147483648
        %v6299 = vor.u32 1.1754944e-38, %v6298
        %v6300 = vsel %vm6297, %v6299, %v6295
        %v6301 = vmul.f32 %v6276, %v6300
        %v6302 = vmin.f32 %v6301, 1.0
        %v6303 = vmax.f32 %v6302, -1.0
        %v6304 = vmul.f32 %v6214, %v6214
        %v6305 = vmin.f32 16.0, %v6304
        %v6306 = vmul.f32 %v6305, 2.1237322e-06
        %v6307 = vadd.f32 %v6306, 0.00028619796
        %v6308 = vmul.f32 %v6305, %v6307
        %v6309 = vadd.f32 %v6308, 0.0036580483
        %v6310 = vmul.f32 %v6305, %v6309
        %v6311 = vadd.f32 %v6310, 0.05243302
        %v6312 = vmul.f32 %v6305, %v6311
        %v6313 = vadd.f32 %v6312, 0.18741608
        %v6314 = vmul.f32 %v6305, %v6313
        %v6315 = vadd.f32 %v6314, 1.1283791
        %v6316 = vmul.f32 %v6214, %v6315
        %v6317 = vmul.f32 %v6305, 3.8918573e-05
        %v6318 = vadd.f32 %v6317, 0.001143296
        %v6319 = vmul.f32 %v6305, %v6318
        %v6320 = vadd.f32 %v6319, 0.014752088
        %v6321 = vmul.f32 %v6305, %v6320
        %v6322 = vadd.f32 %v6321, 0.112945676
        %v6323 = vmul.f32 %v6305, %v6322
        %v6324 = vadd.f32 %v6323, 0.4994258
        %v6325 = vmul.f32 %v6305, %v6324
        %v6326 = vadd.f32 %v6325, 1.0
        %v6327 = vrcp.pop %v6326
        %v6328 = vmul.f32 %v6326, %v6327
        %v6329 = vsub.f32 1.0, %v6328
        %v6330 = vmul.f32 %v6327, %v6329
        %v6331 = vadd.f32 %v6327, %v6330
        %vm6332 = vweird.f32 %v6326
        %vm6333 = vweird.f32 %v6327
        %vm6334 = vmor %vm6332, %vm6333
        %v6335 = vsel %vm6334, %v6327, %v6331
        %v6336 = vand.u32 2147483647, %v6326
        %vm6337 = vcmp.eq.f32.partialorder %v6336, 8.507059e+37
        %v6338 = vand.u32 %v6326, 2147483648
        %v6339 = vor.u32 1.1754944e-38, %v6338
        %v6340 = vsel %vm6337, %v6339, %v6335
        %v6341 = vmul.f32 %v6316, %v6340
        %v6342 = vmin.f32 %v6341, 1.0
        %v6343 = vmax.f32 %v6342, -1.0
        %v6344 = vmul.f32 %v6215, %v6215
        %v6345 = vmin.f32 16.0, %v6344
        %v6346 = vmul.f32 %v6345, 2.1237322e-06
        %v6347 = vadd.f32 %v6346, 0.00028619796
        %v6348 = vmul.f32 %v6345, %v6347
        %v6349 = vadd.f32 %v6348, 0.0036580483
        %v6350 = vmul.f32 %v6345, %v6349
        %v6351 = vadd.f32 %v6350, 0.05243302
        %v6352 = vmul.f32 %v6345, %v6351
        %v6353 = vadd.f32 %v6352, 0.18741608
        %v6354 = vmul.f32 %v6345, %v6353
        %v6355 = vadd.f32 %v6354, 1.1283791
        %v6356 = vmul.f32 %v6215, %v6355
        %v6357 = vmul.f32 %v6345, 3.8918573e-05
        %v6358 = vadd.f32 %v6357, 0.001143296
        %v6359 = vmul.f32 %v6345, %v6358
        %v6360 = vadd.f32 %v6359, 0.014752088
        %v6361 = vmul.f32 %v6345, %v6360
        %v6362 = vadd.f32 %v6361, 0.112945676
        %v6363 = vmul.f32 %v6345, %v6362
        %v6364 = vadd.f32 %v6363, 0.4994258
        %v6365 = vmul.f32 %v6345, %v6364
        %v6366 = vadd.f32 %v6365, 1.0
        %v6367 = vrcp.pop %v6366
        %v6368 = vmul.f32 %v6366, %v6367
        %v6369 = vsub.f32 1.0, %v6368
        %v6370 = vmul.f32 %v6367, %v6369
        %v6371 = vadd.f32 %v6367, %v6370
        %vm6372 = vweird.f32 %v6366
        %vm6373 = vweird.f32 %v6367
        %vm6374 = vmor %vm6372, %vm6373
        %v6375 = vsel %vm6374, %v6367, %v6371
        %v6376 = vand.u32 2147483647, %v6366
        %vm6377 = vcmp.eq.f32.partialorder %v6376, 8.507059e+37
        %v6378 = vand.u32 %v6366, 2147483648
        %v6379 = vor.u32 1.1754944e-38, %v6378
        %v6380 = vsel %vm6377, %v6379, %v6375
        %v6381 = vmul.f32 %v6356, %v6380
        %v6382 = vmin.f32 %v6381, 1.0
        %v6383 = vmax.f32 %v6382, -1.0
        %v6384 = vmul.f32 %v6216, %v6216
        %v6385 = vmin.f32 16.0, %v6384
        %v6386 = vmul.f32 %v6385, 2.1237322e-06
        %v6387 = vadd.f32 %v6386, 0.00028619796
        %v6388 = vmul.f32 %v6385, %v6387
        %v6389 = vadd.f32 %v6388, 0.0036580483
        %v6390 = vmul.f32 %v6385, %v6389
        %v6391 = vadd.f32 %v6390, 0.05243302
        %v6392 = vmul.f32 %v6385, %v6391
        %v6393 = vadd.f32 %v6392, 0.18741608
        %v6394 = vmul.f32 %v6385, %v6393
        %v6395 = vadd.f32 %v6394, 1.1283791
        %v6396 = vmul.f32 %v6216, %v6395
        %v6397 = vmul.f32 %v6385, 3.8918573e-05
        %v6398 = vadd.f32 %v6397, 0.001143296
        %v6399 = vmul.f32 %v6385, %v6398
        %v6400 = vadd.f32 %v6399, 0.014752088
        %v6401 = vmul.f32 %v6385, %v6400
        %v6402 = vadd.f32 %v6401, 0.112945676
        %v6403 = vmul.f32 %v6385, %v6402
        %v6404 = vadd.f32 %v6403, 0.4994258
        %v6405 = vmul.f32 %v6385, %v6404
        %v6406 = vadd.f32 %v6405, 1.0
        %v6407 = vrcp.pop %v6406
        %v6408 = vmul.f32 %v6406, %v6407
        %v6409 = vsub.f32 1.0, %v6408
        %v6410 = vmul.f32 %v6407, %v6409
        %v6411 = vadd.f32 %v6407, %v6410
        %vm6412 = vweird.f32 %v6406
        %vm6413 = vweird.f32 %v6407
        %vm6414 = vmor %vm6412, %vm6413
        %v6415 = vsel %vm6414, %v6407, %v6411
        %v6416 = vand.u32 2147483647, %v6406
        %vm6417 = vcmp.eq.f32.partialorder %v6416, 8.507059e+37
        %v6418 = vand.u32 %v6406, 2147483648
        %v6419 = vor.u32 1.1754944e-38, %v6418
        %v6420 = vsel %vm6417, %v6419, %v6415
        %v6421 = vmul.f32 %v6396, %v6420
        %v6422 = vmin.f32 %v6421, 1.0
        %v6423 = vmax.f32 %v6422, -1.0
        %v6424 = vmul.f32 %v6217, %v6217
        %v6425 = vmin.f32 16.0, %v6424
        %v6426 = vmul.f32 %v6425, 2.1237322e-06
        %v6427 = vadd.f32 %v6426, 0.00028619796
        %v6428 = vmul.f32 %v6425, %v6427
        %v6429 = vadd.f32 %v6428, 0.0036580483
        %v6430 = vmul.f32 %v6425, %v6429
        %v6431 = vadd.f32 %v6430, 0.05243302
        %v6432 = vmul.f32 %v6425, %v6431
        %v6433 = vadd.f32 %v6432, 0.18741608
        %v6434 = vmul.f32 %v6425, %v6433
        %v6435 = vadd.f32 %v6434, 1.1283791
        %v6436 = vmul.f32 %v6217, %v6435
        %v6437 = vmul.f32 %v6425, 3.8918573e-05
        %v6438 = vadd.f32 %v6437, 0.001143296
        %v6439 = vmul.f32 %v6425, %v6438
        %v6440 = vadd.f32 %v6439, 0.014752088
        %v6441 = vmul.f32 %v6425, %v6440
        %v6442 = vadd.f32 %v6441, 0.112945676
        %v6443 = vmul.f32 %v6425, %v6442
        %v6444 = vadd.f32 %v6443, 0.4994258
        %v6445 = vmul.f32 %v6425, %v6444
        %v6446 = vadd.f32 %v6445, 1.0
        %v6447 = vrcp.pop %v6446
        %v6448 = vmul.f32 %v6446, %v6447
        %v6449 = vsub.f32 1.0, %v6448
        %v6450 = vmul.f32 %v6447, %v6449
        %v6451 = vadd.f32 %v6447, %v6450
        %vm6452 = vweird.f32 %v6446
        %vm6453 = vweird.f32 %v6447
        %vm6454 = vmor %vm6452, %vm6453
        %v6455 = vsel %vm6454, %v6447, %v6451
        %v6456 = vand.u32 2147483647, %v6446
        %vm6457 = vcmp.eq.f32.partialorder %v6456, 8.507059e+37
        %v6458 = vand.u32 %v6446, 2147483648
        %v6459 = vor.u32 1.1754944e-38, %v6458
        %v6460 = vsel %vm6457, %v6459, %v6455
        %v6461 = vmul.f32 %v6436, %v6460
        %v6462 = vmin.f32 %v6461, 1.0
        %v6463 = vmax.f32 %v6462, -1.0
        %v6464 = vmul.f32 %v6218, %v6218
        %v6465 = vmin.f32 16.0, %v6464
        %v6466 = vmul.f32 %v6465, 2.1237322e-06
        %v6467 = vadd.f32 %v6466, 0.00028619796
        %v6468 = vmul.f32 %v6465, %v6467
        %v6469 = vadd.f32 %v6468, 0.0036580483
        %v6470 = vmul.f32 %v6465, %v6469
        %v6471 = vadd.f32 %v6470, 0.05243302
        %v6472 = vmul.f32 %v6465, %v6471
        %v6473 = vadd.f32 %v6472, 0.18741608
        %v6474 = vmul.f32 %v6465, %v6473
        %v6475 = vadd.f32 %v6474, 1.1283791
        %v6476 = vmul.f32 %v6218, %v6475
        %v6477 = vmul.f32 %v6465, 3.8918573e-05
        %v6478 = vadd.f32 %v6477, 0.001143296
        %v6479 = vmul.f32 %v6465, %v6478
        %v6480 = vadd.f32 %v6479, 0.014752088
        %v6481 = vmul.f32 %v6465, %v6480
        %v6482 = vadd.f32 %v6481, 0.112945676
        %v6483 = vmul.f32 %v6465, %v6482
        %v6484 = vadd.f32 %v6483, 0.4994258
        %v6485 = vmul.f32 %v6465, %v6484
        %v6486 = vadd.f32 %v6485, 1.0
        %v6487 = vrcp.pop %v6486
        %v6488 = vmul.f32 %v6486, %v6487
        %v6489 = vsub.f32 1.0, %v6488
        %v6490 = vmul.f32 %v6487, %v6489
        %v6491 = vadd.f32 %v6487, %v6490
        %vm6492 = vweird.f32 %v6486
        %vm6493 = vweird.f32 %v6487
        %vm6494 = vmor %vm6492, %vm6493
        %v6495 = vsel %vm6494, %v6487, %v6491
        %v6496 = vand.u32 2147483647, %v6486
        %vm6497 = vcmp.eq.f32.partialorder %v6496, 8.507059e+37
        %v6498 = vand.u32 %v6486, 2147483648
        %v6499 = vor.u32 1.1754944e-38, %v6498
        %v6500 = vsel %vm6497, %v6499, %v6495
        %v6501 = vmul.f32 %v6476, %v6500
        %v6502 = vmin.f32 %v6501, 1.0
        %v6503 = vmax.f32 %v6502, -1.0
        %v6504 = vmul.f32 %v6219, %v6219
        %v6505 = vmin.f32 16.0, %v6504
        %v6506 = vmul.f32 %v6505, 2.1237322e-06
        %v6507 = vadd.f32 %v6506, 0.00028619796
        %v6508 = vmul.f32 %v6505, %v6507
        %v6509 = vadd.f32 %v6508, 0.0036580483
        %v6510 = vmul.f32 %v6505, %v6509
        %v6511 = vadd.f32 %v6510, 0.05243302
        %v6512 = vmul.f32 %v6505, %v6511
        %v6513 = vadd.f32 %v6512, 0.18741608
        %v6514 = vmul.f32 %v6505, %v6513
        %v6515 = vadd.f32 %v6514, 1.1283791
        %v6516 = vmul.f32 %v6219, %v6515
        %v6517 = vmul.f32 %v6505, 3.8918573e-05
        %v6518 = vadd.f32 %v6517, 0.001143296
        %v6519 = vmul.f32 %v6505, %v6518
        %v6520 = vadd.f32 %v6519, 0.014752088
        %v6521 = vmul.f32 %v6505, %v6520
        %v6522 = vadd.f32 %v6521, 0.112945676
        %v6523 = vmul.f32 %v6505, %v6522
        %v6524 = vadd.f32 %v6523, 0.4994258
        %v6525 = vmul.f32 %v6505, %v6524
        %v6526 = vadd.f32 %v6525, 1.0
        %v6527 = vrcp.pop %v6526
        %v6528 = vmul.f32 %v6526, %v6527
        %v6529 = vsub.f32 1.0, %v6528
        %v6530 = vmul.f32 %v6527, %v6529
        %v6531 = vadd.f32 %v6527, %v6530
        %vm6532 = vweird.f32 %v6526
        %vm6533 = vweird.f32 %v6527
        %vm6534 = vmor %vm6532, %vm6533
        %v6535 = vsel %vm6534, %v6527, %v6531
        %v6536 = vand.u32 2147483647, %v6526
        %vm6537 = vcmp.eq.f32.partialorder %v6536, 8.507059e+37
        %v6538 = vand.u32 %v6526, 2147483648
        %v6539 = vor.u32 1.1754944e-38, %v6538
        %v6540 = vsel %vm6537, %v6539, %v6535
        %v6541 = vmul.f32 %v6516, %v6540
        %v6542 = vmin.f32 %v6541, 1.0
        %v6543 = vmax.f32 %v6542, -1.0
        %v6544 = vmul.f32 %v6220, %v6220
        %v6545 = vmin.f32 16.0, %v6544
        %v6546 = vmul.f32 %v6545, 2.1237322e-06
        %v6547 = vadd.f32 %v6546, 0.00028619796
        %v6548 = vmul.f32 %v6545, %v6547
        %v6549 = vadd.f32 %v6548, 0.0036580483
        %v6550 = vmul.f32 %v6545, %v6549
        %v6551 = vadd.f32 %v6550, 0.05243302
        %v6552 = vmul.f32 %v6545, %v6551
        %v6553 = vadd.f32 %v6552, 0.18741608
        %v6554 = vmul.f32 %v6545, %v6553
        %v6555 = vadd.f32 %v6554, 1.1283791
        %v6556 = vmul.f32 %v6220, %v6555
        %v6557 = vmul.f32 %v6545, 3.8918573e-05
        %v6558 = vadd.f32 %v6557, 0.001143296
        %v6559 = vmul.f32 %v6545, %v6558
        %v6560 = vadd.f32 %v6559, 0.014752088
        %v6561 = vmul.f32 %v6545, %v6560
        %v6562 = vadd.f32 %v6561, 0.112945676
        %v6563 = vmul.f32 %v6545, %v6562
        %v6564 = vadd.f32 %v6563, 0.4994258
        %v6565 = vmul.f32 %v6545, %v6564
        %v6566 = vadd.f32 %v6565, 1.0
        %v6567 = vrcp.pop %v6566
        %v6568 = vmul.f32 %v6566, %v6567
        %v6569 = vsub.f32 1.0, %v6568
        %v6570 = vmul.f32 %v6567, %v6569
        %v6571 = vadd.f32 %v6567, %v6570
        %vm6572 = vweird.f32 %v6566
        %vm6573 = vweird.f32 %v6567
        %vm6574 = vmor %vm6572, %vm6573
        %v6575 = vsel %vm6574, %v6567, %v6571
        %v6576 = vand.u32 2147483647, %v6566
        %vm6577 = vcmp.eq.f32.partialorder %v6576, 8.507059e+37
        %v6578 = vand.u32 %v6566, 2147483648
        %v6579 = vor.u32 1.1754944e-38, %v6578
        %v6580 = vsel %vm6577, %v6579, %v6575
        %v6581 = vmul.f32 %v6556, %v6580
        %v6582 = vmin.f32 %v6581, 1.0
        %v6583 = vmax.f32 %v6582, -1.0
        %v6584 = vmul.f32 %v6221, %v6221
        %v6585 = vmin.f32 16.0, %v6584
        %v6586 = vmul.f32 %v6585, 2.1237322e-06
        %v6587 = vadd.f32 %v6586, 0.00028619796
        %v6588 = vmul.f32 %v6585, %v6587
        %v6589 = vadd.f32 %v6588, 0.0036580483
        %v6590 = vmul.f32 %v6585, %v6589
        %v6591 = vadd.f32 %v6590, 0.05243302
        %v6592 = vmul.f32 %v6585, %v6591
        %v6593 = vadd.f32 %v6592, 0.18741608
        %v6594 = vmul.f32 %v6585, %v6593
        %v6595 = vadd.f32 %v6594, 1.1283791
        %v6596 = vmul.f32 %v6221, %v6595
        %v6597 = vmul.f32 %v6585, 3.8918573e-05
        %v6598 = vadd.f32 %v6597, 0.001143296
        %v6599 = vmul.f32 %v6585, %v6598
        %v6600 = vadd.f32 %v6599, 0.014752088
        %v6601 = vmul.f32 %v6585, %v6600
        %v6602 = vadd.f32 %v6601, 0.112945676
        %v6603 = vmul.f32 %v6585, %v6602
        %v6604 = vadd.f32 %v6603, 0.4994258
        %v6605 = vmul.f32 %v6585, %v6604
        %v6606 = vadd.f32 %v6605, 1.0
        %v6607 = vrcp.pop %v6606
        %v6608 = vmul.f32 %v6606, %v6607
        %v6609 = vsub.f32 1.0, %v6608
        %v6610 = vmul.f32 %v6607, %v6609
        %v6611 = vadd.f32 %v6607, %v6610
        %vm6612 = vweird.f32 %v6606
        %vm6613 = vweird.f32 %v6607
        %vm6614 = vmor %vm6612, %vm6613
        %v6615 = vsel %vm6614, %v6607, %v6611
        %v6616 = vand.u32 2147483647, %v6606
        %vm6617 = vcmp.eq.f32.partialorder %v6616, 8.507059e+37
        %v6618 = vand.u32 %v6606, 2147483648
        %v6619 = vor.u32 1.1754944e-38, %v6618
        %v6620 = vsel %vm6617, %v6619, %v6615
        %v6621 = vmul.f32 %v6596, %v6620
        %v6622 = vmin.f32 %v6621, 1.0
        %v6623 = vmax.f32 %v6622, -1.0
        %v6624 = vmul.f32 %v6222, %v6222
        %v6625 = vmin.f32 16.0, %v6624
        %v6626 = vmul.f32 %v6625, 2.1237322e-06
        %v6627 = vadd.f32 %v6626, 0.00028619796
        %v6628 = vmul.f32 %v6625, %v6627
        %v6629 = vadd.f32 %v6628, 0.0036580483
        %v6630 = vmul.f32 %v6625, %v6629
        %v6631 = vadd.f32 %v6630, 0.05243302
        %v6632 = vmul.f32 %v6625, %v6631
        %v6633 = vadd.f32 %v6632, 0.18741608
        %v6634 = vmul.f32 %v6625, %v6633
        %v6635 = vadd.f32 %v6634, 1.1283791
        %v6636 = vmul.f32 %v6222, %v6635
        %v6637 = vmul.f32 %v6625, 3.8918573e-05
        %v6638 = vadd.f32 %v6637, 0.001143296
        %v6639 = vmul.f32 %v6625, %v6638
        %v6640 = vadd.f32 %v6639, 0.014752088
        %v6641 = vmul.f32 %v6625, %v6640
        %v6642 = vadd.f32 %v6641, 0.112945676
        %v6643 = vmul.f32 %v6625, %v6642
        %v6644 = vadd.f32 %v6643, 0.4994258
        %v6645 = vmul.f32 %v6625, %v6644
        %v6646 = vadd.f32 %v6645, 1.0
        %v6647 = vrcp.pop %v6646
        %v6648 = vmul.f32 %v6646, %v6647
        %v6649 = vsub.f32 1.0, %v6648
        %v6650 = vmul.f32 %v6647, %v6649
        %v6651 = vadd.f32 %v6647, %v6650
        %vm6652 = vweird.f32 %v6646
        %vm6653 = vweird.f32 %v6647
        %vm6654 = vmor %vm6652, %vm6653
        %v6655 = vsel %vm6654, %v6647, %v6651
        %v6656 = vand.u32 2147483647, %v6646
        %vm6657 = vcmp.eq.f32.partialorder %v6656, 8.507059e+37
        %v6658 = vand.u32 %v6646, 2147483648
        %v6659 = vor.u32 1.1754944e-38, %v6658
        %v6660 = vsel %vm6657, %v6659, %v6655
        %v6661 = vmul.f32 %v6636, %v6660
        %v6662 = vmin.f32 %v6661, 1.0
        %v6663 = vmax.f32 %v6662, -1.0
        %v6664 = vmul.f32 %v6223, %v6223
        %v6665 = vmin.f32 16.0, %v6664
        %v6666 = vmul.f32 %v6665, 2.1237322e-06
        %v6667 = vadd.f32 %v6666, 0.00028619796
        %v6668 = vmul.f32 %v6665, %v6667
        %v6669 = vadd.f32 %v6668, 0.0036580483
        %v6670 = vmul.f32 %v6665, %v6669
        %v6671 = vadd.f32 %v6670, 0.05243302
        %v6672 = vmul.f32 %v6665, %v6671
        %v6673 = vadd.f32 %v6672, 0.18741608
        %v6674 = vmul.f32 %v6665, %v6673
        %v6675 = vadd.f32 %v6674, 1.1283791
        %v6676 = vmul.f32 %v6223, %v6675
        %v6677 = vmul.f32 %v6665, 3.8918573e-05
        %v6678 = vadd.f32 %v6677, 0.001143296
        %v6679 = vmul.f32 %v6665, %v6678
        %v6680 = vadd.f32 %v6679, 0.014752088
        %v6681 = vmul.f32 %v6665, %v6680
        %v6682 = vadd.f32 %v6681, 0.112945676
        %v6683 = vmul.f32 %v6665, %v6682
        %v6684 = vadd.f32 %v6683, 0.4994258
        %v6685 = vmul.f32 %v6665, %v6684
        %v6686 = vadd.f32 %v6685, 1.0
        %v6687 = vrcp.pop %v6686
        %v6688 = vmul.f32 %v6686, %v6687
        %v6689 = vsub.f32 1.0, %v6688
        %v6690 = vmul.f32 %v6687, %v6689
        %v6691 = vadd.f32 %v6687, %v6690
        %vm6692 = vweird.f32 %v6686
        %vm6693 = vweird.f32 %v6687
        %vm6694 = vmor %vm6692, %vm6693
        %v6695 = vsel %vm6694, %v6687, %v6691
        %v6696 = vand.u32 2147483647, %v6686
        %vm6697 = vcmp.eq.f32.partialorder %v6696, 8.507059e+37
        %v6698 = vand.u32 %v6686, 2147483648
        %v6699 = vor.u32 1.1754944e-38, %v6698
        %v6700 = vsel %vm6697, %v6699, %v6695
        %v6701 = vmul.f32 %v6676, %v6700
        %v6702 = vmin.f32 %v6701, 1.0
        %v6703 = vmax.f32 %v6702, -1.0
        %v6704 = vadd.f32 %v6263, 1.0
        %v6705 = vadd.f32 %v6303, 1.0
        %v6706 = vadd.f32 %v6343, 1.0
        %v6707 = vadd.f32 %v6383, 1.0
        %v6708 = vadd.f32 %v6423, 1.0
        %v6709 = vadd.f32 %v6463, 1.0
        %v6710 = vadd.f32 %v6503, 1.0
        %v6711 = vadd.f32 %v6543, 1.0
        %v6712 = vadd.f32 %v6583, 1.0
        %v6713 = vadd.f32 %v6623, 1.0
        %v6714 = vadd.f32 %v6663, 1.0
        %v6715 = vadd.f32 %v6703, 1.0
        %v6716 = vmul.f32 %v6200, %v6704
        %v6717 = vmul.f32 %v6201, %v6705
        %v6718 = vmul.f32 %v6202, %v6706
        %v6719 = vmul.f32 %v6203, %v6707
        %v6720 = vmul.f32 %v6204, %v6708
        %v6721 = vmul.f32 %v6205, %v6709
        %v6722 = vmul.f32 %v6206, %v6710
        %v6723 = vmul.f32 %v6207, %v6711
        %v6724 = vmul.f32 %v6208, %v6712
        %v6725 = vmul.f32 %v6209, %v6713
        %v6726 = vmul.f32 %v6210, %v6714
        %v6727 = vmul.f32 %v6211, %v6715
        %s6728 = scalar_lea.vmem %s15, 1
        %v6729 = vld [vmem:[%s6728] sm:$0x1]
        %v6731 = vperm.slane %v6729, 0
        %v6733 = vadd.f32 %v5781, %v6731
        %v6734 = vadd.f32 %v5784, %v6731
        %v6735 = vadd.f32 %v5787, %v6731
        %v6736 = vadd.f32 %v5790, %v6731
        %v6737 = vpack.c.bf16 %v6717, %v6716
        %v6738 = vpack.c.bf16 %v6719, %v6718
        %v6739 = vpack.c.bf16 %v6721, %v6720
        %v6740 = vpack.c.bf16 %v6723, %v6722
        %v6741 = vpack.c.bf16 %v6725, %v6724
        %v6742 = vpack.c.bf16 %v6727, %v6726
        %s6743 = scalar_lea.vmem %s14, 32
        %v6744 = vld [vmem:[%s6743] sm:$0xf]
        %v6745 = vld [vmem:[%s6743 + $0x4] sm:$0xf]
        %v6746 = vld [vmem:[%s6743 + $0x8] sm:$0xf]
        %v6747 = vld [vmem:[%s6743 + $0xc] sm:$0xf]
        %v6748 = vld [vmem:[%s6743 + $0x10] sm:$0xf]
        %v6749 = vld [vmem:[%s6743 + $0x14] sm:$0xf]
        %v6750 = vld [vmem:[%s6743 + $0x18] sm:$0xf]
        %v6751 = vld [vmem:[%s6743 + $0x1c] sm:$0xf]
        %v6760 = vunpack.c.l.b16 %v6744
        %v6761 = vunpack.c.l.b16 %v6745
        %v6762 = vunpack.c.l.b16 %v6746
        %v6763 = vunpack.c.l.b16 %v6747
        %v6764 = vunpack.c.l.b16 %v6748
        %v6765 = vunpack.c.l.b16 %v6749
        %v6766 = vunpack.c.l.b16 %v6750
        %v6767 = vunpack.c.l.b16 %v6751
        %v6768 = vpack.c.b16 %v6761, %v6760
        %v6769 = vpack.c.b16 %v6763, %v6762
        %v6770 = vpack.c.b16 %v6765, %v6764
        %v6771 = vpack.c.b16 %v6767, %v6766
        %v6777 = vsel %vm715, %v6737, 0
        %v6780 = vsel %vm715, %v6738, 0
        %v6783 = vsel %vm715, %v6739, 0
        %v6786 = vsel %vm715, %v6740, 0
        %v6789 = vsel %vm715, %v6741, 0
        %v6792 = vsel %vm715, %v6742, 0
        %6794 = vmatpush.bf16.msra.mxu0 0
        %6795 = vmatpush.bf16.msra.mxu0 0
        %6796 = vmatpush.bf16.msra.mxu0 0
        %6797 = vmatpush.bf16.msra.mxu0 0
        %6798 = vmatpush.bf16.msra.mxu0 %v6771
        %6799 = vmatpush.bf16.msra.mxu0 %v6770
        %6800 = vmatpush.bf16.msra.mxu0 %v6769
        %6801 = vmatpush.bf16.msra.mxu0 %v6768
        %6802 = vmatmul.bf16.gmra.mxu0 %v6777
        %v6803 = vpop.f32.mrf.mxu0
        %v6804 = vadd.f32 0.0, %v6803
        %v6805 = vpop.f32.mrf.mxu0
        %6806 = vmatmul.bf16.gmra.mxu0 %v6780
        %v6807 = vpop.f32.mrf.mxu0
        %v6808 = vpop.f32.mrf.mxu0
        %v6809 = vadd.f32 0.0, %v6808
        %6810 = vmatmul.bf16.gmra.mxu0 %v6783
        %v6811 = vpop.f32.mrf.mxu0
        %v6812 = vpop.f32.mrf.mxu0
        %6813 = vmatmul.bf16.gmra.mxu0 %v6786
        %v6814 = vpop.f32.mrf.mxu0
        %v6815 = vadd.f32 0.0, %v6814
        %v6816 = vpop.f32.mrf.mxu0
        %6817 = vmatmul.bf16.gmra.mxu0 %v6789
        %v6818 = vpop.f32.mrf.mxu0
        %v6819 = vpop.f32.mrf.mxu0
        %v6820 = vadd.f32 0.0, %v6819
        %6821 = vmatmul.bf16.gmra.mxu0 %v6792
        %v6822 = vpop.f32.mrf.mxu0
        %v6823 = vpop.f32.mrf.mxu0
        %6824 = vdwg.mxu0
        %v6825 = vadd.f32 %v6733, %v6804
        %v6826 = vadd.f32 %v6734, %v6809
        %v6827 = vadd.f32 %v6735, %v6815
        %v6828 = vadd.f32 %v6736, %v6820
        %v6830 = vrot.slane %v6826, 7
        %v6833 = vrot.slane %v6827, 6
        %v6836 = vrot.slane %v6828, 5
        %vm6838 = vcmask 1040384
        %v6839 = vsel %vm6838, %v6825, %v6830
        %vm6840 = vcmask 1041408
        %v6841 = vsel %vm6840, %v6839, %v6833
        %vm6842 = vcmask 1042432
        %v6843 = vsel %vm6842, %v6841, %v6836
        %v6844 = vld [vmem:[%s16] sm:$0x1]
        %v6845 = vld [vmem:[%s17] sm:$0x1]
        %vm6846 = vcmask 257024
        %v6847 = vsel %vm6846, %v6843, 0.0
        %6848 = vadd.xlane.f32.xlu0 %v6847
        %v6849 = vpop.xlane.xlu0 %6848
        %v6850 = vmul.f32 %v6849, %v830
        %v6851 = vmul.f32 %v6843, %v6843
        %v6852 = vsel %vm6846, %v6851, 0.0
        %6853 = vadd.xlane.f32.xlu0 %v6852
        %v6854 = vpop.xlane.xlu0 %6853
        %v6855 = vmul.f32 %v6854, %v830
        %v6856 = vsub.f32 %v6843, %v6850
        %v6857 = vmul.f32 %v6850, %v6850
        %v6858 = vsub.f32 %v6855, %v6857
        %v6859 = vadd.f32 %v6858, 1e-05
        %v6860 = vrsqrt.pop %v6859
        %v6861 = vmul.f32 %v6860, %v6859
        %v6862 = vmul.f32 %v6861, %v6860
        %v6863 = vmul.f32 0.5, %v6862
        %v6864 = vsub.f32 1.5, %v6863
        %v6865 = vmul.f32 %v6860, %v6864
        %vm6866 = vweird.f32 %v6859
        %vm6867 = vweird.f32 %v6860
        %vm6868 = vmor %vm6866, %vm6867
        %v6869 = vsel %vm6868, %v6860, %v6865
        %v6870 = vmul.f32 %v6856, %v6869
        %v6872 = vperm.slane %v6844, 0
        %v6874 = vmul.f32 %v6870, %v6872
        %v6876 = vperm.slane %v6845, 0
        %v6878 = vadd.f32 %v6874, %v6876
        %v6879 = vpack.c.bf16 %v6878, %v6878
        %v6880 = vld [vmem:[%s18] sm:$0xf]
        %v6881 = vld [vmem:[%s18 + $0x4] sm:$0xf]
        %v6882 = vld [vmem:[%s18 + $0x8] sm:$0xf]
        %v6883 = vld [vmem:[%s18 + $0xc] sm:$0xf]
        %v6884 = vld [vmem:[%s19] sm:$0x1]
        %v6886 = vperm.slane %v6884, 0
        %v6892 = vunpack.c.l.b16 %v6880
        %v6893 = vunpack.c.l.b16 %v6881
        %v6894 = vunpack.c.l.b16 %v6882
        %v6895 = vunpack.c.l.b16 %v6883
        %v6896 = vpack.c.b16 %v6893, %v6892
        %v6897 = vpack.c.b16 %v6895, %v6894
        %v6901 = vsel %vm787, %v6879, 0
        %6903 = vmatpush.bf16.msra.mxu0 0
        %6904 = vmatpush.bf16.msra.mxu0 0
        %6905 = vmatpush.bf16.msra.mxu0 0
        %6906 = vmatpush.bf16.msra.mxu0 0
        %6907 = vmatpush.bf16.msra.mxu0 0
        %6908 = vmatpush.bf16.msra.mxu0 0
        %6909 = vmatpush.bf16.msra.mxu0 %v6897
        %6910 = vmatpush.bf16.msra.mxu0 %v6896
        %6911 = vmatmul.bf16.gmra.mxu0 %v6901
        %v6912 = vpop.f32.mrf.mxu0
        %v6913 = vadd.f32 %v6886, %v6912
        %v6914 = vpop.f32.mrf.mxu0
        %6915 = vdwg.mxu0
        %6916 = vst [vmem:[%s622] sm:$0xf] %v6913
        %s6917 = sand.u32 %s467, 1
        %s6918 = scalar_lea.sflag [#allocation3], %s6917
        %s6919 = sand.u32 %s467, 1
        %s6920 = smul.addr %s6919, 4
        %s6921 = scalar_lea.vmem [#allocation2], %s6920
        // Predicated region
        $region101: #{vit_forward.1} parent=99 // pred_check
          %p6922 = pneg %p477
        $region102: #{vit_forward.1} parent=99 // pred_check_branch
          %6924 = sbr.rel (%p6922) target = $region104
        $region103: #{vit_forward.1} parent=99 // pred_region
          %6926 = vsyncadd %s6918, 0
          %s6927 = smul.addr %s34, 4
          %s6928 = scalar_lea.hbm %s20, %s6927
          %s6930 = sshll.u32 %s6921, 4
          %s6931 = int_to_ptr.vmem [resolvable:$true] %s6930
          %s6932 = sshll.u32 %s6928, 4
          %s6933 = int_to_ptr.hbm [resolvable:$true] %s6932
          %6935 = dma.vmem_to_hbm [thread:$0]  %s6931, 64, %s6933, %s6918
        $region104: #{vit_forward.1} parent=99 // pred_fallthru
          _
      $region100: #{vit_forward.1} parent=5 // pred_fallthru
        _
      %p6936 = scmp.le.s32.totalorder 2, %s29
      // Predicated region
      $region105: #{vit_forward.1} parent=5 // pred_check
        %p6937 = pneg %p6936
      $region106: #{vit_forward.1} parent=5 // pred_check_branch
        %6939 = sbr.rel (%p6937) target = $region108
      $region107: #{vit_forward.1} parent=5 // pred_region
        %s6940 = ssub.s32 %s29, 2
        // Predicated region
        $region109: #{vit_forward.1} parent=107 // pred_check
          %p6941 = pneg %p483
        $region110: #{vit_forward.1} parent=107 // pred_check_branch
          %6943 = sbr.rel (%p6941) target = $region112
        $region111: #{vit_forward.1} parent=107 // pred_region
          %s6944 = sand.u32 %s468, 1
          %s6945 = scalar_lea.sflag [#allocation3], %s6944
          %s6946 = sand.u32 %s468, 1
          %s6947 = smul.addr %s6946, 4
          %s6948 = scalar_lea.vmem [#allocation2], %s6947
          %6950 = dma.done %s6945, 64
        $region112: #{vit_forward.1} parent=107 // pred_fallthru
          _
      $region108: #{vit_forward.1} parent=5 // pred_fallthru
        _
    $region6: #{vit_forward.1} parent=1 // loop_footer
      %s33 = sadd.s32 1, %s29
    $region7: #{vit_forward.1} parent=1 // loop_footer_branch
      %28 = sbr.rel target = $region3
    $region8: #{vit_forward.1} parent=1 // loop_exit
      _
    %6951 = vsyncpa [#allocation3], 1
    %s6952 = scalar_lea.sflag [#allocation3], 1
    %6953 = vsyncpa %s6952, 1

</llo_original>
